<compile_context>
chip_gen: v7x
topology: tpu7x:2x2x1
jax: 0.10.0
libtpu: 0.0.40
codegen_flags: <defaults>
</compile_context>

<pallas_src>
import jax
import jax.numpy as jnp
from jax.experimental import pallas as pl
from jax.experimental.pallas import tpu as pltpu


def _const_spec(a):
    nd = a.ndim
    return pl.BlockSpec(a.shape, lambda n, _nd=nd: (0,) * _nd)


# -----------------------------------------------------------------------------
# Fused kernel builder. One grid step == one batch element.
#   refs layout:  x(T,V,Cin), mixer(TV,TV), dbn_s(V,Cin), dbn_b(V,Cin),
#                 per layer: wg(Ci,Co), bg(1,Co), wt(9*Co,Co), bt(1,Co),
#                            bns(1,Co), bnb(1,Co), [wd(Ci,Co), bd(1,Co)],
#                 wh(128,Kpad), bh(1,Kpad), out(T,Kpad)
# -----------------------------------------------------------------------------
def _build_fused_kernel(layer_cfg, T, V):
    TV = T * V

    def kernel(*refs):
        x_ref, m_ref, dbs_ref, dbb_ref = refs[0], refs[1], refs[2], refs[3]
        o_ref = refs[-1]
        idx = 4

        # data_bn (BatchNorm1d over V*C channels, inference, folded per-(v,c) scale/shift)
        h3 = x_ref[...].astype(jnp.float32) * dbs_ref[...] + dbb_ref[...]     # (T, V, Cin)
        h = h3.reshape(TV, h3.shape[-1])                                      # (T*V, Cin)
        mixer = m_ref[...]                                                    # I_T (x) A^T

        for ci, co, has_down in layer_cfg:
            wg = refs[idx][...]; bg = refs[idx + 1][...]
            wt = refs[idx + 2][...]; bt = refs[idx + 3][...]
            bns = refs[idx + 4][...]; bnb = refs[idx + 5][...]
            idx += 6

            if has_down:                       # 1x1 conv residual
                res = jnp.dot(h, refs[idx][...],
                              preferred_element_type=jnp.float32) + refs[idx + 1][...]
                idx += 2
            else:                              # identity residual: no matmul
                res = h

            # GraphConv: channel matmul first, then node mixing as one (TV,TV)@(TV,Co)
            # MXU matmul.  The conv bias is added after the node mix, which is exactly
            # equal to conv1x1(nodemix(x)) since the contractions act on different axes.
            g = jnp.dot(h, wg, preferred_element_type=jnp.float32)            # (TV, Co)
            g = jnp.dot(mixer, g, preferred_element_type=jnp.float32) + bg    # (TV, Co)

            # Temporal conv (9,1), padding (4,0): im2col along T -> one big-K matmul.
            g3 = g.reshape(T, V, co)
            zpad = jnp.zeros((4, V, co), jnp.float32)
            gp = jnp.concatenate([zpad, g3, zpad], axis=0)                    # (T+8, V, Co)
            slab = jnp.concatenate(
                [gp[k:k + T].reshape(TV, co) for k in range(9)], axis=-1)     # (TV, 9*Co)
            y = jnp.dot(slab, wt, preferred_element_type=jnp.float32) + bt

            # BatchNorm2d (inference, folded) + residual + ReLU
            y = y * bns + bnb
            h = jnp.maximum(y + res, 0.0)                                     # (TV, Co)

        wh = refs[idx][...]; bh = refs[idx + 1][...]
        # AdaptiveAvgPool2d((None,1)) over nodes, CTC linear head (padded to 128 lanes),
        # log_softmax.  Pad columns carry a -1e30 bias so exp() == 0 there and the
        # softmax is exact over the real classes (pad columns are sliced off outside).
        feat = jnp.mean(h.reshape(T, V, h.shape[-1]), axis=1)                 # (T, 128)
        logits = jnp.dot(feat, wh, preferred_element_type=jnp.float32) + bh   # (T, Kpad)
        m = jnp.max(logits, axis=-1, keepdims=True)
        z = logits - m
        lse = jnp.log(jnp.sum(jnp.exp(z), axis=-1, keepdims=True))
        o_ref[...] = z - lse

    return kernel


# -----------------------------------------------------------------------------
# Full forward (Pallas path).  x: (N, C, T, V) as in PyTorch.
# Returns gloss log-probs (N, T, num_class).  The optional multitask heads are
# instantiated with 0 classes (None in the PyTorch module) and therefore omitted.
# -----------------------------------------------------------------------------
def stgcn_forward(x, p):
    N, C, T, V = x.shape
    num_class = p['wh'].shape[1]
    kpad = ((num_class + 127) // 128) * 128

    xt = jnp.transpose(x, (0, 2, 3, 1))                        # (N, T, V, C)
    # Node-mixing operator acting on rows indexed (t*V + v):  I_T (x) A^T
    mixer = jnp.kron(jnp.eye(T, dtype=jnp.float32), p['A'].T)  # (T*V, T*V)
    # data_bn: channel index after view(N, V*C, T) is v*C + c
    dbn_s = p['dbn_scale'].reshape(V, C)
    dbn_b = p['dbn_shift'].reshape(V, C)
    # lane-dense head: pad classes to a multiple of 128; pad bias -1e30 masks softmax
    wh_pad = jnp.zeros((p['wh'].shape[0], kpad), jnp.float32).at[:, :num_class].set(p['wh'])
    bh_pad = jnp.full((1, kpad), -1e30, jnp.float32).at[:, :num_class].set(p['bh'])

    inputs = [xt, mixer, dbn_s, dbn_b]
    layer_cfg = []
    for wg, bg, wt, bt, bns, bnb, wd, bd in p['layers']:
        ci, co = wg.shape
        has_down = wd is not None
        inputs += [wg, bg, wt.reshape(9 * co, co), bt, bns, bnb]
        if has_down:
            inputs += [wd, bd]
        layer_cfg.append((ci, co, has_down))
    inputs += [wh_pad, bh_pad]

    in_specs = [pl.BlockSpec((None, T, V, C), lambda n: (n, 0, 0, 0))]
    in_specs += [_const_spec(a) for a in inputs[1:]]

    out = pl.pallas_call(
        _build_fused_kernel(layer_cfg, T, V),
        out_shape=jax.ShapeDtypeStruct((N, T, kpad), jnp.float32),
        grid=(N,),
        in_specs=in_specs,
        out_specs=pl.BlockSpec((None, T, kpad), lambda n: (n, 0, 0)),
        compiler_params=pltpu.CompilerParams(dimension_semantics=("parallel",)),
    )(*inputs)
    return out[:, :, :num_class]


# -----------------------------------------------------------------------------
# Parameters (deterministic, synthetic).
# -----------------------------------------------------------------------------
def init_params(key, in_channels, num_class, num_nodes):
    eps = 1e-5
    chans = [(in_channels, 64), (64, 64), (64, 64), (64, 128)]
    keys = iter(jax.random.split(key, 64))
    p = {}
    # adjacency: module falls back to identity when no config file exists
    p['A'] = jnp.eye(num_nodes, dtype=jnp.float32)
    # data_bn = BatchNorm1d(V*C), inference mode, running stats (0, 1)
    gamma = 1.0 + 0.1 * jax.random.normal(next(keys), (num_nodes * in_channels,), jnp.float32)
    beta = 0.1 * jax.random.normal(next(keys), (num_nodes * in_channels,), jnp.float32)
    p['dbn_scale'] = gamma / jnp.sqrt(1.0 + eps)
    p['dbn_shift'] = beta
    layers = []
    for ci, co in chans:
        wg = jax.random.normal(next(keys), (ci, co), jnp.float32) / jnp.sqrt(float(ci))
        bg = 0.1 * jax.random.normal(next(keys), (1, co), jnp.float32)
        wt = jax.random.normal(next(keys), (9, co, co), jnp.float32) / jnp.sqrt(9.0 * co)
        bt = 0.1 * jax.random.normal(next(keys), (1, co), jnp.float32)
        g2 = 1.0 + 0.1 * jax.random.normal(next(keys), (1, co), jnp.float32)
        b2 = 0.1 * jax.random.normal(next(keys), (1, co), jnp.float32)
        bns = g2 / jnp.sqrt(1.0 + eps)          # running_var = 1
        bnb = b2                                # running_mean = 0
        if ci != co:
            wd = jax.random.normal(next(keys), (ci, co), jnp.float32) / jnp.sqrt(float(ci))
            bd = 0.1 * jax.random.normal(next(keys), (1, co), jnp.float32)
        else:                                   # identity residual -> kernel skips the matmul
            wd, bd = None, None
        layers.append((wg, bg, wt, bt, bns, bnb, wd, bd))
    p['layers'] = layers
    p['wh'] = jax.random.normal(next(keys), (128, num_class), jnp.float32) / jnp.sqrt(128.0)
    p['bh'] = 0.1 * jax.random.normal(next(keys), (1, num_class), jnp.float32)
    return p


# -----------------------------------------------------------------------------
# Pure-JAX reference mirroring the PyTorch forward (NCTV layout), high precision.
# -----------------------------------------------------------------------------
def reference_forward(x, p):
    N, C, T, V = x.shape
    hp = jax.lax.Precision.HIGHEST
    scale = p['dbn_scale'].reshape(V, C).T
    shift = p['dbn_shift'].reshape(V, C).T
    h = x * scale[None, :, None, :] + shift[None, :, None, :]
    for wg, bg, wt, bt, bns, bnb, wd, bd in p['layers']:
        if wd is None:
            res = h
        else:
            res = jnp.einsum('nctv,co->notv', h, wd, precision=hp) + bd.reshape(1, -1, 1, 1)
        xg = jnp.einsum('nctv,vw->nctw', h, p['A'], precision=hp)
        g = jnp.einsum('nctv,co->notv', xg, wg, precision=hp) + bg.reshape(1, -1, 1, 1)
        gp = jnp.pad(g, ((0, 0), (0, 0), (4, 4), (0, 0)))
        y = sum(jnp.einsum('nctv,co->notv', gp[:, :, k:k + T, :], wt[k], precision=hp)
                for k in range(9))
        y = y + bt.reshape(1, -1, 1, 1)
        y = y * bns.reshape(1, -1, 1, 1) + bnb.reshape(1, -1, 1, 1)
        h = jax.nn.relu(y + res)
    feat = jnp.mean(h, axis=3).transpose(0, 2, 1)           # (N, T, 128)
    logits = jnp.einsum('ntc,ck->ntk', feat, p['wh'], precision=hp) + p['bh']
    return jax.nn.log_softmax(logits, axis=-1)


if __name__ == "__main__":
    N, C, T, V = 2, 3, 16, 16
    num_class = 10
    key = jax.random.PRNGKey(0)
    kx, kp = jax.random.split(key)
    x = jax.random.normal(kx, (N, C, T, V), jnp.float32)
    params = init_params(kp, C, num_class, V)

    # TODO(synk): BatchNorms run in inference mode (folded running stats); training-mode
    # batch statistics and the disabled multitask heads are not reproduced.
    fwd = jax.jit(stgcn_forward)
    out = jax.block_until_ready(fwd(x, params))
    ref = jax.block_until_ready(reference_forward(x, params))

    assert out.shape == (N, T, num_class), out.shape
    if not bool(jnp.allclose(out, ref, atol=5e-2, rtol=5e-2)):
        raise AssertionError(
            f"mismatch vs reference, max abs diff {float(jnp.max(jnp.abs(out - ref)))}")
    print("KERNEL_OK")
</pallas_src>

<mosaic_0001>
module attributes {stable_mosaic.version = 11 : i64} {
  func.func @kernel(%arg0: i32, %arg1: memref<1x16x16x3xf32, #tpu.memory_space<vmem>>, %arg2: memref<256x256xf32, #tpu.memory_space<vmem>>, %arg3: memref<16x3xf32, #tpu.memory_space<vmem>>, %arg4: memref<16x3xf32, #tpu.memory_space<vmem>>, %arg5: memref<3x64xf32, #tpu.memory_space<vmem>>, %arg6: memref<1x64xf32, #tpu.memory_space<vmem>>, %arg7: memref<576x64xf32, #tpu.memory_space<vmem>>, %arg8: memref<1x64xf32, #tpu.memory_space<vmem>>, %arg9: memref<1x64xf32, #tpu.memory_space<vmem>>, %arg10: memref<1x64xf32, #tpu.memory_space<vmem>>, %arg11: memref<3x64xf32, #tpu.memory_space<vmem>>, %arg12: memref<1x64xf32, #tpu.memory_space<vmem>>, %arg13: memref<64x64xf32, #tpu.memory_space<vmem>>, %arg14: memref<1x64xf32, #tpu.memory_space<vmem>>, %arg15: memref<576x64xf32, #tpu.memory_space<vmem>>, %arg16: memref<1x64xf32, #tpu.memory_space<vmem>>, %arg17: memref<1x64xf32, #tpu.memory_space<vmem>>, %arg18: memref<1x64xf32, #tpu.memory_space<vmem>>, %arg19: memref<64x64xf32, #tpu.memory_space<vmem>>, %arg20: memref<1x64xf32, #tpu.memory_space<vmem>>, %arg21: memref<576x64xf32, #tpu.memory_space<vmem>>, %arg22: memref<1x64xf32, #tpu.memory_space<vmem>>, %arg23: memref<1x64xf32, #tpu.memory_space<vmem>>, %arg24: memref<1x64xf32, #tpu.memory_space<vmem>>, %arg25: memref<64x128xf32, #tpu.memory_space<vmem>>, %arg26: memref<1x128xf32, #tpu.memory_space<vmem>>, %arg27: memref<1152x128xf32, #tpu.memory_space<vmem>>, %arg28: memref<1x128xf32, #tpu.memory_space<vmem>>, %arg29: memref<1x128xf32, #tpu.memory_space<vmem>>, %arg30: memref<1x128xf32, #tpu.memory_space<vmem>>, %arg31: memref<64x128xf32, #tpu.memory_space<vmem>>, %arg32: memref<1x128xf32, #tpu.memory_space<vmem>>, %arg33: memref<128x128xf32, #tpu.memory_space<vmem>>, %arg34: memref<1x128xf32, #tpu.memory_space<vmem>>, %arg35: memref<1x16x128xf32, #tpu.memory_space<vmem>>) attributes {dimension_semantics = [#tpu.dimension_semantics<parallel>], iteration_bounds = array<i64: 2>, scalar_prefetch = 0 : i64, scratch_operands = 0 : i64, tpu.core_type = #tpu.core_type<tc>, window_params = [{transform_indices = @transform_0, window_bounds = array<i64: 1, 16, 16, 3>}, {pipeline_mode = #tpu.pipeline_mode<synchronous>, transform_indices = @transform_1, window_bounds = array<i64: 256, 256>}, {pipeline_mode = #tpu.pipeline_mode<synchronous>, transform_indices = @transform_2, window_bounds = array<i64: 16, 3>}, {pipeline_mode = #tpu.pipeline_mode<synchronous>, transform_indices = @transform_3, window_bounds = array<i64: 16, 3>}, {pipeline_mode = #tpu.pipeline_mode<synchronous>, transform_indices = @transform_4, window_bounds = array<i64: 3, 64>}, {pipeline_mode = #tpu.pipeline_mode<synchronous>, transform_indices = @transform_5, window_bounds = array<i64: 1, 64>}, {pipeline_mode = #tpu.pipeline_mode<synchronous>, transform_indices = @transform_6, window_bounds = array<i64: 576, 64>}, {pipeline_mode = #tpu.pipeline_mode<synchronous>, transform_indices = @transform_7, window_bounds = array<i64: 1, 64>}, {pipeline_mode = #tpu.pipeline_mode<synchronous>, transform_indices = @transform_8, window_bounds = array<i64: 1, 64>}, {pipeline_mode = #tpu.pipeline_mode<synchronous>, transform_indices = @transform_9, window_bounds = array<i64: 1, 64>}, {pipeline_mode = #tpu.pipeline_mode<synchronous>, transform_indices = @transform_10, window_bounds = array<i64: 3, 64>}, {pipeline_mode = #tpu.pipeline_mode<synchronous>, transform_indices = @transform_11, window_bounds = array<i64: 1, 64>}, {pipeline_mode = #tpu.pipeline_mode<synchronous>, transform_indices = @transform_12, window_bounds = array<i64: 64, 64>}, {pipeline_mode = #tpu.pipeline_mode<synchronous>, transform_indices = @transform_13, window_bounds = array<i64: 1, 64>}, {pipeline_mode = #tpu.pipeline_mode<synchronous>, transform_indices = @transform_14, window_bounds = array<i64: 576, 64>}, {pipeline_mode = #tpu.pipeline_mode<synchronous>, transform_indices = @transform_15, window_bounds = array<i64: 1, 64>}, {pipeline_mode = #tpu.pipeline_mode<synchronous>, transform_indices = @transform_16, window_bounds = array<i64: 1, 64>}, {pipeline_mode = #tpu.pipeline_mode<synchronous>, transform_indices = @transform_17, window_bounds = array<i64: 1, 64>}, {pipeline_mode = #tpu.pipeline_mode<synchronous>, transform_indices = @transform_18, window_bounds = array<i64: 64, 64>}, {pipeline_mode = #tpu.pipeline_mode<synchronous>, transform_indices = @transform_19, window_bounds = array<i64: 1, 64>}, {pipeline_mode = #tpu.pipeline_mode<synchronous>, transform_indices = @transform_20, window_bounds = array<i64: 576, 64>}, {pipeline_mode = #tpu.pipeline_mode<synchronous>, transform_indices = @transform_21, window_bounds = array<i64: 1, 64>}, {pipeline_mode = #tpu.pipeline_mode<synchronous>, transform_indices = @transform_22, window_bounds = array<i64: 1, 64>}, {pipeline_mode = #tpu.pipeline_mode<synchronous>, transform_indices = @transform_23, window_bounds = array<i64: 1, 64>}, {pipeline_mode = #tpu.pipeline_mode<synchronous>, transform_indices = @transform_24, window_bounds = array<i64: 64, 128>}, {pipeline_mode = #tpu.pipeline_mode<synchronous>, transform_indices = @transform_25, window_bounds = array<i64: 1, 128>}, {pipeline_mode = #tpu.pipeline_mode<synchronous>, transform_indices = @transform_26, window_bounds = array<i64: 1152, 128>}, {pipeline_mode = #tpu.pipeline_mode<synchronous>, transform_indices = @transform_27, window_bounds = array<i64: 1, 128>}, {pipeline_mode = #tpu.pipeline_mode<synchronous>, transform_indices = @transform_28, window_bounds = array<i64: 1, 128>}, {pipeline_mode = #tpu.pipeline_mode<synchronous>, transform_indices = @transform_29, window_bounds = array<i64: 1, 128>}, {pipeline_mode = #tpu.pipeline_mode<synchronous>, transform_indices = @transform_30, window_bounds = array<i64: 64, 128>}, {pipeline_mode = #tpu.pipeline_mode<synchronous>, transform_indices = @transform_31, window_bounds = array<i64: 1, 128>}, {pipeline_mode = #tpu.pipeline_mode<synchronous>, transform_indices = @transform_32, window_bounds = array<i64: 128, 128>}, {pipeline_mode = #tpu.pipeline_mode<synchronous>, transform_indices = @transform_33, window_bounds = array<i64: 1, 128>}, {transform_indices = @transform_34, window_bounds = array<i64: 1, 16, 128>}]} {
    %c0 = arith.constant 0 : index
    %c0_0 = arith.constant 0 : index
    %c0_1 = arith.constant 0 : index
    %c0_2 = arith.constant 0 : index
    %0 = vector.load %arg1[%c0, %c0_0, %c0_1, %c0_2] : memref<1x16x16x3xf32, #tpu.memory_space<vmem>>, vector<1x16x16x3xf32>
    %1 = vector.shape_cast %0 : vector<1x16x16x3xf32> to vector<16x16x3xf32>
    %c0_3 = arith.constant 0 : index
    %c0_4 = arith.constant 0 : index
    %2 = vector.load %arg3[%c0_3, %c0_4] : memref<16x3xf32, #tpu.memory_space<vmem>>, vector<16x3xf32>
    %3 = vector.shape_cast %2 : vector<16x3xf32> to vector<1x16x3xf32>
    %4 = vector.broadcast %3 : vector<1x16x3xf32> to vector<16x16x3xf32>
    %5 = arith.mulf %1, %4 : vector<16x16x3xf32>
    %c0_5 = arith.constant 0 : index
    %c0_6 = arith.constant 0 : index
    %6 = vector.load %arg4[%c0_5, %c0_6] : memref<16x3xf32, #tpu.memory_space<vmem>>, vector<16x3xf32>
    %7 = vector.shape_cast %6 : vector<16x3xf32> to vector<1x16x3xf32>
    %8 = vector.broadcast %7 : vector<1x16x3xf32> to vector<16x16x3xf32>
    %9 = arith.addf %5, %8 : vector<16x16x3xf32>
    %10 = vector.shape_cast %9 : vector<16x16x3xf32> to vector<256x3xf32>
    %c0_7 = arith.constant 0 : index
    %c0_8 = arith.constant 0 : index
    %11 = vector.load %arg2[%c0_7, %c0_8] : memref<256x256xf32, #tpu.memory_space<vmem>>, vector<256x256xf32>
    %c0_9 = arith.constant 0 : index
    %c0_10 = arith.constant 0 : index
    %12 = vector.load %arg5[%c0_9, %c0_10] : memref<3x64xf32, #tpu.memory_space<vmem>>, vector<3x64xf32>
    %c0_11 = arith.constant 0 : index
    %c0_12 = arith.constant 0 : index
    %13 = vector.load %arg6[%c0_11, %c0_12] : memref<1x64xf32, #tpu.memory_space<vmem>>, vector<1x64xf32>
    %c0_13 = arith.constant 0 : index
    %c0_14 = arith.constant 0 : index
    %14 = vector.load %arg7[%c0_13, %c0_14] : memref<576x64xf32, #tpu.memory_space<vmem>>, vector<576x64xf32>
    %c0_15 = arith.constant 0 : index
    %c0_16 = arith.constant 0 : index
    %15 = vector.load %arg8[%c0_15, %c0_16] : memref<1x64xf32, #tpu.memory_space<vmem>>, vector<1x64xf32>
    %c0_17 = arith.constant 0 : index
    %c0_18 = arith.constant 0 : index
    %16 = vector.load %arg9[%c0_17, %c0_18] : memref<1x64xf32, #tpu.memory_space<vmem>>, vector<1x64xf32>
    %c0_19 = arith.constant 0 : index
    %c0_20 = arith.constant 0 : index
    %17 = vector.load %arg10[%c0_19, %c0_20] : memref<1x64xf32, #tpu.memory_space<vmem>>, vector<1x64xf32>
    %c0_21 = arith.constant 0 : index
    %c0_22 = arith.constant 0 : index
    %18 = vector.load %arg11[%c0_21, %c0_22] : memref<3x64xf32, #tpu.memory_space<vmem>>, vector<3x64xf32>
    %cst = arith.constant dense<0.000000e+00> : vector<256x64xf32>
    %19 = tpu.matmul %10, %18, %cst {dimension_numbers = #tpu.dot_dimension_numbers<[1], [0], [0], [1], [0, 0, 1, 1], [], []>} : vector<256x3xf32>, vector<3x64xf32>, vector<256x64xf32> -> vector<256x64xf32>
    %c0_23 = arith.constant 0 : index
    %c0_24 = arith.constant 0 : index
    %20 = vector.load %arg12[%c0_23, %c0_24] : memref<1x64xf32, #tpu.memory_space<vmem>>, vector<1x64xf32>
    %21 = vector.broadcast %20 : vector<1x64xf32> to vector<256x64xf32>
    %22 = arith.addf %19, %21 : vector<256x64xf32>
    %cst_25 = arith.constant dense<0.000000e+00> : vector<256x64xf32>
    %23 = tpu.matmul %10, %12, %cst_25 {dimension_numbers = #tpu.dot_dimension_numbers<[1], [0], [0], [1], [0, 0, 1, 1], [], []>} : vector<256x3xf32>, vector<3x64xf32>, vector<256x64xf32> -> vector<256x64xf32>
    %cst_26 = arith.constant dense<0.000000e+00> : vector<256x64xf32>
    %24 = tpu.matmul %11, %23, %cst_26 {dimension_numbers = #tpu.dot_dimension_numbers<[1], [0], [0], [1], [0, 0, 1, 1], [], []>} : vector<256x256xf32>, vector<256x64xf32>, vector<256x64xf32> -> vector<256x64xf32>
    %25 = vector.broadcast %13 : vector<1x64xf32> to vector<256x64xf32>
    %26 = arith.addf %24, %25 : vector<256x64xf32>
    %27 = vector.shape_cast %26 : vector<256x64xf32> to vector<16x16x64xf32>
    %cst_27 = arith.constant 0.000000e+00 : f32
    %28 = vector.broadcast %cst_27 : f32 to vector<4x16x64xf32>
    %29 = tpu.concatenate %28, %27, %28 in 0 : vector<4x16x64xf32>, vector<16x16x64xf32>, vector<4x16x64xf32> -> vector<24x16x64xf32>
    %30 = vector.extract_strided_slice %29 {offsets = [0, 0, 0], sizes = [16, 16, 64], strides = [1, 1, 1]} : vector<24x16x64xf32> to vector<16x16x64xf32>
    %31 = vector.shape_cast %30 : vector<16x16x64xf32> to vector<256x64xf32>
    %32 = vector.extract_strided_slice %29 {offsets = [1, 0, 0], sizes = [16, 16, 64], strides = [1, 1, 1]} : vector<24x16x64xf32> to vector<16x16x64xf32>
    %33 = vector.shape_cast %32 : vector<16x16x64xf32> to vector<256x64xf32>
    %34 = vector.extract_strided_slice %29 {offsets = [2, 0, 0], sizes = [16, 16, 64], strides = [1, 1, 1]} : vector<24x16x64xf32> to vector<16x16x64xf32>
    %35 = vector.shape_cast %34 : vector<16x16x64xf32> to vector<256x64xf32>
    %36 = vector.extract_strided_slice %29 {offsets = [3, 0, 0], sizes = [16, 16, 64], strides = [1, 1, 1]} : vector<24x16x64xf32> to vector<16x16x64xf32>
    %37 = vector.shape_cast %36 : vector<16x16x64xf32> to vector<256x64xf32>
    %38 = vector.extract_strided_slice %29 {offsets = [4, 0, 0], sizes = [16, 16, 64], strides = [1, 1, 1]} : vector<24x16x64xf32> to vector<16x16x64xf32>
    %39 = vector.shape_cast %38 : vector<16x16x64xf32> to vector<256x64xf32>
    %40 = vector.extract_strided_slice %29 {offsets = [5, 0, 0], sizes = [16, 16, 64], strides = [1, 1, 1]} : vector<24x16x64xf32> to vector<16x16x64xf32>
    %41 = vector.shape_cast %40 : vector<16x16x64xf32> to vector<256x64xf32>
    %42 = vector.extract_strided_slice %29 {offsets = [6, 0, 0], sizes = [16, 16, 64], strides = [1, 1, 1]} : vector<24x16x64xf32> to vector<16x16x64xf32>
    %43 = vector.shape_cast %42 : vector<16x16x64xf32> to vector<256x64xf32>
    %44 = vector.extract_strided_slice %29 {offsets = [7, 0, 0], sizes = [16, 16, 64], strides = [1, 1, 1]} : vector<24x16x64xf32> to vector<16x16x64xf32>
    %45 = vector.shape_cast %44 : vector<16x16x64xf32> to vector<256x64xf32>
    %46 = vector.extract_strided_slice %29 {offsets = [8, 0, 0], sizes = [16, 16, 64], strides = [1, 1, 1]} : vector<24x16x64xf32> to vector<16x16x64xf32>
    %47 = vector.shape_cast %46 : vector<16x16x64xf32> to vector<256x64xf32>
    %48 = tpu.concatenate %31, %33, %35, %37, %39, %41, %43, %45, %47 in 1 : vector<256x64xf32>, vector<256x64xf32>, vector<256x64xf32>, vector<256x64xf32>, vector<256x64xf32>, vector<256x64xf32>, vector<256x64xf32>, vector<256x64xf32>, vector<256x64xf32> -> vector<256x576xf32>
    %cst_28 = arith.constant dense<0.000000e+00> : vector<256x64xf32>
    %49 = tpu.matmul %48, %14, %cst_28 {dimension_numbers = #tpu.dot_dimension_numbers<[1], [0], [0], [1], [0, 0, 1, 1], [], []>} : vector<256x576xf32>, vector<576x64xf32>, vector<256x64xf32> -> vector<256x64xf32>
    %50 = vector.broadcast %15 : vector<1x64xf32> to vector<256x64xf32>
    %51 = arith.addf %49, %50 : vector<256x64xf32>
    %52 = vector.broadcast %16 : vector<1x64xf32> to vector<256x64xf32>
    %53 = arith.mulf %51, %52 : vector<256x64xf32>
    %54 = vector.broadcast %17 : vector<1x64xf32> to vector<256x64xf32>
    %55 = arith.addf %53, %54 : vector<256x64xf32>
    %56 = arith.addf %55, %22 : vector<256x64xf32>
    %cst_29 = arith.constant 0.000000e+00 : f32
    %57 = vector.broadcast %cst_29 : f32 to vector<256x64xf32>
    %58 = arith.maximumf %56, %57 : vector<256x64xf32>
    %c0_30 = arith.constant 0 : index
    %c0_31 = arith.constant 0 : index
    %59 = vector.load %arg13[%c0_30, %c0_31] : memref<64x64xf32, #tpu.memory_space<vmem>>, vector<64x64xf32>
    %c0_32 = arith.constant 0 : index
    %c0_33 = arith.constant 0 : index
    %60 = vector.load %arg14[%c0_32, %c0_33] : memref<1x64xf32, #tpu.memory_space<vmem>>, vector<1x64xf32>
    %c0_34 = arith.constant 0 : index
    %c0_35 = arith.constant 0 : index
    %61 = vector.load %arg15[%c0_34, %c0_35] : memref<576x64xf32, #tpu.memory_space<vmem>>, vector<576x64xf32>
    %c0_36 = arith.constant 0 : index
    %c0_37 = arith.constant 0 : index
    %62 = vector.load %arg16[%c0_36, %c0_37] : memref<1x64xf32, #tpu.memory_space<vmem>>, vector<1x64xf32>
    %c0_38 = arith.constant 0 : index
    %c0_39 = arith.constant 0 : index
    %63 = vector.load %arg17[%c0_38, %c0_39] : memref<1x64xf32, #tpu.memory_space<vmem>>, vector<1x64xf32>
    %c0_40 = arith.constant 0 : index
    %c0_41 = arith.constant 0 : index
    %64 = vector.load %arg18[%c0_40, %c0_41] : memref<1x64xf32, #tpu.memory_space<vmem>>, vector<1x64xf32>
    %cst_42 = arith.constant dense<0.000000e+00> : vector<256x64xf32>
    %65 = tpu.matmul %58, %59, %cst_42 {dimension_numbers = #tpu.dot_dimension_numbers<[1], [0], [0], [1], [0, 0, 1, 1], [], []>} : vector<256x64xf32>, vector<64x64xf32>, vector<256x64xf32> -> vector<256x64xf32>
    %cst_43 = arith.constant dense<0.000000e+00> : vector<256x64xf32>
    %66 = tpu.matmul %11, %65, %cst_43 {dimension_numbers = #tpu.dot_dimension_numbers<[1], [0], [0], [1], [0, 0, 1, 1], [], []>} : vector<256x256xf32>, vector<256x64xf32>, vector<256x64xf32> -> vector<256x64xf32>
    %67 = vector.broadcast %60 : vector<1x64xf32> to vector<256x64xf32>
    %68 = arith.addf %66, %67 : vector<256x64xf32>
    %69 = vector.shape_cast %68 : vector<256x64xf32> to vector<16x16x64xf32>
    %cst_44 = arith.constant 0.000000e+00 : f32
    %70 = vector.broadcast %cst_44 : f32 to vector<4x16x64xf32>
    %71 = tpu.concatenate %70, %69, %70 in 0 : vector<4x16x64xf32>, vector<16x16x64xf32>, vector<4x16x64xf32> -> vector<24x16x64xf32>
    %72 = vector.extract_strided_slice %71 {offsets = [0, 0, 0], sizes = [16, 16, 64], strides = [1, 1, 1]} : vector<24x16x64xf32> to vector<16x16x64xf32>
    %73 = vector.shape_cast %72 : vector<16x16x64xf32> to vector<256x64xf32>
    %74 = vector.extract_strided_slice %71 {offsets = [1, 0, 0], sizes = [16, 16, 64], strides = [1, 1, 1]} : vector<24x16x64xf32> to vector<16x16x64xf32>
    %75 = vector.shape_cast %74 : vector<16x16x64xf32> to vector<256x64xf32>
    %76 = vector.extract_strided_slice %71 {offsets = [2, 0, 0], sizes = [16, 16, 64], strides = [1, 1, 1]} : vector<24x16x64xf32> to vector<16x16x64xf32>
    %77 = vector.shape_cast %76 : vector<16x16x64xf32> to vector<256x64xf32>
    %78 = vector.extract_strided_slice %71 {offsets = [3, 0, 0], sizes = [16, 16, 64], strides = [1, 1, 1]} : vector<24x16x64xf32> to vector<16x16x64xf32>
    %79 = vector.shape_cast %78 : vector<16x16x64xf32> to vector<256x64xf32>
    %80 = vector.extract_strided_slice %71 {offsets = [4, 0, 0], sizes = [16, 16, 64], strides = [1, 1, 1]} : vector<24x16x64xf32> to vector<16x16x64xf32>
    %81 = vector.shape_cast %80 : vector<16x16x64xf32> to vector<256x64xf32>
    %82 = vector.extract_strided_slice %71 {offsets = [5, 0, 0], sizes = [16, 16, 64], strides = [1, 1, 1]} : vector<24x16x64xf32> to vector<16x16x64xf32>
    %83 = vector.shape_cast %82 : vector<16x16x64xf32> to vector<256x64xf32>
    %84 = vector.extract_strided_slice %71 {offsets = [6, 0, 0], sizes = [16, 16, 64], strides = [1, 1, 1]} : vector<24x16x64xf32> to vector<16x16x64xf32>
    %85 = vector.shape_cast %84 : vector<16x16x64xf32> to vector<256x64xf32>
    %86 = vector.extract_strided_slice %71 {offsets = [7, 0, 0], sizes = [16, 16, 64], strides = [1, 1, 1]} : vector<24x16x64xf32> to vector<16x16x64xf32>
    %87 = vector.shape_cast %86 : vector<16x16x64xf32> to vector<256x64xf32>
    %88 = vector.extract_strided_slice %71 {offsets = [8, 0, 0], sizes = [16, 16, 64], strides = [1, 1, 1]} : vector<24x16x64xf32> to vector<16x16x64xf32>
    %89 = vector.shape_cast %88 : vector<16x16x64xf32> to vector<256x64xf32>
    %90 = tpu.concatenate %73, %75, %77, %79, %81, %83, %85, %87, %89 in 1 : vector<256x64xf32>, vector<256x64xf32>, vector<256x64xf32>, vector<256x64xf32>, vector<256x64xf32>, vector<256x64xf32>, vector<256x64xf32>, vector<256x64xf32>, vector<256x64xf32> -> vector<256x576xf32>
    %cst_45 = arith.constant dense<0.000000e+00> : vector<256x64xf32>
    %91 = tpu.matmul %90, %61, %cst_45 {dimension_numbers = #tpu.dot_dimension_numbers<[1], [0], [0], [1], [0, 0, 1, 1], [], []>} : vector<256x576xf32>, vector<576x64xf32>, vector<256x64xf32> -> vector<256x64xf32>
    %92 = vector.broadcast %62 : vector<1x64xf32> to vector<256x64xf32>
    %93 = arith.addf %91, %92 : vector<256x64xf32>
    %94 = vector.broadcast %63 : vector<1x64xf32> to vector<256x64xf32>
    %95 = arith.mulf %93, %94 : vector<256x64xf32>
    %96 = vector.broadcast %64 : vector<1x64xf32> to vector<256x64xf32>
    %97 = arith.addf %95, %96 : vector<256x64xf32>
    %98 = arith.addf %97, %58 : vector<256x64xf32>
    %cst_46 = arith.constant 0.000000e+00 : f32
    %99 = vector.broadcast %cst_46 : f32 to vector<256x64xf32>
    %100 = arith.maximumf %98, %99 : vector<256x64xf32>
    %c0_47 = arith.constant 0 : index
    %c0_48 = arith.constant 0 : index
    %101 = vector.load %arg19[%c0_47, %c0_48] : memref<64x64xf32, #tpu.memory_space<vmem>>, vector<64x64xf32>
    %c0_49 = arith.constant 0 : index
    %c0_50 = arith.constant 0 : index
    %102 = vector.load %arg20[%c0_49, %c0_50] : memref<1x64xf32, #tpu.memory_space<vmem>>, vector<1x64xf32>
    %c0_51 = arith.constant 0 : index
    %c0_52 = arith.constant 0 : index
    %103 = vector.load %arg21[%c0_51, %c0_52] : memref<576x64xf32, #tpu.memory_space<vmem>>, vector<576x64xf32>
    %c0_53 = arith.constant 0 : index
    %c0_54 = arith.constant 0 : index
    %104 = vector.load %arg22[%c0_53, %c0_54] : memref<1x64xf32, #tpu.memory_space<vmem>>, vector<1x64xf32>
    %c0_55 = arith.constant 0 : index
    %c0_56 = arith.constant 0 : index
    %105 = vector.load %arg23[%c0_55, %c0_56] : memref<1x64xf32, #tpu.memory_space<vmem>>, vector<1x64xf32>
    %c0_57 = arith.constant 0 : index
    %c0_58 = arith.constant 0 : index
    %106 = vector.load %arg24[%c0_57, %c0_58] : memref<1x64xf32, #tpu.memory_space<vmem>>, vector<1x64xf32>
    %cst_59 = arith.constant dense<0.000000e+00> : vector<256x64xf32>
    %107 = tpu.matmul %100, %101, %cst_59 {dimension_numbers = #tpu.dot_dimension_numbers<[1], [0], [0], [1], [0, 0, 1, 1], [], []>} : vector<256x64xf32>, vector<64x64xf32>, vector<256x64xf32> -> vector<256x64xf32>
    %cst_60 = arith.constant dense<0.000000e+00> : vector<256x64xf32>
    %108 = tpu.matmul %11, %107, %cst_60 {dimension_numbers = #tpu.dot_dimension_numbers<[1], [0], [0], [1], [0, 0, 1, 1], [], []>} : vector<256x256xf32>, vector<256x64xf32>, vector<256x64xf32> -> vector<256x64xf32>
    %109 = vector.broadcast %102 : vector<1x64xf32> to vector<256x64xf32>
    %110 = arith.addf %108, %109 : vector<256x64xf32>
    %111 = vector.shape_cast %110 : vector<256x64xf32> to vector<16x16x64xf32>
    %cst_61 = arith.constant 0.000000e+00 : f32
    %112 = vector.broadcast %cst_61 : f32 to vector<4x16x64xf32>
    %113 = tpu.concatenate %112, %111, %112 in 0 : vector<4x16x64xf32>, vector<16x16x64xf32>, vector<4x16x64xf32> -> vector<24x16x64xf32>
    %114 = vector.extract_strided_slice %113 {offsets = [0, 0, 0], sizes = [16, 16, 64], strides = [1, 1, 1]} : vector<24x16x64xf32> to vector<16x16x64xf32>
    %115 = vector.shape_cast %114 : vector<16x16x64xf32> to vector<256x64xf32>
    %116 = vector.extract_strided_slice %113 {offsets = [1, 0, 0], sizes = [16, 16, 64], strides = [1, 1, 1]} : vector<24x16x64xf32> to vector<16x16x64xf32>
    %117 = vector.shape_cast %116 : vector<16x16x64xf32> to vector<256x64xf32>
    %118 = vector.extract_strided_slice %113 {offsets = [2, 0, 0], sizes = [16, 16, 64], strides = [1, 1, 1]} : vector<24x16x64xf32> to vector<16x16x64xf32>
    %119 = vector.shape_cast %118 : vector<16x16x64xf32> to vector<256x64xf32>
    %120 = vector.extract_strided_slice %113 {offsets = [3, 0, 0], sizes = [16, 16, 64], strides = [1, 1, 1]} : vector<24x16x64xf32> to vector<16x16x64xf32>
    %121 = vector.shape_cast %120 : vector<16x16x64xf32> to vector<256x64xf32>
    %122 = vector.extract_strided_slice %113 {offsets = [4, 0, 0], sizes = [16, 16, 64], strides = [1, 1, 1]} : vector<24x16x64xf32> to vector<16x16x64xf32>
    %123 = vector.shape_cast %122 : vector<16x16x64xf32> to vector<256x64xf32>
    %124 = vector.extract_strided_slice %113 {offsets = [5, 0, 0], sizes = [16, 16, 64], strides = [1, 1, 1]} : vector<24x16x64xf32> to vector<16x16x64xf32>
    %125 = vector.shape_cast %124 : vector<16x16x64xf32> to vector<256x64xf32>
    %126 = vector.extract_strided_slice %113 {offsets = [6, 0, 0], sizes = [16, 16, 64], strides = [1, 1, 1]} : vector<24x16x64xf32> to vector<16x16x64xf32>
    %127 = vector.shape_cast %126 : vector<16x16x64xf32> to vector<256x64xf32>
    %128 = vector.extract_strided_slice %113 {offsets = [7, 0, 0], sizes = [16, 16, 64], strides = [1, 1, 1]} : vector<24x16x64xf32> to vector<16x16x64xf32>
    %129 = vector.shape_cast %128 : vector<16x16x64xf32> to vector<256x64xf32>
    %130 = vector.extract_strided_slice %113 {offsets = [8, 0, 0], sizes = [16, 16, 64], strides = [1, 1, 1]} : vector<24x16x64xf32> to vector<16x16x64xf32>
    %131 = vector.shape_cast %130 : vector<16x16x64xf32> to vector<256x64xf32>
    %132 = tpu.concatenate %115, %117, %119, %121, %123, %125, %127, %129, %131 in 1 : vector<256x64xf32>, vector<256x64xf32>, vector<256x64xf32>, vector<256x64xf32>, vector<256x64xf32>, vector<256x64xf32>, vector<256x64xf32>, vector<256x64xf32>, vector<256x64xf32> -> vector<256x576xf32>
    %cst_62 = arith.constant dense<0.000000e+00> : vector<256x64xf32>
    %133 = tpu.matmul %132, %103, %cst_62 {dimension_numbers = #tpu.dot_dimension_numbers<[1], [0], [0], [1], [0, 0, 1, 1], [], []>} : vector<256x576xf32>, vector<576x64xf32>, vector<256x64xf32> -> vector<256x64xf32>
    %134 = vector.broadcast %104 : vector<1x64xf32> to vector<256x64xf32>
    %135 = arith.addf %133, %134 : vector<256x64xf32>
    %136 = vector.broadcast %105 : vector<1x64xf32> to vector<256x64xf32>
    %137 = arith.mulf %135, %136 : vector<256x64xf32>
    %138 = vector.broadcast %106 : vector<1x64xf32> to vector<256x64xf32>
    %139 = arith.addf %137, %138 : vector<256x64xf32>
    %140 = arith.addf %139, %100 : vector<256x64xf32>
    %cst_63 = arith.constant 0.000000e+00 : f32
    %141 = vector.broadcast %cst_63 : f32 to vector<256x64xf32>
    %142 = arith.maximumf %140, %141 : vector<256x64xf32>
    %c0_64 = arith.constant 0 : index
    %c0_65 = arith.constant 0 : index
    %143 = vector.load %arg25[%c0_64, %c0_65] : memref<64x128xf32, #tpu.memory_space<vmem>>, vector<64x128xf32>
    %c0_66 = arith.constant 0 : index
    %c0_67 = arith.constant 0 : index
    %144 = vector.load %arg26[%c0_66, %c0_67] : memref<1x128xf32, #tpu.memory_space<vmem>>, vector<1x128xf32>
    %c0_68 = arith.constant 0 : index
    %c0_69 = arith.constant 0 : index
    %145 = vector.load %arg27[%c0_68, %c0_69] : memref<1152x128xf32, #tpu.memory_space<vmem>>, vector<1152x128xf32>
    %c0_70 = arith.constant 0 : index
    %c0_71 = arith.constant 0 : index
    %146 = vector.load %arg28[%c0_70, %c0_71] : memref<1x128xf32, #tpu.memory_space<vmem>>, vector<1x128xf32>
    %c0_72 = arith.constant 0 : index
    %c0_73 = arith.constant 0 : index
    %147 = vector.load %arg29[%c0_72, %c0_73] : memref<1x128xf32, #tpu.memory_space<vmem>>, vector<1x128xf32>
    %c0_74 = arith.constant 0 : index
    %c0_75 = arith.constant 0 : index
    %148 = vector.load %arg30[%c0_74, %c0_75] : memref<1x128xf32, #tpu.memory_space<vmem>>, vector<1x128xf32>
    %c0_76 = arith.constant 0 : index
    %c0_77 = arith.constant 0 : index
    %149 = vector.load %arg31[%c0_76, %c0_77] : memref<64x128xf32, #tpu.memory_space<vmem>>, vector<64x128xf32>
    %cst_78 = arith.constant dense<0.000000e+00> : vector<256x128xf32>
    %150 = tpu.matmul %142, %149, %cst_78 {dimension_numbers = #tpu.dot_dimension_numbers<[1], [0], [0], [1], [0, 0, 1, 1], [], []>} : vector<256x64xf32>, vector<64x128xf32>, vector<256x128xf32> -> vector<256x128xf32>
    %c0_79 = arith.constant 0 : index
    %c0_80 = arith.constant 0 : index
    %151 = vector.load %arg32[%c0_79, %c0_80] : memref<1x128xf32, #tpu.memory_space<vmem>>, vector<1x128xf32>
    %152 = vector.broadcast %151 : vector<1x128xf32> to vector<256x128xf32>
    %153 = arith.addf %150, %152 : vector<256x128xf32>
    %cst_81 = arith.constant dense<0.000000e+00> : vector<256x128xf32>
    %154 = tpu.matmul %142, %143, %cst_81 {dimension_numbers = #tpu.dot_dimension_numbers<[1], [0], [0], [1], [0, 0, 1, 1], [], []>} : vector<256x64xf32>, vector<64x128xf32>, vector<256x128xf32> -> vector<256x128xf32>
    %cst_82 = arith.constant dense<0.000000e+00> : vector<256x128xf32>
    %155 = tpu.matmul %11, %154, %cst_82 {dimension_numbers = #tpu.dot_dimension_numbers<[1], [0], [0], [1], [0, 0, 1, 1], [], []>} : vector<256x256xf32>, vector<256x128xf32>, vector<256x128xf32> -> vector<256x128xf32>
    %156 = vector.broadcast %144 : vector<1x128xf32> to vector<256x128xf32>
    %157 = arith.addf %155, %156 : vector<256x128xf32>
    %158 = vector.shape_cast %157 : vector<256x128xf32> to vector<16x16x128xf32>
    %cst_83 = arith.constant 0.000000e+00 : f32
    %159 = vector.broadcast %cst_83 : f32 to vector<4x16x128xf32>
    %160 = tpu.concatenate %159, %158, %159 in 0 : vector<4x16x128xf32>, vector<16x16x128xf32>, vector<4x16x128xf32> -> vector<24x16x128xf32>
    %161 = vector.extract_strided_slice %160 {offsets = [0, 0, 0], sizes = [16, 16, 128], strides = [1, 1, 1]} : vector<24x16x128xf32> to vector<16x16x128xf32>
    %162 = vector.shape_cast %161 : vector<16x16x128xf32> to vector<256x128xf32>
    %163 = vector.extract_strided_slice %160 {offsets = [1, 0, 0], sizes = [16, 16, 128], strides = [1, 1, 1]} : vector<24x16x128xf32> to vector<16x16x128xf32>
    %164 = vector.shape_cast %163 : vector<16x16x128xf32> to vector<256x128xf32>
    %165 = vector.extract_strided_slice %160 {offsets = [2, 0, 0], sizes = [16, 16, 128], strides = [1, 1, 1]} : vector<24x16x128xf32> to vector<16x16x128xf32>
    %166 = vector.shape_cast %165 : vector<16x16x128xf32> to vector<256x128xf32>
    %167 = vector.extract_strided_slice %160 {offsets = [3, 0, 0], sizes = [16, 16, 128], strides = [1, 1, 1]} : vector<24x16x128xf32> to vector<16x16x128xf32>
    %168 = vector.shape_cast %167 : vector<16x16x128xf32> to vector<256x128xf32>
    %169 = vector.extract_strided_slice %160 {offsets = [4, 0, 0], sizes = [16, 16, 128], strides = [1, 1, 1]} : vector<24x16x128xf32> to vector<16x16x128xf32>
    %170 = vector.shape_cast %169 : vector<16x16x128xf32> to vector<256x128xf32>
    %171 = vector.extract_strided_slice %160 {offsets = [5, 0, 0], sizes = [16, 16, 128], strides = [1, 1, 1]} : vector<24x16x128xf32> to vector<16x16x128xf32>
    %172 = vector.shape_cast %171 : vector<16x16x128xf32> to vector<256x128xf32>
    %173 = vector.extract_strided_slice %160 {offsets = [6, 0, 0], sizes = [16, 16, 128], strides = [1, 1, 1]} : vector<24x16x128xf32> to vector<16x16x128xf32>
    %174 = vector.shape_cast %173 : vector<16x16x128xf32> to vector<256x128xf32>
    %175 = vector.extract_strided_slice %160 {offsets = [7, 0, 0], sizes = [16, 16, 128], strides = [1, 1, 1]} : vector<24x16x128xf32> to vector<16x16x128xf32>
    %176 = vector.shape_cast %175 : vector<16x16x128xf32> to vector<256x128xf32>
    %177 = vector.extract_strided_slice %160 {offsets = [8, 0, 0], sizes = [16, 16, 128], strides = [1, 1, 1]} : vector<24x16x128xf32> to vector<16x16x128xf32>
    %178 = vector.shape_cast %177 : vector<16x16x128xf32> to vector<256x128xf32>
    %179 = tpu.concatenate %162, %164, %166, %168, %170, %172, %174, %176, %178 in 1 : vector<256x128xf32>, vector<256x128xf32>, vector<256x128xf32>, vector<256x128xf32>, vector<256x128xf32>, vector<256x128xf32>, vector<256x128xf32>, vector<256x128xf32>, vector<256x128xf32> -> vector<256x1152xf32>
    %cst_84 = arith.constant dense<0.000000e+00> : vector<256x128xf32>
    %180 = tpu.matmul %179, %145, %cst_84 {dimension_numbers = #tpu.dot_dimension_numbers<[1], [0], [0], [1], [0, 0, 1, 1], [], []>} : vector<256x1152xf32>, vector<1152x128xf32>, vector<256x128xf32> -> vector<256x128xf32>
    %181 = vector.broadcast %146 : vector<1x128xf32> to vector<256x128xf32>
    %182 = arith.addf %180, %181 : vector<256x128xf32>
    %183 = vector.broadcast %147 : vector<1x128xf32> to vector<256x128xf32>
    %184 = arith.mulf %182, %183 : vector<256x128xf32>
    %185 = vector.broadcast %148 : vector<1x128xf32> to vector<256x128xf32>
    %186 = arith.addf %184, %185 : vector<256x128xf32>
    %187 = arith.addf %186, %153 : vector<256x128xf32>
    %cst_85 = arith.constant 0.000000e+00 : f32
    %188 = vector.broadcast %cst_85 : f32 to vector<256x128xf32>
    %189 = arith.maximumf %187, %188 : vector<256x128xf32>
    %c0_86 = arith.constant 0 : index
    %c0_87 = arith.constant 0 : index
    %190 = vector.load %arg33[%c0_86, %c0_87] : memref<128x128xf32, #tpu.memory_space<vmem>>, vector<128x128xf32>
    %c0_88 = arith.constant 0 : index
    %c0_89 = arith.constant 0 : index
    %191 = vector.load %arg34[%c0_88, %c0_89] : memref<1x128xf32, #tpu.memory_space<vmem>>, vector<1x128xf32>
    %192 = vector.shape_cast %189 : vector<256x128xf32> to vector<16x16x128xf32>
    %cst_90 = arith.constant dense<0.000000e+00> : vector<16x128xf32>
    %193 = vector.multi_reduction <add>, %192, %cst_90 [1] : vector<16x16x128xf32> to vector<16x128xf32>
    %cst_91 = arith.constant 1.600000e+01 : f32
    %194 = vector.broadcast %cst_91 : f32 to vector<16x128xf32>
    %195 = arith.divf %193, %194 : vector<16x128xf32>
    %cst_92 = arith.constant dense<0.000000e+00> : vector<16x128xf32>
    %196 = tpu.matmul %195, %190, %cst_92 {dimension_numbers = #tpu.dot_dimension_numbers<[1], [0], [0], [1], [0, 0, 1, 1], [], []>} : vector<16x128xf32>, vector<128x128xf32>, vector<16x128xf32> -> vector<16x128xf32>
    %197 = vector.broadcast %191 : vector<1x128xf32> to vector<16x128xf32>
    %198 = arith.addf %196, %197 : vector<16x128xf32>
    %cst_93 = arith.constant dense<0xFF800000> : vector<16xf32>
    %199 = vector.multi_reduction <maximumf>, %198, %cst_93 [1] : vector<16x128xf32> to vector<16xf32>
    %200 = vector.shape_cast %199 : vector<16xf32> to vector<16x1xf32>
    %201 = vector.broadcast %200 : vector<16x1xf32> to vector<16x128xf32>
    %202 = arith.subf %198, %201 : vector<16x128xf32>
    %203 = math.exp %202 : vector<16x128xf32>
    %cst_94 = arith.constant dense<0.000000e+00> : vector<16xf32>
    %204 = vector.multi_reduction <add>, %203, %cst_94 [1] : vector<16x128xf32> to vector<16xf32>
    %205 = vector.shape_cast %204 : vector<16xf32> to vector<16x1xf32>
    %206 = math.log %205 : vector<16x1xf32>
    %207 = vector.broadcast %206 : vector<16x1xf32> to vector<16x128xf32>
    %208 = arith.subf %202, %207 : vector<16x128xf32>
    %c0_95 = arith.constant 0 : index
    %c0_96 = arith.constant 0 : index
    %c0_97 = arith.constant 0 : index
    %209 = vector.load %arg35[%c0_95, %c0_96, %c0_97] : memref<1x16x128xf32, #tpu.memory_space<vmem>>, vector<1x16x128xf32>
    %210 = vector.shape_cast %209 : vector<1x16x128xf32> to vector<16x128xf32>
    %211 = vector.shape_cast %208 : vector<16x128xf32> to vector<1x16x128xf32>
    tpu.vector_store %arg35[%c0_95, %c0_96, %c0_97], %211 {strides = array<i32>} : memref<1x16x128xf32, #tpu.memory_space<vmem>>, vector<1x16x128xf32>,
    return
  }
  func.func @transform_0(%arg0: i32) -> (i32, i32, i32, i32) {
    %c0_i32 = arith.constant 0 : i32
    %c0_i32_0 = arith.constant 0 : i32
    %c0_i32_1 = arith.constant 0 : i32
    %c0_i32_2 = arith.constant 0 : i32
    return %arg0, %c0_i32, %c0_i32_0, %c0_i32_1 : i32, i32, i32, i32
  }
  func.func @transform_1(%arg0: i32) -> (i32, i32) {
    %c0_i32 = arith.constant 0 : i32
    %c0_i32_0 = arith.constant 0 : i32
    %c0_i32_1 = arith.constant 0 : i32
    return %c0_i32, %c0_i32_0 : i32, i32
  }
  func.func @transform_2(%arg0: i32) -> (i32, i32) {
    %c0_i32 = arith.constant 0 : i32
    %c0_i32_0 = arith.constant 0 : i32
    %c0_i32_1 = arith.constant 0 : i32
    return %c0_i32, %c0_i32_0 : i32, i32
  }
  func.func @transform_3(%arg0: i32) -> (i32, i32) {
    %c0_i32 = arith.constant 0 : i32
    %c0_i32_0 = arith.constant 0 : i32
    %c0_i32_1 = arith.constant 0 : i32
    return %c0_i32, %c0_i32_0 : i32, i32
  }
  func.func @transform_4(%arg0: i32) -> (i32, i32) {
    %c0_i32 = arith.constant 0 : i32
    %c0_i32_0 = arith.constant 0 : i32
    %c0_i32_1 = arith.constant 0 : i32
    return %c0_i32, %c0_i32_0 : i32, i32
  }
  func.func @transform_5(%arg0: i32) -> (i32, i32) {
    %c0_i32 = arith.constant 0 : i32
    %c0_i32_0 = arith.constant 0 : i32
    %c0_i32_1 = arith.constant 0 : i32
    return %c0_i32, %c0_i32_0 : i32, i32
  }
  func.func @transform_6(%arg0: i32) -> (i32, i32) {
    %c0_i32 = arith.constant 0 : i32
    %c0_i32_0 = arith.constant 0 : i32
    %c0_i32_1 = arith.constant 0 : i32
    return %c0_i32, %c0_i32_0 : i32, i32
  }
  func.func @transform_7(%arg0: i32) -> (i32, i32) {
    %c0_i32 = arith.constant 0 : i32
    %c0_i32_0 = arith.constant 0 : i32
    %c0_i32_1 = arith.constant 0 : i32
    return %c0_i32, %c0_i32_0 : i32, i32
  }
  func.func @transform_8(%arg0: i32) -> (i32, i32) {
    %c0_i32 = arith.constant 0 : i32
    %c0_i32_0 = arith.constant 0 : i32
    %c0_i32_1 = arith.constant 0 : i32
    return %c0_i32, %c0_i32_0 : i32, i32
  }
  func.func @transform_9(%arg0: i32) -> (i32, i32) {
    %c0_i32 = arith.constant 0 : i32
    %c0_i32_0 = arith.constant 0 : i32
    %c0_i32_1 = arith.constant 0 : i32
    return %c0_i32, %c0_i32_0 : i32, i32
  }
  func.func @transform_10(%arg0: i32) -> (i32, i32) {
    %c0_i32 = arith.constant 0 : i32
    %c0_i32_0 = arith.constant 0 : i32
    %c0_i32_1 = arith.constant 0 : i32
    return %c0_i32, %c0_i32_0 : i32, i32
  }
  func.func @transform_11(%arg0: i32) -> (i32, i32) {
    %c0_i32 = arith.constant 0 : i32
    %c0_i32_0 = arith.constant 0 : i32
    %c0_i32_1 = arith.constant 0 : i32
    return %c0_i32, %c0_i32_0 : i32, i32
  }
  func.func @transform_12(%arg0: i32) -> (i32, i32) {
    %c0_i32 = arith.constant 0 : i32
    %c0_i32_0 = arith.constant 0 : i32
    %c0_i32_1 = arith.constant 0 : i32
    return %c0_i32, %c0_i32_0 : i32, i32
  }
  func.func @transform_13(%arg0: i32) -> (i32, i32) {
    %c0_i32 = arith.constant 0 : i32
    %c0_i32_0 = arith.constant 0 : i32
    %c0_i32_1 = arith.constant 0 : i32
    return %c0_i32, %c0_i32_0 : i32, i32
  }
  func.func @transform_14(%arg0: i32) -> (i32, i32) {
    %c0_i32 = arith.constant 0 : i32
    %c0_i32_0 = arith.constant 0 : i32
    %c0_i32_1 = arith.constant 0 : i32
    return %c0_i32, %c0_i32_0 : i32, i32
  }
  func.func @transform_15(%arg0: i32) -> (i32, i32) {
    %c0_i32 = arith.constant 0 : i32
    %c0_i32_0 = arith.constant 0 : i32
    %c0_i32_1 = arith.constant 0 : i32
    return %c0_i32, %c0_i32_0 : i32, i32
  }
  func.func @transform_16(%arg0: i32) -> (i32, i32) {
    %c0_i32 = arith.constant 0 : i32
    %c0_i32_0 = arith.constant 0 : i32
    %c0_i32_1 = arith.constant 0 : i32
    return %c0_i32, %c0_i32_0 : i32, i32
  }
  func.func @transform_17(%arg0: i32) -> (i32, i32) {
    %c0_i32 = arith.constant 0 : i32
    %c0_i32_0 = arith.constant 0 : i32
    %c0_i32_1 = arith.constant 0 : i32
    return %c0_i32, %c0_i32_0 : i32, i32
  }
  func.func @transform_18(%arg0: i32) -> (i32, i32) {
    %c0_i32 = arith.constant 0 : i32
    %c0_i32_0 = arith.constant 0 : i32
    %c0_i32_1 = arith.constant 0 : i32
    return %c0_i32, %c0_i32_0 : i32, i32
  }
  func.func @transform_19(%arg0: i32) -> (i32, i32) {
    %c0_i32 = arith.constant 0 : i32
    %c0_i32_0 = arith.constant 0 : i32
    %c0_i32_1 = arith.constant 0 : i32
    return %c0_i32, %c0_i32_0 : i32, i32
  }
  func.func @transform_20(%arg0: i32) -> (i32, i32) {
    %c0_i32 = arith.constant 0 : i32
    %c0_i32_0 = arith.constant 0 : i32
    %c0_i32_1 = arith.constant 0 : i32
    return %c0_i32, %c0_i32_0 : i32, i32
  }
  func.func @transform_21(%arg0: i32) -> (i32, i32) {
    %c0_i32 = arith.constant 0 : i32
    %c0_i32_0 = arith.constant 0 : i32
    %c0_i32_1 = arith.constant 0 : i32
    return %c0_i32, %c0_i32_0 : i32, i32
  }
  func.func @transform_22(%arg0: i32) -> (i32, i32) {
    %c0_i32 = arith.constant 0 : i32
    %c0_i32_0 = arith.constant 0 : i32
    %c0_i32_1 = arith.constant 0 : i32
    return %c0_i32, %c0_i32_0 : i32, i32
  }
  func.func @transform_23(%arg0: i32) -> (i32, i32) {
    %c0_i32 = arith.constant 0 : i32
    %c0_i32_0 = arith.constant 0 : i32
    %c0_i32_1 = arith.constant 0 : i32
    return %c0_i32, %c0_i32_0 : i32, i32
  }
  func.func @transform_24(%arg0: i32) -> (i32, i32) {
    %c0_i32 = arith.constant 0 : i32
    %c0_i32_0 = arith.constant 0 : i32
    %c0_i32_1 = arith.constant 0 : i32
    return %c0_i32, %c0_i32_0 : i32, i32
  }
  func.func @transform_25(%arg0: i32) -> (i32, i32) {
    %c0_i32 = arith.constant 0 : i32
    %c0_i32_0 = arith.constant 0 : i32
    %c0_i32_1 = arith.constant 0 : i32
    return %c0_i32, %c0_i32_0 : i32, i32
  }
  func.func @transform_26(%arg0: i32) -> (i32, i32) {
    %c0_i32 = arith.constant 0 : i32
    %c0_i32_0 = arith.constant 0 : i32
    %c0_i32_1 = arith.constant 0 : i32
    return %c0_i32, %c0_i32_0 : i32, i32
  }
  func.func @transform_27(%arg0: i32) -> (i32, i32) {
    %c0_i32 = arith.constant 0 : i32
    %c0_i32_0 = arith.constant 0 : i32
    %c0_i32_1 = arith.constant 0 : i32
    return %c0_i32, %c0_i32_0 : i32, i32
  }
  func.func @transform_28(%arg0: i32) -> (i32, i32) {
    %c0_i32 = arith.constant 0 : i32
    %c0_i32_0 = arith.constant 0 : i32
    %c0_i32_1 = arith.constant 0 : i32
    return %c0_i32, %c0_i32_0 : i32, i32
  }
  func.func @transform_29(%arg0: i32) -> (i32, i32) {
    %c0_i32 = arith.constant 0 : i32
    %c0_i32_0 = arith.constant 0 : i32
    %c0_i32_1 = arith.constant 0 : i32
    return %c0_i32, %c0_i32_0 : i32, i32
  }
  func.func @transform_30(%arg0: i32) -> (i32, i32) {
    %c0_i32 = arith.constant 0 : i32
    %c0_i32_0 = arith.constant 0 : i32
    %c0_i32_1 = arith.constant 0 : i32
    return %c0_i32, %c0_i32_0 : i32, i32
  }
  func.func @transform_31(%arg0: i32) -> (i32, i32) {
    %c0_i32 = arith.constant 0 : i32
    %c0_i32_0 = arith.constant 0 : i32
    %c0_i32_1 = arith.constant 0 : i32
    return %c0_i32, %c0_i32_0 : i32, i32
  }
  func.func @transform_32(%arg0: i32) -> (i32, i32) {
    %c0_i32 = arith.constant 0 : i32
    %c0_i32_0 = arith.constant 0 : i32
    %c0_i32_1 = arith.constant 0 : i32
    return %c0_i32, %c0_i32_0 : i32, i32
  }
  func.func @transform_33(%arg0: i32) -> (i32, i32) {
    %c0_i32 = arith.constant 0 : i32
    %c0_i32_0 = arith.constant 0 : i32
    %c0_i32_1 = arith.constant 0 : i32
    return %c0_i32, %c0_i32_0 : i32, i32
  }
  func.func @transform_34(%arg0: i32) -> (i32, i32, i32) {
    %c0_i32 = arith.constant 0 : i32
    %c0_i32_0 = arith.constant 0 : i32
    %c0_i32_1 = arith.constant 0 : i32
    return %arg0, %c0_i32, %c0_i32_0 : i32, i32, i32
  }
}

</mosaic_0001>

<llo_original>
// kernel: stgcn_forward.1
$region0: #{stgcn_forward.1}
  #allocation0 [shape = 'u32[]', space=smem, size = 0x4, offset = 0x4, fixed_abs, tag = 'smem constant byte address 0x4 - core index']
  #allocation1 [shape = 'u32[144,128]{1,0:T(1,128)}', space=vmem, size = 0x12000, scoped, tag = 'internal scratch']
  %s0 = inlined_call_operand.smem [shape: u32[35], index: -1, kind: input, shape index: {}]
  %s1 = sld [smem:[%s0]]
  %s2 = scalar_lea.smem %s0, 1
  %s3 = sld [smem:[%s2]]
  %s4 = scalar_lea.smem %s0, 2
  %s5 = sld [smem:[%s4]]
  %s6 = scalar_lea.smem %s0, 3
  %s7 = sld [smem:[%s6]]
  %s8 = scalar_lea.smem %s0, 4
  %s9 = sld [smem:[%s8]]
  %s10 = scalar_lea.smem %s0, 5
  %s11 = sld [smem:[%s10]]
  %s12 = scalar_lea.smem %s0, 6
  %s13 = sld [smem:[%s12]]
  %s14 = scalar_lea.smem %s0, 7
  %s15 = sld [smem:[%s14]]
  %s16 = scalar_lea.smem %s0, 8
  %s17 = sld [smem:[%s16]]
  %s18 = scalar_lea.smem %s0, 9
  %s19 = sld [smem:[%s18]]
  %s20 = scalar_lea.smem %s0, 10
  %s21 = sld [smem:[%s20]]
  %s22 = scalar_lea.smem %s0, 11
  %s23 = sld [smem:[%s22]]
  %s24 = scalar_lea.smem %s0, 12
  %s25 = sld [smem:[%s24]]
  %s26 = scalar_lea.smem %s0, 13
  %s27 = sld [smem:[%s26]]
  %s28 = scalar_lea.smem %s0, 14
  %s29 = sld [smem:[%s28]]
  %s30 = scalar_lea.smem %s0, 15
  %s31 = sld [smem:[%s30]]
  %s32 = scalar_lea.smem %s0, 16
  %s33 = sld [smem:[%s32]]
  %s34 = scalar_lea.smem %s0, 17
  %s35 = sld [smem:[%s34]]
  %s36 = scalar_lea.smem %s0, 18
  %s37 = sld [smem:[%s36]]
  %s38 = scalar_lea.smem %s0, 19
  %s39 = sld [smem:[%s38]]
  %s40 = scalar_lea.smem %s0, 20
  %s41 = sld [smem:[%s40]]
  %s42 = scalar_lea.smem %s0, 21
  %s43 = sld [smem:[%s42]]
  %s44 = scalar_lea.smem %s0, 22
  %s45 = sld [smem:[%s44]]
  %s46 = scalar_lea.smem %s0, 23
  %s47 = sld [smem:[%s46]]
  %s48 = scalar_lea.smem %s0, 24
  %s49 = sld [smem:[%s48]]
  %s50 = scalar_lea.smem %s0, 25
  %s51 = sld [smem:[%s50]]
  %s52 = scalar_lea.smem %s0, 26
  %s53 = sld [smem:[%s52]]
  %s54 = scalar_lea.smem %s0, 27
  %s55 = sld [smem:[%s54]]
  %s56 = scalar_lea.smem %s0, 28
  %s57 = sld [smem:[%s56]]
  %s58 = scalar_lea.smem %s0, 29
  %s59 = sld [smem:[%s58]]
  %s60 = scalar_lea.smem %s0, 30
  %s61 = sld [smem:[%s60]]
  %s62 = scalar_lea.smem %s0, 31
  %s63 = sld [smem:[%s62]]
  %s64 = scalar_lea.smem %s0, 32
  %s65 = sld [smem:[%s64]]
  %s66 = scalar_lea.smem %s0, 33
  %s67 = sld [smem:[%s66]]
  %s68 = scalar_lea.smem %s0, 34
  %s69 = sld [smem:[%s68]]
  %s70 = sld [smem:[#allocation0]]
  $region169: #{stgcn_forward.1} parent=0
    _
  %s72 = ssub.s32 1, %s70
  %s73 = scalar_select 0, %s72, %s70
  loop: start=0, step=1, limit=4
  $region2: #{stgcn_forward.1} parent=0 // loop_pre_header
    _
  $region3: #{stgcn_forward.1} parent=0 // loop_header
    %s75 = sphi 0, %s79
    %p76 = scmp.ge.s32.totalorder %s75, 4
    %s85 = sphi 0, %s87
    %s88 = sphi 0, %s85
    %s89 = sphi 0, %s88
    %s105 = sphi 0, %s89
    %s109 = sphi 0, %s109
    %s111 = sphi 0, %s109
    %s112 = sphi 0, %s111
    %s126 = sphi 0, %s112
    %s130 = sphi 0, %s130
    %s132 = sphi 0, %s130
    %s133 = sphi 0, %s132
    %s147 = sphi 0, %s133
    %s151 = sphi 0, %s151
    %s153 = sphi 0, %s151
    %s154 = sphi 0, %s153
    %s168 = sphi 0, %s154
    %s172 = sphi 0, %s172
    %s174 = sphi 0, %s172
    %s175 = sphi 0, %s174
    %s189 = sphi 0, %s175
    %s193 = sphi 0, %s193
    %s195 = sphi 0, %s193
    %s196 = sphi 0, %s195
    %s210 = sphi 0, %s196
    %s214 = sphi 0, %s214
    %s216 = sphi 0, %s214
    %s217 = sphi 0, %s216
    %s231 = sphi 0, %s217
    %s235 = sphi 0, %s235
    %s237 = sphi 0, %s235
    %s238 = sphi 0, %s237
    %s252 = sphi 0, %s238
    %s256 = sphi 0, %s256
    %s258 = sphi 0, %s256
    %s259 = sphi 0, %s258
    %s273 = sphi 0, %s259
    %s277 = sphi 0, %s277
    %s279 = sphi 0, %s277
    %s280 = sphi 0, %s279
    %s294 = sphi 0, %s280
    %s298 = sphi 0, %s298
    %s300 = sphi 0, %s298
    %s301 = sphi 0, %s300
    %s315 = sphi 0, %s301
    %s319 = sphi 0, %s319
    %s321 = sphi 0, %s319
    %s322 = sphi 0, %s321
    %s336 = sphi 0, %s322
    %s340 = sphi 0, %s340
    %s342 = sphi 0, %s340
    %s343 = sphi 0, %s342
    %s357 = sphi 0, %s343
    %s361 = sphi 0, %s361
    %s363 = sphi 0, %s361
    %s364 = sphi 0, %s363
    %s378 = sphi 0, %s364
    %s382 = sphi 0, %s382
    %s384 = sphi 0, %s382
    %s385 = sphi 0, %s384
    %s399 = sphi 0, %s385
    %s403 = sphi 0, %s403
    %s405 = sphi 0, %s403
    %s406 = sphi 0, %s405
    %s420 = sphi 0, %s406
    %s424 = sphi 0, %s424
    %s426 = sphi 0, %s424
    %s427 = sphi 0, %s426
    %s441 = sphi 0, %s427
    %s445 = sphi 0, %s445
    %s447 = sphi 0, %s445
    %s448 = sphi 0, %s447
    %s462 = sphi 0, %s448
    %s466 = sphi 0, %s466
    %s468 = sphi 0, %s466
    %s469 = sphi 0, %s468
    %s483 = sphi 0, %s469
    %s487 = sphi 0, %s487
    %s489 = sphi 0, %s487
    %s490 = sphi 0, %s489
    %s504 = sphi 0, %s490
    %s508 = sphi 0, %s508
    %s510 = sphi 0, %s508
    %s511 = sphi 0, %s510
    %s525 = sphi 0, %s511
    %s529 = sphi 0, %s529
    %s531 = sphi 0, %s529
    %s532 = sphi 0, %s531
    %s546 = sphi 0, %s532
    %s550 = sphi 0, %s550
    %s552 = sphi 0, %s550
    %s553 = sphi 0, %s552
    %s567 = sphi 0, %s553
    %s571 = sphi 0, %s571
    %s573 = sphi 0, %s571
    %s574 = sphi 0, %s573
    %s588 = sphi 0, %s574
    %s592 = sphi 0, %s592
    %s594 = sphi 0, %s592
    %s595 = sphi 0, %s594
    %s609 = sphi 0, %s595
    %s613 = sphi 0, %s613
    %s615 = sphi 0, %s613
    %s616 = sphi 0, %s615
    %s630 = sphi 0, %s616
    %s634 = sphi 0, %s634
    %s636 = sphi 0, %s634
    %s637 = sphi 0, %s636
    %s651 = sphi 0, %s637
    %s655 = sphi 0, %s655
    %s657 = sphi 0, %s655
    %s658 = sphi 0, %s657
    %s672 = sphi 0, %s658
    %s676 = sphi 0, %s676
    %s678 = sphi 0, %s676
    %s679 = sphi 0, %s678
    %s693 = sphi 0, %s679
    %s697 = sphi 0, %s697
    %s699 = sphi 0, %s697
    %s700 = sphi 0, %s699
    %s714 = sphi 0, %s700
    %s718 = sphi 0, %s718
    %s720 = sphi 0, %s718
    %s721 = sphi 0, %s720
    %s735 = sphi 0, %s721
    %s739 = sphi 0, %s739
    %s741 = sphi 0, %s739
    %s742 = sphi 0, %s741
    %s756 = sphi 0, %s742
    %s760 = sphi 0, %s760
    %s762 = sphi 0, %s760
    %s763 = sphi 0, %s762
    %s777 = sphi 0, %s763
    %s781 = sphi 0, %s781
    %s783 = sphi 0, %s781
    %s784 = sphi 0, %s783
    %s798 = sphi 0, %s784
    %s804 = sphi 0, %s806
    %s807 = sphi 0, %s804
    %s808 = sphi 0, %s807
    %s824 = sphi 0, %s808
  $region4: #{stgcn_forward.1} parent=0 // loop_header_branch
    %78 = sbr.rel (%p76) target = $region8
  $region5: #{stgcn_forward.1} parent=0 // loop_body
    %s80 = ssub.s32 %s75, 1
    %s81 = ssub.s32 %s75, 2
    %s82 = sadd.s32 %s75, 1
    %s83 = ssub.s32 %s75, %s82
    %p84 = scmp.eq.s32.totalorder %s83, 0
    %s86 = sadd.s32 %s85, 1
    %s87 = scalar_select %p84, %s85, %s86
    %p90 = pneg %p84
    %p91 = scmp.eq.s32.totalorder %s75, 1
    %p92 = por %p90, %p91
    %p93 = scmp.ne.s32.totalorder %s85, %s88
    %p94 = scmp.eq.s32.totalorder %s75, 0
    %p95 = por %p93, %p94
    %p96 = scmp.ne.s32.totalorder %s85, %s88
    %p97 = scmp.eq.s32.totalorder %s80, 1
    %p98 = por %p96, %p97
    %p99 = scmp.ne.s32.totalorder %s88, %s89
    %p100 = scmp.eq.s32.totalorder %s80, 0
    %p101 = por %p99, %p100
    %p102 = scmp.ne.s32.totalorder %s88, %s89
    %p103 = scmp.eq.s32.totalorder %s81, 1
    %p104 = por %p102, %p103
    %p106 = scmp.ne.s32.totalorder %s89, %s105
    %p107 = scmp.eq.s32.totalorder %s81, 0
    %p108 = por %p106, %p107
    %s110 = sadd.s32 %s109, 1
    %p113 = scmp.eq.s32.totalorder %s75, 1
    %p114 = scmp.ne.s32.totalorder %s109, %s111
    %p115 = scmp.eq.s32.totalorder %s75, 0
    %p116 = por %p114, %p115
    %p117 = scmp.ne.s32.totalorder %s109, %s111
    %p118 = scmp.eq.s32.totalorder %s80, 1
    %p119 = por %p117, %p118
    %p120 = scmp.ne.s32.totalorder %s111, %s112
    %p121 = scmp.eq.s32.totalorder %s80, 0
    %p122 = por %p120, %p121
    %p123 = scmp.ne.s32.totalorder %s111, %s112
    %p124 = scmp.eq.s32.totalorder %s81, 1
    %p125 = por %p123, %p124
    %p127 = scmp.ne.s32.totalorder %s112, %s126
    %p128 = scmp.eq.s32.totalorder %s81, 0
    %p129 = por %p127, %p128
    %s131 = sadd.s32 %s130, 1
    %p134 = scmp.eq.s32.totalorder %s75, 1
    %p135 = scmp.ne.s32.totalorder %s130, %s132
    %p136 = scmp.eq.s32.totalorder %s75, 0
    %p137 = por %p135, %p136
    %p138 = scmp.ne.s32.totalorder %s130, %s132
    %p139 = scmp.eq.s32.totalorder %s80, 1
    %p140 = por %p138, %p139
    %p141 = scmp.ne.s32.totalorder %s132, %s133
    %p142 = scmp.eq.s32.totalorder %s80, 0
    %p143 = por %p141, %p142
    %p144 = scmp.ne.s32.totalorder %s132, %s133
    %p145 = scmp.eq.s32.totalorder %s81, 1
    %p146 = por %p144, %p145
    %p148 = scmp.ne.s32.totalorder %s133, %s147
    %p149 = scmp.eq.s32.totalorder %s81, 0
    %p150 = por %p148, %p149
    %s152 = sadd.s32 %s151, 1
    %p155 = scmp.eq.s32.totalorder %s75, 1
    %p156 = scmp.ne.s32.totalorder %s151, %s153
    %p157 = scmp.eq.s32.totalorder %s75, 0
    %p158 = por %p156, %p157
    %p159 = scmp.ne.s32.totalorder %s151, %s153
    %p160 = scmp.eq.s32.totalorder %s80, 1
    %p161 = por %p159, %p160
    %p162 = scmp.ne.s32.totalorder %s153, %s154
    %p163 = scmp.eq.s32.totalorder %s80, 0
    %p164 = por %p162, %p163
    %p165 = scmp.ne.s32.totalorder %s153, %s154
    %p166 = scmp.eq.s32.totalorder %s81, 1
    %p167 = por %p165, %p166
    %p169 = scmp.ne.s32.totalorder %s154, %s168
    %p170 = scmp.eq.s32.totalorder %s81, 0
    %p171 = por %p169, %p170
    %s173 = sadd.s32 %s172, 1
    %p176 = scmp.eq.s32.totalorder %s75, 1
    %p177 = scmp.ne.s32.totalorder %s172, %s174
    %p178 = scmp.eq.s32.totalorder %s75, 0
    %p179 = por %p177, %p178
    %p180 = scmp.ne.s32.totalorder %s172, %s174
    %p181 = scmp.eq.s32.totalorder %s80, 1
    %p182 = por %p180, %p181
    %p183 = scmp.ne.s32.totalorder %s174, %s175
    %p184 = scmp.eq.s32.totalorder %s80, 0
    %p185 = por %p183, %p184
    %p186 = scmp.ne.s32.totalorder %s174, %s175
    %p187 = scmp.eq.s32.totalorder %s81, 1
    %p188 = por %p186, %p187
    %p190 = scmp.ne.s32.totalorder %s175, %s189
    %p191 = scmp.eq.s32.totalorder %s81, 0
    %p192 = por %p190, %p191
    %s194 = sadd.s32 %s193, 1
    %p197 = scmp.eq.s32.totalorder %s75, 1
    %p198 = scmp.ne.s32.totalorder %s193, %s195
    %p199 = scmp.eq.s32.totalorder %s75, 0
    %p200 = por %p198, %p199
    %p201 = scmp.ne.s32.totalorder %s193, %s195
    %p202 = scmp.eq.s32.totalorder %s80, 1
    %p203 = por %p201, %p202
    %p204 = scmp.ne.s32.totalorder %s195, %s196
    %p205 = scmp.eq.s32.totalorder %s80, 0
    %p206 = por %p204, %p205
    %p207 = scmp.ne.s32.totalorder %s195, %s196
    %p208 = scmp.eq.s32.totalorder %s81, 1
    %p209 = por %p207, %p208
    %p211 = scmp.ne.s32.totalorder %s196, %s210
    %p212 = scmp.eq.s32.totalorder %s81, 0
    %p213 = por %p211, %p212
    %s215 = sadd.s32 %s214, 1
    %p218 = scmp.eq.s32.totalorder %s75, 1
    %p219 = scmp.ne.s32.totalorder %s214, %s216
    %p220 = scmp.eq.s32.totalorder %s75, 0
    %p221 = por %p219, %p220
    %p222 = scmp.ne.s32.totalorder %s214, %s216
    %p223 = scmp.eq.s32.totalorder %s80, 1
    %p224 = por %p222, %p223
    %p225 = scmp.ne.s32.totalorder %s216, %s217
    %p226 = scmp.eq.s32.totalorder %s80, 0
    %p227 = por %p225, %p226
    %p228 = scmp.ne.s32.totalorder %s216, %s217
    %p229 = scmp.eq.s32.totalorder %s81, 1
    %p230 = por %p228, %p229
    %p232 = scmp.ne.s32.totalorder %s217, %s231
    %p233 = scmp.eq.s32.totalorder %s81, 0
    %p234 = por %p232, %p233
    %s236 = sadd.s32 %s235, 1
    %p239 = scmp.eq.s32.totalorder %s75, 1
    %p240 = scmp.ne.s32.totalorder %s235, %s237
    %p241 = scmp.eq.s32.totalorder %s75, 0
    %p242 = por %p240, %p241
    %p243 = scmp.ne.s32.totalorder %s235, %s237
    %p244 = scmp.eq.s32.totalorder %s80, 1
    %p245 = por %p243, %p244
    %p246 = scmp.ne.s32.totalorder %s237, %s238
    %p247 = scmp.eq.s32.totalorder %s80, 0
    %p248 = por %p246, %p247
    %p249 = scmp.ne.s32.totalorder %s237, %s238
    %p250 = scmp.eq.s32.totalorder %s81, 1
    %p251 = por %p249, %p250
    %p253 = scmp.ne.s32.totalorder %s238, %s252
    %p254 = scmp.eq.s32.totalorder %s81, 0
    %p255 = por %p253, %p254
    %s257 = sadd.s32 %s256, 1
    %p260 = scmp.eq.s32.totalorder %s75, 1
    %p261 = scmp.ne.s32.totalorder %s256, %s258
    %p262 = scmp.eq.s32.totalorder %s75, 0
    %p263 = por %p261, %p262
    %p264 = scmp.ne.s32.totalorder %s256, %s258
    %p265 = scmp.eq.s32.totalorder %s80, 1
    %p266 = por %p264, %p265
    %p267 = scmp.ne.s32.totalorder %s258, %s259
    %p268 = scmp.eq.s32.totalorder %s80, 0
    %p269 = por %p267, %p268
    %p270 = scmp.ne.s32.totalorder %s258, %s259
    %p271 = scmp.eq.s32.totalorder %s81, 1
    %p272 = por %p270, %p271
    %p274 = scmp.ne.s32.totalorder %s259, %s273
    %p275 = scmp.eq.s32.totalorder %s81, 0
    %p276 = por %p274, %p275
    %s278 = sadd.s32 %s277, 1
    %p281 = scmp.eq.s32.totalorder %s75, 1
    %p282 = scmp.ne.s32.totalorder %s277, %s279
    %p283 = scmp.eq.s32.totalorder %s75, 0
    %p284 = por %p282, %p283
    %p285 = scmp.ne.s32.totalorder %s277, %s279
    %p286 = scmp.eq.s32.totalorder %s80, 1
    %p287 = por %p285, %p286
    %p288 = scmp.ne.s32.totalorder %s279, %s280
    %p289 = scmp.eq.s32.totalorder %s80, 0
    %p290 = por %p288, %p289
    %p291 = scmp.ne.s32.totalorder %s279, %s280
    %p292 = scmp.eq.s32.totalorder %s81, 1
    %p293 = por %p291, %p292
    %p295 = scmp.ne.s32.totalorder %s280, %s294
    %p296 = scmp.eq.s32.totalorder %s81, 0
    %p297 = por %p295, %p296
    %s299 = sadd.s32 %s298, 1
    %p302 = scmp.eq.s32.totalorder %s75, 1
    %p303 = scmp.ne.s32.totalorder %s298, %s300
    %p304 = scmp.eq.s32.totalorder %s75, 0
    %p305 = por %p303, %p304
    %p306 = scmp.ne.s32.totalorder %s298, %s300
    %p307 = scmp.eq.s32.totalorder %s80, 1
    %p308 = por %p306, %p307
    %p309 = scmp.ne.s32.totalorder %s300, %s301
    %p310 = scmp.eq.s32.totalorder %s80, 0
    %p311 = por %p309, %p310
    %p312 = scmp.ne.s32.totalorder %s300, %s301
    %p313 = scmp.eq.s32.totalorder %s81, 1
    %p314 = por %p312, %p313
    %p316 = scmp.ne.s32.totalorder %s301, %s315
    %p317 = scmp.eq.s32.totalorder %s81, 0
    %p318 = por %p316, %p317
    %s320 = sadd.s32 %s319, 1
    %p323 = scmp.eq.s32.totalorder %s75, 1
    %p324 = scmp.ne.s32.totalorder %s319, %s321
    %p325 = scmp.eq.s32.totalorder %s75, 0
    %p326 = por %p324, %p325
    %p327 = scmp.ne.s32.totalorder %s319, %s321
    %p328 = scmp.eq.s32.totalorder %s80, 1
    %p329 = por %p327, %p328
    %p330 = scmp.ne.s32.totalorder %s321, %s322
    %p331 = scmp.eq.s32.totalorder %s80, 0
    %p332 = por %p330, %p331
    %p333 = scmp.ne.s32.totalorder %s321, %s322
    %p334 = scmp.eq.s32.totalorder %s81, 1
    %p335 = por %p333, %p334
    %p337 = scmp.ne.s32.totalorder %s322, %s336
    %p338 = scmp.eq.s32.totalorder %s81, 0
    %p339 = por %p337, %p338
    %s341 = sadd.s32 %s340, 1
    %p344 = scmp.eq.s32.totalorder %s75, 1
    %p345 = scmp.ne.s32.totalorder %s340, %s342
    %p346 = scmp.eq.s32.totalorder %s75, 0
    %p347 = por %p345, %p346
    %p348 = scmp.ne.s32.totalorder %s340, %s342
    %p349 = scmp.eq.s32.totalorder %s80, 1
    %p350 = por %p348, %p349
    %p351 = scmp.ne.s32.totalorder %s342, %s343
    %p352 = scmp.eq.s32.totalorder %s80, 0
    %p353 = por %p351, %p352
    %p354 = scmp.ne.s32.totalorder %s342, %s343
    %p355 = scmp.eq.s32.totalorder %s81, 1
    %p356 = por %p354, %p355
    %p358 = scmp.ne.s32.totalorder %s343, %s357
    %p359 = scmp.eq.s32.totalorder %s81, 0
    %p360 = por %p358, %p359
    %s362 = sadd.s32 %s361, 1
    %p365 = scmp.eq.s32.totalorder %s75, 1
    %p366 = scmp.ne.s32.totalorder %s361, %s363
    %p367 = scmp.eq.s32.totalorder %s75, 0
    %p368 = por %p366, %p367
    %p369 = scmp.ne.s32.totalorder %s361, %s363
    %p370 = scmp.eq.s32.totalorder %s80, 1
    %p371 = por %p369, %p370
    %p372 = scmp.ne.s32.totalorder %s363, %s364
    %p373 = scmp.eq.s32.totalorder %s80, 0
    %p374 = por %p372, %p373
    %p375 = scmp.ne.s32.totalorder %s363, %s364
    %p376 = scmp.eq.s32.totalorder %s81, 1
    %p377 = por %p375, %p376
    %p379 = scmp.ne.s32.totalorder %s364, %s378
    %p380 = scmp.eq.s32.totalorder %s81, 0
    %p381 = por %p379, %p380
    %s383 = sadd.s32 %s382, 1
    %p386 = scmp.eq.s32.totalorder %s75, 1
    %p387 = scmp.ne.s32.totalorder %s382, %s384
    %p388 = scmp.eq.s32.totalorder %s75, 0
    %p389 = por %p387, %p388
    %p390 = scmp.ne.s32.totalorder %s382, %s384
    %p391 = scmp.eq.s32.totalorder %s80, 1
    %p392 = por %p390, %p391
    %p393 = scmp.ne.s32.totalorder %s384, %s385
    %p394 = scmp.eq.s32.totalorder %s80, 0
    %p395 = por %p393, %p394
    %p396 = scmp.ne.s32.totalorder %s384, %s385
    %p397 = scmp.eq.s32.totalorder %s81, 1
    %p398 = por %p396, %p397
    %p400 = scmp.ne.s32.totalorder %s385, %s399
    %p401 = scmp.eq.s32.totalorder %s81, 0
    %p402 = por %p400, %p401
    %s404 = sadd.s32 %s403, 1
    %p407 = scmp.eq.s32.totalorder %s75, 1
    %p408 = scmp.ne.s32.totalorder %s403, %s405
    %p409 = scmp.eq.s32.totalorder %s75, 0
    %p410 = por %p408, %p409
    %p411 = scmp.ne.s32.totalorder %s403, %s405
    %p412 = scmp.eq.s32.totalorder %s80, 1
    %p413 = por %p411, %p412
    %p414 = scmp.ne.s32.totalorder %s405, %s406
    %p415 = scmp.eq.s32.totalorder %s80, 0
    %p416 = por %p414, %p415
    %p417 = scmp.ne.s32.totalorder %s405, %s406
    %p418 = scmp.eq.s32.totalorder %s81, 1
    %p419 = por %p417, %p418
    %p421 = scmp.ne.s32.totalorder %s406, %s420
    %p422 = scmp.eq.s32.totalorder %s81, 0
    %p423 = por %p421, %p422
    %s425 = sadd.s32 %s424, 1
    %p428 = scmp.eq.s32.totalorder %s75, 1
    %p429 = scmp.ne.s32.totalorder %s424, %s426
    %p430 = scmp.eq.s32.totalorder %s75, 0
    %p431 = por %p429, %p430
    %p432 = scmp.ne.s32.totalorder %s424, %s426
    %p433 = scmp.eq.s32.totalorder %s80, 1
    %p434 = por %p432, %p433
    %p435 = scmp.ne.s32.totalorder %s426, %s427
    %p436 = scmp.eq.s32.totalorder %s80, 0
    %p437 = por %p435, %p436
    %p438 = scmp.ne.s32.totalorder %s426, %s427
    %p439 = scmp.eq.s32.totalorder %s81, 1
    %p440 = por %p438, %p439
    %p442 = scmp.ne.s32.totalorder %s427, %s441
    %p443 = scmp.eq.s32.totalorder %s81, 0
    %p444 = por %p442, %p443
    %s446 = sadd.s32 %s445, 1
    %p449 = scmp.eq.s32.totalorder %s75, 1
    %p450 = scmp.ne.s32.totalorder %s445, %s447
    %p451 = scmp.eq.s32.totalorder %s75, 0
    %p452 = por %p450, %p451
    %p453 = scmp.ne.s32.totalorder %s445, %s447
    %p454 = scmp.eq.s32.totalorder %s80, 1
    %p455 = por %p453, %p454
    %p456 = scmp.ne.s32.totalorder %s447, %s448
    %p457 = scmp.eq.s32.totalorder %s80, 0
    %p458 = por %p456, %p457
    %p459 = scmp.ne.s32.totalorder %s447, %s448
    %p460 = scmp.eq.s32.totalorder %s81, 1
    %p461 = por %p459, %p460
    %p463 = scmp.ne.s32.totalorder %s448, %s462
    %p464 = scmp.eq.s32.totalorder %s81, 0
    %p465 = por %p463, %p464
    %s467 = sadd.s32 %s466, 1
    %p470 = scmp.eq.s32.totalorder %s75, 1
    %p471 = scmp.ne.s32.totalorder %s466, %s468
    %p472 = scmp.eq.s32.totalorder %s75, 0
    %p473 = por %p471, %p472
    %p474 = scmp.ne.s32.totalorder %s466, %s468
    %p475 = scmp.eq.s32.totalorder %s80, 1
    %p476 = por %p474, %p475
    %p477 = scmp.ne.s32.totalorder %s468, %s469
    %p478 = scmp.eq.s32.totalorder %s80, 0
    %p479 = por %p477, %p478
    %p480 = scmp.ne.s32.totalorder %s468, %s469
    %p481 = scmp.eq.s32.totalorder %s81, 1
    %p482 = por %p480, %p481
    %p484 = scmp.ne.s32.totalorder %s469, %s483
    %p485 = scmp.eq.s32.totalorder %s81, 0
    %p486 = por %p484, %p485
    %s488 = sadd.s32 %s487, 1
    %p491 = scmp.eq.s32.totalorder %s75, 1
    %p492 = scmp.ne.s32.totalorder %s487, %s489
    %p493 = scmp.eq.s32.totalorder %s75, 0
    %p494 = por %p492, %p493
    %p495 = scmp.ne.s32.totalorder %s487, %s489
    %p496 = scmp.eq.s32.totalorder %s80, 1
    %p497 = por %p495, %p496
    %p498 = scmp.ne.s32.totalorder %s489, %s490
    %p499 = scmp.eq.s32.totalorder %s80, 0
    %p500 = por %p498, %p499
    %p501 = scmp.ne.s32.totalorder %s489, %s490
    %p502 = scmp.eq.s32.totalorder %s81, 1
    %p503 = por %p501, %p502
    %p505 = scmp.ne.s32.totalorder %s490, %s504
    %p506 = scmp.eq.s32.totalorder %s81, 0
    %p507 = por %p505, %p506
    %s509 = sadd.s32 %s508, 1
    %p512 = scmp.eq.s32.totalorder %s75, 1
    %p513 = scmp.ne.s32.totalorder %s508, %s510
    %p514 = scmp.eq.s32.totalorder %s75, 0
    %p515 = por %p513, %p514
    %p516 = scmp.ne.s32.totalorder %s508, %s510
    %p517 = scmp.eq.s32.totalorder %s80, 1
    %p518 = por %p516, %p517
    %p519 = scmp.ne.s32.totalorder %s510, %s511
    %p520 = scmp.eq.s32.totalorder %s80, 0
    %p521 = por %p519, %p520
    %p522 = scmp.ne.s32.totalorder %s510, %s511
    %p523 = scmp.eq.s32.totalorder %s81, 1
    %p524 = por %p522, %p523
    %p526 = scmp.ne.s32.totalorder %s511, %s525
    %p527 = scmp.eq.s32.totalorder %s81, 0
    %p528 = por %p526, %p527
    %s530 = sadd.s32 %s529, 1
    %p533 = scmp.eq.s32.totalorder %s75, 1
    %p534 = scmp.ne.s32.totalorder %s529, %s531
    %p535 = scmp.eq.s32.totalorder %s75, 0
    %p536 = por %p534, %p535
    %p537 = scmp.ne.s32.totalorder %s529, %s531
    %p538 = scmp.eq.s32.totalorder %s80, 1
    %p539 = por %p537, %p538
    %p540 = scmp.ne.s32.totalorder %s531, %s532
    %p541 = scmp.eq.s32.totalorder %s80, 0
    %p542 = por %p540, %p541
    %p543 = scmp.ne.s32.totalorder %s531, %s532
    %p544 = scmp.eq.s32.totalorder %s81, 1
    %p545 = por %p543, %p544
    %p547 = scmp.ne.s32.totalorder %s532, %s546
    %p548 = scmp.eq.s32.totalorder %s81, 0
    %p549 = por %p547, %p548
    %s551 = sadd.s32 %s550, 1
    %p554 = scmp.eq.s32.totalorder %s75, 1
    %p555 = scmp.ne.s32.totalorder %s550, %s552
    %p556 = scmp.eq.s32.totalorder %s75, 0
    %p557 = por %p555, %p556
    %p558 = scmp.ne.s32.totalorder %s550, %s552
    %p559 = scmp.eq.s32.totalorder %s80, 1
    %p560 = por %p558, %p559
    %p561 = scmp.ne.s32.totalorder %s552, %s553
    %p562 = scmp.eq.s32.totalorder %s80, 0
    %p563 = por %p561, %p562
    %p564 = scmp.ne.s32.totalorder %s552, %s553
    %p565 = scmp.eq.s32.totalorder %s81, 1
    %p566 = por %p564, %p565
    %p568 = scmp.ne.s32.totalorder %s553, %s567
    %p569 = scmp.eq.s32.totalorder %s81, 0
    %p570 = por %p568, %p569
    %s572 = sadd.s32 %s571, 1
    %p575 = scmp.eq.s32.totalorder %s75, 1
    %p576 = scmp.ne.s32.totalorder %s571, %s573
    %p577 = scmp.eq.s32.totalorder %s75, 0
    %p578 = por %p576, %p577
    %p579 = scmp.ne.s32.totalorder %s571, %s573
    %p580 = scmp.eq.s32.totalorder %s80, 1
    %p581 = por %p579, %p580
    %p582 = scmp.ne.s32.totalorder %s573, %s574
    %p583 = scmp.eq.s32.totalorder %s80, 0
    %p584 = por %p582, %p583
    %p585 = scmp.ne.s32.totalorder %s573, %s574
    %p586 = scmp.eq.s32.totalorder %s81, 1
    %p587 = por %p585, %p586
    %p589 = scmp.ne.s32.totalorder %s574, %s588
    %p590 = scmp.eq.s32.totalorder %s81, 0
    %p591 = por %p589, %p590
    %s593 = sadd.s32 %s592, 1
    %p596 = scmp.eq.s32.totalorder %s75, 1
    %p597 = scmp.ne.s32.totalorder %s592, %s594
    %p598 = scmp.eq.s32.totalorder %s75, 0
    %p599 = por %p597, %p598
    %p600 = scmp.ne.s32.totalorder %s592, %s594
    %p601 = scmp.eq.s32.totalorder %s80, 1
    %p602 = por %p600, %p601
    %p603 = scmp.ne.s32.totalorder %s594, %s595
    %p604 = scmp.eq.s32.totalorder %s80, 0
    %p605 = por %p603, %p604
    %p606 = scmp.ne.s32.totalorder %s594, %s595
    %p607 = scmp.eq.s32.totalorder %s81, 1
    %p608 = por %p606, %p607
    %p610 = scmp.ne.s32.totalorder %s595, %s609
    %p611 = scmp.eq.s32.totalorder %s81, 0
    %p612 = por %p610, %p611
    %s614 = sadd.s32 %s613, 1
    %p617 = scmp.eq.s32.totalorder %s75, 1
    %p618 = scmp.ne.s32.totalorder %s613, %s615
    %p619 = scmp.eq.s32.totalorder %s75, 0
    %p620 = por %p618, %p619
    %p621 = scmp.ne.s32.totalorder %s613, %s615
    %p622 = scmp.eq.s32.totalorder %s80, 1
    %p623 = por %p621, %p622
    %p624 = scmp.ne.s32.totalorder %s615, %s616
    %p625 = scmp.eq.s32.totalorder %s80, 0
    %p626 = por %p624, %p625
    %p627 = scmp.ne.s32.totalorder %s615, %s616
    %p628 = scmp.eq.s32.totalorder %s81, 1
    %p629 = por %p627, %p628
    %p631 = scmp.ne.s32.totalorder %s616, %s630
    %p632 = scmp.eq.s32.totalorder %s81, 0
    %p633 = por %p631, %p632
    %s635 = sadd.s32 %s634, 1
    %p638 = scmp.eq.s32.totalorder %s75, 1
    %p639 = scmp.ne.s32.totalorder %s634, %s636
    %p640 = scmp.eq.s32.totalorder %s75, 0
    %p641 = por %p639, %p640
    %p642 = scmp.ne.s32.totalorder %s634, %s636
    %p643 = scmp.eq.s32.totalorder %s80, 1
    %p644 = por %p642, %p643
    %p645 = scmp.ne.s32.totalorder %s636, %s637
    %p646 = scmp.eq.s32.totalorder %s80, 0
    %p647 = por %p645, %p646
    %p648 = scmp.ne.s32.totalorder %s636, %s637
    %p649 = scmp.eq.s32.totalorder %s81, 1
    %p650 = por %p648, %p649
    %p652 = scmp.ne.s32.totalorder %s637, %s651
    %p653 = scmp.eq.s32.totalorder %s81, 0
    %p654 = por %p652, %p653
    %s656 = sadd.s32 %s655, 1
    %p659 = scmp.eq.s32.totalorder %s75, 1
    %p660 = scmp.ne.s32.totalorder %s655, %s657
    %p661 = scmp.eq.s32.totalorder %s75, 0
    %p662 = por %p660, %p661
    %p663 = scmp.ne.s32.totalorder %s655, %s657
    %p664 = scmp.eq.s32.totalorder %s80, 1
    %p665 = por %p663, %p664
    %p666 = scmp.ne.s32.totalorder %s657, %s658
    %p667 = scmp.eq.s32.totalorder %s80, 0
    %p668 = por %p666, %p667
    %p669 = scmp.ne.s32.totalorder %s657, %s658
    %p670 = scmp.eq.s32.totalorder %s81, 1
    %p671 = por %p669, %p670
    %p673 = scmp.ne.s32.totalorder %s658, %s672
    %p674 = scmp.eq.s32.totalorder %s81, 0
    %p675 = por %p673, %p674
    %s677 = sadd.s32 %s676, 1
    %p680 = scmp.eq.s32.totalorder %s75, 1
    %p681 = scmp.ne.s32.totalorder %s676, %s678
    %p682 = scmp.eq.s32.totalorder %s75, 0
    %p683 = por %p681, %p682
    %p684 = scmp.ne.s32.totalorder %s676, %s678
    %p685 = scmp.eq.s32.totalorder %s80, 1
    %p686 = por %p684, %p685
    %p687 = scmp.ne.s32.totalorder %s678, %s679
    %p688 = scmp.eq.s32.totalorder %s80, 0
    %p689 = por %p687, %p688
    %p690 = scmp.ne.s32.totalorder %s678, %s679
    %p691 = scmp.eq.s32.totalorder %s81, 1
    %p692 = por %p690, %p691
    %p694 = scmp.ne.s32.totalorder %s679, %s693
    %p695 = scmp.eq.s32.totalorder %s81, 0
    %p696 = por %p694, %p695
    %s698 = sadd.s32 %s697, 1
    %p701 = scmp.eq.s32.totalorder %s75, 1
    %p702 = scmp.ne.s32.totalorder %s697, %s699
    %p703 = scmp.eq.s32.totalorder %s75, 0
    %p704 = por %p702, %p703
    %p705 = scmp.ne.s32.totalorder %s697, %s699
    %p706 = scmp.eq.s32.totalorder %s80, 1
    %p707 = por %p705, %p706
    %p708 = scmp.ne.s32.totalorder %s699, %s700
    %p709 = scmp.eq.s32.totalorder %s80, 0
    %p710 = por %p708, %p709
    %p711 = scmp.ne.s32.totalorder %s699, %s700
    %p712 = scmp.eq.s32.totalorder %s81, 1
    %p713 = por %p711, %p712
    %p715 = scmp.ne.s32.totalorder %s700, %s714
    %p716 = scmp.eq.s32.totalorder %s81, 0
    %p717 = por %p715, %p716
    %s719 = sadd.s32 %s718, 1
    %p722 = scmp.eq.s32.totalorder %s75, 1
    %p723 = scmp.ne.s32.totalorder %s718, %s720
    %p724 = scmp.eq.s32.totalorder %s75, 0
    %p725 = por %p723, %p724
    %p726 = scmp.ne.s32.totalorder %s718, %s720
    %p727 = scmp.eq.s32.totalorder %s80, 1
    %p728 = por %p726, %p727
    %p729 = scmp.ne.s32.totalorder %s720, %s721
    %p730 = scmp.eq.s32.totalorder %s80, 0
    %p731 = por %p729, %p730
    %p732 = scmp.ne.s32.totalorder %s720, %s721
    %p733 = scmp.eq.s32.totalorder %s81, 1
    %p734 = por %p732, %p733
    %p736 = scmp.ne.s32.totalorder %s721, %s735
    %p737 = scmp.eq.s32.totalorder %s81, 0
    %p738 = por %p736, %p737
    %s740 = sadd.s32 %s739, 1
    %p743 = scmp.eq.s32.totalorder %s75, 1
    %p744 = scmp.ne.s32.totalorder %s739, %s741
    %p745 = scmp.eq.s32.totalorder %s75, 0
    %p746 = por %p744, %p745
    %p747 = scmp.ne.s32.totalorder %s739, %s741
    %p748 = scmp.eq.s32.totalorder %s80, 1
    %p749 = por %p747, %p748
    %p750 = scmp.ne.s32.totalorder %s741, %s742
    %p751 = scmp.eq.s32.totalorder %s80, 0
    %p752 = por %p750, %p751
    %p753 = scmp.ne.s32.totalorder %s741, %s742
    %p754 = scmp.eq.s32.totalorder %s81, 1
    %p755 = por %p753, %p754
    %p757 = scmp.ne.s32.totalorder %s742, %s756
    %p758 = scmp.eq.s32.totalorder %s81, 0
    %p759 = por %p757, %p758
    %s761 = sadd.s32 %s760, 1
    %p764 = scmp.eq.s32.totalorder %s75, 1
    %p765 = scmp.ne.s32.totalorder %s760, %s762
    %p766 = scmp.eq.s32.totalorder %s75, 0
    %p767 = por %p765, %p766
    %p768 = scmp.ne.s32.totalorder %s760, %s762
    %p769 = scmp.eq.s32.totalorder %s80, 1
    %p770 = por %p768, %p769
    %p771 = scmp.ne.s32.totalorder %s762, %s763
    %p772 = scmp.eq.s32.totalorder %s80, 0
    %p773 = por %p771, %p772
    %p774 = scmp.ne.s32.totalorder %s762, %s763
    %p775 = scmp.eq.s32.totalorder %s81, 1
    %p776 = por %p774, %p775
    %p778 = scmp.ne.s32.totalorder %s763, %s777
    %p779 = scmp.eq.s32.totalorder %s81, 0
    %p780 = por %p778, %p779
    %s782 = sadd.s32 %s781, 1
    %p785 = scmp.eq.s32.totalorder %s75, 1
    %p786 = scmp.ne.s32.totalorder %s781, %s783
    %p787 = scmp.eq.s32.totalorder %s75, 0
    %p788 = por %p786, %p787
    %p789 = scmp.ne.s32.totalorder %s781, %s783
    %p790 = scmp.eq.s32.totalorder %s80, 1
    %p791 = por %p789, %p790
    %p792 = scmp.ne.s32.totalorder %s783, %s784
    %p793 = scmp.eq.s32.totalorder %s80, 0
    %p794 = por %p792, %p793
    %p795 = scmp.ne.s32.totalorder %s783, %s784
    %p796 = scmp.eq.s32.totalorder %s81, 1
    %p797 = por %p795, %p796
    %p799 = scmp.ne.s32.totalorder %s784, %s798
    %p800 = scmp.eq.s32.totalorder %s81, 0
    %p801 = por %p799, %p800
    %s802 = ssub.s32 %s75, %s82
    %p803 = scmp.eq.s32.totalorder %s802, 0
    %s805 = sadd.s32 %s804, 1
    %s806 = scalar_select %p803, %s804, %s805
    %p809 = pneg %p803
    %p810 = scmp.eq.s32.totalorder %s75, 1
    %p811 = por %p809, %p810
    %p812 = scmp.ne.s32.totalorder %s804, %s807
    %p813 = scmp.eq.s32.totalorder %s75, 0
    %p814 = por %p812, %p813
    %p815 = scmp.ne.s32.totalorder %s804, %s807
    %p816 = scmp.eq.s32.totalorder %s80, 1
    %p817 = por %p815, %p816
    %p818 = scmp.ne.s32.totalorder %s807, %s808
    %p819 = scmp.eq.s32.totalorder %s80, 0
    %p820 = por %p818, %p819
    %p821 = scmp.ne.s32.totalorder %s807, %s808
    %p822 = scmp.eq.s32.totalorder %s81, 1
    %p823 = por %p821, %p822
    %p825 = scmp.ne.s32.totalorder %s808, %s824
    %p826 = scmp.eq.s32.totalorder %s81, 0
    %p827 = por %p825, %p826
    %p828 = scmp.le.s32.totalorder 1, %s75
    %p829 = scmp.lt.s32.totalorder %s75, 3
    %p830 = pnand %p828, %p829
    %p831 = pneg %p830
    // Predicated region
    $region9: #{stgcn_forward.1} parent=5 // pred_check
      _
    $region10: #{stgcn_forward.1} parent=5 // pred_check_branch
      %833 = sbr.rel (%p830) target = $region12
    $region11: #{stgcn_forward.1} parent=5 // pred_region
      %s834 = ssub.s32 %s75, 1
      // Predicated region
      $region13: #{stgcn_forward.1} parent=11 // pred_check
        %p835 = pneg %p122
      $region14: #{stgcn_forward.1} parent=11 // pred_check_branch
        %837 = sbr.rel (%p835) target = $region16
      $region15: #{stgcn_forward.1} parent=11 // pred_region
        _
      $region16: #{stgcn_forward.1} parent=11 // pred_fallthru
        _
      // Predicated region
      $region17: #{stgcn_forward.1} parent=11 // pred_check
        %p838 = pneg %p143
      $region18: #{stgcn_forward.1} parent=11 // pred_check_branch
        %840 = sbr.rel (%p838) target = $region20
      $region19: #{stgcn_forward.1} parent=11 // pred_region
        _
      $region20: #{stgcn_forward.1} parent=11 // pred_fallthru
        _
      // Predicated region
      $region21: #{stgcn_forward.1} parent=11 // pred_check
        %p841 = pneg %p164
      $region22: #{stgcn_forward.1} parent=11 // pred_check_branch
        %843 = sbr.rel (%p841) target = $region24
      $region23: #{stgcn_forward.1} parent=11 // pred_region
        _
      $region24: #{stgcn_forward.1} parent=11 // pred_fallthru
        _
      // Predicated region
      $region25: #{stgcn_forward.1} parent=11 // pred_check
        %p844 = pneg %p185
      $region26: #{stgcn_forward.1} parent=11 // pred_check_branch
        %846 = sbr.rel (%p844) target = $region28
      $region27: #{stgcn_forward.1} parent=11 // pred_region
        _
      $region28: #{stgcn_forward.1} parent=11 // pred_fallthru
        _
      // Predicated region
      $region29: #{stgcn_forward.1} parent=11 // pred_check
        %p847 = pneg %p206
      $region30: #{stgcn_forward.1} parent=11 // pred_check_branch
        %849 = sbr.rel (%p847) target = $region32
      $region31: #{stgcn_forward.1} parent=11 // pred_region
        _
      $region32: #{stgcn_forward.1} parent=11 // pred_fallthru
        _
      // Predicated region
      $region33: #{stgcn_forward.1} parent=11 // pred_check
        %p850 = pneg %p227
      $region34: #{stgcn_forward.1} parent=11 // pred_check_branch
        %852 = sbr.rel (%p850) target = $region36
      $region35: #{stgcn_forward.1} parent=11 // pred_region
        _
      $region36: #{stgcn_forward.1} parent=11 // pred_fallthru
        _
      // Predicated region
      $region37: #{stgcn_forward.1} parent=11 // pred_check
        %p853 = pneg %p248
      $region38: #{stgcn_forward.1} parent=11 // pred_check_branch
        %855 = sbr.rel (%p853) target = $region40
      $region39: #{stgcn_forward.1} parent=11 // pred_region
        _
      $region40: #{stgcn_forward.1} parent=11 // pred_fallthru
        _
      // Predicated region
      $region41: #{stgcn_forward.1} parent=11 // pred_check
        %p856 = pneg %p269
      $region42: #{stgcn_forward.1} parent=11 // pred_check_branch
        %858 = sbr.rel (%p856) target = $region44
      $region43: #{stgcn_forward.1} parent=11 // pred_region
        _
      $region44: #{stgcn_forward.1} parent=11 // pred_fallthru
        _
      // Predicated region
      $region45: #{stgcn_forward.1} parent=11 // pred_check
        %p859 = pneg %p290
      $region46: #{stgcn_forward.1} parent=11 // pred_check_branch
        %861 = sbr.rel (%p859) target = $region48
      $region47: #{stgcn_forward.1} parent=11 // pred_region
        _
      $region48: #{stgcn_forward.1} parent=11 // pred_fallthru
        _
      // Predicated region
      $region49: #{stgcn_forward.1} parent=11 // pred_check
        %p862 = pneg %p311
      $region50: #{stgcn_forward.1} parent=11 // pred_check_branch
        %864 = sbr.rel (%p862) target = $region52
      $region51: #{stgcn_forward.1} parent=11 // pred_region
        _
      $region52: #{stgcn_forward.1} parent=11 // pred_fallthru
        _
      // Predicated region
      $region53: #{stgcn_forward.1} parent=11 // pred_check
        %p865 = pneg %p332
      $region54: #{stgcn_forward.1} parent=11 // pred_check_branch
        %867 = sbr.rel (%p865) target = $region56
      $region55: #{stgcn_forward.1} parent=11 // pred_region
        _
      $region56: #{stgcn_forward.1} parent=11 // pred_fallthru
        _
      // Predicated region
      $region57: #{stgcn_forward.1} parent=11 // pred_check
        %p868 = pneg %p353
      $region58: #{stgcn_forward.1} parent=11 // pred_check_branch
        %870 = sbr.rel (%p868) target = $region60
      $region59: #{stgcn_forward.1} parent=11 // pred_region
        _
      $region60: #{stgcn_forward.1} parent=11 // pred_fallthru
        _
      // Predicated region
      $region61: #{stgcn_forward.1} parent=11 // pred_check
        %p871 = pneg %p374
      $region62: #{stgcn_forward.1} parent=11 // pred_check_branch
        %873 = sbr.rel (%p871) target = $region64
      $region63: #{stgcn_forward.1} parent=11 // pred_region
        _
      $region64: #{stgcn_forward.1} parent=11 // pred_fallthru
        _
      // Predicated region
      $region65: #{stgcn_forward.1} parent=11 // pred_check
        %p874 = pneg %p395
      $region66: #{stgcn_forward.1} parent=11 // pred_check_branch
        %876 = sbr.rel (%p874) target = $region68
      $region67: #{stgcn_forward.1} parent=11 // pred_region
        _
      $region68: #{stgcn_forward.1} parent=11 // pred_fallthru
        _
      // Predicated region
      $region69: #{stgcn_forward.1} parent=11 // pred_check
        %p877 = pneg %p416
      $region70: #{stgcn_forward.1} parent=11 // pred_check_branch
        %879 = sbr.rel (%p877) target = $region72
      $region71: #{stgcn_forward.1} parent=11 // pred_region
        _
      $region72: #{stgcn_forward.1} parent=11 // pred_fallthru
        _
      // Predicated region
      $region73: #{stgcn_forward.1} parent=11 // pred_check
        %p880 = pneg %p437
      $region74: #{stgcn_forward.1} parent=11 // pred_check_branch
        %882 = sbr.rel (%p880) target = $region76
      $region75: #{stgcn_forward.1} parent=11 // pred_region
        _
      $region76: #{stgcn_forward.1} parent=11 // pred_fallthru
        _
      // Predicated region
      $region77: #{stgcn_forward.1} parent=11 // pred_check
        %p883 = pneg %p458
      $region78: #{stgcn_forward.1} parent=11 // pred_check_branch
        %885 = sbr.rel (%p883) target = $region80
      $region79: #{stgcn_forward.1} parent=11 // pred_region
        _
      $region80: #{stgcn_forward.1} parent=11 // pred_fallthru
        _
      // Predicated region
      $region81: #{stgcn_forward.1} parent=11 // pred_check
        %p886 = pneg %p479
      $region82: #{stgcn_forward.1} parent=11 // pred_check_branch
        %888 = sbr.rel (%p886) target = $region84
      $region83: #{stgcn_forward.1} parent=11 // pred_region
        _
      $region84: #{stgcn_forward.1} parent=11 // pred_fallthru
        _
      // Predicated region
      $region85: #{stgcn_forward.1} parent=11 // pred_check
        %p889 = pneg %p500
      $region86: #{stgcn_forward.1} parent=11 // pred_check_branch
        %891 = sbr.rel (%p889) target = $region88
      $region87: #{stgcn_forward.1} parent=11 // pred_region
        _
      $region88: #{stgcn_forward.1} parent=11 // pred_fallthru
        _
      // Predicated region
      $region89: #{stgcn_forward.1} parent=11 // pred_check
        %p892 = pneg %p521
      $region90: #{stgcn_forward.1} parent=11 // pred_check_branch
        %894 = sbr.rel (%p892) target = $region92
      $region91: #{stgcn_forward.1} parent=11 // pred_region
        _
      $region92: #{stgcn_forward.1} parent=11 // pred_fallthru
        _
      // Predicated region
      $region93: #{stgcn_forward.1} parent=11 // pred_check
        %p895 = pneg %p542
      $region94: #{stgcn_forward.1} parent=11 // pred_check_branch
        %897 = sbr.rel (%p895) target = $region96
      $region95: #{stgcn_forward.1} parent=11 // pred_region
        _
      $region96: #{stgcn_forward.1} parent=11 // pred_fallthru
        _
      // Predicated region
      $region97: #{stgcn_forward.1} parent=11 // pred_check
        %p898 = pneg %p563
      $region98: #{stgcn_forward.1} parent=11 // pred_check_branch
        %900 = sbr.rel (%p898) target = $region100
      $region99: #{stgcn_forward.1} parent=11 // pred_region
        _
      $region100: #{stgcn_forward.1} parent=11 // pred_fallthru
        _
      // Predicated region
      $region101: #{stgcn_forward.1} parent=11 // pred_check
        %p901 = pneg %p584
      $region102: #{stgcn_forward.1} parent=11 // pred_check_branch
        %903 = sbr.rel (%p901) target = $region104
      $region103: #{stgcn_forward.1} parent=11 // pred_region
        _
      $region104: #{stgcn_forward.1} parent=11 // pred_fallthru
        _
      // Predicated region
      $region105: #{stgcn_forward.1} parent=11 // pred_check
        %p904 = pneg %p605
      $region106: #{stgcn_forward.1} parent=11 // pred_check_branch
        %906 = sbr.rel (%p904) target = $region108
      $region107: #{stgcn_forward.1} parent=11 // pred_region
        _
      $region108: #{stgcn_forward.1} parent=11 // pred_fallthru
        _
      // Predicated region
      $region109: #{stgcn_forward.1} parent=11 // pred_check
        %p907 = pneg %p626
      $region110: #{stgcn_forward.1} parent=11 // pred_check_branch
        %909 = sbr.rel (%p907) target = $region112
      $region111: #{stgcn_forward.1} parent=11 // pred_region
        _
      $region112: #{stgcn_forward.1} parent=11 // pred_fallthru
        _
      // Predicated region
      $region113: #{stgcn_forward.1} parent=11 // pred_check
        %p910 = pneg %p647
      $region114: #{stgcn_forward.1} parent=11 // pred_check_branch
        %912 = sbr.rel (%p910) target = $region116
      $region115: #{stgcn_forward.1} parent=11 // pred_region
        _
      $region116: #{stgcn_forward.1} parent=11 // pred_fallthru
        _
      // Predicated region
      $region117: #{stgcn_forward.1} parent=11 // pred_check
        %p913 = pneg %p668
      $region118: #{stgcn_forward.1} parent=11 // pred_check_branch
        %915 = sbr.rel (%p913) target = $region120
      $region119: #{stgcn_forward.1} parent=11 // pred_region
        _
      $region120: #{stgcn_forward.1} parent=11 // pred_fallthru
        _
      // Predicated region
      $region121: #{stgcn_forward.1} parent=11 // pred_check
        %p916 = pneg %p689
      $region122: #{stgcn_forward.1} parent=11 // pred_check_branch
        %918 = sbr.rel (%p916) target = $region124
      $region123: #{stgcn_forward.1} parent=11 // pred_region
        _
      $region124: #{stgcn_forward.1} parent=11 // pred_fallthru
        _
      // Predicated region
      $region125: #{stgcn_forward.1} parent=11 // pred_check
        %p919 = pneg %p710
      $region126: #{stgcn_forward.1} parent=11 // pred_check_branch
        %921 = sbr.rel (%p919) target = $region128
      $region127: #{stgcn_forward.1} parent=11 // pred_region
        _
      $region128: #{stgcn_forward.1} parent=11 // pred_fallthru
        _
      // Predicated region
      $region129: #{stgcn_forward.1} parent=11 // pred_check
        %p922 = pneg %p731
      $region130: #{stgcn_forward.1} parent=11 // pred_check_branch
        %924 = sbr.rel (%p922) target = $region132
      $region131: #{stgcn_forward.1} parent=11 // pred_region
        _
      $region132: #{stgcn_forward.1} parent=11 // pred_fallthru
        _
      // Predicated region
      $region133: #{stgcn_forward.1} parent=11 // pred_check
        %p925 = pneg %p752
      $region134: #{stgcn_forward.1} parent=11 // pred_check_branch
        %927 = sbr.rel (%p925) target = $region136
      $region135: #{stgcn_forward.1} parent=11 // pred_region
        _
      $region136: #{stgcn_forward.1} parent=11 // pred_fallthru
        _
      // Predicated region
      $region137: #{stgcn_forward.1} parent=11 // pred_check
        %p928 = pneg %p773
      $region138: #{stgcn_forward.1} parent=11 // pred_check_branch
        %930 = sbr.rel (%p928) target = $region140
      $region139: #{stgcn_forward.1} parent=11 // pred_region
        _
      $region140: #{stgcn_forward.1} parent=11 // pred_fallthru
        _
      // Predicated region
      $region141: #{stgcn_forward.1} parent=11 // pred_check
        %p931 = pneg %p794
      $region142: #{stgcn_forward.1} parent=11 // pred_check_branch
        %933 = sbr.rel (%p931) target = $region144
      $region143: #{stgcn_forward.1} parent=11 // pred_region
        _
      $region144: #{stgcn_forward.1} parent=11 // pred_fallthru
        _
    $region12: #{stgcn_forward.1} parent=5 // pred_fallthru
      _
    %p934 = scmp.lt.s32.totalorder %s75, 2
    // Predicated region
    $region145: #{stgcn_forward.1} parent=5 // pred_check
      %p935 = pneg %p934
    $region146: #{stgcn_forward.1} parent=5 // pred_check_branch
      %937 = sbr.rel (%p935) target = $region148
    $region147: #{stgcn_forward.1} parent=5 // pred_region
      // Predicated region
      $region149: #{stgcn_forward.1} parent=147 // pred_check
        %p938 = pneg %p95
      $region150: #{stgcn_forward.1} parent=147 // pred_check_branch
        %940 = sbr.rel (%p938) target = $region152
      $region151: #{stgcn_forward.1} parent=147 // pred_region
        %p941 = scmp.lt.s32.totalorder %s75, 1
        %s942 = scalar_select %p941, %s75, 1
        %s943 = smul.addr %s942, 32
        %s944 = smul.addr %s943, 8
        %s945 = scalar_lea.vmem %s1, %s944
      $region152: #{stgcn_forward.1} parent=147 // pred_fallthru
        _
    $region148: #{stgcn_forward.1} parent=5 // pred_fallthru
      _
    %p946 = scmp.le.s32.totalorder 1, %s75
    %p947 = scmp.lt.s32.totalorder %s75, 3
    %p948 = pnand %p946, %p947
    %p949 = pneg %p948
    // Predicated region
    $region153: #{stgcn_forward.1} parent=5 // pred_check
      _
    $region154: #{stgcn_forward.1} parent=5 // pred_check_branch
      %951 = sbr.rel (%p948) target = $region156
    $region155: #{stgcn_forward.1} parent=5 // pred_region
      %s952 = ssub.s32 %s75, 1
      %p953 = scmp.lt.s32.totalorder %s80, 1
      %s954 = scalar_select %p953, %s80, 1
      %s955 = smul.addr %s954, 32
      %s956 = smul.addr %s955, 8
      %s957 = scalar_lea.vmem %s1, %s956
      %p958 = pneg %p101
      %p959 = pneg %p98
      %p960 = pneg %p122
      %p961 = pneg %p119
      %p962 = pneg %p143
      %p963 = pneg %p140
      %p964 = pneg %p164
      %p965 = pneg %p161
      %p966 = pneg %p185
      %p967 = pneg %p182
      %p968 = pneg %p206
      %p969 = pneg %p203
      %p970 = pneg %p227
      %p971 = pneg %p224
      %p972 = pneg %p248
      %p973 = pneg %p245
      %p974 = pneg %p269
      %p975 = pneg %p266
      %p976 = pneg %p290
      %p977 = pneg %p287
      %p978 = pneg %p311
      %p979 = pneg %p308
      %p980 = pneg %p332
      %p981 = pneg %p329
      %p982 = pneg %p353
      %p983 = pneg %p350
      %p984 = pneg %p374
      %p985 = pneg %p371
      %p986 = pneg %p395
      %p987 = pneg %p392
      %p988 = pneg %p416
      %p989 = pneg %p413
      %p990 = pneg %p437
      %p991 = pneg %p434
      %p992 = pneg %p458
      %p993 = pneg %p455
      %p994 = pneg %p479
      %p995 = pneg %p476
      %p996 = pneg %p500
      %p997 = pneg %p497
      %p998 = pneg %p521
      %p999 = pneg %p518
      %p1000 = pneg %p542
      %p1001 = pneg %p539
      %p1002 = pneg %p563
      %p1003 = pneg %p560
      %p1004 = pneg %p584
      %p1005 = pneg %p581
      %p1006 = pneg %p605
      %p1007 = pneg %p602
      %p1008 = pneg %p626
      %p1009 = pneg %p623
      %p1010 = pneg %p647
      %p1011 = pneg %p644
      %p1012 = pneg %p668
      %p1013 = pneg %p665
      %p1014 = pneg %p689
      %p1015 = pneg %p686
      %p1016 = pneg %p710
      %p1017 = pneg %p707
      %p1018 = pneg %p731
      %p1019 = pneg %p728
      %p1020 = pneg %p752
      %p1021 = pneg %p749
      %p1022 = pneg %p773
      %p1023 = pneg %p770
      %p1024 = pneg %p794
      %p1025 = pneg %p791
      %p1026 = pneg %p820
      %p1027 = pneg %p817
      %p1028 = scmp.lt.s32.totalorder %s80, 1
      %s1029 = scalar_select %p1028, %s80, 1
      %s1030 = smul.addr %s1029, 2
      %s1031 = smul.addr %s1030, 8
      %s1032 = scalar_lea.vmem %s69, %s1031
      %p1033 = scmp.lt.s32.totalorder %s80, 1
      %s1034 = scalar_select %p1033, %s80, 1
      %s1035 = smul.addr %s1034, 32
      %s1036 = smul.addr %s1035, 8
      %s1037 = scalar_lea.vmem %s1, %s1036
      %p1038 = scmp.lt.s32.totalorder %s80, 1
      %s1039 = scalar_select %p1038, %s80, 1
      %s1040 = smul.addr %s1039, 2
      %s1041 = smul.addr %s1040, 8
      %s1042 = scalar_lea.vmem %s69, %s1041
      %v1043 = vld [vmem:[%s1037] sm:$0xff]
      %v1044 = vld [vmem:[%s1037 + $0x8] sm:$0xff]
      %v1045 = vld [vmem:[%s1037 + $0x10] sm:$0xff]
      %v1046 = vld [vmem:[%s1037 + $0x18] sm:$0xff]
      %v1047 = vld [vmem:[%s1037 + $0x20] sm:$0xff]
      %v1048 = vld [vmem:[%s1037 + $0x28] sm:$0xff]
      %v1049 = vld [vmem:[%s1037 + $0x30] sm:$0xff]
      %v1050 = vld [vmem:[%s1037 + $0x38] sm:$0xff]
      %v1051 = vld [vmem:[%s1037 + $0x40] sm:$0xff]
      %v1052 = vld [vmem:[%s1037 + $0x48] sm:$0xff]
      %v1053 = vld [vmem:[%s1037 + $0x50] sm:$0xff]
      %v1054 = vld [vmem:[%s1037 + $0x58] sm:$0xff]
      %v1055 = vld [vmem:[%s1037 + $0x60] sm:$0xff]
      %v1056 = vld [vmem:[%s1037 + $0x68] sm:$0xff]
      %v1057 = vld [vmem:[%s1037 + $0x70] sm:$0xff]
      %v1058 = vld [vmem:[%s1037 + $0x78] sm:$0xff]
      %v1059 = vld [vmem:[%s1037 + $0x80] sm:$0xff]
      %v1060 = vld [vmem:[%s1037 + $0x88] sm:$0xff]
      %v1061 = vld [vmem:[%s1037 + $0x90] sm:$0xff]
      %v1062 = vld [vmem:[%s1037 + $0x98] sm:$0xff]
      %v1063 = vld [vmem:[%s1037 + $0xa0] sm:$0xff]
      %v1064 = vld [vmem:[%s1037 + $0xa8] sm:$0xff]
      %v1065 = vld [vmem:[%s1037 + $0xb0] sm:$0xff]
      %v1066 = vld [vmem:[%s1037 + $0xb8] sm:$0xff]
      %v1067 = vld [vmem:[%s1037 + $0xc0] sm:$0xff]
      %v1068 = vld [vmem:[%s1037 + $0xc8] sm:$0xff]
      %v1069 = vld [vmem:[%s1037 + $0xd0] sm:$0xff]
      %v1070 = vld [vmem:[%s1037 + $0xd8] sm:$0xff]
      %v1071 = vld [vmem:[%s1037 + $0xe0] sm:$0xff]
      %v1072 = vld [vmem:[%s1037 + $0xe8] sm:$0xff]
      %v1073 = vld [vmem:[%s1037 + $0xf0] sm:$0xff]
      %v1074 = vld [vmem:[%s1037 + $0xf8] sm:$0xff]
      %v1075 = vld [vmem:[%s5] sm:$0xff]
      %v1076 = vld [vmem:[%s5 + $0x8] sm:$0xff]
      %v1077 = vmul.f32 %v1043, %v1075
      %v1078 = vmul.f32 %v1044, %v1076
      %v1079 = vmul.f32 %v1045, %v1075
      %v1080 = vmul.f32 %v1046, %v1076
      %v1081 = vmul.f32 %v1047, %v1075
      %v1082 = vmul.f32 %v1048, %v1076
      %v1083 = vmul.f32 %v1049, %v1075
      %v1084 = vmul.f32 %v1050, %v1076
      %v1085 = vmul.f32 %v1051, %v1075
      %v1086 = vmul.f32 %v1052, %v1076
      %v1087 = vmul.f32 %v1053, %v1075
      %v1088 = vmul.f32 %v1054, %v1076
      %v1089 = vmul.f32 %v1055, %v1075
      %v1090 = vmul.f32 %v1056, %v1076
      %v1091 = vmul.f32 %v1057, %v1075
      %v1092 = vmul.f32 %v1058, %v1076
      %v1093 = vmul.f32 %v1059, %v1075
      %v1094 = vmul.f32 %v1060, %v1076
      %v1095 = vmul.f32 %v1061, %v1075
      %v1096 = vmul.f32 %v1062, %v1076
      %v1097 = vmul.f32 %v1063, %v1075
      %v1098 = vmul.f32 %v1064, %v1076
      %v1099 = vmul.f32 %v1065, %v1075
      %v1100 = vmul.f32 %v1066, %v1076
      %v1101 = vmul.f32 %v1067, %v1075
      %v1102 = vmul.f32 %v1068, %v1076
      %v1103 = vmul.f32 %v1069, %v1075
      %v1104 = vmul.f32 %v1070, %v1076
      %v1105 = vmul.f32 %v1071, %v1075
      %v1106 = vmul.f32 %v1072, %v1076
      %v1107 = vmul.f32 %v1073, %v1075
      %v1108 = vmul.f32 %v1074, %v1076
      %v1109 = vld [vmem:[%s7] sm:$0xff]
      %v1110 = vld [vmem:[%s7 + $0x8] sm:$0xff]
      %v1111 = vadd.f32 %v1077, %v1109
      %v1112 = vadd.f32 %v1078, %v1110
      %v1113 = vadd.f32 %v1079, %v1109
      %v1114 = vadd.f32 %v1080, %v1110
      %v1115 = vadd.f32 %v1081, %v1109
      %v1116 = vadd.f32 %v1082, %v1110
      %v1117 = vadd.f32 %v1083, %v1109
      %v1118 = vadd.f32 %v1084, %v1110
      %v1119 = vadd.f32 %v1085, %v1109
      %v1120 = vadd.f32 %v1086, %v1110
      %v1121 = vadd.f32 %v1087, %v1109
      %v1122 = vadd.f32 %v1088, %v1110
      %v1123 = vadd.f32 %v1089, %v1109
      %v1124 = vadd.f32 %v1090, %v1110
      %v1125 = vadd.f32 %v1091, %v1109
      %v1126 = vadd.f32 %v1092, %v1110
      %v1127 = vadd.f32 %v1093, %v1109
      %v1128 = vadd.f32 %v1094, %v1110
      %v1129 = vadd.f32 %v1095, %v1109
      %v1130 = vadd.f32 %v1096, %v1110
      %v1131 = vadd.f32 %v1097, %v1109
      %v1132 = vadd.f32 %v1098, %v1110
      %v1133 = vadd.f32 %v1099, %v1109
      %v1134 = vadd.f32 %v1100, %v1110
      %v1135 = vadd.f32 %v1101, %v1109
      %v1136 = vadd.f32 %v1102, %v1110
      %v1137 = vadd.f32 %v1103, %v1109
      %v1138 = vadd.f32 %v1104, %v1110
      %v1139 = vadd.f32 %v1105, %v1109
      %v1140 = vadd.f32 %v1106, %v1110
      %v1141 = vadd.f32 %v1107, %v1109
      %v1142 = vadd.f32 %v1108, %v1110
      %v1143 = vld [vmem:[%s3] sm:$0xff]
      %v1144 = vld [vmem:[%s3 + $0x8] sm:$0xff]
      %v1145 = vld [vmem:[%s3 + $0x10] sm:$0xff]
      %v1146 = vld [vmem:[%s3 + $0x18] sm:$0xff]
      %v1147 = vld [vmem:[%s3 + $0x20] sm:$0xff]
      %v1148 = vld [vmem:[%s3 + $0x28] sm:$0xff]
      %v1149 = vld [vmem:[%s3 + $0x30] sm:$0xff]
      %v1150 = vld [vmem:[%s3 + $0x38] sm:$0xff]
      %v1151 = vld [vmem:[%s3 + $0x40] sm:$0xff]
      %v1152 = vld [vmem:[%s3 + $0x48] sm:$0xff]
      %v1153 = vld [vmem:[%s3 + $0x50] sm:$0xff]
      %v1154 = vld [vmem:[%s3 + $0x58] sm:$0xff]
      %v1155 = vld [vmem:[%s3 + $0x60] sm:$0xff]
      %v1156 = vld [vmem:[%s3 + $0x68] sm:$0xff]
      %v1157 = vld [vmem:[%s3 + $0x70] sm:$0xff]
      %v1158 = vld [vmem:[%s3 + $0x78] sm:$0xff]
      %v1159 = vld [vmem:[%s3 + $0x80] sm:$0xff]
      %v1160 = vld [vmem:[%s3 + $0x88] sm:$0xff]
      %v1161 = vld [vmem:[%s3 + $0x90] sm:$0xff]
      %v1162 = vld [vmem:[%s3 + $0x98] sm:$0xff]
      %v1163 = vld [vmem:[%s3 + $0xa0] sm:$0xff]
      %v1164 = vld [vmem:[%s3 + $0xa8] sm:$0xff]
      %v1165 = vld [vmem:[%s3 + $0xb0] sm:$0xff]
      %v1166 = vld [vmem:[%s3 + $0xb8] sm:$0xff]
      %v1167 = vld [vmem:[%s3 + $0xc0] sm:$0xff]
      %v1168 = vld [vmem:[%s3 + $0xc8] sm:$0xff]
      %v1169 = vld [vmem:[%s3 + $0xd0] sm:$0xff]
      %v1170 = vld [vmem:[%s3 + $0xd8] sm:$0xff]
      %v1171 = vld [vmem:[%s3 + $0xe0] sm:$0xff]
      %v1172 = vld [vmem:[%s3 + $0xe8] sm:$0xff]
      %v1173 = vld [vmem:[%s3 + $0xf0] sm:$0xff]
      %v1174 = vld [vmem:[%s3 + $0xf8] sm:$0xff]
      %v1175 = vld [vmem:[%s3 + $0x100] sm:$0xff]
      %v1176 = vld [vmem:[%s3 + $0x108] sm:$0xff]
      %v1177 = vld [vmem:[%s3 + $0x110] sm:$0xff]
      %v1178 = vld [vmem:[%s3 + $0x118] sm:$0xff]
      %v1179 = vld [vmem:[%s3 + $0x120] sm:$0xff]
      %v1180 = vld [vmem:[%s3 + $0x128] sm:$0xff]
      %v1181 = vld [vmem:[%s3 + $0x130] sm:$0xff]
      %v1182 = vld [vmem:[%s3 + $0x138] sm:$0xff]
      %v1183 = vld [vmem:[%s3 + $0x140] sm:$0xff]
      %v1184 = vld [vmem:[%s3 + $0x148] sm:$0xff]
      %v1185 = vld [vmem:[%s3 + $0x150] sm:$0xff]
      %v1186 = vld [vmem:[%s3 + $0x158] sm:$0xff]
      %v1187 = vld [vmem:[%s3 + $0x160] sm:$0xff]
      %v1188 = vld [vmem:[%s3 + $0x168] sm:$0xff]
      %v1189 = vld [vmem:[%s3 + $0x170] sm:$0xff]
      %v1190 = vld [vmem:[%s3 + $0x178] sm:$0xff]
      %v1191 = vld [vmem:[%s3 + $0x180] sm:$0xff]
      %v1192 = vld [vmem:[%s3 + $0x188] sm:$0xff]
      %v1193 = vld [vmem:[%s3 + $0x190] sm:$0xff]
      %v1194 = vld [vmem:[%s3 + $0x198] sm:$0xff]
      %v1195 = vld [vmem:[%s3 + $0x1a0] sm:$0xff]
      %v1196 = vld [vmem:[%s3 + $0x1a8] sm:$0xff]
      %v1197 = vld [vmem:[%s3 + $0x1b0] sm:$0xff]
      %v1198 = vld [vmem:[%s3 + $0x1b8] sm:$0xff]
      %v1199 = vld [vmem:[%s3 + $0x1c0] sm:$0xff]
      %v1200 = vld [vmem:[%s3 + $0x1c8] sm:$0xff]
      %v1201 = vld [vmem:[%s3 + $0x1d0] sm:$0xff]
      %v1202 = vld [vmem:[%s3 + $0x1d8] sm:$0xff]
      %v1203 = vld [vmem:[%s3 + $0x1e0] sm:$0xff]
      %v1204 = vld [vmem:[%s3 + $0x1e8] sm:$0xff]
      %v1205 = vld [vmem:[%s3 + $0x1f0] sm:$0xff]
      %v1206 = vld [vmem:[%s3 + $0x1f8] sm:$0xff]
      %v1207 = vld [vmem:[%s9] sm:$0x7]
      %v1208 = vld [vmem:[%s11] sm:$0x1]
      %v1209 = vld [vmem:[%s13] sm:$0xff]
      %v1210 = vld [vmem:[%s13 + $0x8] sm:$0xff]
      %v1211 = vld [vmem:[%s13 + $0x10] sm:$0xff]
      %v1212 = vld [vmem:[%s13 + $0x18] sm:$0xff]
      %v1213 = vld [vmem:[%s13 + $0x20] sm:$0xff]
      %v1214 = vld [vmem:[%s13 + $0x28] sm:$0xff]
      %v1215 = vld [vmem:[%s13 + $0x30] sm:$0xff]
      %v1216 = vld [vmem:[%s13 + $0x38] sm:$0xff]
      %v1217 = vld [vmem:[%s13 + $0x40] sm:$0xff]
      %v1218 = vld [vmem:[%s13 + $0x48] sm:$0xff]
      %v1219 = vld [vmem:[%s13 + $0x50] sm:$0xff]
      %v1220 = vld [vmem:[%s13 + $0x58] sm:$0xff]
      %v1221 = vld [vmem:[%s13 + $0x60] sm:$0xff]
      %v1222 = vld [vmem:[%s13 + $0x68] sm:$0xff]
      %v1223 = vld [vmem:[%s13 + $0x70] sm:$0xff]
      %v1224 = vld [vmem:[%s13 + $0x78] sm:$0xff]
      %v1225 = vld [vmem:[%s13 + $0x80] sm:$0xff]
      %v1226 = vld [vmem:[%s13 + $0x88] sm:$0xff]
      %v1227 = vld [vmem:[%s13 + $0x90] sm:$0xff]
      %v1228 = vld [vmem:[%s13 + $0x98] sm:$0xff]
      %v1229 = vld [vmem:[%s13 + $0xa0] sm:$0xff]
      %v1230 = vld [vmem:[%s13 + $0xa8] sm:$0xff]
      %v1231 = vld [vmem:[%s13 + $0xb0] sm:$0xff]
      %v1232 = vld [vmem:[%s13 + $0xb8] sm:$0xff]
      %v1233 = vld [vmem:[%s13 + $0xc0] sm:$0xff]
      %v1234 = vld [vmem:[%s13 + $0xc8] sm:$0xff]
      %v1235 = vld [vmem:[%s13 + $0xd0] sm:$0xff]
      %v1236 = vld [vmem:[%s13 + $0xd8] sm:$0xff]
      %v1237 = vld [vmem:[%s13 + $0xe0] sm:$0xff]
      %v1238 = vld [vmem:[%s13 + $0xe8] sm:$0xff]
      %v1239 = vld [vmem:[%s13 + $0xf0] sm:$0xff]
      %v1240 = vld [vmem:[%s13 + $0xf8] sm:$0xff]
      %v1241 = vld [vmem:[%s13 + $0x100] sm:$0xff]
      %v1242 = vld [vmem:[%s13 + $0x108] sm:$0xff]
      %v1243 = vld [vmem:[%s13 + $0x110] sm:$0xff]
      %v1244 = vld [vmem:[%s13 + $0x118] sm:$0xff]
      %v1245 = vld [vmem:[%s13 + $0x120] sm:$0xff]
      %v1246 = vld [vmem:[%s13 + $0x128] sm:$0xff]
      %v1247 = vld [vmem:[%s13 + $0x130] sm:$0xff]
      %v1248 = vld [vmem:[%s13 + $0x138] sm:$0xff]
      %v1249 = vld [vmem:[%s13 + $0x140] sm:$0xff]
      %v1250 = vld [vmem:[%s13 + $0x148] sm:$0xff]
      %v1251 = vld [vmem:[%s13 + $0x150] sm:$0xff]
      %v1252 = vld [vmem:[%s13 + $0x158] sm:$0xff]
      %v1253 = vld [vmem:[%s13 + $0x160] sm:$0xff]
      %v1254 = vld [vmem:[%s13 + $0x168] sm:$0xff]
      %v1255 = vld [vmem:[%s13 + $0x170] sm:$0xff]
      %v1256 = vld [vmem:[%s13 + $0x178] sm:$0xff]
      %v1257 = vld [vmem:[%s13 + $0x180] sm:$0xff]
      %v1258 = vld [vmem:[%s13 + $0x188] sm:$0xff]
      %v1259 = vld [vmem:[%s13 + $0x190] sm:$0xff]
      %v1260 = vld [vmem:[%s13 + $0x198] sm:$0xff]
      %v1261 = vld [vmem:[%s13 + $0x1a0] sm:$0xff]
      %v1262 = vld [vmem:[%s13 + $0x1a8] sm:$0xff]
      %v1263 = vld [vmem:[%s13 + $0x1b0] sm:$0xff]
      %v1264 = vld [vmem:[%s13 + $0x1b8] sm:$0xff]
      %v1265 = vld [vmem:[%s13 + $0x1c0] sm:$0xff]
      %v1266 = vld [vmem:[%s13 + $0x1c8] sm:$0xff]
      %v1267 = vld [vmem:[%s13 + $0x1d0] sm:$0xff]
      %v1268 = vld [vmem:[%s13 + $0x1d8] sm:$0xff]
      %v1269 = vld [vmem:[%s13 + $0x1e0] sm:$0xff]
      %v1270 = vld [vmem:[%s13 + $0x1e8] sm:$0xff]
      %v1271 = vld [vmem:[%s13 + $0x1f0] sm:$0xff]
      %v1272 = vld [vmem:[%s13 + $0x1f8] sm:$0xff]
      %v1273 = vld [vmem:[%s13 + $0x200] sm:$0xff]
      %v1274 = vld [vmem:[%s13 + $0x208] sm:$0xff]
      %v1275 = vld [vmem:[%s13 + $0x210] sm:$0xff]
      %v1276 = vld [vmem:[%s13 + $0x218] sm:$0xff]
      %v1277 = vld [vmem:[%s13 + $0x220] sm:$0xff]
      %v1278 = vld [vmem:[%s13 + $0x228] sm:$0xff]
      %v1279 = vld [vmem:[%s13 + $0x230] sm:$0xff]
      %v1280 = vld [vmem:[%s13 + $0x238] sm:$0xff]
      %v1281 = vld [vmem:[%s15] sm:$0x1]
      %v1282 = vld [vmem:[%s17] sm:$0x1]
      %v1283 = vld [vmem:[%s19] sm:$0x1]
      %v1284 = vld [vmem:[%s21] sm:$0x7]
      %v1285 = vld [vmem:[%s23] sm:$0x1]
      %v1287 = vlaneseq
      %v1288 = vshrl.u32 %v1287, 7
      %v1289 = vsub.s32 0, %v1288
      %v1290 = vrot.slane %v1285, %v1289
      %vm1292 = vcmask 23552
      %v1294 = vsel %vm1292, %v1111, 0
      %v1297 = vsel %vm1292, %v1112, 0
      %v1300 = vsel %vm1292, %v1113, 0
      %v1303 = vsel %vm1292, %v1114, 0
      %v1306 = vsel %vm1292, %v1115, 0
      %v1309 = vsel %vm1292, %v1116, 0
      %v1312 = vsel %vm1292, %v1117, 0
      %v1315 = vsel %vm1292, %v1118, 0
      %v1318 = vsel %vm1292, %v1119, 0
      %v1321 = vsel %vm1292, %v1120, 0
      %v1324 = vsel %vm1292, %v1121, 0
      %v1327 = vsel %vm1292, %v1122, 0
      %v1330 = vsel %vm1292, %v1123, 0
      %v1333 = vsel %vm1292, %v1124, 0
      %v1336 = vsel %vm1292, %v1125, 0
      %v1339 = vsel %vm1292, %v1126, 0
      %v1342 = vsel %vm1292, %v1127, 0
      %v1345 = vsel %vm1292, %v1128, 0
      %v1348 = vsel %vm1292, %v1129, 0
      %v1351 = vsel %vm1292, %v1130, 0
      %v1354 = vsel %vm1292, %v1131, 0
      %v1357 = vsel %vm1292, %v1132, 0
      %v1360 = vsel %vm1292, %v1133, 0
      %v1363 = vsel %vm1292, %v1134, 0
      %v1366 = vsel %vm1292, %v1135, 0
      %v1369 = vsel %vm1292, %v1136, 0
      %v1372 = vsel %vm1292, %v1137, 0
      %v1375 = vsel %vm1292, %v1138, 0
      %v1378 = vsel %vm1292, %v1139, 0
      %v1381 = vsel %vm1292, %v1140, 0
      %v1384 = vsel %vm1292, %v1141, 0
      %v1387 = vsel %vm1292, %v1142, 0
      %vm1389 = vcmask 1042432
      %v1391 = vsel %vm1389, %v1284, 0
      %1393 = vmatprep.subr.mxu0 0.0
      %1394 = vmatpush1.msra.mxu0 %v1391
      %1395 = vmatprep.subr.mxu0 0.0
      %1396 = vmatpush1.msra.mxu0 0.0
      %1397 = vmatprep.subr.mxu0 0.0
      %1398 = vmatpush1.msra.mxu0 0.0
      %1399 = vmatprep.subr.mxu0 0.0
      %1400 = vmatpush1.msra.mxu0 0.0
      %1401 = vmatprep.subr.mxu0 0.0
      %1402 = vmatpush1.msra.mxu0 0.0
      %1403 = vmatprep.subr.mxu0 0.0
      %1404 = vmatpush1.msra.mxu0 0.0
      %1405 = vmatprep.subr.mxu0 0.0
      %1406 = vmatpush1.msra.mxu0 0.0
      %1407 = vmatprep.subr.mxu0 0.0
      %1408 = vmatpush1.msra.mxu0 0.0
      %1409 = vmatprep.subr.mxu0 0.0
      %1410 = vmatpush1.msra.mxu0 0.0
      %1411 = vmatprep.subr.mxu0 0.0
      %1412 = vmatpush1.msra.mxu0 0.0
      %1413 = vmatprep.subr.mxu0 0.0
      %1414 = vmatpush1.msra.mxu0 0.0
      %1415 = vmatprep.subr.mxu0 0.0
      %1416 = vmatpush1.msra.mxu0 0.0
      %1417 = vmatprep.subr.mxu0 0.0
      %1418 = vmatpush1.msra.mxu0 0.0
      %1419 = vmatprep.subr.mxu0 0.0
      %1420 = vmatpush1.msra.mxu0 0.0
      %1421 = vmatprep.subr.mxu0 0.0
      %1422 = vmatpush1.msra.mxu0 0.0
      %1423 = vmatprep.subr.mxu0 0.0
      %1424 = vmatpush1.msra.mxu0 0.0
      %1425 = vmatprep.subr.mxu0 0.0
      %1426 = vmatpush1.msra.mxu0 0.0
      %1427 = vmatprep.subr.mxu0 0.0
      %1428 = vmatpush1.msra.mxu0 0.0
      %1429 = vmatprep.subr.mxu0 0.0
      %1430 = vmatpush1.msra.mxu0 0.0
      %1431 = vmatprep.subr.mxu0 0.0
      %1432 = vmatpush1.msra.mxu0 0.0
      %1433 = vmatprep.subr.mxu0 0.0
      %1434 = vmatpush1.msra.mxu0 0.0
      %1435 = vmatprep.subr.mxu0 0.0
      %1436 = vmatpush1.msra.mxu0 0.0
      %1437 = vmatprep.subr.mxu0 0.0
      %1438 = vmatpush1.msra.mxu0 0.0
      %1439 = vmatprep.subr.mxu0 0.0
      %1440 = vmatpush1.msra.mxu0 0.0
      %1441 = vmatprep.subr.mxu0 0.0
      %1442 = vmatpush1.msra.mxu0 0.0
      %1443 = vmatprep.subr.mxu0 0.0
      %1444 = vmatpush1.msra.mxu0 0.0
      %1445 = vmatprep.subr.mxu0 0.0
      %1446 = vmatpush1.msra.mxu0 0.0
      %1447 = vmatprep.subr.mxu0 0.0
      %1448 = vmatpush1.msra.mxu0 0.0
      %1449 = vmatprep.subr.mxu0 0.0
      %1450 = vmatpush1.msra.mxu0 0.0
      %1451 = vmatprep.subr.mxu0 0.0
      %1452 = vmatpush1.msra.mxu0 0.0
      %1453 = vmatprep.subr.mxu0 0.0
      %1454 = vmatpush1.msra.mxu0 0.0
      %1455 = vmatprep.subr.mxu0 0.0
      %1456 = vmatpush1.msra.mxu0 0.0
      %1457 = vmatprep.mubr.f32.mxu0 0.0
      %1458 = vmatmul.mubr.f32.gmra.mrb[0].mxu0 %v1294
      %v1459 = vpop.f32.mrb[0].mxu0
      %v1460 = vadd.f32 %v1290, %v1459
      %v1461 = vpop.f32.mrb[0].mxu0
      %1462 = vmatprep.mubr.f32.mxu0 0.0
      %1463 = vmatmul.mubr.f32.gmra.mrb[0].mxu0 %v1297
      %v1464 = vpop.f32.mrb[0].mxu0
      %v1465 = vadd.f32 %v1290, %v1464
      %v1466 = vpop.f32.mrb[0].mxu0
      %1467 = vmatprep.mubr.f32.mxu0 0.0
      %1468 = vmatmul.mubr.f32.gmra.mrb[0].mxu0 %v1300
      %v1469 = vpop.f32.mrb[0].mxu0
      %v1470 = vadd.f32 %v1290, %v1469
      %v1471 = vpop.f32.mrb[0].mxu0
      %1472 = vmatprep.mubr.f32.mxu0 0.0
      %1473 = vmatmul.mubr.f32.gmra.mrb[0].mxu0 %v1303
      %v1474 = vpop.f32.mrb[0].mxu0
      %v1475 = vadd.f32 %v1290, %v1474
      %v1476 = vpop.f32.mrb[0].mxu0
      %1477 = vmatprep.mubr.f32.mxu0 0.0
      %1478 = vmatmul.mubr.f32.gmra.mrb[0].mxu0 %v1306
      %v1479 = vpop.f32.mrb[0].mxu0
      %v1480 = vadd.f32 %v1290, %v1479
      %v1481 = vpop.f32.mrb[0].mxu0
      %1482 = vmatprep.mubr.f32.mxu0 0.0
      %1483 = vmatmul.mubr.f32.gmra.mrb[0].mxu0 %v1309
      %v1484 = vpop.f32.mrb[0].mxu0
      %v1485 = vadd.f32 %v1290, %v1484
      %v1486 = vpop.f32.mrb[0].mxu0
      %1487 = vmatprep.mubr.f32.mxu0 0.0
      %1488 = vmatmul.mubr.f32.gmra.mrb[0].mxu0 %v1312
      %v1489 = vpop.f32.mrb[0].mxu0
      %v1490 = vadd.f32 %v1290, %v1489
      %v1491 = vpop.f32.mrb[0].mxu0
      %1492 = vmatprep.mubr.f32.mxu0 0.0
      %1493 = vmatmul.mubr.f32.gmra.mrb[0].mxu0 %v1315
      %v1494 = vpop.f32.mrb[0].mxu0
      %v1495 = vadd.f32 %v1290, %v1494
      %v1496 = vpop.f32.mrb[0].mxu0
      %1497 = vmatprep.mubr.f32.mxu0 0.0
      %1498 = vmatmul.mubr.f32.gmra.mrb[0].mxu0 %v1318
      %v1499 = vpop.f32.mrb[0].mxu0
      %v1500 = vadd.f32 %v1290, %v1499
      %v1501 = vpop.f32.mrb[0].mxu0
      %1502 = vmatprep.mubr.f32.mxu0 0.0
      %1503 = vmatmul.mubr.f32.gmra.mrb[0].mxu0 %v1321
      %v1504 = vpop.f32.mrb[0].mxu0
      %v1505 = vadd.f32 %v1290, %v1504
      %v1506 = vpop.f32.mrb[0].mxu0
      %1507 = vmatprep.mubr.f32.mxu0 0.0
      %1508 = vmatmul.mubr.f32.gmra.mrb[0].mxu0 %v1324
      %v1509 = vpop.f32.mrb[0].mxu0
      %v1510 = vadd.f32 %v1290, %v1509
      %v1511 = vpop.f32.mrb[0].mxu0
      %1512 = vmatprep.mubr.f32.mxu0 0.0
      %1513 = vmatmul.mubr.f32.gmra.mrb[0].mxu0 %v1327
      %v1514 = vpop.f32.mrb[0].mxu0
      %v1515 = vadd.f32 %v1290, %v1514
      %v1516 = vpop.f32.mrb[0].mxu0
      %1517 = vmatprep.mubr.f32.mxu0 0.0
      %1518 = vmatmul.mubr.f32.gmra.mrb[0].mxu0 %v1330
      %v1519 = vpop.f32.mrb[0].mxu0
      %v1520 = vadd.f32 %v1290, %v1519
      %v1521 = vpop.f32.mrb[0].mxu0
      %1522 = vmatprep.mubr.f32.mxu0 0.0
      %1523 = vmatmul.mubr.f32.gmra.mrb[0].mxu0 %v1333
      %v1524 = vpop.f32.mrb[0].mxu0
      %v1525 = vadd.f32 %v1290, %v1524
      %v1526 = vpop.f32.mrb[0].mxu0
      %1527 = vmatprep.mubr.f32.mxu0 0.0
      %1528 = vmatmul.mubr.f32.gmra.mrb[0].mxu0 %v1336
      %v1529 = vpop.f32.mrb[0].mxu0
      %v1530 = vadd.f32 %v1290, %v1529
      %v1531 = vpop.f32.mrb[0].mxu0
      %1532 = vmatprep.mubr.f32.mxu0 0.0
      %1533 = vmatmul.mubr.f32.gmra.mrb[0].mxu0 %v1339
      %v1534 = vpop.f32.mrb[0].mxu0
      %v1535 = vadd.f32 %v1290, %v1534
      %v1536 = vpop.f32.mrb[0].mxu0
      %1537 = vmatprep.mubr.f32.mxu0 0.0
      %1538 = vmatmul.mubr.f32.gmra.mrb[0].mxu0 %v1342
      %v1539 = vpop.f32.mrb[0].mxu0
      %v1540 = vadd.f32 %v1290, %v1539
      %v1541 = vpop.f32.mrb[0].mxu0
      %1542 = vmatprep.mubr.f32.mxu0 0.0
      %1543 = vmatmul.mubr.f32.gmra.mrb[0].mxu0 %v1345
      %v1544 = vpop.f32.mrb[0].mxu0
      %v1545 = vadd.f32 %v1290, %v1544
      %v1546 = vpop.f32.mrb[0].mxu0
      %1547 = vmatprep.mubr.f32.mxu0 0.0
      %1548 = vmatmul.mubr.f32.gmra.mrb[0].mxu0 %v1348
      %v1549 = vpop.f32.mrb[0].mxu0
      %v1550 = vadd.f32 %v1290, %v1549
      %v1551 = vpop.f32.mrb[0].mxu0
      %1552 = vmatprep.mubr.f32.mxu0 0.0
      %1553 = vmatmul.mubr.f32.gmra.mrb[0].mxu0 %v1351
      %v1554 = vpop.f32.mrb[0].mxu0
      %v1555 = vadd.f32 %v1290, %v1554
      %v1556 = vpop.f32.mrb[0].mxu0
      %1557 = vmatprep.mubr.f32.mxu0 0.0
      %1558 = vmatmul.mubr.f32.gmra.mrb[0].mxu0 %v1354
      %v1559 = vpop.f32.mrb[0].mxu0
      %v1560 = vadd.f32 %v1290, %v1559
      %v1561 = vpop.f32.mrb[0].mxu0
      %1562 = vmatprep.mubr.f32.mxu0 0.0
      %1563 = vmatmul.mubr.f32.gmra.mrb[0].mxu0 %v1357
      %v1564 = vpop.f32.mrb[0].mxu0
      %v1565 = vadd.f32 %v1290, %v1564
      %v1566 = vpop.f32.mrb[0].mxu0
      %1567 = vmatprep.mubr.f32.mxu0 0.0
      %1568 = vmatmul.mubr.f32.gmra.mrb[0].mxu0 %v1360
      %v1569 = vpop.f32.mrb[0].mxu0
      %v1570 = vadd.f32 %v1290, %v1569
      %v1571 = vpop.f32.mrb[0].mxu0
      %1572 = vmatprep.mubr.f32.mxu0 0.0
      %1573 = vmatmul.mubr.f32.gmra.mrb[0].mxu0 %v1363
      %v1574 = vpop.f32.mrb[0].mxu0
      %v1575 = vadd.f32 %v1290, %v1574
      %v1576 = vpop.f32.mrb[0].mxu0
      %1577 = vmatprep.mubr.f32.mxu0 0.0
      %1578 = vmatmul.mubr.f32.gmra.mrb[0].mxu0 %v1366
      %v1579 = vpop.f32.mrb[0].mxu0
      %v1580 = vadd.f32 %v1290, %v1579
      %v1581 = vpop.f32.mrb[0].mxu0
      %1582 = vmatprep.mubr.f32.mxu0 0.0
      %1583 = vmatmul.mubr.f32.gmra.mrb[0].mxu0 %v1369
      %v1584 = vpop.f32.mrb[0].mxu0
      %v1585 = vadd.f32 %v1290, %v1584
      %v1586 = vpop.f32.mrb[0].mxu0
      %1587 = vmatprep.mubr.f32.mxu0 0.0
      %1588 = vmatmul.mubr.f32.gmra.mrb[0].mxu0 %v1372
      %v1589 = vpop.f32.mrb[0].mxu0
      %v1590 = vadd.f32 %v1290, %v1589
      %v1591 = vpop.f32.mrb[0].mxu0
      %1592 = vmatprep.mubr.f32.mxu0 0.0
      %1593 = vmatmul.mubr.f32.gmra.mrb[0].mxu0 %v1375
      %v1594 = vpop.f32.mrb[0].mxu0
      %v1595 = vadd.f32 %v1290, %v1594
      %v1596 = vpop.f32.mrb[0].mxu0
      %1597 = vmatprep.mubr.f32.mxu0 0.0
      %1598 = vmatmul.mubr.f32.gmra.mrb[0].mxu0 %v1378
      %v1599 = vpop.f32.mrb[0].mxu0
      %v1600 = vadd.f32 %v1290, %v1599
      %v1601 = vpop.f32.mrb[0].mxu0
      %1602 = vmatprep.mubr.f32.mxu0 0.0
      %1603 = vmatmul.mubr.f32.gmra.mrb[0].mxu0 %v1381
      %v1604 = vpop.f32.mrb[0].mxu0
      %v1605 = vadd.f32 %v1290, %v1604
      %v1606 = vpop.f32.mrb[0].mxu0
      %1607 = vmatprep.mubr.f32.mxu0 0.0
      %1608 = vmatmul.mubr.f32.gmra.mrb[0].mxu0 %v1384
      %v1609 = vpop.f32.mrb[0].mxu0
      %v1610 = vadd.f32 %v1290, %v1609
      %v1611 = vpop.f32.mrb[0].mxu0
      %1612 = vmatprep.mubr.f32.mxu0 0.0
      %1613 = vmatmul.mubr.f32.gmra.mrb[0].mxu0 %v1387
      %v1614 = vpop.f32.mrb[0].mxu0
      %v1615 = vadd.f32 %v1290, %v1614
      %v1616 = vpop.f32.mrb[0].mxu0
      %1617 = vdwg.mxu0
      %v1619 = vsel %vm1389, %v1207, 0
      %1621 = vmatprep.subr.mxu0 0.0
      %1622 = vmatpush1.msra.mxu0 %v1619
      %1623 = vmatprep.subr.mxu0 0.0
      %1624 = vmatpush1.msra.mxu0 0.0
      %1625 = vmatprep.subr.mxu0 0.0
      %1626 = vmatpush1.msra.mxu0 0.0
      %1627 = vmatprep.subr.mxu0 0.0
      %1628 = vmatpush1.msra.mxu0 0.0
      %1629 = vmatprep.subr.mxu0 0.0
      %1630 = vmatpush1.msra.mxu0 0.0
      %1631 = vmatprep.subr.mxu0 0.0
      %1632 = vmatpush1.msra.mxu0 0.0
      %1633 = vmatprep.subr.mxu0 0.0
      %1634 = vmatpush1.msra.mxu0 0.0
      %1635 = vmatprep.subr.mxu0 0.0
      %1636 = vmatpush1.msra.mxu0 0.0
      %1637 = vmatprep.subr.mxu0 0.0
      %1638 = vmatpush1.msra.mxu0 0.0
      %1639 = vmatprep.subr.mxu0 0.0
      %1640 = vmatpush1.msra.mxu0 0.0
      %1641 = vmatprep.subr.mxu0 0.0
      %1642 = vmatpush1.msra.mxu0 0.0
      %1643 = vmatprep.subr.mxu0 0.0
      %1644 = vmatpush1.msra.mxu0 0.0
      %1645 = vmatprep.subr.mxu0 0.0
      %1646 = vmatpush1.msra.mxu0 0.0
      %1647 = vmatprep.subr.mxu0 0.0
      %1648 = vmatpush1.msra.mxu0 0.0
      %1649 = vmatprep.subr.mxu0 0.0
      %1650 = vmatpush1.msra.mxu0 0.0
      %1651 = vmatprep.subr.mxu0 0.0
      %1652 = vmatpush1.msra.mxu0 0.0
      %1653 = vmatprep.subr.mxu0 0.0
      %1654 = vmatpush1.msra.mxu0 0.0
      %1655 = vmatprep.subr.mxu0 0.0
      %1656 = vmatpush1.msra.mxu0 0.0
      %1657 = vmatprep.subr.mxu0 0.0
      %1658 = vmatpush1.msra.mxu0 0.0
      %1659 = vmatprep.subr.mxu0 0.0
      %1660 = vmatpush1.msra.mxu0 0.0
      %1661 = vmatprep.subr.mxu0 0.0
      %1662 = vmatpush1.msra.mxu0 0.0
      %1663 = vmatprep.subr.mxu0 0.0
      %1664 = vmatpush1.msra.mxu0 0.0
      %1665 = vmatprep.subr.mxu0 0.0
      %1666 = vmatpush1.msra.mxu0 0.0
      %1667 = vmatprep.subr.mxu0 0.0
      %1668 = vmatpush1.msra.mxu0 0.0
      %1669 = vmatprep.subr.mxu0 0.0
      %1670 = vmatpush1.msra.mxu0 0.0
      %1671 = vmatprep.subr.mxu0 0.0
      %1672 = vmatpush1.msra.mxu0 0.0
      %1673 = vmatprep.subr.mxu0 0.0
      %1674 = vmatpush1.msra.mxu0 0.0
      %1675 = vmatprep.subr.mxu0 0.0
      %1676 = vmatpush1.msra.mxu0 0.0
      %1677 = vmatprep.subr.mxu0 0.0
      %1678 = vmatpush1.msra.mxu0 0.0
      %1679 = vmatprep.subr.mxu0 0.0
      %1680 = vmatpush1.msra.mxu0 0.0
      %1681 = vmatprep.subr.mxu0 0.0
      %1682 = vmatpush1.msra.mxu0 0.0
      %1683 = vmatprep.subr.mxu0 0.0
      %1684 = vmatpush1.msra.mxu0 0.0
      %1685 = vmatprep.mubr.f32.mxu0 0.0
      %1686 = vmatmul.mubr.f32.gmra.mrb[0].mxu0 %v1294
      %v1687 = vpop.f32.mrb[0].mxu0
      %v1688 = vadd.f32 0.0, %v1687
      %v1689 = vpop.f32.mrb[0].mxu0
      %1690 = vmatprep.mubr.f32.mxu0 0.0
      %1691 = vmatmul.mubr.f32.gmra.mrb[0].mxu0 %v1297
      %v1692 = vpop.f32.mrb[0].mxu0
      %v1693 = vadd.f32 0.0, %v1692
      %v1694 = vpop.f32.mrb[0].mxu0
      %1695 = vmatprep.mubr.f32.mxu0 0.0
      %1696 = vmatmul.mubr.f32.gmra.mrb[0].mxu0 %v1300
      %v1697 = vpop.f32.mrb[0].mxu0
      %v1698 = vadd.f32 0.0, %v1697
      %v1699 = vpop.f32.mrb[0].mxu0
      %1700 = vmatprep.mubr.f32.mxu0 0.0
      %1701 = vmatmul.mubr.f32.gmra.mrb[0].mxu0 %v1303
      %v1702 = vpop.f32.mrb[0].mxu0
      %v1703 = vadd.f32 0.0, %v1702
      %v1704 = vpop.f32.mrb[0].mxu0
      %1705 = vmatprep.mubr.f32.mxu0 0.0
      %1706 = vmatmul.mubr.f32.gmra.mrb[0].mxu0 %v1306
      %v1707 = vpop.f32.mrb[0].mxu0
      %v1708 = vadd.f32 0.0, %v1707
      %v1709 = vpop.f32.mrb[0].mxu0
      %1710 = vmatprep.mubr.f32.mxu0 0.0
      %1711 = vmatmul.mubr.f32.gmra.mrb[0].mxu0 %v1309
      %v1712 = vpop.f32.mrb[0].mxu0
      %v1713 = vadd.f32 0.0, %v1712
      %v1714 = vpop.f32.mrb[0].mxu0
      %1715 = vmatprep.mubr.f32.mxu0 0.0
      %1716 = vmatmul.mubr.f32.gmra.mrb[0].mxu0 %v1312
      %v1717 = vpop.f32.mrb[0].mxu0
      %v1718 = vadd.f32 0.0, %v1717
      %v1719 = vpop.f32.mrb[0].mxu0
      %1720 = vmatprep.mubr.f32.mxu0 0.0
      %1721 = vmatmul.mubr.f32.gmra.mrb[0].mxu0 %v1315
      %v1722 = vpop.f32.mrb[0].mxu0
      %v1723 = vadd.f32 0.0, %v1722
      %v1724 = vpop.f32.mrb[0].mxu0
      %1725 = vmatprep.mubr.f32.mxu0 0.0
      %1726 = vmatmul.mubr.f32.gmra.mrb[0].mxu0 %v1318
      %v1727 = vpop.f32.mrb[0].mxu0
      %v1728 = vadd.f32 0.0, %v1727
      %v1729 = vpop.f32.mrb[0].mxu0
      %1730 = vmatprep.mubr.f32.mxu0 0.0
      %1731 = vmatmul.mubr.f32.gmra.mrb[0].mxu0 %v1321
      %v1732 = vpop.f32.mrb[0].mxu0
      %v1733 = vadd.f32 0.0, %v1732
      %v1734 = vpop.f32.mrb[0].mxu0
      %1735 = vmatprep.mubr.f32.mxu0 0.0
      %1736 = vmatmul.mubr.f32.gmra.mrb[0].mxu0 %v1324
      %v1737 = vpop.f32.mrb[0].mxu0
      %v1738 = vadd.f32 0.0, %v1737
      %v1739 = vpop.f32.mrb[0].mxu0
      %1740 = vmatprep.mubr.f32.mxu0 0.0
      %1741 = vmatmul.mubr.f32.gmra.mrb[0].mxu0 %v1327
      %v1742 = vpop.f32.mrb[0].mxu0
      %v1743 = vadd.f32 0.0, %v1742
      %v1744 = vpop.f32.mrb[0].mxu0
      %1745 = vmatprep.mubr.f32.mxu0 0.0
      %1746 = vmatmul.mubr.f32.gmra.mrb[0].mxu0 %v1330
      %v1747 = vpop.f32.mrb[0].mxu0
      %v1748 = vadd.f32 0.0, %v1747
      %v1749 = vpop.f32.mrb[0].mxu0
      %1750 = vmatprep.mubr.f32.mxu0 0.0
      %1751 = vmatmul.mubr.f32.gmra.mrb[0].mxu0 %v1333
      %v1752 = vpop.f32.mrb[0].mxu0
      %v1753 = vadd.f32 0.0, %v1752
      %v1754 = vpop.f32.mrb[0].mxu0
      %1755 = vmatprep.mubr.f32.mxu0 0.0
      %1756 = vmatmul.mubr.f32.gmra.mrb[0].mxu0 %v1336
      %v1757 = vpop.f32.mrb[0].mxu0
      %v1758 = vadd.f32 0.0, %v1757
      %v1759 = vpop.f32.mrb[0].mxu0
      %1760 = vmatprep.mubr.f32.mxu0 0.0
      %1761 = vmatmul.mubr.f32.gmra.mrb[0].mxu0 %v1339
      %v1762 = vpop.f32.mrb[0].mxu0
      %v1763 = vadd.f32 0.0, %v1762
      %v1764 = vpop.f32.mrb[0].mxu0
      %1765 = vmatprep.mubr.f32.mxu0 0.0
      %1766 = vmatmul.mubr.f32.gmra.mrb[0].mxu0 %v1342
      %v1767 = vpop.f32.mrb[0].mxu0
      %v1768 = vadd.f32 0.0, %v1767
      %v1769 = vpop.f32.mrb[0].mxu0
      %1770 = vmatprep.mubr.f32.mxu0 0.0
      %1771 = vmatmul.mubr.f32.gmra.mrb[0].mxu0 %v1345
      %v1772 = vpop.f32.mrb[0].mxu0
      %v1773 = vadd.f32 0.0, %v1772
      %v1774 = vpop.f32.mrb[0].mxu0
      %1775 = vmatprep.mubr.f32.mxu0 0.0
      %1776 = vmatmul.mubr.f32.gmra.mrb[0].mxu0 %v1348
      %v1777 = vpop.f32.mrb[0].mxu0
      %v1778 = vadd.f32 0.0, %v1777
      %v1779 = vpop.f32.mrb[0].mxu0
      %1780 = vmatprep.mubr.f32.mxu0 0.0
      %1781 = vmatmul.mubr.f32.gmra.mrb[0].mxu0 %v1351
      %v1782 = vpop.f32.mrb[0].mxu0
      %v1783 = vadd.f32 0.0, %v1782
      %v1784 = vpop.f32.mrb[0].mxu0
      %1785 = vmatprep.mubr.f32.mxu0 0.0
      %1786 = vmatmul.mubr.f32.gmra.mrb[0].mxu0 %v1354
      %v1787 = vpop.f32.mrb[0].mxu0
      %v1788 = vadd.f32 0.0, %v1787
      %v1789 = vpop.f32.mrb[0].mxu0
      %1790 = vmatprep.mubr.f32.mxu0 0.0
      %1791 = vmatmul.mubr.f32.gmra.mrb[0].mxu0 %v1357
      %v1792 = vpop.f32.mrb[0].mxu0
      %v1793 = vadd.f32 0.0, %v1792
      %v1794 = vpop.f32.mrb[0].mxu0
      %1795 = vmatprep.mubr.f32.mxu0 0.0
      %1796 = vmatmul.mubr.f32.gmra.mrb[0].mxu0 %v1360
      %v1797 = vpop.f32.mrb[0].mxu0
      %v1798 = vadd.f32 0.0, %v1797
      %v1799 = vpop.f32.mrb[0].mxu0
      %1800 = vmatprep.mubr.f32.mxu0 0.0
      %1801 = vmatmul.mubr.f32.gmra.mrb[0].mxu0 %v1363
      %v1802 = vpop.f32.mrb[0].mxu0
      %v1803 = vadd.f32 0.0, %v1802
      %v1804 = vpop.f32.mrb[0].mxu0
      %1805 = vmatprep.mubr.f32.mxu0 0.0
      %1806 = vmatmul.mubr.f32.gmra.mrb[0].mxu0 %v1366
      %v1807 = vpop.f32.mrb[0].mxu0
      %v1808 = vadd.f32 0.0, %v1807
      %v1809 = vpop.f32.mrb[0].mxu0
      %1810 = vmatprep.mubr.f32.mxu0 0.0
      %1811 = vmatmul.mubr.f32.gmra.mrb[0].mxu0 %v1369
      %v1812 = vpop.f32.mrb[0].mxu0
      %v1813 = vadd.f32 0.0, %v1812
      %v1814 = vpop.f32.mrb[0].mxu0
      %1815 = vmatprep.mubr.f32.mxu0 0.0
      %1816 = vmatmul.mubr.f32.gmra.mrb[0].mxu0 %v1372
      %v1817 = vpop.f32.mrb[0].mxu0
      %v1818 = vadd.f32 0.0, %v1817
      %v1819 = vpop.f32.mrb[0].mxu0
      %1820 = vmatprep.mubr.f32.mxu0 0.0
      %1821 = vmatmul.mubr.f32.gmra.mrb[0].mxu0 %v1375
      %v1822 = vpop.f32.mrb[0].mxu0
      %v1823 = vadd.f32 0.0, %v1822
      %v1824 = vpop.f32.mrb[0].mxu0
      %1825 = vmatprep.mubr.f32.mxu0 0.0
      %1826 = vmatmul.mubr.f32.gmra.mrb[0].mxu0 %v1378
      %v1827 = vpop.f32.mrb[0].mxu0
      %v1828 = vadd.f32 0.0, %v1827
      %v1829 = vpop.f32.mrb[0].mxu0
      %1830 = vmatprep.mubr.f32.mxu0 0.0
      %1831 = vmatmul.mubr.f32.gmra.mrb[0].mxu0 %v1381
      %v1832 = vpop.f32.mrb[0].mxu0
      %v1833 = vadd.f32 0.0, %v1832
      %v1834 = vpop.f32.mrb[0].mxu0
      %1835 = vmatprep.mubr.f32.mxu0 0.0
      %1836 = vmatmul.mubr.f32.gmra.mrb[0].mxu0 %v1384
      %v1837 = vpop.f32.mrb[0].mxu0
      %v1838 = vadd.f32 0.0, %v1837
      %v1839 = vpop.f32.mrb[0].mxu0
      %1840 = vmatprep.mubr.f32.mxu0 0.0
      %1841 = vmatmul.mubr.f32.gmra.mrb[0].mxu0 %v1387
      %v1842 = vpop.f32.mrb[0].mxu0
      %v1843 = vadd.f32 0.0, %v1842
      %v1844 = vpop.f32.mrb[0].mxu0
      %1845 = vdwg.mxu0
      %v1847 = vlaneseq
      %v1848 = vshrl.u32 %v1847, 7
      %v1849 = vsub.s32 0, %v1848
      %v1850 = vrot.slane %v1208, %v1849
      %1852 = vmatprep.subr.mxu0 0.0
      %1853 = vmatpush1.msra.mxu0 %v1688
      %1854 = vmatprep.subr.mxu0 0.0
      %1855 = vmatpush1.msra.mxu0 %v1693
      %1856 = vmatprep.subr.mxu0 0.0
      %1857 = vmatpush1.msra.mxu0 %v1698
      %1858 = vmatprep.subr.mxu0 0.0
      %1859 = vmatpush1.msra.mxu0 %v1703
      %1860 = vmatprep.subr.mxu0 0.0
      %1861 = vmatpush1.msra.mxu0 %v1708
      %1862 = vmatprep.subr.mxu0 0.0
      %1863 = vmatpush1.msra.mxu0 %v1713
      %1864 = vmatprep.subr.mxu0 0.0
      %1865 = vmatpush1.msra.mxu0 %v1718
      %1866 = vmatprep.subr.mxu0 0.0
      %1867 = vmatpush1.msra.mxu0 %v1723
      %1868 = vmatprep.subr.mxu0 0.0
      %1869 = vmatpush1.msra.mxu0 %v1728
      %1870 = vmatprep.subr.mxu0 0.0
      %1871 = vmatpush1.msra.mxu0 %v1733
      %1872 = vmatprep.subr.mxu0 0.0
      %1873 = vmatpush1.msra.mxu0 %v1738
      %1874 = vmatprep.subr.mxu0 0.0
      %1875 = vmatpush1.msra.mxu0 %v1743
      %1876 = vmatprep.subr.mxu0 0.0
      %1877 = vmatpush1.msra.mxu0 %v1748
      %1878 = vmatprep.subr.mxu0 0.0
      %1879 = vmatpush1.msra.mxu0 %v1753
      %1880 = vmatprep.subr.mxu0 0.0
      %1881 = vmatpush1.msra.mxu0 %v1758
      %1882 = vmatprep.subr.mxu0 0.0
      %1883 = vmatpush1.msra.mxu0 %v1763
      %1884 = vmatprep.subr.mxu0 0.0
      %1885 = vmatpush1.msra.mxu0 %v1768
      %1886 = vmatprep.subr.mxu0 0.0
      %1887 = vmatpush1.msra.mxu0 %v1773
      %1888 = vmatprep.subr.mxu0 0.0
      %1889 = vmatpush1.msra.mxu0 %v1778
      %1890 = vmatprep.subr.mxu0 0.0
      %1891 = vmatpush1.msra.mxu0 %v1783
      %1892 = vmatprep.subr.mxu0 0.0
      %1893 = vmatpush1.msra.mxu0 %v1788
      %1894 = vmatprep.subr.mxu0 0.0
      %1895 = vmatpush1.msra.mxu0 %v1793
      %1896 = vmatprep.subr.mxu0 0.0
      %1897 = vmatpush1.msra.mxu0 %v1798
      %1898 = vmatprep.subr.mxu0 0.0
      %1899 = vmatpush1.msra.mxu0 %v1803
      %1900 = vmatprep.subr.mxu0 0.0
      %1901 = vmatpush1.msra.mxu0 %v1808
      %1902 = vmatprep.subr.mxu0 0.0
      %1903 = vmatpush1.msra.mxu0 %v1813
      %1904 = vmatprep.subr.mxu0 0.0
      %1905 = vmatpush1.msra.mxu0 %v1818
      %1906 = vmatprep.subr.mxu0 0.0
      %1907 = vmatpush1.msra.mxu0 %v1823
      %1908 = vmatprep.subr.mxu0 0.0
      %1909 = vmatpush1.msra.mxu0 %v1828
      %1910 = vmatprep.subr.mxu0 0.0
      %1911 = vmatpush1.msra.mxu0 %v1833
      %1912 = vmatprep.subr.mxu0 0.0
      %1913 = vmatpush1.msra.mxu0 %v1838
      %1914 = vmatprep.subr.mxu0 0.0
      %1915 = vmatpush1.msra.mxu0 %v1843
      %1916 = vmatprep.mubr.f32.mxu0 %v1144
      %1917 = vmatmul.mubr.f32.gmra.mrb[0].mxu0 %v1143
      %v1918 = vpop.f32.mrb[0].mxu0
      %v1919 = vadd.f32 %v1850, %v1918
      %v1920 = vpop.f32.mrb[0].mxu0
      %1921 = vmatprep.mubr.f32.mxu0 %v1146
      %1922 = vmatmul.mubr.f32.gmra.mrb[0].mxu0 %v1145
      %v1923 = vpop.f32.mrb[0].mxu0
      %v1924 = vadd.f32 %v1850, %v1923
      %v1925 = vpop.f32.mrb[0].mxu0
      %1926 = vmatprep.mubr.f32.mxu0 %v1148
      %1927 = vmatmul.mubr.f32.gmra.mrb[0].mxu0 %v1147
      %v1928 = vpop.f32.mrb[0].mxu0
      %v1929 = vadd.f32 %v1850, %v1928
      %v1930 = vpop.f32.mrb[0].mxu0
      %1931 = vmatprep.mubr.f32.mxu0 %v1150
      %1932 = vmatmul.mubr.f32.gmra.mrb[0].mxu0 %v1149
      %v1933 = vpop.f32.mrb[0].mxu0
      %v1934 = vadd.f32 %v1850, %v1933
      %v1935 = vpop.f32.mrb[0].mxu0
      %1936 = vmatprep.mubr.f32.mxu0 %v1152
      %1937 = vmatmul.mubr.f32.gmra.mrb[0].mxu0 %v1151
      %v1938 = vpop.f32.mrb[0].mxu0
      %v1939 = vadd.f32 %v1850, %v1938
      %v1940 = vpop.f32.mrb[0].mxu0
      %1941 = vmatprep.mubr.f32.mxu0 %v1154
      %1942 = vmatmul.mubr.f32.gmra.mrb[0].mxu0 %v1153
      %v1943 = vpop.f32.mrb[0].mxu0
      %v1944 = vadd.f32 %v1850, %v1943
      %v1945 = vpop.f32.mrb[0].mxu0
      %1946 = vmatprep.mubr.f32.mxu0 %v1156
      %1947 = vmatmul.mubr.f32.gmra.mrb[0].mxu0 %v1155
      %v1948 = vpop.f32.mrb[0].mxu0
      %v1949 = vadd.f32 %v1850, %v1948
      %v1950 = vpop.f32.mrb[0].mxu0
      %1951 = vmatprep.mubr.f32.mxu0 %v1158
      %1952 = vmatmul.mubr.f32.gmra.mrb[0].mxu0 %v1157
      %v1953 = vpop.f32.mrb[0].mxu0
      %v1954 = vadd.f32 %v1850, %v1953
      %v1955 = vpop.f32.mrb[0].mxu0
      %1956 = vmatprep.mubr.f32.mxu0 %v1160
      %1957 = vmatmul.mubr.f32.gmra.mrb[0].mxu0 %v1159
      %v1958 = vpop.f32.mrb[0].mxu0
      %v1959 = vadd.f32 %v1850, %v1958
      %v1960 = vpop.f32.mrb[0].mxu0
      %1961 = vmatprep.mubr.f32.mxu0 %v1162
      %1962 = vmatmul.mubr.f32.gmra.mrb[0].mxu0 %v1161
      %v1963 = vpop.f32.mrb[0].mxu0
      %v1964 = vadd.f32 %v1850, %v1963
      %v1965 = vpop.f32.mrb[0].mxu0
      %1966 = vmatprep.mubr.f32.mxu0 %v1164
      %1967 = vmatmul.mubr.f32.gmra.mrb[0].mxu0 %v1163
      %v1968 = vpop.f32.mrb[0].mxu0
      %v1969 = vadd.f32 %v1850, %v1968
      %v1970 = vpop.f32.mrb[0].mxu0
      %1971 = vmatprep.mubr.f32.mxu0 %v1166
      %1972 = vmatmul.mubr.f32.gmra.mrb[0].mxu0 %v1165
      %v1973 = vpop.f32.mrb[0].mxu0
      %v1974 = vadd.f32 %v1850, %v1973
      %v1975 = vpop.f32.mrb[0].mxu0
      %1976 = vmatprep.mubr.f32.mxu0 %v1168
      %1977 = vmatmul.mubr.f32.gmra.mrb[0].mxu0 %v1167
      %v1978 = vpop.f32.mrb[0].mxu0
      %v1979 = vadd.f32 %v1850, %v1978
      %v1980 = vpop.f32.mrb[0].mxu0
      %1981 = vmatprep.mubr.f32.mxu0 %v1170
      %1982 = vmatmul.mubr.f32.gmra.mrb[0].mxu0 %v1169
      %v1983 = vpop.f32.mrb[0].mxu0
      %v1984 = vadd.f32 %v1850, %v1983
      %v1985 = vpop.f32.mrb[0].mxu0
      %1986 = vmatprep.mubr.f32.mxu0 %v1172
      %1987 = vmatmul.mubr.f32.gmra.mrb[0].mxu0 %v1171
      %v1988 = vpop.f32.mrb[0].mxu0
      %v1989 = vadd.f32 %v1850, %v1988
      %v1990 = vpop.f32.mrb[0].mxu0
      %1991 = vmatprep.mubr.f32.mxu0 %v1174
      %1992 = vmatmul.mubr.f32.gmra.mrb[0].mxu0 %v1173
      %v1993 = vpop.f32.mrb[0].mxu0
      %v1994 = vadd.f32 %v1850, %v1993
      %v1995 = vpop.f32.mrb[0].mxu0
      %1996 = vmatprep.mubr.f32.mxu0 %v1176
      %1997 = vmatmul.mubr.f32.gmra.mrb[0].mxu0 %v1175
      %v1998 = vpop.f32.mrb[0].mxu0
      %v1999 = vadd.f32 %v1850, %v1998
      %v2000 = vpop.f32.mrb[0].mxu0
      %2001 = vmatprep.mubr.f32.mxu0 %v1178
      %2002 = vmatmul.mubr.f32.gmra.mrb[0].mxu0 %v1177
      %v2003 = vpop.f32.mrb[0].mxu0
      %v2004 = vadd.f32 %v1850, %v2003
      %v2005 = vpop.f32.mrb[0].mxu0
      %2006 = vmatprep.mubr.f32.mxu0 %v1180
      %2007 = vmatmul.mubr.f32.gmra.mrb[0].mxu0 %v1179
      %v2008 = vpop.f32.mrb[0].mxu0
      %v2009 = vadd.f32 %v1850, %v2008
      %v2010 = vpop.f32.mrb[0].mxu0
      %2011 = vmatprep.mubr.f32.mxu0 %v1182
      %2012 = vmatmul.mubr.f32.gmra.mrb[0].mxu0 %v1181
      %v2013 = vpop.f32.mrb[0].mxu0
      %v2014 = vadd.f32 %v1850, %v2013
      %v2015 = vpop.f32.mrb[0].mxu0
      %2016 = vmatprep.mubr.f32.mxu0 %v1184
      %2017 = vmatmul.mubr.f32.gmra.mrb[0].mxu0 %v1183
      %v2018 = vpop.f32.mrb[0].mxu0
      %v2019 = vadd.f32 %v1850, %v2018
      %v2020 = vpop.f32.mrb[0].mxu0
      %2021 = vmatprep.mubr.f32.mxu0 %v1186
      %2022 = vmatmul.mubr.f32.gmra.mrb[0].mxu0 %v1185
      %v2023 = vpop.f32.mrb[0].mxu0
      %v2024 = vadd.f32 %v1850, %v2023
      %v2025 = vpop.f32.mrb[0].mxu0
      %2026 = vmatprep.mubr.f32.mxu0 %v1188
      %2027 = vmatmul.mubr.f32.gmra.mrb[0].mxu0 %v1187
      %v2028 = vpop.f32.mrb[0].mxu0
      %v2029 = vadd.f32 %v1850, %v2028
      %v2030 = vpop.f32.mrb[0].mxu0
      %2031 = vmatprep.mubr.f32.mxu0 %v1190
      %2032 = vmatmul.mubr.f32.gmra.mrb[0].mxu0 %v1189
      %v2033 = vpop.f32.mrb[0].mxu0
      %v2034 = vadd.f32 %v1850, %v2033
      %v2035 = vpop.f32.mrb[0].mxu0
      %2036 = vmatprep.mubr.f32.mxu0 %v1192
      %2037 = vmatmul.mubr.f32.gmra.mrb[0].mxu0 %v1191
      %v2038 = vpop.f32.mrb[0].mxu0
      %v2039 = vadd.f32 %v1850, %v2038
      %v2040 = vpop.f32.mrb[0].mxu0
      %2041 = vmatprep.mubr.f32.mxu0 %v1194
      %2042 = vmatmul.mubr.f32.gmra.mrb[0].mxu0 %v1193
      %v2043 = vpop.f32.mrb[0].mxu0
      %v2044 = vadd.f32 %v1850, %v2043
      %v2045 = vpop.f32.mrb[0].mxu0
      %2046 = vmatprep.mubr.f32.mxu0 %v1196
      %2047 = vmatmul.mubr.f32.gmra.mrb[0].mxu0 %v1195
      %v2048 = vpop.f32.mrb[0].mxu0
      %v2049 = vadd.f32 %v1850, %v2048
      %v2050 = vpop.f32.mrb[0].mxu0
      %2051 = vmatprep.mubr.f32.mxu0 %v1198
      %2052 = vmatmul.mubr.f32.gmra.mrb[0].mxu0 %v1197
      %v2053 = vpop.f32.mrb[0].mxu0
      %v2054 = vadd.f32 %v1850, %v2053
      %v2055 = vpop.f32.mrb[0].mxu0
      %2056 = vmatprep.mubr.f32.mxu0 %v1200
      %2057 = vmatmul.mubr.f32.gmra.mrb[0].mxu0 %v1199
      %v2058 = vpop.f32.mrb[0].mxu0
      %v2059 = vadd.f32 %v1850, %v2058
      %v2060 = vpop.f32.mrb[0].mxu0
      %2061 = vmatprep.mubr.f32.mxu0 %v1202
      %2062 = vmatmul.mubr.f32.gmra.mrb[0].mxu0 %v1201
      %v2063 = vpop.f32.mrb[0].mxu0
      %v2064 = vadd.f32 %v1850, %v2063
      %v2065 = vpop.f32.mrb[0].mxu0
      %2066 = vmatprep.mubr.f32.mxu0 %v1204
      %2067 = vmatmul.mubr.f32.gmra.mrb[0].mxu0 %v1203
      %v2068 = vpop.f32.mrb[0].mxu0
      %v2069 = vadd.f32 %v1850, %v2068
      %v2070 = vpop.f32.mrb[0].mxu0
      %2071 = vmatprep.mubr.f32.mxu0 %v1206
      %2072 = vmatmul.mubr.f32.gmra.mrb[0].mxu0 %v1205
      %v2073 = vpop.f32.mrb[0].mxu0
      %v2074 = vadd.f32 %v1850, %v2073
      %v2075 = vpop.f32.mrb[0].mxu0
      %2076 = vdwg.mxu0
      %2104 = vrot.lane.b32.xlu0 0.0, 64
      %v2105 = vpop.permute.xlu0 %2104
      %2106 = vrot.lane.b32.xlu0 %v1919, 64
      %v2107 = vpop.permute.xlu0 %2106
      %2108 = vrot.lane.b32.xlu0 %v1924, 64
      %v2109 = vpop.permute.xlu0 %2108
      %2110 = vrot.lane.b32.xlu0 %v1929, 64
      %v2111 = vpop.permute.xlu0 %2110
      %2112 = vrot.lane.b32.xlu0 %v1934, 64
      %v2113 = vpop.permute.xlu0 %2112
      %2114 = vrot.lane.b32.xlu0 %v1939, 64
      %v2115 = vpop.permute.xlu0 %2114
      %2116 = vrot.lane.b32.xlu0 %v1944, 64
      %v2117 = vpop.permute.xlu0 %2116
      %2118 = vrot.lane.b32.xlu0 %v1949, 64
      %v2119 = vpop.permute.xlu0 %2118
      %2120 = vrot.lane.b32.xlu0 %v1954, 64
      %v2121 = vpop.permute.xlu0 %2120
      %2122 = vrot.lane.b32.xlu0 %v1959, 64
      %v2123 = vpop.permute.xlu0 %2122
      %2124 = vrot.lane.b32.xlu0 %v1964, 64
      %v2125 = vpop.permute.xlu0 %2124
      %2126 = vrot.lane.b32.xlu0 %v1969, 64
      %v2127 = vpop.permute.xlu0 %2126
      %2128 = vrot.lane.b32.xlu0 %v1974, 64
      %v2129 = vpop.permute.xlu0 %2128
      %2130 = vrot.lane.b32.xlu0 %v1979, 64
      %v2131 = vpop.permute.xlu0 %2130
      %2132 = vrot.lane.b32.xlu0 %v1984, 64
      %v2133 = vpop.permute.xlu0 %2132
      %2134 = vrot.lane.b32.xlu0 %v1989, 64
      %v2135 = vpop.permute.xlu0 %2134
      %2136 = vrot.lane.b32.xlu0 %v1994, 64
      %v2137 = vpop.permute.xlu0 %2136
      %2138 = vrot.lane.b32.xlu0 %v1999, 64
      %v2139 = vpop.permute.xlu0 %2138
      %2140 = vrot.lane.b32.xlu0 %v2004, 64
      %v2141 = vpop.permute.xlu0 %2140
      %2142 = vrot.lane.b32.xlu0 %v2009, 64
      %v2143 = vpop.permute.xlu0 %2142
      %2144 = vrot.lane.b32.xlu0 %v2014, 64
      %v2145 = vpop.permute.xlu0 %2144
      %2146 = vrot.lane.b32.xlu0 %v2019, 64
      %v2147 = vpop.permute.xlu0 %2146
      %2148 = vrot.lane.b32.xlu0 %v2024, 64
      %v2149 = vpop.permute.xlu0 %2148
      %2150 = vrot.lane.b32.xlu0 %v2029, 64
      %v2151 = vpop.permute.xlu0 %2150
      %2152 = vrot.lane.b32.xlu0 %v2034, 64
      %v2153 = vpop.permute.xlu0 %2152
      %2154 = vrot.lane.b32.xlu0 %v2039, 64
      %v2155 = vpop.permute.xlu0 %2154
      %2156 = vrot.lane.b32.xlu0 %v2044, 64
      %v2157 = vpop.permute.xlu0 %2156
      %2189 = vrot.lane.b32.xlu0 %v2049, 64
      %v2190 = vpop.permute.xlu0 %2189
      %2191 = vrot.lane.b32.xlu0 %v2054, 64
      %v2192 = vpop.permute.xlu0 %2191
      %2193 = vrot.lane.b32.xlu0 %v2059, 64
      %v2194 = vpop.permute.xlu0 %2193
      %2195 = vrot.lane.b32.xlu0 %v2064, 64
      %v2196 = vpop.permute.xlu0 %2195
      %2203 = vrot.lane.b32.xlu0 %v2069, 64
      %v2204 = vpop.permute.xlu0 %2203
      %2205 = vrot.lane.b32.xlu0 %v2074, 64
      %v2206 = vpop.permute.xlu0 %2205
      %vm2209 = vcmask 523264
      %v2210 = vsel %vm2209, 0.0, %v2105
      %v2211 = vsel %vm2209, 0.0, %v2107
      %v2212 = vsel %vm2209, 0.0, %v2109
      %v2213 = vsel %vm2209, %v1919, %v2111
      %v2214 = vsel %vm2209, %v1924, %v2113
      %v2215 = vsel %vm2209, %v1929, %v2115
      %v2216 = vsel %vm2209, %v1934, %v2117
      %v2217 = vsel %vm2209, %v1939, %v2119
      %v2218 = vsel %vm2209, %v1944, %v2121
      %v2219 = vsel %vm2209, %v1949, %v2123
      %v2220 = vsel %vm2209, %v1954, %v2125
      %v2221 = vsel %vm2209, %v1959, %v2127
      %v2222 = vsel %vm2209, %v1964, %v2129
      %v2223 = vsel %vm2209, %v1969, %v2131
      %v2224 = vsel %vm2209, %v1974, %v2133
      %v2225 = vsel %vm2209, %v1979, %v2135
      %v2226 = vsel %vm2209, %v1984, %v2137
      %v2227 = vsel %vm2209, %v1989, %v2139
      %v2228 = vsel %vm2209, %v1994, %v2141
      %v2229 = vsel %vm2209, %v1999, %v2143
      %v2230 = vsel %vm2209, %v2004, %v2145
      %v2231 = vsel %vm2209, %v2009, %v2147
      %v2232 = vsel %vm2209, %v2014, %v2149
      %v2233 = vsel %vm2209, %v2019, %v2151
      %v2234 = vsel %vm2209, %v2024, %v2153
      %v2235 = vsel %vm2209, %v2029, %v2155
      %v2236 = vsel %vm2209, %v2034, %v2157
      %v2237 = vsel %vm2209, %v2039, %v2190
      %v2238 = vsel %vm2209, %v2044, %v2192
      %v2239 = vsel %vm2209, %v2049, %v2194
      %v2240 = vsel %vm2209, %v2054, %v2196
      %v2241 = vsel %vm2209, %v2059, %v2204
      %v2242 = vsel %vm2209, %v2064, %v2206
      %v2243 = vsel %vm2209, %v2069, %v2105
      %v2244 = vsel %vm2209, %v2074, %v2105
      %v2246 = vlaneseq
      %v2247 = vshrl.u32 %v2246, 7
      %v2248 = vsub.s32 0, %v2247
      %v2249 = vrot.slane %v1281, %v2248
      %v2251 = vsel %vm2209, %v1959, 0
      %v2253 = vsel %vm2209, %v1964, 0
      %v2255 = vsel %vm2209, %v1969, 0
      %v2257 = vsel %vm2209, %v1974, 0
      %v2259 = vsel %vm2209, %v1979, 0
      %v2261 = vsel %vm2209, %v1984, 0
      %v2263 = vsel %vm2209, %v1989, 0
      %v2265 = vsel %vm2209, %v1994, 0
      %v2267 = vsel %vm2209, %v1999, 0
      %v2269 = vsel %vm2209, %v2004, 0
      %v2271 = vsel %vm2209, %v2009, 0
      %v2273 = vsel %vm2209, %v2014, 0
      %v2275 = vsel %vm2209, %v2019, 0
      %v2277 = vsel %vm2209, %v2024, 0
      %v2279 = vsel %vm2209, %v2029, 0
      %v2281 = vsel %vm2209, %v2034, 0
      %v2283 = vsel %vm2209, %v2039, 0
      %v2285 = vsel %vm2209, %v2044, 0
      %v2287 = vsel %vm2209, %v2049, 0
      %v2289 = vsel %vm2209, %v2054, 0
      %v2291 = vsel %vm2209, %v2059, 0
      %v2293 = vsel %vm2209, %v2064, 0
      %v2295 = vsel %vm2209, %v2069, 0
      %v2297 = vsel %vm2209, %v2074, 0
      %v2299 = vsel %vm2209, 0.0, 0
      %2301 = vmatprep.subr.mxu0 0.0
      %2302 = vmatpush1.msra.mxu0 %v1209
      %2303 = vmatprep.subr.mxu0 0.0
      %2304 = vmatpush1.msra.mxu0 %v1210
      %2305 = vmatprep.subr.mxu0 0.0
      %2306 = vmatpush1.msra.mxu0 %v1211
      %2307 = vmatprep.subr.mxu0 0.0
      %2308 = vmatpush1.msra.mxu0 %v1212
      %2309 = vmatprep.subr.mxu0 0.0
      %2310 = vmatpush1.msra.mxu0 %v1213
      %2311 = vmatprep.subr.mxu0 0.0
      %2312 = vmatpush1.msra.mxu0 %v1214
      %2313 = vmatprep.subr.mxu0 0.0
      %2314 = vmatpush1.msra.mxu0 %v1215
      %2315 = vmatprep.subr.mxu0 0.0
      %2316 = vmatpush1.msra.mxu0 %v1216
      %2317 = vmatprep.subr.mxu0 0.0
      %2318 = vmatpush1.msra.mxu0 %v1217
      %2319 = vmatprep.subr.mxu0 0.0
      %2320 = vmatpush1.msra.mxu0 %v1218
      %2321 = vmatprep.subr.mxu0 0.0
      %2322 = vmatpush1.msra.mxu0 %v1219
      %2323 = vmatprep.subr.mxu0 0.0
      %2324 = vmatpush1.msra.mxu0 %v1220
      %2325 = vmatprep.subr.mxu0 0.0
      %2326 = vmatpush1.msra.mxu0 %v1221
      %2327 = vmatprep.subr.mxu0 0.0
      %2328 = vmatpush1.msra.mxu0 %v1222
      %2329 = vmatprep.subr.mxu0 0.0
      %2330 = vmatpush1.msra.mxu0 %v1223
      %2331 = vmatprep.subr.mxu0 0.0
      %2332 = vmatpush1.msra.mxu0 %v1224
      %2333 = vmatprep.subr.mxu0 0.0
      %2334 = vmatpush1.msra.mxu0 %v1225
      %2335 = vmatprep.subr.mxu0 0.0
      %2336 = vmatpush1.msra.mxu0 %v1226
      %2337 = vmatprep.subr.mxu0 0.0
      %2338 = vmatpush1.msra.mxu0 %v1227
      %2339 = vmatprep.subr.mxu0 0.0
      %2340 = vmatpush1.msra.mxu0 %v1228
      %2341 = vmatprep.subr.mxu0 0.0
      %2342 = vmatpush1.msra.mxu0 %v1229
      %2343 = vmatprep.subr.mxu0 0.0
      %2344 = vmatpush1.msra.mxu0 %v1230
      %2345 = vmatprep.subr.mxu0 0.0
      %2346 = vmatpush1.msra.mxu0 %v1231
      %2347 = vmatprep.subr.mxu0 0.0
      %2348 = vmatpush1.msra.mxu0 %v1232
      %2349 = vmatprep.subr.mxu0 0.0
      %2350 = vmatpush1.msra.mxu0 %v1233
      %2351 = vmatprep.subr.mxu0 0.0
      %2352 = vmatpush1.msra.mxu0 %v1234
      %2353 = vmatprep.subr.mxu0 0.0
      %2354 = vmatpush1.msra.mxu0 %v1235
      %2355 = vmatprep.subr.mxu0 0.0
      %2356 = vmatpush1.msra.mxu0 %v1236
      %2357 = vmatprep.subr.mxu0 0.0
      %2358 = vmatpush1.msra.mxu0 %v1237
      %2359 = vmatprep.subr.mxu0 0.0
      %2360 = vmatpush1.msra.mxu0 %v1238
      %2361 = vmatprep.subr.mxu0 0.0
      %2362 = vmatpush1.msra.mxu0 %v1239
      %2363 = vmatprep.subr.mxu0 0.0
      %2364 = vmatpush1.msra.mxu0 %v1240
      %2365 = vmatprep.mubr.f32.mxu0 %v2210
      %2366 = vmatmul.mubr.f32.gmra.mrb[0].mxu0 %v2210
      %v2367 = vpop.f32.mrb[0].mxu0
      %v2368 = vadd.f32 %v2249, %v2367
      %v2369 = vpop.f32.mrb[0].mxu0
      %2370 = vmatprep.mubr.f32.mxu0 %v2210
      %2371 = vmatmul.mubr.f32.gmra.mrb[0].mxu0 %v2210
      %v2372 = vpop.f32.mrb[0].mxu0
      %v2373 = vadd.f32 %v2249, %v2372
      %v2374 = vpop.f32.mrb[0].mxu0
      %2375 = vmatprep.mubr.f32.mxu0 %v2211
      %2376 = vmatmul.mubr.f32.gmra.mrb[0].mxu0 %v2210
      %v2377 = vpop.f32.mrb[0].mxu0
      %v2378 = vadd.f32 %v2249, %v2377
      %v2379 = vpop.f32.mrb[0].mxu0
      %2380 = vmatprep.mubr.f32.mxu0 %v2212
      %2381 = vmatmul.mubr.f32.gmra.mrb[0].mxu0 %v2210
      %v2382 = vpop.f32.mrb[0].mxu0
      %v2383 = vadd.f32 %v2249, %v2382
      %v2384 = vpop.f32.mrb[0].mxu0
      %2385 = vmatprep.mubr.f32.mxu0 %v2213
      %2386 = vmatmul.mubr.f32.gmra.mrb[0].mxu0 %v2210
      %v2387 = vpop.f32.mrb[0].mxu0
      %v2388 = vadd.f32 %v2249, %v2387
      %v2389 = vpop.f32.mrb[0].mxu0
      %2390 = vmatprep.mubr.f32.mxu0 %v2214
      %2391 = vmatmul.mubr.f32.gmra.mrb[0].mxu0 %v2210
      %v2392 = vpop.f32.mrb[0].mxu0
      %v2393 = vadd.f32 %v2249, %v2392
      %v2394 = vpop.f32.mrb[0].mxu0
      %2395 = vmatprep.mubr.f32.mxu0 %v2215
      %2396 = vmatmul.mubr.f32.gmra.mrb[0].mxu0 %v2211
      %v2397 = vpop.f32.mrb[0].mxu0
      %v2398 = vadd.f32 %v2249, %v2397
      %v2399 = vpop.f32.mrb[0].mxu0
      %2400 = vmatprep.mubr.f32.mxu0 %v2216
      %2401 = vmatmul.mubr.f32.gmra.mrb[0].mxu0 %v2212
      %v2402 = vpop.f32.mrb[0].mxu0
      %v2403 = vadd.f32 %v2249, %v2402
      %v2404 = vpop.f32.mrb[0].mxu0
      %2405 = vmatprep.mubr.f32.mxu0 %v2217
      %2406 = vmatmul.mubr.f32.gmra.mrb[0].mxu0 %v2213
      %v2407 = vpop.f32.mrb[0].mxu0
      %v2408 = vadd.f32 %v2249, %v2407
      %v2409 = vpop.f32.mrb[0].mxu0
      %2410 = vmatprep.mubr.f32.mxu0 %v2218
      %2411 = vmatmul.mubr.f32.gmra.mrb[0].mxu0 %v2214
      %v2412 = vpop.f32.mrb[0].mxu0
      %v2413 = vadd.f32 %v2249, %v2412
      %v2414 = vpop.f32.mrb[0].mxu0
      %2415 = vmatprep.mubr.f32.mxu0 %v2219
      %2416 = vmatmul.mubr.f32.gmra.mrb[0].mxu0 %v2215
      %v2417 = vpop.f32.mrb[0].mxu0
      %v2418 = vadd.f32 %v2249, %v2417
      %v2419 = vpop.f32.mrb[0].mxu0
      %2420 = vmatprep.mubr.f32.mxu0 %v2220
      %2421 = vmatmul.mubr.f32.gmra.mrb[0].mxu0 %v2216
      %v2422 = vpop.f32.mrb[0].mxu0
      %v2423 = vadd.f32 %v2249, %v2422
      %v2424 = vpop.f32.mrb[0].mxu0
      %2425 = vmatprep.mubr.f32.mxu0 %v2221
      %2426 = vmatmul.mubr.f32.gmra.mrb[0].mxu0 %v2217
      %v2427 = vpop.f32.mrb[0].mxu0
      %v2428 = vadd.f32 %v2249, %v2427
      %v2429 = vpop.f32.mrb[0].mxu0
      %2430 = vmatprep.mubr.f32.mxu0 %v2222
      %2431 = vmatmul.mubr.f32.gmra.mrb[0].mxu0 %v2218
      %v2432 = vpop.f32.mrb[0].mxu0
      %v2433 = vadd.f32 %v2249, %v2432
      %v2434 = vpop.f32.mrb[0].mxu0
      %2435 = vmatprep.mubr.f32.mxu0 %v2223
      %2436 = vmatmul.mubr.f32.gmra.mrb[0].mxu0 %v2219
      %v2437 = vpop.f32.mrb[0].mxu0
      %v2438 = vadd.f32 %v2249, %v2437
      %v2439 = vpop.f32.mrb[0].mxu0
      %2440 = vmatprep.mubr.f32.mxu0 %v2224
      %2441 = vmatmul.mubr.f32.gmra.mrb[0].mxu0 %v2220
      %v2442 = vpop.f32.mrb[0].mxu0
      %v2443 = vadd.f32 %v2249, %v2442
      %v2444 = vpop.f32.mrb[0].mxu0
      %2445 = vmatprep.mubr.f32.mxu0 %v2225
      %2446 = vmatmul.mubr.f32.gmra.mrb[0].mxu0 %v2221
      %v2447 = vpop.f32.mrb[0].mxu0
      %v2448 = vadd.f32 %v2249, %v2447
      %v2449 = vpop.f32.mrb[0].mxu0
      %2450 = vmatprep.mubr.f32.mxu0 %v2226
      %2451 = vmatmul.mubr.f32.gmra.mrb[0].mxu0 %v2222
      %v2452 = vpop.f32.mrb[0].mxu0
      %v2453 = vadd.f32 %v2249, %v2452
      %v2454 = vpop.f32.mrb[0].mxu0
      %2455 = vmatprep.mubr.f32.mxu0 %v2227
      %2456 = vmatmul.mubr.f32.gmra.mrb[0].mxu0 %v2223
      %v2457 = vpop.f32.mrb[0].mxu0
      %v2458 = vadd.f32 %v2249, %v2457
      %v2459 = vpop.f32.mrb[0].mxu0
      %2460 = vmatprep.mubr.f32.mxu0 %v2228
      %2461 = vmatmul.mubr.f32.gmra.mrb[0].mxu0 %v2224
      %v2462 = vpop.f32.mrb[0].mxu0
      %v2463 = vadd.f32 %v2249, %v2462
      %v2464 = vpop.f32.mrb[0].mxu0
      %2465 = vmatprep.mubr.f32.mxu0 %v2229
      %2466 = vmatmul.mubr.f32.gmra.mrb[0].mxu0 %v2225
      %v2467 = vpop.f32.mrb[0].mxu0
      %v2468 = vadd.f32 %v2249, %v2467
      %v2469 = vpop.f32.mrb[0].mxu0
      %2470 = vmatprep.mubr.f32.mxu0 %v2230
      %2471 = vmatmul.mubr.f32.gmra.mrb[0].mxu0 %v2226
      %v2472 = vpop.f32.mrb[0].mxu0
      %v2473 = vadd.f32 %v2249, %v2472
      %v2474 = vpop.f32.mrb[0].mxu0
      %2475 = vmatprep.mubr.f32.mxu0 %v2231
      %2476 = vmatmul.mubr.f32.gmra.mrb[0].mxu0 %v2227
      %v2477 = vpop.f32.mrb[0].mxu0
      %v2478 = vadd.f32 %v2249, %v2477
      %v2479 = vpop.f32.mrb[0].mxu0
      %2480 = vmatprep.mubr.f32.mxu0 %v2232
      %2481 = vmatmul.mubr.f32.gmra.mrb[0].mxu0 %v2228
      %v2482 = vpop.f32.mrb[0].mxu0
      %v2483 = vadd.f32 %v2249, %v2482
      %v2484 = vpop.f32.mrb[0].mxu0
      %2485 = vmatprep.mubr.f32.mxu0 %v2233
      %2486 = vmatmul.mubr.f32.gmra.mrb[0].mxu0 %v2229
      %v2487 = vpop.f32.mrb[0].mxu0
      %v2488 = vadd.f32 %v2249, %v2487
      %v2489 = vpop.f32.mrb[0].mxu0
      %2490 = vmatprep.mubr.f32.mxu0 %v2234
      %2491 = vmatmul.mubr.f32.gmra.mrb[0].mxu0 %v2230
      %v2492 = vpop.f32.mrb[0].mxu0
      %v2493 = vadd.f32 %v2249, %v2492
      %v2494 = vpop.f32.mrb[0].mxu0
      %2495 = vmatprep.mubr.f32.mxu0 %v2235
      %2496 = vmatmul.mubr.f32.gmra.mrb[0].mxu0 %v2231
      %v2497 = vpop.f32.mrb[0].mxu0
      %v2498 = vadd.f32 %v2249, %v2497
      %v2499 = vpop.f32.mrb[0].mxu0
      %2500 = vmatprep.mubr.f32.mxu0 %v2236
      %2501 = vmatmul.mubr.f32.gmra.mrb[0].mxu0 %v2232
      %v2502 = vpop.f32.mrb[0].mxu0
      %v2503 = vadd.f32 %v2249, %v2502
      %v2504 = vpop.f32.mrb[0].mxu0
      %2505 = vmatprep.mubr.f32.mxu0 %v2237
      %2506 = vmatmul.mubr.f32.gmra.mrb[0].mxu0 %v2233
      %v2507 = vpop.f32.mrb[0].mxu0
      %v2508 = vadd.f32 %v2249, %v2507
      %v2509 = vpop.f32.mrb[0].mxu0
      %2510 = vmatprep.mubr.f32.mxu0 %v2238
      %2511 = vmatmul.mubr.f32.gmra.mrb[0].mxu0 %v2234
      %v2512 = vpop.f32.mrb[0].mxu0
      %v2513 = vadd.f32 %v2249, %v2512
      %v2514 = vpop.f32.mrb[0].mxu0
      %2515 = vmatprep.mubr.f32.mxu0 %v2239
      %2516 = vmatmul.mubr.f32.gmra.mrb[0].mxu0 %v2235
      %v2517 = vpop.f32.mrb[0].mxu0
      %v2518 = vadd.f32 %v2249, %v2517
      %v2519 = vpop.f32.mrb[0].mxu0
      %2520 = vmatprep.mubr.f32.mxu0 %v2240
      %2521 = vmatmul.mubr.f32.gmra.mrb[0].mxu0 %v2236
      %v2522 = vpop.f32.mrb[0].mxu0
      %v2523 = vadd.f32 %v2249, %v2522
      %v2524 = vpop.f32.mrb[0].mxu0
      %2525 = vdwg.mxu0
      %2526 = vmatprep.subr.mxu0 0.0
      %2527 = vmatpush1.msra.mxu0 %v1241
      %2528 = vmatprep.subr.mxu0 0.0
      %2529 = vmatpush1.msra.mxu0 %v1242
      %2530 = vmatprep.subr.mxu0 0.0
      %2531 = vmatpush1.msra.mxu0 %v1243
      %2532 = vmatprep.subr.mxu0 0.0
      %2533 = vmatpush1.msra.mxu0 %v1244
      %2534 = vmatprep.subr.mxu0 0.0
      %2535 = vmatpush1.msra.mxu0 %v1245
      %2536 = vmatprep.subr.mxu0 0.0
      %2537 = vmatpush1.msra.mxu0 %v1246
      %2538 = vmatprep.subr.mxu0 0.0
      %2539 = vmatpush1.msra.mxu0 %v1247
      %2540 = vmatprep.subr.mxu0 0.0
      %2541 = vmatpush1.msra.mxu0 %v1248
      %2542 = vmatprep.subr.mxu0 0.0
      %2543 = vmatpush1.msra.mxu0 %v1249
      %2544 = vmatprep.subr.mxu0 0.0
      %2545 = vmatpush1.msra.mxu0 %v1250
      %2546 = vmatprep.subr.mxu0 0.0
      %2547 = vmatpush1.msra.mxu0 %v1251
      %2548 = vmatprep.subr.mxu0 0.0
      %2549 = vmatpush1.msra.mxu0 %v1252
      %2550 = vmatprep.subr.mxu0 0.0
      %2551 = vmatpush1.msra.mxu0 %v1253
      %2552 = vmatprep.subr.mxu0 0.0
      %2553 = vmatpush1.msra.mxu0 %v1254
      %2554 = vmatprep.subr.mxu0 0.0
      %2555 = vmatpush1.msra.mxu0 %v1255
      %2556 = vmatprep.subr.mxu0 0.0
      %2557 = vmatpush1.msra.mxu0 %v1256
      %2558 = vmatprep.subr.mxu0 0.0
      %2559 = vmatpush1.msra.mxu0 %v1257
      %2560 = vmatprep.subr.mxu0 0.0
      %2561 = vmatpush1.msra.mxu0 %v1258
      %2562 = vmatprep.subr.mxu0 0.0
      %2563 = vmatpush1.msra.mxu0 %v1259
      %2564 = vmatprep.subr.mxu0 0.0
      %2565 = vmatpush1.msra.mxu0 %v1260
      %2566 = vmatprep.subr.mxu0 0.0
      %2567 = vmatpush1.msra.mxu0 %v1261
      %2568 = vmatprep.subr.mxu0 0.0
      %2569 = vmatpush1.msra.mxu0 %v1262
      %2570 = vmatprep.subr.mxu0 0.0
      %2571 = vmatpush1.msra.mxu0 %v1263
      %2572 = vmatprep.subr.mxu0 0.0
      %2573 = vmatpush1.msra.mxu0 %v1264
      %2574 = vmatprep.subr.mxu0 0.0
      %2575 = vmatpush1.msra.mxu0 %v1265
      %2576 = vmatprep.subr.mxu0 0.0
      %2577 = vmatpush1.msra.mxu0 %v1266
      %2578 = vmatprep.subr.mxu0 0.0
      %2579 = vmatpush1.msra.mxu0 %v1267
      %2580 = vmatprep.subr.mxu0 0.0
      %2581 = vmatpush1.msra.mxu0 %v1268
      %2582 = vmatprep.subr.mxu0 0.0
      %2583 = vmatpush1.msra.mxu0 %v1269
      %2584 = vmatprep.subr.mxu0 0.0
      %2585 = vmatpush1.msra.mxu0 %v1270
      %2586 = vmatprep.subr.mxu0 0.0
      %2587 = vmatpush1.msra.mxu0 %v1271
      %2588 = vmatprep.subr.mxu0 0.0
      %2589 = vmatpush1.msra.mxu0 %v1272
      %2590 = vmatprep.mubr.f32.mxu0 %v2217
      %2591 = vmatmul.mubr.f32.gmra.mrb[0].mxu0 %v2213
      %v2592 = vpop.f32.mrb[0].mxu0
      %v2593 = vadd.f32 %v2368, %v2592
      %v2594 = vpop.f32.mrb[0].mxu0
      %2595 = vmatprep.mubr.f32.mxu0 %v2218
      %2596 = vmatmul.mubr.f32.gmra.mrb[0].mxu0 %v2214
      %v2597 = vpop.f32.mrb[0].mxu0
      %v2598 = vadd.f32 %v2373, %v2597
      %v2599 = vpop.f32.mrb[0].mxu0
      %2600 = vmatprep.mubr.f32.mxu0 %v2219
      %2601 = vmatmul.mubr.f32.gmra.mrb[0].mxu0 %v2215
      %v2602 = vpop.f32.mrb[0].mxu0
      %v2603 = vadd.f32 %v2378, %v2602
      %v2604 = vpop.f32.mrb[0].mxu0
      %2605 = vmatprep.mubr.f32.mxu0 %v2220
      %2606 = vmatmul.mubr.f32.gmra.mrb[0].mxu0 %v2216
      %v2607 = vpop.f32.mrb[0].mxu0
      %v2608 = vadd.f32 %v2383, %v2607
      %v2609 = vpop.f32.mrb[0].mxu0
      %2610 = vmatprep.mubr.f32.mxu0 %v2221
      %2611 = vmatmul.mubr.f32.gmra.mrb[0].mxu0 %v2217
      %v2612 = vpop.f32.mrb[0].mxu0
      %v2613 = vadd.f32 %v2388, %v2612
      %v2614 = vpop.f32.mrb[0].mxu0
      %2615 = vmatprep.mubr.f32.mxu0 %v2222
      %2616 = vmatmul.mubr.f32.gmra.mrb[0].mxu0 %v2218
      %v2617 = vpop.f32.mrb[0].mxu0
      %v2618 = vadd.f32 %v2393, %v2617
      %v2619 = vpop.f32.mrb[0].mxu0
      %2620 = vmatprep.mubr.f32.mxu0 %v2223
      %2621 = vmatmul.mubr.f32.gmra.mrb[0].mxu0 %v2219
      %v2622 = vpop.f32.mrb[0].mxu0
      %v2623 = vadd.f32 %v2398, %v2622
      %v2624 = vpop.f32.mrb[0].mxu0
      %2625 = vmatprep.mubr.f32.mxu0 %v2224
      %2626 = vmatmul.mubr.f32.gmra.mrb[0].mxu0 %v2220
      %v2627 = vpop.f32.mrb[0].mxu0
      %v2628 = vadd.f32 %v2403, %v2627
      %v2629 = vpop.f32.mrb[0].mxu0
      %2630 = vmatprep.mubr.f32.mxu0 %v2225
      %2631 = vmatmul.mubr.f32.gmra.mrb[0].mxu0 %v2221
      %v2632 = vpop.f32.mrb[0].mxu0
      %v2633 = vadd.f32 %v2408, %v2632
      %v2634 = vpop.f32.mrb[0].mxu0
      %2635 = vmatprep.mubr.f32.mxu0 %v2226
      %2636 = vmatmul.mubr.f32.gmra.mrb[0].mxu0 %v2222
      %v2637 = vpop.f32.mrb[0].mxu0
      %v2638 = vadd.f32 %v2413, %v2637
      %v2639 = vpop.f32.mrb[0].mxu0
      %2640 = vmatprep.mubr.f32.mxu0 %v2227
      %2641 = vmatmul.mubr.f32.gmra.mrb[0].mxu0 %v2223
      %v2642 = vpop.f32.mrb[0].mxu0
      %v2643 = vadd.f32 %v2418, %v2642
      %v2644 = vpop.f32.mrb[0].mxu0
      %2645 = vmatprep.mubr.f32.mxu0 %v2228
      %2646 = vmatmul.mubr.f32.gmra.mrb[0].mxu0 %v2224
      %v2647 = vpop.f32.mrb[0].mxu0
      %v2648 = vadd.f32 %v2423, %v2647
      %v2649 = vpop.f32.mrb[0].mxu0
      %2650 = vmatprep.mubr.f32.mxu0 %v2229
      %2651 = vmatmul.mubr.f32.gmra.mrb[0].mxu0 %v2225
      %v2652 = vpop.f32.mrb[0].mxu0
      %v2653 = vadd.f32 %v2428, %v2652
      %v2654 = vpop.f32.mrb[0].mxu0
      %2655 = vmatprep.mubr.f32.mxu0 %v2230
      %2656 = vmatmul.mubr.f32.gmra.mrb[0].mxu0 %v2226
      %v2657 = vpop.f32.mrb[0].mxu0
      %v2658 = vadd.f32 %v2433, %v2657
      %v2659 = vpop.f32.mrb[0].mxu0
      %2660 = vmatprep.mubr.f32.mxu0 %v2231
      %2661 = vmatmul.mubr.f32.gmra.mrb[0].mxu0 %v2227
      %v2662 = vpop.f32.mrb[0].mxu0
      %v2663 = vadd.f32 %v2438, %v2662
      %v2664 = vpop.f32.mrb[0].mxu0
      %2665 = vmatprep.mubr.f32.mxu0 %v2232
      %2666 = vmatmul.mubr.f32.gmra.mrb[0].mxu0 %v2228
      %v2667 = vpop.f32.mrb[0].mxu0
      %v2668 = vadd.f32 %v2443, %v2667
      %v2669 = vpop.f32.mrb[0].mxu0
      %2670 = vmatprep.mubr.f32.mxu0 %v2233
      %2671 = vmatmul.mubr.f32.gmra.mrb[0].mxu0 %v2229
      %v2672 = vpop.f32.mrb[0].mxu0
      %v2673 = vadd.f32 %v2448, %v2672
      %v2674 = vpop.f32.mrb[0].mxu0
      %2675 = vmatprep.mubr.f32.mxu0 %v2234
      %2676 = vmatmul.mubr.f32.gmra.mrb[0].mxu0 %v2230
      %v2677 = vpop.f32.mrb[0].mxu0
      %v2678 = vadd.f32 %v2453, %v2677
      %v2679 = vpop.f32.mrb[0].mxu0
      %2680 = vmatprep.mubr.f32.mxu0 %v2235
      %2681 = vmatmul.mubr.f32.gmra.mrb[0].mxu0 %v2231
      %v2682 = vpop.f32.mrb[0].mxu0
      %v2683 = vadd.f32 %v2458, %v2682
      %v2684 = vpop.f32.mrb[0].mxu0
      %2685 = vmatprep.mubr.f32.mxu0 %v2236
      %2686 = vmatmul.mubr.f32.gmra.mrb[0].mxu0 %v2232
      %v2687 = vpop.f32.mrb[0].mxu0
      %v2688 = vadd.f32 %v2463, %v2687
      %v2689 = vpop.f32.mrb[0].mxu0
      %2690 = vmatprep.mubr.f32.mxu0 %v2237
      %2691 = vmatmul.mubr.f32.gmra.mrb[0].mxu0 %v2233
      %v2692 = vpop.f32.mrb[0].mxu0
      %v2693 = vadd.f32 %v2468, %v2692
      %v2694 = vpop.f32.mrb[0].mxu0
      %2695 = vmatprep.mubr.f32.mxu0 %v2238
      %2696 = vmatmul.mubr.f32.gmra.mrb[0].mxu0 %v2234
      %v2697 = vpop.f32.mrb[0].mxu0
      %v2698 = vadd.f32 %v2473, %v2697
      %v2699 = vpop.f32.mrb[0].mxu0
      %2700 = vmatprep.mubr.f32.mxu0 %v2239
      %2701 = vmatmul.mubr.f32.gmra.mrb[0].mxu0 %v2235
      %v2702 = vpop.f32.mrb[0].mxu0
      %v2703 = vadd.f32 %v2478, %v2702
      %v2704 = vpop.f32.mrb[0].mxu0
      %2705 = vmatprep.mubr.f32.mxu0 %v2240
      %2706 = vmatmul.mubr.f32.gmra.mrb[0].mxu0 %v2236
      %v2707 = vpop.f32.mrb[0].mxu0
      %v2708 = vadd.f32 %v2483, %v2707
      %v2709 = vpop.f32.mrb[0].mxu0
      %2710 = vmatprep.mubr.f32.mxu0 %v2241
      %2711 = vmatmul.mubr.f32.gmra.mrb[0].mxu0 %v2237
      %v2712 = vpop.f32.mrb[0].mxu0
      %v2713 = vadd.f32 %v2488, %v2712
      %v2714 = vpop.f32.mrb[0].mxu0
      %2715 = vmatprep.mubr.f32.mxu0 %v2242
      %2716 = vmatmul.mubr.f32.gmra.mrb[0].mxu0 %v2238
      %v2717 = vpop.f32.mrb[0].mxu0
      %v2718 = vadd.f32 %v2493, %v2717
      %v2719 = vpop.f32.mrb[0].mxu0
      %2720 = vmatprep.mubr.f32.mxu0 %v2243
      %2721 = vmatmul.mubr.f32.gmra.mrb[0].mxu0 %v2239
      %v2722 = vpop.f32.mrb[0].mxu0
      %v2723 = vadd.f32 %v2498, %v2722
      %v2724 = vpop.f32.mrb[0].mxu0
      %2725 = vmatprep.mubr.f32.mxu0 %v2244
      %2726 = vmatmul.mubr.f32.gmra.mrb[0].mxu0 %v2240
      %v2727 = vpop.f32.mrb[0].mxu0
      %v2728 = vadd.f32 %v2503, %v2727
      %v2729 = vpop.f32.mrb[0].mxu0
      %2730 = vmatprep.mubr.f32.mxu0 %v2210
      %2731 = vmatmul.mubr.f32.gmra.mrb[0].mxu0 %v2241
      %v2732 = vpop.f32.mrb[0].mxu0
      %v2733 = vadd.f32 %v2508, %v2732
      %v2734 = vpop.f32.mrb[0].mxu0
      %2735 = vmatprep.mubr.f32.mxu0 %v2210
      %2736 = vmatmul.mubr.f32.gmra.mrb[0].mxu0 %v2242
      %v2737 = vpop.f32.mrb[0].mxu0
      %v2738 = vadd.f32 %v2513, %v2737
      %v2739 = vpop.f32.mrb[0].mxu0
      %2740 = vmatprep.mubr.f32.mxu0 %v2210
      %2741 = vmatmul.mubr.f32.gmra.mrb[0].mxu0 %v2243
      %v2742 = vpop.f32.mrb[0].mxu0
      %v2743 = vadd.f32 %v2518, %v2742
      %v2744 = vpop.f32.mrb[0].mxu0
      %2745 = vmatprep.mubr.f32.mxu0 %v2210
      %2746 = vmatmul.mubr.f32.gmra.mrb[0].mxu0 %v2244
      %v2747 = vpop.f32.mrb[0].mxu0
      %v2748 = vadd.f32 %v2523, %v2747
      %v2749 = vpop.f32.mrb[0].mxu0
      %2750 = vdwg.mxu0
      %2751 = vmatprep.subr.mxu0 0.0
      %2752 = vmatpush1.msra.mxu0 %v1273
      %2753 = vmatprep.subr.mxu0 0.0
      %2754 = vmatpush1.msra.mxu0 %v1274
      %2755 = vmatprep.subr.mxu0 0.0
      %2756 = vmatpush1.msra.mxu0 %v1275
      %2757 = vmatprep.subr.mxu0 0.0
      %2758 = vmatpush1.msra.mxu0 %v1276
      %2759 = vmatprep.subr.mxu0 0.0
      %2760 = vmatpush1.msra.mxu0 %v1277
      %2761 = vmatprep.subr.mxu0 0.0
      %2762 = vmatpush1.msra.mxu0 %v1278
      %2763 = vmatprep.subr.mxu0 0.0
      %2764 = vmatpush1.msra.mxu0 %v1279
      %2765 = vmatprep.subr.mxu0 0.0
      %2766 = vmatpush1.msra.mxu0 %v1280
      %2767 = vmatprep.subr.mxu0 0.0
      %2768 = vmatpush1.msra.mxu0 0.0
      %2769 = vmatprep.subr.mxu0 0.0
      %2770 = vmatpush1.msra.mxu0 0.0
      %2771 = vmatprep.subr.mxu0 0.0
      %2772 = vmatpush1.msra.mxu0 0.0
      %2773 = vmatprep.subr.mxu0 0.0
      %2774 = vmatpush1.msra.mxu0 0.0
      %2775 = vmatprep.subr.mxu0 0.0
      %2776 = vmatpush1.msra.mxu0 0.0
      %2777 = vmatprep.subr.mxu0 0.0
      %2778 = vmatpush1.msra.mxu0 0.0
      %2779 = vmatprep.subr.mxu0 0.0
      %2780 = vmatpush1.msra.mxu0 0.0
      %2781 = vmatprep.subr.mxu0 0.0
      %2782 = vmatpush1.msra.mxu0 0.0
      %2783 = vmatprep.subr.mxu0 0.0
      %2784 = vmatpush1.msra.mxu0 0.0
      %2785 = vmatprep.subr.mxu0 0.0
      %2786 = vmatpush1.msra.mxu0 0.0
      %2787 = vmatprep.subr.mxu0 0.0
      %2788 = vmatpush1.msra.mxu0 0.0
      %2789 = vmatprep.subr.mxu0 0.0
      %2790 = vmatpush1.msra.mxu0 0.0
      %2791 = vmatprep.subr.mxu0 0.0
      %2792 = vmatpush1.msra.mxu0 0.0
      %2793 = vmatprep.subr.mxu0 0.0
      %2794 = vmatpush1.msra.mxu0 0.0
      %2795 = vmatprep.subr.mxu0 0.0
      %2796 = vmatpush1.msra.mxu0 0.0
      %2797 = vmatprep.subr.mxu0 0.0
      %2798 = vmatpush1.msra.mxu0 0.0
      %2799 = vmatprep.subr.mxu0 0.0
      %2800 = vmatpush1.msra.mxu0 0.0
      %2801 = vmatprep.subr.mxu0 0.0
      %2802 = vmatpush1.msra.mxu0 0.0
      %2803 = vmatprep.subr.mxu0 0.0
      %2804 = vmatpush1.msra.mxu0 0.0
      %2805 = vmatprep.subr.mxu0 0.0
      %2806 = vmatpush1.msra.mxu0 0.0
      %2807 = vmatprep.subr.mxu0 0.0
      %2808 = vmatpush1.msra.mxu0 0.0
      %2809 = vmatprep.subr.mxu0 0.0
      %2810 = vmatpush1.msra.mxu0 0.0
      %2811 = vmatprep.subr.mxu0 0.0
      %2812 = vmatpush1.msra.mxu0 0.0
      %2813 = vmatprep.subr.mxu0 0.0
      %2814 = vmatpush1.msra.mxu0 0.0
      %2815 = vmatprep.mubr.f32.mxu0 0.0
      %2816 = vmatmul.mubr.f32.gmra.mrb[0].mxu0 %v2251
      %v2817 = vpop.f32.mrb[0].mxu0
      %v2818 = vadd.f32 %v2593, %v2817
      %v2819 = vpop.f32.mrb[0].mxu0
      %2820 = vmatprep.mubr.f32.mxu0 0.0
      %2821 = vmatmul.mubr.f32.gmra.mrb[0].mxu0 %v2253
      %v2822 = vpop.f32.mrb[0].mxu0
      %v2823 = vadd.f32 %v2598, %v2822
      %v2824 = vpop.f32.mrb[0].mxu0
      %2825 = vmatprep.mubr.f32.mxu0 0.0
      %2826 = vmatmul.mubr.f32.gmra.mrb[0].mxu0 %v2255
      %v2827 = vpop.f32.mrb[0].mxu0
      %v2828 = vadd.f32 %v2603, %v2827
      %v2829 = vpop.f32.mrb[0].mxu0
      %2830 = vmatprep.mubr.f32.mxu0 0.0
      %2831 = vmatmul.mubr.f32.gmra.mrb[0].mxu0 %v2257
      %v2832 = vpop.f32.mrb[0].mxu0
      %v2833 = vadd.f32 %v2608, %v2832
      %v2834 = vpop.f32.mrb[0].mxu0
      %2835 = vmatprep.mubr.f32.mxu0 0.0
      %2836 = vmatmul.mubr.f32.gmra.mrb[0].mxu0 %v2259
      %v2837 = vpop.f32.mrb[0].mxu0
      %v2838 = vadd.f32 %v2613, %v2837
      %v2839 = vpop.f32.mrb[0].mxu0
      %2840 = vmatprep.mubr.f32.mxu0 0.0
      %2841 = vmatmul.mubr.f32.gmra.mrb[0].mxu0 %v2261
      %v2842 = vpop.f32.mrb[0].mxu0
      %v2843 = vadd.f32 %v2618, %v2842
      %v2844 = vpop.f32.mrb[0].mxu0
      %2845 = vmatprep.mubr.f32.mxu0 0.0
      %2846 = vmatmul.mubr.f32.gmra.mrb[0].mxu0 %v2263
      %v2847 = vpop.f32.mrb[0].mxu0
      %v2848 = vadd.f32 %v2623, %v2847
      %v2849 = vpop.f32.mrb[0].mxu0
      %2850 = vmatprep.mubr.f32.mxu0 0.0
      %2851 = vmatmul.mubr.f32.gmra.mrb[0].mxu0 %v2265
      %v2852 = vpop.f32.mrb[0].mxu0
      %v2853 = vadd.f32 %v2628, %v2852
      %v2854 = vpop.f32.mrb[0].mxu0
      %2855 = vmatprep.mubr.f32.mxu0 0.0
      %2856 = vmatmul.mubr.f32.gmra.mrb[0].mxu0 %v2267
      %v2857 = vpop.f32.mrb[0].mxu0
      %v2858 = vadd.f32 %v2633, %v2857
      %v2859 = vpop.f32.mrb[0].mxu0
      %2860 = vmatprep.mubr.f32.mxu0 0.0
      %2861 = vmatmul.mubr.f32.gmra.mrb[0].mxu0 %v2269
      %v2862 = vpop.f32.mrb[0].mxu0
      %v2863 = vadd.f32 %v2638, %v2862
      %v2864 = vpop.f32.mrb[0].mxu0
      %2865 = vmatprep.mubr.f32.mxu0 0.0
      %2866 = vmatmul.mubr.f32.gmra.mrb[0].mxu0 %v2271
      %v2867 = vpop.f32.mrb[0].mxu0
      %v2868 = vadd.f32 %v2643, %v2867
      %v2869 = vpop.f32.mrb[0].mxu0
      %2870 = vmatprep.mubr.f32.mxu0 0.0
      %2871 = vmatmul.mubr.f32.gmra.mrb[0].mxu0 %v2273
      %v2872 = vpop.f32.mrb[0].mxu0
      %v2873 = vadd.f32 %v2648, %v2872
      %v2874 = vpop.f32.mrb[0].mxu0
      %2875 = vmatprep.mubr.f32.mxu0 0.0
      %2876 = vmatmul.mubr.f32.gmra.mrb[0].mxu0 %v2275
      %v2877 = vpop.f32.mrb[0].mxu0
      %v2878 = vadd.f32 %v2653, %v2877
      %v2879 = vpop.f32.mrb[0].mxu0
      %2880 = vmatprep.mubr.f32.mxu0 0.0
      %2881 = vmatmul.mubr.f32.gmra.mrb[0].mxu0 %v2277
      %v2882 = vpop.f32.mrb[0].mxu0
      %v2883 = vadd.f32 %v2658, %v2882
      %v2884 = vpop.f32.mrb[0].mxu0
      %2885 = vmatprep.mubr.f32.mxu0 0.0
      %2886 = vmatmul.mubr.f32.gmra.mrb[0].mxu0 %v2279
      %v2887 = vpop.f32.mrb[0].mxu0
      %v2888 = vadd.f32 %v2663, %v2887
      %v2889 = vpop.f32.mrb[0].mxu0
      %2890 = vmatprep.mubr.f32.mxu0 0.0
      %2891 = vmatmul.mubr.f32.gmra.mrb[0].mxu0 %v2281
      %v2892 = vpop.f32.mrb[0].mxu0
      %v2893 = vadd.f32 %v2668, %v2892
      %v2894 = vpop.f32.mrb[0].mxu0
      %2895 = vmatprep.mubr.f32.mxu0 0.0
      %2896 = vmatmul.mubr.f32.gmra.mrb[0].mxu0 %v2283
      %v2897 = vpop.f32.mrb[0].mxu0
      %v2898 = vadd.f32 %v2673, %v2897
      %v2899 = vpop.f32.mrb[0].mxu0
      %2900 = vmatprep.mubr.f32.mxu0 0.0
      %2901 = vmatmul.mubr.f32.gmra.mrb[0].mxu0 %v2285
      %v2902 = vpop.f32.mrb[0].mxu0
      %v2903 = vadd.f32 %v2678, %v2902
      %v2904 = vpop.f32.mrb[0].mxu0
      %2905 = vmatprep.mubr.f32.mxu0 0.0
      %2906 = vmatmul.mubr.f32.gmra.mrb[0].mxu0 %v2287
      %v2907 = vpop.f32.mrb[0].mxu0
      %v2908 = vadd.f32 %v2683, %v2907
      %v2909 = vpop.f32.mrb[0].mxu0
      %2910 = vmatprep.mubr.f32.mxu0 0.0
      %2911 = vmatmul.mubr.f32.gmra.mrb[0].mxu0 %v2289
      %v2912 = vpop.f32.mrb[0].mxu0
      %v2913 = vadd.f32 %v2688, %v2912
      %v2914 = vpop.f32.mrb[0].mxu0
      %2915 = vmatprep.mubr.f32.mxu0 0.0
      %2916 = vmatmul.mubr.f32.gmra.mrb[0].mxu0 %v2291
      %v2917 = vpop.f32.mrb[0].mxu0
      %v2918 = vadd.f32 %v2693, %v2917
      %v2919 = vpop.f32.mrb[0].mxu0
      %2920 = vmatprep.mubr.f32.mxu0 0.0
      %2921 = vmatmul.mubr.f32.gmra.mrb[0].mxu0 %v2293
      %v2922 = vpop.f32.mrb[0].mxu0
      %v2923 = vadd.f32 %v2698, %v2922
      %v2924 = vpop.f32.mrb[0].mxu0
      %2925 = vmatprep.mubr.f32.mxu0 0.0
      %2926 = vmatmul.mubr.f32.gmra.mrb[0].mxu0 %v2295
      %v2927 = vpop.f32.mrb[0].mxu0
      %v2928 = vadd.f32 %v2703, %v2927
      %v2929 = vpop.f32.mrb[0].mxu0
      %2930 = vmatprep.mubr.f32.mxu0 0.0
      %2931 = vmatmul.mubr.f32.gmra.mrb[0].mxu0 %v2297
      %v2932 = vpop.f32.mrb[0].mxu0
      %v2933 = vadd.f32 %v2708, %v2932
      %v2934 = vpop.f32.mrb[0].mxu0
      %2935 = vmatprep.mubr.f32.mxu0 0.0
      %2936 = vmatmul.mubr.f32.gmra.mrb[0].mxu0 %v2299
      %v2937 = vpop.f32.mrb[0].mxu0
      %v2938 = vadd.f32 %v2713, %v2937
      %v2939 = vpop.f32.mrb[0].mxu0
      %2940 = vmatprep.mubr.f32.mxu0 0.0
      %2941 = vmatmul.mubr.f32.gmra.mrb[0].mxu0 %v2299
      %v2942 = vpop.f32.mrb[0].mxu0
      %v2943 = vadd.f32 %v2718, %v2942
      %v2944 = vpop.f32.mrb[0].mxu0
      %2945 = vmatprep.mubr.f32.mxu0 0.0
      %2946 = vmatmul.mubr.f32.gmra.mrb[0].mxu0 %v2299
      %v2947 = vpop.f32.mrb[0].mxu0
      %v2948 = vadd.f32 %v2723, %v2947
      %v2949 = vpop.f32.mrb[0].mxu0
      %2950 = vmatprep.mubr.f32.mxu0 0.0
      %2951 = vmatmul.mubr.f32.gmra.mrb[0].mxu0 %v2299
      %v2952 = vpop.f32.mrb[0].mxu0
      %v2953 = vadd.f32 %v2728, %v2952
      %v2954 = vpop.f32.mrb[0].mxu0
      %2955 = vmatprep.mubr.f32.mxu0 0.0
      %2956 = vmatmul.mubr.f32.gmra.mrb[0].mxu0 %v2299
      %v2957 = vpop.f32.mrb[0].mxu0
      %v2958 = vadd.f32 %v2733, %v2957
      %v2959 = vpop.f32.mrb[0].mxu0
      %2960 = vmatprep.mubr.f32.mxu0 0.0
      %2961 = vmatmul.mubr.f32.gmra.mrb[0].mxu0 %v2299
      %v2962 = vpop.f32.mrb[0].mxu0
      %v2963 = vadd.f32 %v2738, %v2962
      %v2964 = vpop.f32.mrb[0].mxu0
      %2965 = vmatprep.mubr.f32.mxu0 0.0
      %2966 = vmatmul.mubr.f32.gmra.mrb[0].mxu0 %v2299
      %v2967 = vpop.f32.mrb[0].mxu0
      %v2968 = vadd.f32 %v2743, %v2967
      %v2969 = vpop.f32.mrb[0].mxu0
      %2970 = vmatprep.mubr.f32.mxu0 0.0
      %2971 = vmatmul.mubr.f32.gmra.mrb[0].mxu0 %v2299
      %v2972 = vpop.f32.mrb[0].mxu0
      %v2973 = vadd.f32 %v2748, %v2972
      %v2974 = vpop.f32.mrb[0].mxu0
      %2975 = vdwg.mxu0
      %v2977 = vlaneseq
      %v2978 = vshrl.u32 %v2977, 7
      %v2979 = vsub.s32 0, %v2978
      %v2980 = vrot.slane %v1282, %v2979
      %v2982 = vmul.f32 %v2818, %v2980
      %v2983 = vmul.f32 %v2823, %v2980
      %v2984 = vmul.f32 %v2828, %v2980
      %v2985 = vmul.f32 %v2833, %v2980
      %v2986 = vmul.f32 %v2838, %v2980
      %v2987 = vmul.f32 %v2843, %v2980
      %v2988 = vmul.f32 %v2848, %v2980
      %v2989 = vmul.f32 %v2853, %v2980
      %v2990 = vmul.f32 %v2858, %v2980
      %v2991 = vmul.f32 %v2863, %v2980
      %v2992 = vmul.f32 %v2868, %v2980
      %v2993 = vmul.f32 %v2873, %v2980
      %v2994 = vmul.f32 %v2878, %v2980
      %v2995 = vmul.f32 %v2883, %v2980
      %v2996 = vmul.f32 %v2888, %v2980
      %v2997 = vmul.f32 %v2893, %v2980
      %v2998 = vmul.f32 %v2898, %v2980
      %v2999 = vmul.f32 %v2903, %v2980
      %v3000 = vmul.f32 %v2908, %v2980
      %v3001 = vmul.f32 %v2913, %v2980
      %v3002 = vmul.f32 %v2918, %v2980
      %v3003 = vmul.f32 %v2923, %v2980
      %v3004 = vmul.f32 %v2928, %v2980
      %v3005 = vmul.f32 %v2933, %v2980
      %v3006 = vmul.f32 %v2938, %v2980
      %v3007 = vmul.f32 %v2943, %v2980
      %v3008 = vmul.f32 %v2948, %v2980
      %v3009 = vmul.f32 %v2953, %v2980
      %v3010 = vmul.f32 %v2958, %v2980
      %v3011 = vmul.f32 %v2963, %v2980
      %v3012 = vmul.f32 %v2968, %v2980
      %v3013 = vmul.f32 %v2973, %v2980
      %v3015 = vlaneseq
      %v3016 = vshrl.u32 %v3015, 7
      %v3017 = vsub.s32 0, %v3016
      %v3018 = vrot.slane %v1283, %v3017
      %v3020 = vadd.f32 %v2982, %v3018
      %v3021 = vadd.f32 %v2983, %v3018
      %v3022 = vadd.f32 %v2984, %v3018
      %v3023 = vadd.f32 %v2985, %v3018
      %v3024 = vadd.f32 %v2986, %v3018
      %v3025 = vadd.f32 %v2987, %v3018
      %v3026 = vadd.f32 %v2988, %v3018
      %v3027 = vadd.f32 %v2989, %v3018
      %v3028 = vadd.f32 %v2990, %v3018
      %v3029 = vadd.f32 %v2991, %v3018
      %v3030 = vadd.f32 %v2992, %v3018
      %v3031 = vadd.f32 %v2993, %v3018
      %v3032 = vadd.f32 %v2994, %v3018
      %v3033 = vadd.f32 %v2995, %v3018
      %v3034 = vadd.f32 %v2996, %v3018
      %v3035 = vadd.f32 %v2997, %v3018
      %v3036 = vadd.f32 %v2998, %v3018
      %v3037 = vadd.f32 %v2999, %v3018
      %v3038 = vadd.f32 %v3000, %v3018
      %v3039 = vadd.f32 %v3001, %v3018
      %v3040 = vadd.f32 %v3002, %v3018
      %v3041 = vadd.f32 %v3003, %v3018
      %v3042 = vadd.f32 %v3004, %v3018
      %v3043 = vadd.f32 %v3005, %v3018
      %v3044 = vadd.f32 %v3006, %v3018
      %v3045 = vadd.f32 %v3007, %v3018
      %v3046 = vadd.f32 %v3008, %v3018
      %v3047 = vadd.f32 %v3009, %v3018
      %v3048 = vadd.f32 %v3010, %v3018
      %v3049 = vadd.f32 %v3011, %v3018
      %v3050 = vadd.f32 %v3012, %v3018
      %v3051 = vadd.f32 %v3013, %v3018
      %v3052 = vadd.f32 %v3020, %v1460
      %v3053 = vadd.f32 %v3021, %v1465
      %v3054 = vadd.f32 %v3022, %v1470
      %v3055 = vadd.f32 %v3023, %v1475
      %v3056 = vadd.f32 %v3024, %v1480
      %v3057 = vadd.f32 %v3025, %v1485
      %v3058 = vadd.f32 %v3026, %v1490
      %v3059 = vadd.f32 %v3027, %v1495
      %v3060 = vadd.f32 %v3028, %v1500
      %v3061 = vadd.f32 %v3029, %v1505
      %v3062 = vadd.f32 %v3030, %v1510
      %v3063 = vadd.f32 %v3031, %v1515
      %v3064 = vadd.f32 %v3032, %v1520
      %v3065 = vadd.f32 %v3033, %v1525
      %v3066 = vadd.f32 %v3034, %v1530
      %v3067 = vadd.f32 %v3035, %v1535
      %v3068 = vadd.f32 %v3036, %v1540
      %v3069 = vadd.f32 %v3037, %v1545
      %v3070 = vadd.f32 %v3038, %v1550
      %v3071 = vadd.f32 %v3039, %v1555
      %v3072 = vadd.f32 %v3040, %v1560
      %v3073 = vadd.f32 %v3041, %v1565
      %v3074 = vadd.f32 %v3042, %v1570
      %v3075 = vadd.f32 %v3043, %v1575
      %v3076 = vadd.f32 %v3044, %v1580
      %v3077 = vadd.f32 %v3045, %v1585
      %v3078 = vadd.f32 %v3046, %v1590
      %v3079 = vadd.f32 %v3047, %v1595
      %v3080 = vadd.f32 %v3048, %v1600
      %v3081 = vadd.f32 %v3049, %v1605
      %v3082 = vadd.f32 %v3050, %v1610
      %v3083 = vadd.f32 %v3051, %v1615
      %v3084 = vmax.f32 %v3052, 0.0
      %v3085 = vmax.f32 %v3053, 0.0
      %v3086 = vmax.f32 %v3054, 0.0
      %v3087 = vmax.f32 %v3055, 0.0
      %v3088 = vmax.f32 %v3056, 0.0
      %v3089 = vmax.f32 %v3057, 0.0
      %v3090 = vmax.f32 %v3058, 0.0
      %v3091 = vmax.f32 %v3059, 0.0
      %v3092 = vmax.f32 %v3060, 0.0
      %v3093 = vmax.f32 %v3061, 0.0
      %v3094 = vmax.f32 %v3062, 0.0
      %v3095 = vmax.f32 %v3063, 0.0
      %v3096 = vmax.f32 %v3064, 0.0
      %v3097 = vmax.f32 %v3065, 0.0
      %v3098 = vmax.f32 %v3066, 0.0
      %v3099 = vmax.f32 %v3067, 0.0
      %v3100 = vmax.f32 %v3068, 0.0
      %v3101 = vmax.f32 %v3069, 0.0
      %v3102 = vmax.f32 %v3070, 0.0
      %v3103 = vmax.f32 %v3071, 0.0
      %v3104 = vmax.f32 %v3072, 0.0
      %v3105 = vmax.f32 %v3073, 0.0
      %v3106 = vmax.f32 %v3074, 0.0
      %v3107 = vmax.f32 %v3075, 0.0
      %v3108 = vmax.f32 %v3076, 0.0
      %v3109 = vmax.f32 %v3077, 0.0
      %v3110 = vmax.f32 %v3078, 0.0
      %v3111 = vmax.f32 %v3079, 0.0
      %v3112 = vmax.f32 %v3080, 0.0
      %v3113 = vmax.f32 %v3081, 0.0
      %v3114 = vmax.f32 %v3082, 0.0
      %v3115 = vmax.f32 %v3083, 0.0
      %v3116 = vld [vmem:[%s25] sm:$0xff]
      %v3117 = vld [vmem:[%s25 + $0x8] sm:$0xff]
      %v3118 = vld [vmem:[%s25 + $0x10] sm:$0xff]
      %v3119 = vld [vmem:[%s25 + $0x18] sm:$0xff]
      %v3120 = vld [vmem:[%s25 + $0x20] sm:$0xff]
      %v3121 = vld [vmem:[%s25 + $0x28] sm:$0xff]
      %v3122 = vld [vmem:[%s25 + $0x30] sm:$0xff]
      %v3123 = vld [vmem:[%s25 + $0x38] sm:$0xff]
      %v3124 = vld [vmem:[%s27] sm:$0x1]
      %v3125 = vld [vmem:[%s29] sm:$0xff]
      %v3126 = vld [vmem:[%s29 + $0x8] sm:$0xff]
      %v3127 = vld [vmem:[%s29 + $0x10] sm:$0xff]
      %v3128 = vld [vmem:[%s29 + $0x18] sm:$0xff]
      %v3129 = vld [vmem:[%s29 + $0x20] sm:$0xff]
      %v3130 = vld [vmem:[%s29 + $0x28] sm:$0xff]
      %v3131 = vld [vmem:[%s29 + $0x30] sm:$0xff]
      %v3132 = vld [vmem:[%s29 + $0x38] sm:$0xff]
      %v3133 = vld [vmem:[%s29 + $0x40] sm:$0xff]
      %v3134 = vld [vmem:[%s29 + $0x48] sm:$0xff]
      %v3135 = vld [vmem:[%s29 + $0x50] sm:$0xff]
      %v3136 = vld [vmem:[%s29 + $0x58] sm:$0xff]
      %v3137 = vld [vmem:[%s29 + $0x60] sm:$0xff]
      %v3138 = vld [vmem:[%s29 + $0x68] sm:$0xff]
      %v3139 = vld [vmem:[%s29 + $0x70] sm:$0xff]
      %v3140 = vld [vmem:[%s29 + $0x78] sm:$0xff]
      %v3141 = vld [vmem:[%s29 + $0x80] sm:$0xff]
      %v3142 = vld [vmem:[%s29 + $0x88] sm:$0xff]
      %v3143 = vld [vmem:[%s29 + $0x90] sm:$0xff]
      %v3144 = vld [vmem:[%s29 + $0x98] sm:$0xff]
      %v3145 = vld [vmem:[%s29 + $0xa0] sm:$0xff]
      %v3146 = vld [vmem:[%s29 + $0xa8] sm:$0xff]
      %v3147 = vld [vmem:[%s29 + $0xb0] sm:$0xff]
      %v3148 = vld [vmem:[%s29 + $0xb8] sm:$0xff]
      %v3149 = vld [vmem:[%s29 + $0xc0] sm:$0xff]
      %v3150 = vld [vmem:[%s29 + $0xc8] sm:$0xff]
      %v3151 = vld [vmem:[%s29 + $0xd0] sm:$0xff]
      %v3152 = vld [vmem:[%s29 + $0xd8] sm:$0xff]
      %v3153 = vld [vmem:[%s29 + $0xe0] sm:$0xff]
      %v3154 = vld [vmem:[%s29 + $0xe8] sm:$0xff]
      %v3155 = vld [vmem:[%s29 + $0xf0] sm:$0xff]
      %v3156 = vld [vmem:[%s29 + $0xf8] sm:$0xff]
      %v3157 = vld [vmem:[%s29 + $0x100] sm:$0xff]
      %v3158 = vld [vmem:[%s29 + $0x108] sm:$0xff]
      %v3159 = vld [vmem:[%s29 + $0x110] sm:$0xff]
      %v3160 = vld [vmem:[%s29 + $0x118] sm:$0xff]
      %v3161 = vld [vmem:[%s29 + $0x120] sm:$0xff]
      %v3162 = vld [vmem:[%s29 + $0x128] sm:$0xff]
      %v3163 = vld [vmem:[%s29 + $0x130] sm:$0xff]
      %v3164 = vld [vmem:[%s29 + $0x138] sm:$0xff]
      %v3165 = vld [vmem:[%s29 + $0x140] sm:$0xff]
      %v3166 = vld [vmem:[%s29 + $0x148] sm:$0xff]
      %v3167 = vld [vmem:[%s29 + $0x150] sm:$0xff]
      %v3168 = vld [vmem:[%s29 + $0x158] sm:$0xff]
      %v3169 = vld [vmem:[%s29 + $0x160] sm:$0xff]
      %v3170 = vld [vmem:[%s29 + $0x168] sm:$0xff]
      %v3171 = vld [vmem:[%s29 + $0x170] sm:$0xff]
      %v3172 = vld [vmem:[%s29 + $0x178] sm:$0xff]
      %v3173 = vld [vmem:[%s29 + $0x180] sm:$0xff]
      %v3174 = vld [vmem:[%s29 + $0x188] sm:$0xff]
      %v3175 = vld [vmem:[%s29 + $0x190] sm:$0xff]
      %v3176 = vld [vmem:[%s29 + $0x198] sm:$0xff]
      %v3177 = vld [vmem:[%s29 + $0x1a0] sm:$0xff]
      %v3178 = vld [vmem:[%s29 + $0x1a8] sm:$0xff]
      %v3179 = vld [vmem:[%s29 + $0x1b0] sm:$0xff]
      %v3180 = vld [vmem:[%s29 + $0x1b8] sm:$0xff]
      %v3181 = vld [vmem:[%s29 + $0x1c0] sm:$0xff]
      %v3182 = vld [vmem:[%s29 + $0x1c8] sm:$0xff]
      %v3183 = vld [vmem:[%s29 + $0x1d0] sm:$0xff]
      %v3184 = vld [vmem:[%s29 + $0x1d8] sm:$0xff]
      %v3185 = vld [vmem:[%s29 + $0x1e0] sm:$0xff]
      %v3186 = vld [vmem:[%s29 + $0x1e8] sm:$0xff]
      %v3187 = vld [vmem:[%s29 + $0x1f0] sm:$0xff]
      %v3188 = vld [vmem:[%s29 + $0x1f8] sm:$0xff]
      %v3189 = vld [vmem:[%s29 + $0x200] sm:$0xff]
      %v3190 = vld [vmem:[%s29 + $0x208] sm:$0xff]
      %v3191 = vld [vmem:[%s29 + $0x210] sm:$0xff]
      %v3192 = vld [vmem:[%s29 + $0x218] sm:$0xff]
      %v3193 = vld [vmem:[%s29 + $0x220] sm:$0xff]
      %v3194 = vld [vmem:[%s29 + $0x228] sm:$0xff]
      %v3195 = vld [vmem:[%s29 + $0x230] sm:$0xff]
      %v3196 = vld [vmem:[%s29 + $0x238] sm:$0xff]
      %v3197 = vld [vmem:[%s31] sm:$0x1]
      %v3198 = vld [vmem:[%s33] sm:$0x1]
      %v3199 = vld [vmem:[%s35] sm:$0x1]
      %v3201 = vsel %vm2209, %v3084, 0
      %v3204 = vsel %vm2209, %v3085, 0
      %v3207 = vsel %vm2209, %v3086, 0
      %v3210 = vsel %vm2209, %v3087, 0
      %v3213 = vsel %vm2209, %v3088, 0
      %v3216 = vsel %vm2209, %v3089, 0
      %v3219 = vsel %vm2209, %v3090, 0
      %v3222 = vsel %vm2209, %v3091, 0
      %v3225 = vsel %vm2209, %v3092, 0
      %v3228 = vsel %vm2209, %v3093, 0
      %v3231 = vsel %vm2209, %v3094, 0
      %v3234 = vsel %vm2209, %v3095, 0
      %v3237 = vsel %vm2209, %v3096, 0
      %v3240 = vsel %vm2209, %v3097, 0
      %v3243 = vsel %vm2209, %v3098, 0
      %v3246 = vsel %vm2209, %v3099, 0
      %v3249 = vsel %vm2209, %v3100, 0
      %v3252 = vsel %vm2209, %v3101, 0
      %v3255 = vsel %vm2209, %v3102, 0
      %v3258 = vsel %vm2209, %v3103, 0
      %v3261 = vsel %vm2209, %v3104, 0
      %v3264 = vsel %vm2209, %v3105, 0
      %v3267 = vsel %vm2209, %v3106, 0
      %v3270 = vsel %vm2209, %v3107, 0
      %v3273 = vsel %vm2209, %v3108, 0
      %v3276 = vsel %vm2209, %v3109, 0
      %v3279 = vsel %vm2209, %v3110, 0
      %v3282 = vsel %vm2209, %v3111, 0
      %v3285 = vsel %vm2209, %v3112, 0
      %v3288 = vsel %vm2209, %v3113, 0
      %v3291 = vsel %vm2209, %v3114, 0
      %v3294 = vsel %vm2209, %v3115, 0
      %3296 = vmatprep.subr.mxu0 0.0
      %3297 = vmatpush1.msra.mxu0 %v3116
      %3298 = vmatprep.subr.mxu0 0.0
      %3299 = vmatpush1.msra.mxu0 %v3117
      %3300 = vmatprep.subr.mxu0 0.0
      %3301 = vmatpush1.msra.mxu0 %v3118
      %3302 = vmatprep.subr.mxu0 0.0
      %3303 = vmatpush1.msra.mxu0 %v3119
      %3304 = vmatprep.subr.mxu0 0.0
      %3305 = vmatpush1.msra.mxu0 %v3120
      %3306 = vmatprep.subr.mxu0 0.0
      %3307 = vmatpush1.msra.mxu0 %v3121
      %3308 = vmatprep.subr.mxu0 0.0
      %3309 = vmatpush1.msra.mxu0 %v3122
      %3310 = vmatprep.subr.mxu0 0.0
      %3311 = vmatpush1.msra.mxu0 %v3123
      %3312 = vmatprep.subr.mxu0 0.0
      %3313 = vmatpush1.msra.mxu0 0.0
      %3314 = vmatprep.subr.mxu0 0.0
      %3315 = vmatpush1.msra.mxu0 0.0
      %3316 = vmatprep.subr.mxu0 0.0
      %3317 = vmatpush1.msra.mxu0 0.0
      %3318 = vmatprep.subr.mxu0 0.0
      %3319 = vmatpush1.msra.mxu0 0.0
      %3320 = vmatprep.subr.mxu0 0.0
      %3321 = vmatpush1.msra.mxu0 0.0
      %3322 = vmatprep.subr.mxu0 0.0
      %3323 = vmatpush1.msra.mxu0 0.0
      %3324 = vmatprep.subr.mxu0 0.0
      %3325 = vmatpush1.msra.mxu0 0.0
      %3326 = vmatprep.subr.mxu0 0.0
      %3327 = vmatpush1.msra.mxu0 0.0
      %3328 = vmatprep.subr.mxu0 0.0
      %3329 = vmatpush1.msra.mxu0 0.0
      %3330 = vmatprep.subr.mxu0 0.0
      %3331 = vmatpush1.msra.mxu0 0.0
      %3332 = vmatprep.subr.mxu0 0.0
      %3333 = vmatpush1.msra.mxu0 0.0
      %3334 = vmatprep.subr.mxu0 0.0
      %3335 = vmatpush1.msra.mxu0 0.0
      %3336 = vmatprep.subr.mxu0 0.0
      %3337 = vmatpush1.msra.mxu0 0.0
      %3338 = vmatprep.subr.mxu0 0.0
      %3339 = vmatpush1.msra.mxu0 0.0
      %3340 = vmatprep.subr.mxu0 0.0
      %3341 = vmatpush1.msra.mxu0 0.0
      %3342 = vmatprep.subr.mxu0 0.0
      %3343 = vmatpush1.msra.mxu0 0.0
      %3344 = vmatprep.subr.mxu0 0.0
      %3345 = vmatpush1.msra.mxu0 0.0
      %3346 = vmatprep.subr.mxu0 0.0
      %3347 = vmatpush1.msra.mxu0 0.0
      %3348 = vmatprep.subr.mxu0 0.0
      %3349 = vmatpush1.msra.mxu0 0.0
      %3350 = vmatprep.subr.mxu0 0.0
      %3351 = vmatpush1.msra.mxu0 0.0
      %3352 = vmatprep.subr.mxu0 0.0
      %3353 = vmatpush1.msra.mxu0 0.0
      %3354 = vmatprep.subr.mxu0 0.0
      %3355 = vmatpush1.msra.mxu0 0.0
      %3356 = vmatprep.subr.mxu0 0.0
      %3357 = vmatpush1.msra.mxu0 0.0
      %3358 = vmatprep.subr.mxu0 0.0
      %3359 = vmatpush1.msra.mxu0 0.0
      %3360 = vmatprep.mubr.f32.mxu0 0.0
      %3361 = vmatmul.mubr.f32.gmra.mrb[0].mxu0 %v3201
      %v3362 = vpop.f32.mrb[0].mxu0
      %v3363 = vadd.f32 0.0, %v3362
      %v3364 = vpop.f32.mrb[0].mxu0
      %3365 = vmatprep.mubr.f32.mxu0 0.0
      %3366 = vmatmul.mubr.f32.gmra.mrb[0].mxu0 %v3204
      %v3367 = vpop.f32.mrb[0].mxu0
      %v3368 = vadd.f32 0.0, %v3367
      %v3369 = vpop.f32.mrb[0].mxu0
      %3370 = vmatprep.mubr.f32.mxu0 0.0
      %3371 = vmatmul.mubr.f32.gmra.mrb[0].mxu0 %v3207
      %v3372 = vpop.f32.mrb[0].mxu0
      %v3373 = vadd.f32 0.0, %v3372
      %v3374 = vpop.f32.mrb[0].mxu0
      %3375 = vmatprep.mubr.f32.mxu0 0.0
      %3376 = vmatmul.mubr.f32.gmra.mrb[0].mxu0 %v3210
      %v3377 = vpop.f32.mrb[0].mxu0
      %v3378 = vadd.f32 0.0, %v3377
      %v3379 = vpop.f32.mrb[0].mxu0
      %3380 = vmatprep.mubr.f32.mxu0 0.0
      %3381 = vmatmul.mubr.f32.gmra.mrb[0].mxu0 %v3213
      %v3382 = vpop.f32.mrb[0].mxu0
      %v3383 = vadd.f32 0.0, %v3382
      %v3384 = vpop.f32.mrb[0].mxu0
      %3385 = vmatprep.mubr.f32.mxu0 0.0
      %3386 = vmatmul.mubr.f32.gmra.mrb[0].mxu0 %v3216
      %v3387 = vpop.f32.mrb[0].mxu0
      %v3388 = vadd.f32 0.0, %v3387
      %v3389 = vpop.f32.mrb[0].mxu0
      %3390 = vmatprep.mubr.f32.mxu0 0.0
      %3391 = vmatmul.mubr.f32.gmra.mrb[0].mxu0 %v3219
      %v3392 = vpop.f32.mrb[0].mxu0
      %v3393 = vadd.f32 0.0, %v3392
      %v3394 = vpop.f32.mrb[0].mxu0
      %3395 = vmatprep.mubr.f32.mxu0 0.0
      %3396 = vmatmul.mubr.f32.gmra.mrb[0].mxu0 %v3222
      %v3397 = vpop.f32.mrb[0].mxu0
      %v3398 = vadd.f32 0.0, %v3397
      %v3399 = vpop.f32.mrb[0].mxu0
      %3400 = vmatprep.mubr.f32.mxu0 0.0
      %3401 = vmatmul.mubr.f32.gmra.mrb[0].mxu0 %v3225
      %v3402 = vpop.f32.mrb[0].mxu0
      %v3403 = vadd.f32 0.0, %v3402
      %v3404 = vpop.f32.mrb[0].mxu0
      %3405 = vmatprep.mubr.f32.mxu0 0.0
      %3406 = vmatmul.mubr.f32.gmra.mrb[0].mxu0 %v3228
      %v3407 = vpop.f32.mrb[0].mxu0
      %v3408 = vadd.f32 0.0, %v3407
      %v3409 = vpop.f32.mrb[0].mxu0
      %3410 = vmatprep.mubr.f32.mxu0 0.0
      %3411 = vmatmul.mubr.f32.gmra.mrb[0].mxu0 %v3231
      %v3412 = vpop.f32.mrb[0].mxu0
      %v3413 = vadd.f32 0.0, %v3412
      %v3414 = vpop.f32.mrb[0].mxu0
      %3415 = vmatprep.mubr.f32.mxu0 0.0
      %3416 = vmatmul.mubr.f32.gmra.mrb[0].mxu0 %v3234
      %v3417 = vpop.f32.mrb[0].mxu0
      %v3418 = vadd.f32 0.0, %v3417
      %v3419 = vpop.f32.mrb[0].mxu0
      %3420 = vmatprep.mubr.f32.mxu0 0.0
      %3421 = vmatmul.mubr.f32.gmra.mrb[0].mxu0 %v3237
      %v3422 = vpop.f32.mrb[0].mxu0
      %v3423 = vadd.f32 0.0, %v3422
      %v3424 = vpop.f32.mrb[0].mxu0
      %3425 = vmatprep.mubr.f32.mxu0 0.0
      %3426 = vmatmul.mubr.f32.gmra.mrb[0].mxu0 %v3240
      %v3427 = vpop.f32.mrb[0].mxu0
      %v3428 = vadd.f32 0.0, %v3427
      %v3429 = vpop.f32.mrb[0].mxu0
      %3430 = vmatprep.mubr.f32.mxu0 0.0
      %3431 = vmatmul.mubr.f32.gmra.mrb[0].mxu0 %v3243
      %v3432 = vpop.f32.mrb[0].mxu0
      %v3433 = vadd.f32 0.0, %v3432
      %v3434 = vpop.f32.mrb[0].mxu0
      %3435 = vmatprep.mubr.f32.mxu0 0.0
      %3436 = vmatmul.mubr.f32.gmra.mrb[0].mxu0 %v3246
      %v3437 = vpop.f32.mrb[0].mxu0
      %v3438 = vadd.f32 0.0, %v3437
      %v3439 = vpop.f32.mrb[0].mxu0
      %3440 = vmatprep.mubr.f32.mxu0 0.0
      %3441 = vmatmul.mubr.f32.gmra.mrb[0].mxu0 %v3249
      %v3442 = vpop.f32.mrb[0].mxu0
      %v3443 = vadd.f32 0.0, %v3442
      %v3444 = vpop.f32.mrb[0].mxu0
      %3445 = vmatprep.mubr.f32.mxu0 0.0
      %3446 = vmatmul.mubr.f32.gmra.mrb[0].mxu0 %v3252
      %v3447 = vpop.f32.mrb[0].mxu0
      %v3448 = vadd.f32 0.0, %v3447
      %v3449 = vpop.f32.mrb[0].mxu0
      %3450 = vmatprep.mubr.f32.mxu0 0.0
      %3451 = vmatmul.mubr.f32.gmra.mrb[0].mxu0 %v3255
      %v3452 = vpop.f32.mrb[0].mxu0
      %v3453 = vadd.f32 0.0, %v3452
      %v3454 = vpop.f32.mrb[0].mxu0
      %3455 = vmatprep.mubr.f32.mxu0 0.0
      %3456 = vmatmul.mubr.f32.gmra.mrb[0].mxu0 %v3258
      %v3457 = vpop.f32.mrb[0].mxu0
      %v3458 = vadd.f32 0.0, %v3457
      %v3459 = vpop.f32.mrb[0].mxu0
      %3460 = vmatprep.mubr.f32.mxu0 0.0
      %3461 = vmatmul.mubr.f32.gmra.mrb[0].mxu0 %v3261
      %v3462 = vpop.f32.mrb[0].mxu0
      %v3463 = vadd.f32 0.0, %v3462
      %v3464 = vpop.f32.mrb[0].mxu0
      %3465 = vmatprep.mubr.f32.mxu0 0.0
      %3466 = vmatmul.mubr.f32.gmra.mrb[0].mxu0 %v3264
      %v3467 = vpop.f32.mrb[0].mxu0
      %v3468 = vadd.f32 0.0, %v3467
      %v3469 = vpop.f32.mrb[0].mxu0
      %3470 = vmatprep.mubr.f32.mxu0 0.0
      %3471 = vmatmul.mubr.f32.gmra.mrb[0].mxu0 %v3267
      %v3472 = vpop.f32.mrb[0].mxu0
      %v3473 = vadd.f32 0.0, %v3472
      %v3474 = vpop.f32.mrb[0].mxu0
      %3475 = vmatprep.mubr.f32.mxu0 0.0
      %3476 = vmatmul.mubr.f32.gmra.mrb[0].mxu0 %v3270
      %v3477 = vpop.f32.mrb[0].mxu0
      %v3478 = vadd.f32 0.0, %v3477
      %v3479 = vpop.f32.mrb[0].mxu0
      %3480 = vmatprep.mubr.f32.mxu0 0.0
      %3481 = vmatmul.mubr.f32.gmra.mrb[0].mxu0 %v3273
      %v3482 = vpop.f32.mrb[0].mxu0
      %v3483 = vadd.f32 0.0, %v3482
      %v3484 = vpop.f32.mrb[0].mxu0
      %3485 = vmatprep.mubr.f32.mxu0 0.0
      %3486 = vmatmul.mubr.f32.gmra.mrb[0].mxu0 %v3276
      %v3487 = vpop.f32.mrb[0].mxu0
      %v3488 = vadd.f32 0.0, %v3487
      %v3489 = vpop.f32.mrb[0].mxu0
      %3490 = vmatprep.mubr.f32.mxu0 0.0
      %3491 = vmatmul.mubr.f32.gmra.mrb[0].mxu0 %v3279
      %v3492 = vpop.f32.mrb[0].mxu0
      %v3493 = vadd.f32 0.0, %v3492
      %v3494 = vpop.f32.mrb[0].mxu0
      %3495 = vmatprep.mubr.f32.mxu0 0.0
      %3496 = vmatmul.mubr.f32.gmra.mrb[0].mxu0 %v3282
      %v3497 = vpop.f32.mrb[0].mxu0
      %v3498 = vadd.f32 0.0, %v3497
      %v3499 = vpop.f32.mrb[0].mxu0
      %3500 = vmatprep.mubr.f32.mxu0 0.0
      %3501 = vmatmul.mubr.f32.gmra.mrb[0].mxu0 %v3285
      %v3502 = vpop.f32.mrb[0].mxu0
      %v3503 = vadd.f32 0.0, %v3502
      %v3504 = vpop.f32.mrb[0].mxu0
      %3505 = vmatprep.mubr.f32.mxu0 0.0
      %3506 = vmatmul.mubr.f32.gmra.mrb[0].mxu0 %v3288
      %v3507 = vpop.f32.mrb[0].mxu0
      %v3508 = vadd.f32 0.0, %v3507
      %v3509 = vpop.f32.mrb[0].mxu0
      %3510 = vmatprep.mubr.f32.mxu0 0.0
      %3511 = vmatmul.mubr.f32.gmra.mrb[0].mxu0 %v3291
      %v3512 = vpop.f32.mrb[0].mxu0
      %v3513 = vadd.f32 0.0, %v3512
      %v3514 = vpop.f32.mrb[0].mxu0
      %3515 = vmatprep.mubr.f32.mxu0 0.0
      %3516 = vmatmul.mubr.f32.gmra.mrb[0].mxu0 %v3294
      %v3517 = vpop.f32.mrb[0].mxu0
      %v3518 = vadd.f32 0.0, %v3517
      %v3519 = vpop.f32.mrb[0].mxu0
      %3520 = vdwg.mxu0
      %v3522 = vlaneseq
      %v3523 = vshrl.u32 %v3522, 7
      %v3524 = vsub.s32 0, %v3523
      %v3525 = vrot.slane %v3124, %v3524
      %3527 = vmatprep.subr.mxu0 0.0
      %3528 = vmatpush1.msra.mxu0 %v3363
      %3529 = vmatprep.subr.mxu0 0.0
      %3530 = vmatpush1.msra.mxu0 %v3368
      %3531 = vmatprep.subr.mxu0 0.0
      %3532 = vmatpush1.msra.mxu0 %v3373
      %3533 = vmatprep.subr.mxu0 0.0
      %3534 = vmatpush1.msra.mxu0 %v3378
      %3535 = vmatprep.subr.mxu0 0.0
      %3536 = vmatpush1.msra.mxu0 %v3383
      %3537 = vmatprep.subr.mxu0 0.0
      %3538 = vmatpush1.msra.mxu0 %v3388
      %3539 = vmatprep.subr.mxu0 0.0
      %3540 = vmatpush1.msra.mxu0 %v3393
      %3541 = vmatprep.subr.mxu0 0.0
      %3542 = vmatpush1.msra.mxu0 %v3398
      %3543 = vmatprep.subr.mxu0 0.0
      %3544 = vmatpush1.msra.mxu0 %v3403
      %3545 = vmatprep.subr.mxu0 0.0
      %3546 = vmatpush1.msra.mxu0 %v3408
      %3547 = vmatprep.subr.mxu0 0.0
      %3548 = vmatpush1.msra.mxu0 %v3413
      %3549 = vmatprep.subr.mxu0 0.0
      %3550 = vmatpush1.msra.mxu0 %v3418
      %3551 = vmatprep.subr.mxu0 0.0
      %3552 = vmatpush1.msra.mxu0 %v3423
      %3553 = vmatprep.subr.mxu0 0.0
      %3554 = vmatpush1.msra.mxu0 %v3428
      %3555 = vmatprep.subr.mxu0 0.0
      %3556 = vmatpush1.msra.mxu0 %v3433
      %3557 = vmatprep.subr.mxu0 0.0
      %3558 = vmatpush1.msra.mxu0 %v3438
      %3559 = vmatprep.subr.mxu0 0.0
      %3560 = vmatpush1.msra.mxu0 %v3443
      %3561 = vmatprep.subr.mxu0 0.0
      %3562 = vmatpush1.msra.mxu0 %v3448
      %3563 = vmatprep.subr.mxu0 0.0
      %3564 = vmatpush1.msra.mxu0 %v3453
      %3565 = vmatprep.subr.mxu0 0.0
      %3566 = vmatpush1.msra.mxu0 %v3458
      %3567 = vmatprep.subr.mxu0 0.0
      %3568 = vmatpush1.msra.mxu0 %v3463
      %3569 = vmatprep.subr.mxu0 0.0
      %3570 = vmatpush1.msra.mxu0 %v3468
      %3571 = vmatprep.subr.mxu0 0.0
      %3572 = vmatpush1.msra.mxu0 %v3473
      %3573 = vmatprep.subr.mxu0 0.0
      %3574 = vmatpush1.msra.mxu0 %v3478
      %3575 = vmatprep.subr.mxu0 0.0
      %3576 = vmatpush1.msra.mxu0 %v3483
      %3577 = vmatprep.subr.mxu0 0.0
      %3578 = vmatpush1.msra.mxu0 %v3488
      %3579 = vmatprep.subr.mxu0 0.0
      %3580 = vmatpush1.msra.mxu0 %v3493
      %3581 = vmatprep.subr.mxu0 0.0
      %3582 = vmatpush1.msra.mxu0 %v3498
      %3583 = vmatprep.subr.mxu0 0.0
      %3584 = vmatpush1.msra.mxu0 %v3503
      %3585 = vmatprep.subr.mxu0 0.0
      %3586 = vmatpush1.msra.mxu0 %v3508
      %3587 = vmatprep.subr.mxu0 0.0
      %3588 = vmatpush1.msra.mxu0 %v3513
      %3589 = vmatprep.subr.mxu0 0.0
      %3590 = vmatpush1.msra.mxu0 %v3518
      %3591 = vmatprep.mubr.f32.mxu0 %v1144
      %3592 = vmatmul.mubr.f32.gmra.mrb[0].mxu0 %v1143
      %v3593 = vpop.f32.mrb[0].mxu0
      %v3594 = vadd.f32 %v3525, %v3593
      %v3595 = vpop.f32.mrb[0].mxu0
      %3596 = vmatprep.mubr.f32.mxu0 %v1146
      %3597 = vmatmul.mubr.f32.gmra.mrb[0].mxu0 %v1145
      %v3598 = vpop.f32.mrb[0].mxu0
      %v3599 = vadd.f32 %v3525, %v3598
      %v3600 = vpop.f32.mrb[0].mxu0
      %3601 = vmatprep.mubr.f32.mxu0 %v1148
      %3602 = vmatmul.mubr.f32.gmra.mrb[0].mxu0 %v1147
      %v3603 = vpop.f32.mrb[0].mxu0
      %v3604 = vadd.f32 %v3525, %v3603
      %v3605 = vpop.f32.mrb[0].mxu0
      %3606 = vmatprep.mubr.f32.mxu0 %v1150
      %3607 = vmatmul.mubr.f32.gmra.mrb[0].mxu0 %v1149
      %v3608 = vpop.f32.mrb[0].mxu0
      %v3609 = vadd.f32 %v3525, %v3608
      %v3610 = vpop.f32.mrb[0].mxu0
      %3611 = vmatprep.mubr.f32.mxu0 %v1152
      %3612 = vmatmul.mubr.f32.gmra.mrb[0].mxu0 %v1151
      %v3613 = vpop.f32.mrb[0].mxu0
      %v3614 = vadd.f32 %v3525, %v3613
      %v3615 = vpop.f32.mrb[0].mxu0
      %3616 = vmatprep.mubr.f32.mxu0 %v1154
      %3617 = vmatmul.mubr.f32.gmra.mrb[0].mxu0 %v1153
      %v3618 = vpop.f32.mrb[0].mxu0
      %v3619 = vadd.f32 %v3525, %v3618
      %v3620 = vpop.f32.mrb[0].mxu0
      %3621 = vmatprep.mubr.f32.mxu0 %v1156
      %3622 = vmatmul.mubr.f32.gmra.mrb[0].mxu0 %v1155
      %v3623 = vpop.f32.mrb[0].mxu0
      %v3624 = vadd.f32 %v3525, %v3623
      %v3625 = vpop.f32.mrb[0].mxu0
      %3626 = vmatprep.mubr.f32.mxu0 %v1158
      %3627 = vmatmul.mubr.f32.gmra.mrb[0].mxu0 %v1157
      %v3628 = vpop.f32.mrb[0].mxu0
      %v3629 = vadd.f32 %v3525, %v3628
      %v3630 = vpop.f32.mrb[0].mxu0
      %3631 = vmatprep.mubr.f32.mxu0 %v1160
      %3632 = vmatmul.mubr.f32.gmra.mrb[0].mxu0 %v1159
      %v3633 = vpop.f32.mrb[0].mxu0
      %v3634 = vadd.f32 %v3525, %v3633
      %v3635 = vpop.f32.mrb[0].mxu0
      %3636 = vmatprep.mubr.f32.mxu0 %v1162
      %3637 = vmatmul.mubr.f32.gmra.mrb[0].mxu0 %v1161
      %v3638 = vpop.f32.mrb[0].mxu0
      %v3639 = vadd.f32 %v3525, %v3638
      %v3640 = vpop.f32.mrb[0].mxu0
      %3641 = vmatprep.mubr.f32.mxu0 %v1164
      %3642 = vmatmul.mubr.f32.gmra.mrb[0].mxu0 %v1163
      %v3643 = vpop.f32.mrb[0].mxu0
      %v3644 = vadd.f32 %v3525, %v3643
      %v3645 = vpop.f32.mrb[0].mxu0
      %3646 = vmatprep.mubr.f32.mxu0 %v1166
      %3647 = vmatmul.mubr.f32.gmra.mrb[0].mxu0 %v1165
      %v3648 = vpop.f32.mrb[0].mxu0
      %v3649 = vadd.f32 %v3525, %v3648
      %v3650 = vpop.f32.mrb[0].mxu0
      %3651 = vmatprep.mubr.f32.mxu0 %v1168
      %3652 = vmatmul.mubr.f32.gmra.mrb[0].mxu0 %v1167
      %v3653 = vpop.f32.mrb[0].mxu0
      %v3654 = vadd.f32 %v3525, %v3653
      %v3655 = vpop.f32.mrb[0].mxu0
      %3656 = vmatprep.mubr.f32.mxu0 %v1170
      %3657 = vmatmul.mubr.f32.gmra.mrb[0].mxu0 %v1169
      %v3658 = vpop.f32.mrb[0].mxu0
      %v3659 = vadd.f32 %v3525, %v3658
      %v3660 = vpop.f32.mrb[0].mxu0
      %3661 = vmatprep.mubr.f32.mxu0 %v1172
      %3662 = vmatmul.mubr.f32.gmra.mrb[0].mxu0 %v1171
      %v3663 = vpop.f32.mrb[0].mxu0
      %v3664 = vadd.f32 %v3525, %v3663
      %v3665 = vpop.f32.mrb[0].mxu0
      %3666 = vmatprep.mubr.f32.mxu0 %v1174
      %3667 = vmatmul.mubr.f32.gmra.mrb[0].mxu0 %v1173
      %v3668 = vpop.f32.mrb[0].mxu0
      %v3669 = vadd.f32 %v3525, %v3668
      %v3670 = vpop.f32.mrb[0].mxu0
      %3671 = vmatprep.mubr.f32.mxu0 %v1176
      %3672 = vmatmul.mubr.f32.gmra.mrb[0].mxu0 %v1175
      %v3673 = vpop.f32.mrb[0].mxu0
      %v3674 = vadd.f32 %v3525, %v3673
      %v3675 = vpop.f32.mrb[0].mxu0
      %3676 = vmatprep.mubr.f32.mxu0 %v1178
      %3677 = vmatmul.mubr.f32.gmra.mrb[0].mxu0 %v1177
      %v3678 = vpop.f32.mrb[0].mxu0
      %v3679 = vadd.f32 %v3525, %v3678
      %v3680 = vpop.f32.mrb[0].mxu0
      %3681 = vmatprep.mubr.f32.mxu0 %v1180
      %3682 = vmatmul.mubr.f32.gmra.mrb[0].mxu0 %v1179
      %v3683 = vpop.f32.mrb[0].mxu0
      %v3684 = vadd.f32 %v3525, %v3683
      %v3685 = vpop.f32.mrb[0].mxu0
      %3686 = vmatprep.mubr.f32.mxu0 %v1182
      %3687 = vmatmul.mubr.f32.gmra.mrb[0].mxu0 %v1181
      %v3688 = vpop.f32.mrb[0].mxu0
      %v3689 = vadd.f32 %v3525, %v3688
      %v3690 = vpop.f32.mrb[0].mxu0
      %3691 = vmatprep.mubr.f32.mxu0 %v1184
      %3692 = vmatmul.mubr.f32.gmra.mrb[0].mxu0 %v1183
      %v3693 = vpop.f32.mrb[0].mxu0
      %v3694 = vadd.f32 %v3525, %v3693
      %v3695 = vpop.f32.mrb[0].mxu0
      %3696 = vmatprep.mubr.f32.mxu0 %v1186
      %3697 = vmatmul.mubr.f32.gmra.mrb[0].mxu0 %v1185
      %v3698 = vpop.f32.mrb[0].mxu0
      %v3699 = vadd.f32 %v3525, %v3698
      %v3700 = vpop.f32.mrb[0].mxu0
      %3701 = vmatprep.mubr.f32.mxu0 %v1188
      %3702 = vmatmul.mubr.f32.gmra.mrb[0].mxu0 %v1187
      %v3703 = vpop.f32.mrb[0].mxu0
      %v3704 = vadd.f32 %v3525, %v3703
      %v3705 = vpop.f32.mrb[0].mxu0
      %3706 = vmatprep.mubr.f32.mxu0 %v1190
      %3707 = vmatmul.mubr.f32.gmra.mrb[0].mxu0 %v1189
      %v3708 = vpop.f32.mrb[0].mxu0
      %v3709 = vadd.f32 %v3525, %v3708
      %v3710 = vpop.f32.mrb[0].mxu0
      %3711 = vmatprep.mubr.f32.mxu0 %v1192
      %3712 = vmatmul.mubr.f32.gmra.mrb[0].mxu0 %v1191
      %v3713 = vpop.f32.mrb[0].mxu0
      %v3714 = vadd.f32 %v3525, %v3713
      %v3715 = vpop.f32.mrb[0].mxu0
      %3716 = vmatprep.mubr.f32.mxu0 %v1194
      %3717 = vmatmul.mubr.f32.gmra.mrb[0].mxu0 %v1193
      %v3718 = vpop.f32.mrb[0].mxu0
      %v3719 = vadd.f32 %v3525, %v3718
      %v3720 = vpop.f32.mrb[0].mxu0
      %3721 = vmatprep.mubr.f32.mxu0 %v1196
      %3722 = vmatmul.mubr.f32.gmra.mrb[0].mxu0 %v1195
      %v3723 = vpop.f32.mrb[0].mxu0
      %v3724 = vadd.f32 %v3525, %v3723
      %v3725 = vpop.f32.mrb[0].mxu0
      %3726 = vmatprep.mubr.f32.mxu0 %v1198
      %3727 = vmatmul.mubr.f32.gmra.mrb[0].mxu0 %v1197
      %v3728 = vpop.f32.mrb[0].mxu0
      %v3729 = vadd.f32 %v3525, %v3728
      %v3730 = vpop.f32.mrb[0].mxu0
      %3731 = vmatprep.mubr.f32.mxu0 %v1200
      %3732 = vmatmul.mubr.f32.gmra.mrb[0].mxu0 %v1199
      %v3733 = vpop.f32.mrb[0].mxu0
      %v3734 = vadd.f32 %v3525, %v3733
      %v3735 = vpop.f32.mrb[0].mxu0
      %3736 = vmatprep.mubr.f32.mxu0 %v1202
      %3737 = vmatmul.mubr.f32.gmra.mrb[0].mxu0 %v1201
      %v3738 = vpop.f32.mrb[0].mxu0
      %v3739 = vadd.f32 %v3525, %v3738
      %v3740 = vpop.f32.mrb[0].mxu0
      %3741 = vmatprep.mubr.f32.mxu0 %v1204
      %3742 = vmatmul.mubr.f32.gmra.mrb[0].mxu0 %v1203
      %v3743 = vpop.f32.mrb[0].mxu0
      %v3744 = vadd.f32 %v3525, %v3743
      %v3745 = vpop.f32.mrb[0].mxu0
      %3746 = vmatprep.mubr.f32.mxu0 %v1206
      %3747 = vmatmul.mubr.f32.gmra.mrb[0].mxu0 %v1205
      %v3748 = vpop.f32.mrb[0].mxu0
      %v3749 = vadd.f32 %v3525, %v3748
      %v3750 = vpop.f32.mrb[0].mxu0
      %3751 = vdwg.mxu0
      %3778 = vrot.lane.b32.xlu0 %v3594, 64
      %v3779 = vpop.permute.xlu0 %3778
      %3780 = vrot.lane.b32.xlu0 %v3599, 64
      %v3781 = vpop.permute.xlu0 %3780
      %3782 = vrot.lane.b32.xlu0 %v3604, 64
      %v3783 = vpop.permute.xlu0 %3782
      %3784 = vrot.lane.b32.xlu0 %v3609, 64
      %v3785 = vpop.permute.xlu0 %3784
      %3786 = vrot.lane.b32.xlu0 %v3614, 64
      %v3787 = vpop.permute.xlu0 %3786
      %3788 = vrot.lane.b32.xlu0 %v3619, 64
      %v3789 = vpop.permute.xlu0 %3788
      %3790 = vrot.lane.b32.xlu0 %v3624, 64
      %v3791 = vpop.permute.xlu0 %3790
      %3792 = vrot.lane.b32.xlu0 %v3629, 64
      %v3793 = vpop.permute.xlu0 %3792
      %3794 = vrot.lane.b32.xlu0 %v3634, 64
      %v3795 = vpop.permute.xlu0 %3794
      %3796 = vrot.lane.b32.xlu0 %v3639, 64
      %v3797 = vpop.permute.xlu0 %3796
      %3798 = vrot.lane.b32.xlu0 %v3644, 64
      %v3799 = vpop.permute.xlu0 %3798
      %3800 = vrot.lane.b32.xlu0 %v3649, 64
      %v3801 = vpop.permute.xlu0 %3800
      %3802 = vrot.lane.b32.xlu0 %v3654, 64
      %v3803 = vpop.permute.xlu0 %3802
      %3804 = vrot.lane.b32.xlu0 %v3659, 64
      %v3805 = vpop.permute.xlu0 %3804
      %3806 = vrot.lane.b32.xlu0 %v3664, 64
      %v3807 = vpop.permute.xlu0 %3806
      %3808 = vrot.lane.b32.xlu0 %v3669, 64
      %v3809 = vpop.permute.xlu0 %3808
      %3810 = vrot.lane.b32.xlu0 %v3674, 64
      %v3811 = vpop.permute.xlu0 %3810
      %3812 = vrot.lane.b32.xlu0 %v3679, 64
      %v3813 = vpop.permute.xlu0 %3812
      %3814 = vrot.lane.b32.xlu0 %v3684, 64
      %v3815 = vpop.permute.xlu0 %3814
      %3816 = vrot.lane.b32.xlu0 %v3689, 64
      %v3817 = vpop.permute.xlu0 %3816
      %3818 = vrot.lane.b32.xlu0 %v3694, 64
      %v3819 = vpop.permute.xlu0 %3818
      %3820 = vrot.lane.b32.xlu0 %v3699, 64
      %v3821 = vpop.permute.xlu0 %3820
      %3822 = vrot.lane.b32.xlu0 %v3704, 64
      %v3823 = vpop.permute.xlu0 %3822
      %3824 = vrot.lane.b32.xlu0 %v3709, 64
      %v3825 = vpop.permute.xlu0 %3824
      %3826 = vrot.lane.b32.xlu0 %v3714, 64
      %v3827 = vpop.permute.xlu0 %3826
      %3828 = vrot.lane.b32.xlu0 %v3719, 64
      %v3829 = vpop.permute.xlu0 %3828
      %3860 = vrot.lane.b32.xlu0 %v3724, 64
      %v3861 = vpop.permute.xlu0 %3860
      %3862 = vrot.lane.b32.xlu0 %v3729, 64
      %v3863 = vpop.permute.xlu0 %3862
      %3864 = vrot.lane.b32.xlu0 %v3734, 64
      %v3865 = vpop.permute.xlu0 %3864
      %3866 = vrot.lane.b32.xlu0 %v3739, 64
      %v3867 = vpop.permute.xlu0 %3866
      %3874 = vrot.lane.b32.xlu0 %v3744, 64
      %v3875 = vpop.permute.xlu0 %3874
      %3876 = vrot.lane.b32.xlu0 %v3749, 64
      %v3877 = vpop.permute.xlu0 %3876
      %v3880 = vsel %vm2209, 0.0, %v3779
      %v3881 = vsel %vm2209, 0.0, %v3781
      %v3882 = vsel %vm2209, %v3594, %v3783
      %v3883 = vsel %vm2209, %v3599, %v3785
      %v3884 = vsel %vm2209, %v3604, %v3787
      %v3885 = vsel %vm2209, %v3609, %v3789
      %v3886 = vsel %vm2209, %v3614, %v3791
      %v3887 = vsel %vm2209, %v3619, %v3793
      %v3888 = vsel %vm2209, %v3624, %v3795
      %v3889 = vsel %vm2209, %v3629, %v3797
      %v3890 = vsel %vm2209, %v3634, %v3799
      %v3891 = vsel %vm2209, %v3639, %v3801
      %v3892 = vsel %vm2209, %v3644, %v3803
      %v3893 = vsel %vm2209, %v3649, %v3805
      %v3894 = vsel %vm2209, %v3654, %v3807
      %v3895 = vsel %vm2209, %v3659, %v3809
      %v3896 = vsel %vm2209, %v3664, %v3811
      %v3897 = vsel %vm2209, %v3669, %v3813
      %v3898 = vsel %vm2209, %v3674, %v3815
      %v3899 = vsel %vm2209, %v3679, %v3817
      %v3900 = vsel %vm2209, %v3684, %v3819
      %v3901 = vsel %vm2209, %v3689, %v3821
      %v3902 = vsel %vm2209, %v3694, %v3823
      %v3903 = vsel %vm2209, %v3699, %v3825
      %v3904 = vsel %vm2209, %v3704, %v3827
      %v3905 = vsel %vm2209, %v3709, %v3829
      %v3906 = vsel %vm2209, %v3714, %v3861
      %v3907 = vsel %vm2209, %v3719, %v3863
      %v3908 = vsel %vm2209, %v3724, %v3865
      %v3909 = vsel %vm2209, %v3729, %v3867
      %v3910 = vsel %vm2209, %v3734, %v3875
      %v3911 = vsel %vm2209, %v3739, %v3877
      %v3912 = vsel %vm2209, %v3744, %v2105
      %v3913 = vsel %vm2209, %v3749, %v2105
      %v3915 = vlaneseq
      %v3916 = vshrl.u32 %v3915, 7
      %v3917 = vsub.s32 0, %v3916
      %v3918 = vrot.slane %v3197, %v3917
      %v3920 = vsel %vm2209, %v3634, 0
      %v3922 = vsel %vm2209, %v3639, 0
      %v3924 = vsel %vm2209, %v3644, 0
      %v3926 = vsel %vm2209, %v3649, 0
      %v3928 = vsel %vm2209, %v3654, 0
      %v3930 = vsel %vm2209, %v3659, 0
      %v3932 = vsel %vm2209, %v3664, 0
      %v3934 = vsel %vm2209, %v3669, 0
      %v3936 = vsel %vm2209, %v3674, 0
      %v3938 = vsel %vm2209, %v3679, 0
      %v3940 = vsel %vm2209, %v3684, 0
      %v3942 = vsel %vm2209, %v3689, 0
      %v3944 = vsel %vm2209, %v3694, 0
      %v3946 = vsel %vm2209, %v3699, 0
      %v3948 = vsel %vm2209, %v3704, 0
      %v3950 = vsel %vm2209, %v3709, 0
      %v3952 = vsel %vm2209, %v3714, 0
      %v3954 = vsel %vm2209, %v3719, 0
      %v3956 = vsel %vm2209, %v3724, 0
      %v3958 = vsel %vm2209, %v3729, 0
      %v3960 = vsel %vm2209, %v3734, 0
      %v3962 = vsel %vm2209, %v3739, 0
      %v3964 = vsel %vm2209, %v3744, 0
      %v3966 = vsel %vm2209, %v3749, 0
      %3968 = vmatprep.subr.mxu0 0.0
      %3969 = vmatpush1.msra.mxu0 %v3125
      %3970 = vmatprep.subr.mxu0 0.0
      %3971 = vmatpush1.msra.mxu0 %v3126
      %3972 = vmatprep.subr.mxu0 0.0
      %3973 = vmatpush1.msra.mxu0 %v3127
      %3974 = vmatprep.subr.mxu0 0.0
      %3975 = vmatpush1.msra.mxu0 %v3128
      %3976 = vmatprep.subr.mxu0 0.0
      %3977 = vmatpush1.msra.mxu0 %v3129
      %3978 = vmatprep.subr.mxu0 0.0
      %3979 = vmatpush1.msra.mxu0 %v3130
      %3980 = vmatprep.subr.mxu0 0.0
      %3981 = vmatpush1.msra.mxu0 %v3131
      %3982 = vmatprep.subr.mxu0 0.0
      %3983 = vmatpush1.msra.mxu0 %v3132
      %3984 = vmatprep.subr.mxu0 0.0
      %3985 = vmatpush1.msra.mxu0 %v3133
      %3986 = vmatprep.subr.mxu0 0.0
      %3987 = vmatpush1.msra.mxu0 %v3134
      %3988 = vmatprep.subr.mxu0 0.0
      %3989 = vmatpush1.msra.mxu0 %v3135
      %3990 = vmatprep.subr.mxu0 0.0
      %3991 = vmatpush1.msra.mxu0 %v3136
      %3992 = vmatprep.subr.mxu0 0.0
      %3993 = vmatpush1.msra.mxu0 %v3137
      %3994 = vmatprep.subr.mxu0 0.0
      %3995 = vmatpush1.msra.mxu0 %v3138
      %3996 = vmatprep.subr.mxu0 0.0
      %3997 = vmatpush1.msra.mxu0 %v3139
      %3998 = vmatprep.subr.mxu0 0.0
      %3999 = vmatpush1.msra.mxu0 %v3140
      %4000 = vmatprep.subr.mxu0 0.0
      %4001 = vmatpush1.msra.mxu0 %v3141
      %4002 = vmatprep.subr.mxu0 0.0
      %4003 = vmatpush1.msra.mxu0 %v3142
      %4004 = vmatprep.subr.mxu0 0.0
      %4005 = vmatpush1.msra.mxu0 %v3143
      %4006 = vmatprep.subr.mxu0 0.0
      %4007 = vmatpush1.msra.mxu0 %v3144
      %4008 = vmatprep.subr.mxu0 0.0
      %4009 = vmatpush1.msra.mxu0 %v3145
      %4010 = vmatprep.subr.mxu0 0.0
      %4011 = vmatpush1.msra.mxu0 %v3146
      %4012 = vmatprep.subr.mxu0 0.0
      %4013 = vmatpush1.msra.mxu0 %v3147
      %4014 = vmatprep.subr.mxu0 0.0
      %4015 = vmatpush1.msra.mxu0 %v3148
      %4016 = vmatprep.subr.mxu0 0.0
      %4017 = vmatpush1.msra.mxu0 %v3149
      %4018 = vmatprep.subr.mxu0 0.0
      %4019 = vmatpush1.msra.mxu0 %v3150
      %4020 = vmatprep.subr.mxu0 0.0
      %4021 = vmatpush1.msra.mxu0 %v3151
      %4022 = vmatprep.subr.mxu0 0.0
      %4023 = vmatpush1.msra.mxu0 %v3152
      %4024 = vmatprep.subr.mxu0 0.0
      %4025 = vmatpush1.msra.mxu0 %v3153
      %4026 = vmatprep.subr.mxu0 0.0
      %4027 = vmatpush1.msra.mxu0 %v3154
      %4028 = vmatprep.subr.mxu0 0.0
      %4029 = vmatpush1.msra.mxu0 %v3155
      %4030 = vmatprep.subr.mxu0 0.0
      %4031 = vmatpush1.msra.mxu0 %v3156
      %4032 = vmatprep.mubr.f32.mxu0 %v2210
      %4033 = vmatmul.mubr.f32.gmra.mrb[0].mxu0 %v2210
      %v4034 = vpop.f32.mrb[0].mxu0
      %v4035 = vadd.f32 %v3918, %v4034
      %v4036 = vpop.f32.mrb[0].mxu0
      %4037 = vmatprep.mubr.f32.mxu0 %v2210
      %4038 = vmatmul.mubr.f32.gmra.mrb[0].mxu0 %v2210
      %v4039 = vpop.f32.mrb[0].mxu0
      %v4040 = vadd.f32 %v3918, %v4039
      %v4041 = vpop.f32.mrb[0].mxu0
      %4042 = vmatprep.mubr.f32.mxu0 %v3880
      %4043 = vmatmul.mubr.f32.gmra.mrb[0].mxu0 %v2210
      %v4044 = vpop.f32.mrb[0].mxu0
      %v4045 = vadd.f32 %v3918, %v4044
      %v4046 = vpop.f32.mrb[0].mxu0
      %4047 = vmatprep.mubr.f32.mxu0 %v3881
      %4048 = vmatmul.mubr.f32.gmra.mrb[0].mxu0 %v2210
      %v4049 = vpop.f32.mrb[0].mxu0
      %v4050 = vadd.f32 %v3918, %v4049
      %v4051 = vpop.f32.mrb[0].mxu0
      %4052 = vmatprep.mubr.f32.mxu0 %v3882
      %4053 = vmatmul.mubr.f32.gmra.mrb[0].mxu0 %v2210
      %v4054 = vpop.f32.mrb[0].mxu0
      %v4055 = vadd.f32 %v3918, %v4054
      %v4056 = vpop.f32.mrb[0].mxu0
      %4057 = vmatprep.mubr.f32.mxu0 %v3883
      %4058 = vmatmul.mubr.f32.gmra.mrb[0].mxu0 %v2210
      %v4059 = vpop.f32.mrb[0].mxu0
      %v4060 = vadd.f32 %v3918, %v4059
      %v4061 = vpop.f32.mrb[0].mxu0
      %4062 = vmatprep.mubr.f32.mxu0 %v3884
      %4063 = vmatmul.mubr.f32.gmra.mrb[0].mxu0 %v3880
      %v4064 = vpop.f32.mrb[0].mxu0
      %v4065 = vadd.f32 %v3918, %v4064
      %v4066 = vpop.f32.mrb[0].mxu0
      %4067 = vmatprep.mubr.f32.mxu0 %v3885
      %4068 = vmatmul.mubr.f32.gmra.mrb[0].mxu0 %v3881
      %v4069 = vpop.f32.mrb[0].mxu0
      %v4070 = vadd.f32 %v3918, %v4069
      %v4071 = vpop.f32.mrb[0].mxu0
      %4072 = vmatprep.mubr.f32.mxu0 %v3886
      %4073 = vmatmul.mubr.f32.gmra.mrb[0].mxu0 %v3882
      %v4074 = vpop.f32.mrb[0].mxu0
      %v4075 = vadd.f32 %v3918, %v4074
      %v4076 = vpop.f32.mrb[0].mxu0
      %4077 = vmatprep.mubr.f32.mxu0 %v3887
      %4078 = vmatmul.mubr.f32.gmra.mrb[0].mxu0 %v3883
      %v4079 = vpop.f32.mrb[0].mxu0
      %v4080 = vadd.f32 %v3918, %v4079
      %v4081 = vpop.f32.mrb[0].mxu0
      %4082 = vmatprep.mubr.f32.mxu0 %v3888
      %4083 = vmatmul.mubr.f32.gmra.mrb[0].mxu0 %v3884
      %v4084 = vpop.f32.mrb[0].mxu0
      %v4085 = vadd.f32 %v3918, %v4084
      %v4086 = vpop.f32.mrb[0].mxu0
      %4087 = vmatprep.mubr.f32.mxu0 %v3889
      %4088 = vmatmul.mubr.f32.gmra.mrb[0].mxu0 %v3885
      %v4089 = vpop.f32.mrb[0].mxu0
      %v4090 = vadd.f32 %v3918, %v4089
      %v4091 = vpop.f32.mrb[0].mxu0
      %4092 = vmatprep.mubr.f32.mxu0 %v3890
      %4093 = vmatmul.mubr.f32.gmra.mrb[0].mxu0 %v3886
      %v4094 = vpop.f32.mrb[0].mxu0
      %v4095 = vadd.f32 %v3918, %v4094
      %v4096 = vpop.f32.mrb[0].mxu0
      %4097 = vmatprep.mubr.f32.mxu0 %v3891
      %4098 = vmatmul.mubr.f32.gmra.mrb[0].mxu0 %v3887
      %v4099 = vpop.f32.mrb[0].mxu0
      %v4100 = vadd.f32 %v3918, %v4099
      %v4101 = vpop.f32.mrb[0].mxu0
      %4102 = vmatprep.mubr.f32.mxu0 %v3892
      %4103 = vmatmul.mubr.f32.gmra.mrb[0].mxu0 %v3888
      %v4104 = vpop.f32.mrb[0].mxu0
      %v4105 = vadd.f32 %v3918, %v4104
      %v4106 = vpop.f32.mrb[0].mxu0
      %4107 = vmatprep.mubr.f32.mxu0 %v3893
      %4108 = vmatmul.mubr.f32.gmra.mrb[0].mxu0 %v3889
      %v4109 = vpop.f32.mrb[0].mxu0
      %v4110 = vadd.f32 %v3918, %v4109
      %v4111 = vpop.f32.mrb[0].mxu0
      %4112 = vmatprep.mubr.f32.mxu0 %v3894
      %4113 = vmatmul.mubr.f32.gmra.mrb[0].mxu0 %v3890
      %v4114 = vpop.f32.mrb[0].mxu0
      %v4115 = vadd.f32 %v3918, %v4114
      %v4116 = vpop.f32.mrb[0].mxu0
      %4117 = vmatprep.mubr.f32.mxu0 %v3895
      %4118 = vmatmul.mubr.f32.gmra.mrb[0].mxu0 %v3891
      %v4119 = vpop.f32.mrb[0].mxu0
      %v4120 = vadd.f32 %v3918, %v4119
      %v4121 = vpop.f32.mrb[0].mxu0
      %4122 = vmatprep.mubr.f32.mxu0 %v3896
      %4123 = vmatmul.mubr.f32.gmra.mrb[0].mxu0 %v3892
      %v4124 = vpop.f32.mrb[0].mxu0
      %v4125 = vadd.f32 %v3918, %v4124
      %v4126 = vpop.f32.mrb[0].mxu0
      %4127 = vmatprep.mubr.f32.mxu0 %v3897
      %4128 = vmatmul.mubr.f32.gmra.mrb[0].mxu0 %v3893
      %v4129 = vpop.f32.mrb[0].mxu0
      %v4130 = vadd.f32 %v3918, %v4129
      %v4131 = vpop.f32.mrb[0].mxu0
      %4132 = vmatprep.mubr.f32.mxu0 %v3898
      %4133 = vmatmul.mubr.f32.gmra.mrb[0].mxu0 %v3894
      %v4134 = vpop.f32.mrb[0].mxu0
      %v4135 = vadd.f32 %v3918, %v4134
      %v4136 = vpop.f32.mrb[0].mxu0
      %4137 = vmatprep.mubr.f32.mxu0 %v3899
      %4138 = vmatmul.mubr.f32.gmra.mrb[0].mxu0 %v3895
      %v4139 = vpop.f32.mrb[0].mxu0
      %v4140 = vadd.f32 %v3918, %v4139
      %v4141 = vpop.f32.mrb[0].mxu0
      %4142 = vmatprep.mubr.f32.mxu0 %v3900
      %4143 = vmatmul.mubr.f32.gmra.mrb[0].mxu0 %v3896
      %v4144 = vpop.f32.mrb[0].mxu0
      %v4145 = vadd.f32 %v3918, %v4144
      %v4146 = vpop.f32.mrb[0].mxu0
      %4147 = vmatprep.mubr.f32.mxu0 %v3901
      %4148 = vmatmul.mubr.f32.gmra.mrb[0].mxu0 %v3897
      %v4149 = vpop.f32.mrb[0].mxu0
      %v4150 = vadd.f32 %v3918, %v4149
      %v4151 = vpop.f32.mrb[0].mxu0
      %4152 = vmatprep.mubr.f32.mxu0 %v3902
      %4153 = vmatmul.mubr.f32.gmra.mrb[0].mxu0 %v3898
      %v4154 = vpop.f32.mrb[0].mxu0
      %v4155 = vadd.f32 %v3918, %v4154
      %v4156 = vpop.f32.mrb[0].mxu0
      %4157 = vmatprep.mubr.f32.mxu0 %v3903
      %4158 = vmatmul.mubr.f32.gmra.mrb[0].mxu0 %v3899
      %v4159 = vpop.f32.mrb[0].mxu0
      %v4160 = vadd.f32 %v3918, %v4159
      %v4161 = vpop.f32.mrb[0].mxu0
      %4162 = vmatprep.mubr.f32.mxu0 %v3904
      %4163 = vmatmul.mubr.f32.gmra.mrb[0].mxu0 %v3900
      %v4164 = vpop.f32.mrb[0].mxu0
      %v4165 = vadd.f32 %v3918, %v4164
      %v4166 = vpop.f32.mrb[0].mxu0
      %4167 = vmatprep.mubr.f32.mxu0 %v3905
      %4168 = vmatmul.mubr.f32.gmra.mrb[0].mxu0 %v3901
      %v4169 = vpop.f32.mrb[0].mxu0
      %v4170 = vadd.f32 %v3918, %v4169
      %v4171 = vpop.f32.mrb[0].mxu0
      %4172 = vmatprep.mubr.f32.mxu0 %v3906
      %4173 = vmatmul.mubr.f32.gmra.mrb[0].mxu0 %v3902
      %v4174 = vpop.f32.mrb[0].mxu0
      %v4175 = vadd.f32 %v3918, %v4174
      %v4176 = vpop.f32.mrb[0].mxu0
      %4177 = vmatprep.mubr.f32.mxu0 %v3907
      %4178 = vmatmul.mubr.f32.gmra.mrb[0].mxu0 %v3903
      %v4179 = vpop.f32.mrb[0].mxu0
      %v4180 = vadd.f32 %v3918, %v4179
      %v4181 = vpop.f32.mrb[0].mxu0
      %4182 = vmatprep.mubr.f32.mxu0 %v3908
      %4183 = vmatmul.mubr.f32.gmra.mrb[0].mxu0 %v3904
      %v4184 = vpop.f32.mrb[0].mxu0
      %v4185 = vadd.f32 %v3918, %v4184
      %v4186 = vpop.f32.mrb[0].mxu0
      %4187 = vmatprep.mubr.f32.mxu0 %v3909
      %4188 = vmatmul.mubr.f32.gmra.mrb[0].mxu0 %v3905
      %v4189 = vpop.f32.mrb[0].mxu0
      %v4190 = vadd.f32 %v3918, %v4189
      %v4191 = vpop.f32.mrb[0].mxu0
      %4192 = vdwg.mxu0
      %4193 = vmatprep.subr.mxu0 0.0
      %4194 = vmatpush1.msra.mxu0 %v3157
      %4195 = vmatprep.subr.mxu0 0.0
      %4196 = vmatpush1.msra.mxu0 %v3158
      %4197 = vmatprep.subr.mxu0 0.0
      %4198 = vmatpush1.msra.mxu0 %v3159
      %4199 = vmatprep.subr.mxu0 0.0
      %4200 = vmatpush1.msra.mxu0 %v3160
      %4201 = vmatprep.subr.mxu0 0.0
      %4202 = vmatpush1.msra.mxu0 %v3161
      %4203 = vmatprep.subr.mxu0 0.0
      %4204 = vmatpush1.msra.mxu0 %v3162
      %4205 = vmatprep.subr.mxu0 0.0
      %4206 = vmatpush1.msra.mxu0 %v3163
      %4207 = vmatprep.subr.mxu0 0.0
      %4208 = vmatpush1.msra.mxu0 %v3164
      %4209 = vmatprep.subr.mxu0 0.0
      %4210 = vmatpush1.msra.mxu0 %v3165
      %4211 = vmatprep.subr.mxu0 0.0
      %4212 = vmatpush1.msra.mxu0 %v3166
      %4213 = vmatprep.subr.mxu0 0.0
      %4214 = vmatpush1.msra.mxu0 %v3167
      %4215 = vmatprep.subr.mxu0 0.0
      %4216 = vmatpush1.msra.mxu0 %v3168
      %4217 = vmatprep.subr.mxu0 0.0
      %4218 = vmatpush1.msra.mxu0 %v3169
      %4219 = vmatprep.subr.mxu0 0.0
      %4220 = vmatpush1.msra.mxu0 %v3170
      %4221 = vmatprep.subr.mxu0 0.0
      %4222 = vmatpush1.msra.mxu0 %v3171
      %4223 = vmatprep.subr.mxu0 0.0
      %4224 = vmatpush1.msra.mxu0 %v3172
      %4225 = vmatprep.subr.mxu0 0.0
      %4226 = vmatpush1.msra.mxu0 %v3173
      %4227 = vmatprep.subr.mxu0 0.0
      %4228 = vmatpush1.msra.mxu0 %v3174
      %4229 = vmatprep.subr.mxu0 0.0
      %4230 = vmatpush1.msra.mxu0 %v3175
      %4231 = vmatprep.subr.mxu0 0.0
      %4232 = vmatpush1.msra.mxu0 %v3176
      %4233 = vmatprep.subr.mxu0 0.0
      %4234 = vmatpush1.msra.mxu0 %v3177
      %4235 = vmatprep.subr.mxu0 0.0
      %4236 = vmatpush1.msra.mxu0 %v3178
      %4237 = vmatprep.subr.mxu0 0.0
      %4238 = vmatpush1.msra.mxu0 %v3179
      %4239 = vmatprep.subr.mxu0 0.0
      %4240 = vmatpush1.msra.mxu0 %v3180
      %4241 = vmatprep.subr.mxu0 0.0
      %4242 = vmatpush1.msra.mxu0 %v3181
      %4243 = vmatprep.subr.mxu0 0.0
      %4244 = vmatpush1.msra.mxu0 %v3182
      %4245 = vmatprep.subr.mxu0 0.0
      %4246 = vmatpush1.msra.mxu0 %v3183
      %4247 = vmatprep.subr.mxu0 0.0
      %4248 = vmatpush1.msra.mxu0 %v3184
      %4249 = vmatprep.subr.mxu0 0.0
      %4250 = vmatpush1.msra.mxu0 %v3185
      %4251 = vmatprep.subr.mxu0 0.0
      %4252 = vmatpush1.msra.mxu0 %v3186
      %4253 = vmatprep.subr.mxu0 0.0
      %4254 = vmatpush1.msra.mxu0 %v3187
      %4255 = vmatprep.subr.mxu0 0.0
      %4256 = vmatpush1.msra.mxu0 %v3188
      %4257 = vmatprep.mubr.f32.mxu0 %v3886
      %4258 = vmatmul.mubr.f32.gmra.mrb[0].mxu0 %v3882
      %v4259 = vpop.f32.mrb[0].mxu0
      %v4260 = vadd.f32 %v4035, %v4259
      %v4261 = vpop.f32.mrb[0].mxu0
      %4262 = vmatprep.mubr.f32.mxu0 %v3887
      %4263 = vmatmul.mubr.f32.gmra.mrb[0].mxu0 %v3883
      %v4264 = vpop.f32.mrb[0].mxu0
      %v4265 = vadd.f32 %v4040, %v4264
      %v4266 = vpop.f32.mrb[0].mxu0
      %4267 = vmatprep.mubr.f32.mxu0 %v3888
      %4268 = vmatmul.mubr.f32.gmra.mrb[0].mxu0 %v3884
      %v4269 = vpop.f32.mrb[0].mxu0
      %v4270 = vadd.f32 %v4045, %v4269
      %v4271 = vpop.f32.mrb[0].mxu0
      %4272 = vmatprep.mubr.f32.mxu0 %v3889
      %4273 = vmatmul.mubr.f32.gmra.mrb[0].mxu0 %v3885
      %v4274 = vpop.f32.mrb[0].mxu0
      %v4275 = vadd.f32 %v4050, %v4274
      %v4276 = vpop.f32.mrb[0].mxu0
      %4277 = vmatprep.mubr.f32.mxu0 %v3890
      %4278 = vmatmul.mubr.f32.gmra.mrb[0].mxu0 %v3886
      %v4279 = vpop.f32.mrb[0].mxu0
      %v4280 = vadd.f32 %v4055, %v4279
      %v4281 = vpop.f32.mrb[0].mxu0
      %4282 = vmatprep.mubr.f32.mxu0 %v3891
      %4283 = vmatmul.mubr.f32.gmra.mrb[0].mxu0 %v3887
      %v4284 = vpop.f32.mrb[0].mxu0
      %v4285 = vadd.f32 %v4060, %v4284
      %v4286 = vpop.f32.mrb[0].mxu0
      %4287 = vmatprep.mubr.f32.mxu0 %v3892
      %4288 = vmatmul.mubr.f32.gmra.mrb[0].mxu0 %v3888
      %v4289 = vpop.f32.mrb[0].mxu0
      %v4290 = vadd.f32 %v4065, %v4289
      %v4291 = vpop.f32.mrb[0].mxu0
      %4292 = vmatprep.mubr.f32.mxu0 %v3893
      %4293 = vmatmul.mubr.f32.gmra.mrb[0].mxu0 %v3889
      %v4294 = vpop.f32.mrb[0].mxu0
      %v4295 = vadd.f32 %v4070, %v4294
      %v4296 = vpop.f32.mrb[0].mxu0
      %4297 = vmatprep.mubr.f32.mxu0 %v3894
      %4298 = vmatmul.mubr.f32.gmra.mrb[0].mxu0 %v3890
      %v4299 = vpop.f32.mrb[0].mxu0
      %v4300 = vadd.f32 %v4075, %v4299
      %v4301 = vpop.f32.mrb[0].mxu0
      %4302 = vmatprep.mubr.f32.mxu0 %v3895
      %4303 = vmatmul.mubr.f32.gmra.mrb[0].mxu0 %v3891
      %v4304 = vpop.f32.mrb[0].mxu0
      %v4305 = vadd.f32 %v4080, %v4304
      %v4306 = vpop.f32.mrb[0].mxu0
      %4307 = vmatprep.mubr.f32.mxu0 %v3896
      %4308 = vmatmul.mubr.f32.gmra.mrb[0].mxu0 %v3892
      %v4309 = vpop.f32.mrb[0].mxu0
      %v4310 = vadd.f32 %v4085, %v4309
      %v4311 = vpop.f32.mrb[0].mxu0
      %4312 = vmatprep.mubr.f32.mxu0 %v3897
      %4313 = vmatmul.mubr.f32.gmra.mrb[0].mxu0 %v3893
      %v4314 = vpop.f32.mrb[0].mxu0
      %v4315 = vadd.f32 %v4090, %v4314
      %v4316 = vpop.f32.mrb[0].mxu0
      %4317 = vmatprep.mubr.f32.mxu0 %v3898
      %4318 = vmatmul.mubr.f32.gmra.mrb[0].mxu0 %v3894
      %v4319 = vpop.f32.mrb[0].mxu0
      %v4320 = vadd.f32 %v4095, %v4319
      %v4321 = vpop.f32.mrb[0].mxu0
      %4322 = vmatprep.mubr.f32.mxu0 %v3899
      %4323 = vmatmul.mubr.f32.gmra.mrb[0].mxu0 %v3895
      %v4324 = vpop.f32.mrb[0].mxu0
      %v4325 = vadd.f32 %v4100, %v4324
      %v4326 = vpop.f32.mrb[0].mxu0
      %4327 = vmatprep.mubr.f32.mxu0 %v3900
      %4328 = vmatmul.mubr.f32.gmra.mrb[0].mxu0 %v3896
      %v4329 = vpop.f32.mrb[0].mxu0
      %v4330 = vadd.f32 %v4105, %v4329
      %v4331 = vpop.f32.mrb[0].mxu0
      %4332 = vmatprep.mubr.f32.mxu0 %v3901
      %4333 = vmatmul.mubr.f32.gmra.mrb[0].mxu0 %v3897
      %v4334 = vpop.f32.mrb[0].mxu0
      %v4335 = vadd.f32 %v4110, %v4334
      %v4336 = vpop.f32.mrb[0].mxu0
      %4337 = vmatprep.mubr.f32.mxu0 %v3902
      %4338 = vmatmul.mubr.f32.gmra.mrb[0].mxu0 %v3898
      %v4339 = vpop.f32.mrb[0].mxu0
      %v4340 = vadd.f32 %v4115, %v4339
      %v4341 = vpop.f32.mrb[0].mxu0
      %4342 = vmatprep.mubr.f32.mxu0 %v3903
      %4343 = vmatmul.mubr.f32.gmra.mrb[0].mxu0 %v3899
      %v4344 = vpop.f32.mrb[0].mxu0
      %v4345 = vadd.f32 %v4120, %v4344
      %v4346 = vpop.f32.mrb[0].mxu0
      %4347 = vmatprep.mubr.f32.mxu0 %v3904
      %4348 = vmatmul.mubr.f32.gmra.mrb[0].mxu0 %v3900
      %v4349 = vpop.f32.mrb[0].mxu0
      %v4350 = vadd.f32 %v4125, %v4349
      %v4351 = vpop.f32.mrb[0].mxu0
      %4352 = vmatprep.mubr.f32.mxu0 %v3905
      %4353 = vmatmul.mubr.f32.gmra.mrb[0].mxu0 %v3901
      %v4354 = vpop.f32.mrb[0].mxu0
      %v4355 = vadd.f32 %v4130, %v4354
      %v4356 = vpop.f32.mrb[0].mxu0
      %4357 = vmatprep.mubr.f32.mxu0 %v3906
      %4358 = vmatmul.mubr.f32.gmra.mrb[0].mxu0 %v3902
      %v4359 = vpop.f32.mrb[0].mxu0
      %v4360 = vadd.f32 %v4135, %v4359
      %v4361 = vpop.f32.mrb[0].mxu0
      %4362 = vmatprep.mubr.f32.mxu0 %v3907
      %4363 = vmatmul.mubr.f32.gmra.mrb[0].mxu0 %v3903
      %v4364 = vpop.f32.mrb[0].mxu0
      %v4365 = vadd.f32 %v4140, %v4364
      %v4366 = vpop.f32.mrb[0].mxu0
      %4367 = vmatprep.mubr.f32.mxu0 %v3908
      %4368 = vmatmul.mubr.f32.gmra.mrb[0].mxu0 %v3904
      %v4369 = vpop.f32.mrb[0].mxu0
      %v4370 = vadd.f32 %v4145, %v4369
      %v4371 = vpop.f32.mrb[0].mxu0
      %4372 = vmatprep.mubr.f32.mxu0 %v3909
      %4373 = vmatmul.mubr.f32.gmra.mrb[0].mxu0 %v3905
      %v4374 = vpop.f32.mrb[0].mxu0
      %v4375 = vadd.f32 %v4150, %v4374
      %v4376 = vpop.f32.mrb[0].mxu0
      %4377 = vmatprep.mubr.f32.mxu0 %v3910
      %4378 = vmatmul.mubr.f32.gmra.mrb[0].mxu0 %v3906
      %v4379 = vpop.f32.mrb[0].mxu0
      %v4380 = vadd.f32 %v4155, %v4379
      %v4381 = vpop.f32.mrb[0].mxu0
      %4382 = vmatprep.mubr.f32.mxu0 %v3911
      %4383 = vmatmul.mubr.f32.gmra.mrb[0].mxu0 %v3907
      %v4384 = vpop.f32.mrb[0].mxu0
      %v4385 = vadd.f32 %v4160, %v4384
      %v4386 = vpop.f32.mrb[0].mxu0
      %4387 = vmatprep.mubr.f32.mxu0 %v3912
      %4388 = vmatmul.mubr.f32.gmra.mrb[0].mxu0 %v3908
      %v4389 = vpop.f32.mrb[0].mxu0
      %v4390 = vadd.f32 %v4165, %v4389
      %v4391 = vpop.f32.mrb[0].mxu0
      %4392 = vmatprep.mubr.f32.mxu0 %v3913
      %4393 = vmatmul.mubr.f32.gmra.mrb[0].mxu0 %v3909
      %v4394 = vpop.f32.mrb[0].mxu0
      %v4395 = vadd.f32 %v4170, %v4394
      %v4396 = vpop.f32.mrb[0].mxu0
      %4397 = vmatprep.mubr.f32.mxu0 %v2210
      %4398 = vmatmul.mubr.f32.gmra.mrb[0].mxu0 %v3910
      %v4399 = vpop.f32.mrb[0].mxu0
      %v4400 = vadd.f32 %v4175, %v4399
      %v4401 = vpop.f32.mrb[0].mxu0
      %4402 = vmatprep.mubr.f32.mxu0 %v2210
      %4403 = vmatmul.mubr.f32.gmra.mrb[0].mxu0 %v3911
      %v4404 = vpop.f32.mrb[0].mxu0
      %v4405 = vadd.f32 %v4180, %v4404
      %v4406 = vpop.f32.mrb[0].mxu0
      %4407 = vmatprep.mubr.f32.mxu0 %v2210
      %4408 = vmatmul.mubr.f32.gmra.mrb[0].mxu0 %v3912
      %v4409 = vpop.f32.mrb[0].mxu0
      %v4410 = vadd.f32 %v4185, %v4409
      %v4411 = vpop.f32.mrb[0].mxu0
      %4412 = vmatprep.mubr.f32.mxu0 %v2210
      %4413 = vmatmul.mubr.f32.gmra.mrb[0].mxu0 %v3913
      %v4414 = vpop.f32.mrb[0].mxu0
      %v4415 = vadd.f32 %v4190, %v4414
      %v4416 = vpop.f32.mrb[0].mxu0
      %4417 = vdwg.mxu0
      %4418 = vmatprep.subr.mxu0 0.0
      %4419 = vmatpush1.msra.mxu0 %v3189
      %4420 = vmatprep.subr.mxu0 0.0
      %4421 = vmatpush1.msra.mxu0 %v3190
      %4422 = vmatprep.subr.mxu0 0.0
      %4423 = vmatpush1.msra.mxu0 %v3191
      %4424 = vmatprep.subr.mxu0 0.0
      %4425 = vmatpush1.msra.mxu0 %v3192
      %4426 = vmatprep.subr.mxu0 0.0
      %4427 = vmatpush1.msra.mxu0 %v3193
      %4428 = vmatprep.subr.mxu0 0.0
      %4429 = vmatpush1.msra.mxu0 %v3194
      %4430 = vmatprep.subr.mxu0 0.0
      %4431 = vmatpush1.msra.mxu0 %v3195
      %4432 = vmatprep.subr.mxu0 0.0
      %4433 = vmatpush1.msra.mxu0 %v3196
      %4434 = vmatprep.subr.mxu0 0.0
      %4435 = vmatpush1.msra.mxu0 0.0
      %4436 = vmatprep.subr.mxu0 0.0
      %4437 = vmatpush1.msra.mxu0 0.0
      %4438 = vmatprep.subr.mxu0 0.0
      %4439 = vmatpush1.msra.mxu0 0.0
      %4440 = vmatprep.subr.mxu0 0.0
      %4441 = vmatpush1.msra.mxu0 0.0
      %4442 = vmatprep.subr.mxu0 0.0
      %4443 = vmatpush1.msra.mxu0 0.0
      %4444 = vmatprep.subr.mxu0 0.0
      %4445 = vmatpush1.msra.mxu0 0.0
      %4446 = vmatprep.subr.mxu0 0.0
      %4447 = vmatpush1.msra.mxu0 0.0
      %4448 = vmatprep.subr.mxu0 0.0
      %4449 = vmatpush1.msra.mxu0 0.0
      %4450 = vmatprep.subr.mxu0 0.0
      %4451 = vmatpush1.msra.mxu0 0.0
      %4452 = vmatprep.subr.mxu0 0.0
      %4453 = vmatpush1.msra.mxu0 0.0
      %4454 = vmatprep.subr.mxu0 0.0
      %4455 = vmatpush1.msra.mxu0 0.0
      %4456 = vmatprep.subr.mxu0 0.0
      %4457 = vmatpush1.msra.mxu0 0.0
      %4458 = vmatprep.subr.mxu0 0.0
      %4459 = vmatpush1.msra.mxu0 0.0
      %4460 = vmatprep.subr.mxu0 0.0
      %4461 = vmatpush1.msra.mxu0 0.0
      %4462 = vmatprep.subr.mxu0 0.0
      %4463 = vmatpush1.msra.mxu0 0.0
      %4464 = vmatprep.subr.mxu0 0.0
      %4465 = vmatpush1.msra.mxu0 0.0
      %4466 = vmatprep.subr.mxu0 0.0
      %4467 = vmatpush1.msra.mxu0 0.0
      %4468 = vmatprep.subr.mxu0 0.0
      %4469 = vmatpush1.msra.mxu0 0.0
      %4470 = vmatprep.subr.mxu0 0.0
      %4471 = vmatpush1.msra.mxu0 0.0
      %4472 = vmatprep.subr.mxu0 0.0
      %4473 = vmatpush1.msra.mxu0 0.0
      %4474 = vmatprep.subr.mxu0 0.0
      %4475 = vmatpush1.msra.mxu0 0.0
      %4476 = vmatprep.subr.mxu0 0.0
      %4477 = vmatpush1.msra.mxu0 0.0
      %4478 = vmatprep.subr.mxu0 0.0
      %4479 = vmatpush1.msra.mxu0 0.0
      %4480 = vmatprep.subr.mxu0 0.0
      %4481 = vmatpush1.msra.mxu0 0.0
      %4482 = vmatprep.mubr.f32.mxu0 0.0
      %4483 = vmatmul.mubr.f32.gmra.mrb[0].mxu0 %v3920
      %v4484 = vpop.f32.mrb[0].mxu0
      %v4485 = vadd.f32 %v4260, %v4484
      %v4486 = vpop.f32.mrb[0].mxu0
      %4487 = vmatprep.mubr.f32.mxu0 0.0
      %4488 = vmatmul.mubr.f32.gmra.mrb[0].mxu0 %v3922
      %v4489 = vpop.f32.mrb[0].mxu0
      %v4490 = vadd.f32 %v4265, %v4489
      %v4491 = vpop.f32.mrb[0].mxu0
      %4492 = vmatprep.mubr.f32.mxu0 0.0
      %4493 = vmatmul.mubr.f32.gmra.mrb[0].mxu0 %v3924
      %v4494 = vpop.f32.mrb[0].mxu0
      %v4495 = vadd.f32 %v4270, %v4494
      %v4496 = vpop.f32.mrb[0].mxu0
      %4497 = vmatprep.mubr.f32.mxu0 0.0
      %4498 = vmatmul.mubr.f32.gmra.mrb[0].mxu0 %v3926
      %v4499 = vpop.f32.mrb[0].mxu0
      %v4500 = vadd.f32 %v4275, %v4499
      %v4501 = vpop.f32.mrb[0].mxu0
      %4502 = vmatprep.mubr.f32.mxu0 0.0
      %4503 = vmatmul.mubr.f32.gmra.mrb[0].mxu0 %v3928
      %v4504 = vpop.f32.mrb[0].mxu0
      %v4505 = vadd.f32 %v4280, %v4504
      %v4506 = vpop.f32.mrb[0].mxu0
      %4507 = vmatprep.mubr.f32.mxu0 0.0
      %4508 = vmatmul.mubr.f32.gmra.mrb[0].mxu0 %v3930
      %v4509 = vpop.f32.mrb[0].mxu0
      %v4510 = vadd.f32 %v4285, %v4509
      %v4511 = vpop.f32.mrb[0].mxu0
      %4512 = vmatprep.mubr.f32.mxu0 0.0
      %4513 = vmatmul.mubr.f32.gmra.mrb[0].mxu0 %v3932
      %v4514 = vpop.f32.mrb[0].mxu0
      %v4515 = vadd.f32 %v4290, %v4514
      %v4516 = vpop.f32.mrb[0].mxu0
      %4517 = vmatprep.mubr.f32.mxu0 0.0
      %4518 = vmatmul.mubr.f32.gmra.mrb[0].mxu0 %v3934
      %v4519 = vpop.f32.mrb[0].mxu0
      %v4520 = vadd.f32 %v4295, %v4519
      %v4521 = vpop.f32.mrb[0].mxu0
      %4522 = vmatprep.mubr.f32.mxu0 0.0
      %4523 = vmatmul.mubr.f32.gmra.mrb[0].mxu0 %v3936
      %v4524 = vpop.f32.mrb[0].mxu0
      %v4525 = vadd.f32 %v4300, %v4524
      %v4526 = vpop.f32.mrb[0].mxu0
      %4527 = vmatprep.mubr.f32.mxu0 0.0
      %4528 = vmatmul.mubr.f32.gmra.mrb[0].mxu0 %v3938
      %v4529 = vpop.f32.mrb[0].mxu0
      %v4530 = vadd.f32 %v4305, %v4529
      %v4531 = vpop.f32.mrb[0].mxu0
      %4532 = vmatprep.mubr.f32.mxu0 0.0
      %4533 = vmatmul.mubr.f32.gmra.mrb[0].mxu0 %v3940
      %v4534 = vpop.f32.mrb[0].mxu0
      %v4535 = vadd.f32 %v4310, %v4534
      %v4536 = vpop.f32.mrb[0].mxu0
      %4537 = vmatprep.mubr.f32.mxu0 0.0
      %4538 = vmatmul.mubr.f32.gmra.mrb[0].mxu0 %v3942
      %v4539 = vpop.f32.mrb[0].mxu0
      %v4540 = vadd.f32 %v4315, %v4539
      %v4541 = vpop.f32.mrb[0].mxu0
      %4542 = vmatprep.mubr.f32.mxu0 0.0
      %4543 = vmatmul.mubr.f32.gmra.mrb[0].mxu0 %v3944
      %v4544 = vpop.f32.mrb[0].mxu0
      %v4545 = vadd.f32 %v4320, %v4544
      %v4546 = vpop.f32.mrb[0].mxu0
      %4547 = vmatprep.mubr.f32.mxu0 0.0
      %4548 = vmatmul.mubr.f32.gmra.mrb[0].mxu0 %v3946
      %v4549 = vpop.f32.mrb[0].mxu0
      %v4550 = vadd.f32 %v4325, %v4549
      %v4551 = vpop.f32.mrb[0].mxu0
      %4552 = vmatprep.mubr.f32.mxu0 0.0
      %4553 = vmatmul.mubr.f32.gmra.mrb[0].mxu0 %v3948
      %v4554 = vpop.f32.mrb[0].mxu0
      %v4555 = vadd.f32 %v4330, %v4554
      %v4556 = vpop.f32.mrb[0].mxu0
      %4557 = vmatprep.mubr.f32.mxu0 0.0
      %4558 = vmatmul.mubr.f32.gmra.mrb[0].mxu0 %v3950
      %v4559 = vpop.f32.mrb[0].mxu0
      %v4560 = vadd.f32 %v4335, %v4559
      %v4561 = vpop.f32.mrb[0].mxu0
      %4562 = vmatprep.mubr.f32.mxu0 0.0
      %4563 = vmatmul.mubr.f32.gmra.mrb[0].mxu0 %v3952
      %v4564 = vpop.f32.mrb[0].mxu0
      %v4565 = vadd.f32 %v4340, %v4564
      %v4566 = vpop.f32.mrb[0].mxu0
      %4567 = vmatprep.mubr.f32.mxu0 0.0
      %4568 = vmatmul.mubr.f32.gmra.mrb[0].mxu0 %v3954
      %v4569 = vpop.f32.mrb[0].mxu0
      %v4570 = vadd.f32 %v4345, %v4569
      %v4571 = vpop.f32.mrb[0].mxu0
      %4572 = vmatprep.mubr.f32.mxu0 0.0
      %4573 = vmatmul.mubr.f32.gmra.mrb[0].mxu0 %v3956
      %v4574 = vpop.f32.mrb[0].mxu0
      %v4575 = vadd.f32 %v4350, %v4574
      %v4576 = vpop.f32.mrb[0].mxu0
      %4577 = vmatprep.mubr.f32.mxu0 0.0
      %4578 = vmatmul.mubr.f32.gmra.mrb[0].mxu0 %v3958
      %v4579 = vpop.f32.mrb[0].mxu0
      %v4580 = vadd.f32 %v4355, %v4579
      %v4581 = vpop.f32.mrb[0].mxu0
      %4582 = vmatprep.mubr.f32.mxu0 0.0
      %4583 = vmatmul.mubr.f32.gmra.mrb[0].mxu0 %v3960
      %v4584 = vpop.f32.mrb[0].mxu0
      %v4585 = vadd.f32 %v4360, %v4584
      %v4586 = vpop.f32.mrb[0].mxu0
      %4587 = vmatprep.mubr.f32.mxu0 0.0
      %4588 = vmatmul.mubr.f32.gmra.mrb[0].mxu0 %v3962
      %v4589 = vpop.f32.mrb[0].mxu0
      %v4590 = vadd.f32 %v4365, %v4589
      %v4591 = vpop.f32.mrb[0].mxu0
      %4592 = vmatprep.mubr.f32.mxu0 0.0
      %4593 = vmatmul.mubr.f32.gmra.mrb[0].mxu0 %v3964
      %v4594 = vpop.f32.mrb[0].mxu0
      %v4595 = vadd.f32 %v4370, %v4594
      %v4596 = vpop.f32.mrb[0].mxu0
      %4597 = vmatprep.mubr.f32.mxu0 0.0
      %4598 = vmatmul.mubr.f32.gmra.mrb[0].mxu0 %v3966
      %v4599 = vpop.f32.mrb[0].mxu0
      %v4600 = vadd.f32 %v4375, %v4599
      %v4601 = vpop.f32.mrb[0].mxu0
      %4602 = vmatprep.mubr.f32.mxu0 0.0
      %4603 = vmatmul.mubr.f32.gmra.mrb[0].mxu0 %v2299
      %v4604 = vpop.f32.mrb[0].mxu0
      %v4605 = vadd.f32 %v4380, %v4604
      %v4606 = vpop.f32.mrb[0].mxu0
      %4607 = vmatprep.mubr.f32.mxu0 0.0
      %4608 = vmatmul.mubr.f32.gmra.mrb[0].mxu0 %v2299
      %v4609 = vpop.f32.mrb[0].mxu0
      %v4610 = vadd.f32 %v4385, %v4609
      %v4611 = vpop.f32.mrb[0].mxu0
      %4612 = vmatprep.mubr.f32.mxu0 0.0
      %4613 = vmatmul.mubr.f32.gmra.mrb[0].mxu0 %v2299
      %v4614 = vpop.f32.mrb[0].mxu0
      %v4615 = vadd.f32 %v4390, %v4614
      %v4616 = vpop.f32.mrb[0].mxu0
      %4617 = vmatprep.mubr.f32.mxu0 0.0
      %4618 = vmatmul.mubr.f32.gmra.mrb[0].mxu0 %v2299
      %v4619 = vpop.f32.mrb[0].mxu0
      %v4620 = vadd.f32 %v4395, %v4619
      %v4621 = vpop.f32.mrb[0].mxu0
      %4622 = vmatprep.mubr.f32.mxu0 0.0
      %4623 = vmatmul.mubr.f32.gmra.mrb[0].mxu0 %v2299
      %v4624 = vpop.f32.mrb[0].mxu0
      %v4625 = vadd.f32 %v4400, %v4624
      %v4626 = vpop.f32.mrb[0].mxu0
      %4627 = vmatprep.mubr.f32.mxu0 0.0
      %4628 = vmatmul.mubr.f32.gmra.mrb[0].mxu0 %v2299
      %v4629 = vpop.f32.mrb[0].mxu0
      %v4630 = vadd.f32 %v4405, %v4629
      %v4631 = vpop.f32.mrb[0].mxu0
      %4632 = vmatprep.mubr.f32.mxu0 0.0
      %4633 = vmatmul.mubr.f32.gmra.mrb[0].mxu0 %v2299
      %v4634 = vpop.f32.mrb[0].mxu0
      %v4635 = vadd.f32 %v4410, %v4634
      %v4636 = vpop.f32.mrb[0].mxu0
      %4637 = vmatprep.mubr.f32.mxu0 0.0
      %4638 = vmatmul.mubr.f32.gmra.mrb[0].mxu0 %v2299
      %v4639 = vpop.f32.mrb[0].mxu0
      %v4640 = vadd.f32 %v4415, %v4639
      %v4641 = vpop.f32.mrb[0].mxu0
      %4642 = vdwg.mxu0
      %v4644 = vlaneseq
      %v4645 = vshrl.u32 %v4644, 7
      %v4646 = vsub.s32 0, %v4645
      %v4647 = vrot.slane %v3198, %v4646
      %v4649 = vmul.f32 %v4485, %v4647
      %v4650 = vmul.f32 %v4490, %v4647
      %v4651 = vmul.f32 %v4495, %v4647
      %v4652 = vmul.f32 %v4500, %v4647
      %v4653 = vmul.f32 %v4505, %v4647
      %v4654 = vmul.f32 %v4510, %v4647
      %v4655 = vmul.f32 %v4515, %v4647
      %v4656 = vmul.f32 %v4520, %v4647
      %v4657 = vmul.f32 %v4525, %v4647
      %v4658 = vmul.f32 %v4530, %v4647
      %v4659 = vmul.f32 %v4535, %v4647
      %v4660 = vmul.f32 %v4540, %v4647
      %v4661 = vmul.f32 %v4545, %v4647
      %v4662 = vmul.f32 %v4550, %v4647
      %v4663 = vmul.f32 %v4555, %v4647
      %v4664 = vmul.f32 %v4560, %v4647
      %v4665 = vmul.f32 %v4565, %v4647
      %v4666 = vmul.f32 %v4570, %v4647
      %v4667 = vmul.f32 %v4575, %v4647
      %v4668 = vmul.f32 %v4580, %v4647
      %v4669 = vmul.f32 %v4585, %v4647
      %v4670 = vmul.f32 %v4590, %v4647
      %v4671 = vmul.f32 %v4595, %v4647
      %v4672 = vmul.f32 %v4600, %v4647
      %v4673 = vmul.f32 %v4605, %v4647
      %v4674 = vmul.f32 %v4610, %v4647
      %v4675 = vmul.f32 %v4615, %v4647
      %v4676 = vmul.f32 %v4620, %v4647
      %v4677 = vmul.f32 %v4625, %v4647
      %v4678 = vmul.f32 %v4630, %v4647
      %v4679 = vmul.f32 %v4635, %v4647
      %v4680 = vmul.f32 %v4640, %v4647
      %v4682 = vlaneseq
      %v4683 = vshrl.u32 %v4682, 7
      %v4684 = vsub.s32 0, %v4683
      %v4685 = vrot.slane %v3199, %v4684
      %v4687 = vadd.f32 %v4649, %v4685
      %v4688 = vadd.f32 %v4650, %v4685
      %v4689 = vadd.f32 %v4651, %v4685
      %v4690 = vadd.f32 %v4652, %v4685
      %v4691 = vadd.f32 %v4653, %v4685
      %v4692 = vadd.f32 %v4654, %v4685
      %v4693 = vadd.f32 %v4655, %v4685
      %v4694 = vadd.f32 %v4656, %v4685
      %v4695 = vadd.f32 %v4657, %v4685
      %v4696 = vadd.f32 %v4658, %v4685
      %v4697 = vadd.f32 %v4659, %v4685
      %v4698 = vadd.f32 %v4660, %v4685
      %v4699 = vadd.f32 %v4661, %v4685
      %v4700 = vadd.f32 %v4662, %v4685
      %v4701 = vadd.f32 %v4663, %v4685
      %v4702 = vadd.f32 %v4664, %v4685
      %v4703 = vadd.f32 %v4665, %v4685
      %v4704 = vadd.f32 %v4666, %v4685
      %v4705 = vadd.f32 %v4667, %v4685
      %v4706 = vadd.f32 %v4668, %v4685
      %v4707 = vadd.f32 %v4669, %v4685
      %v4708 = vadd.f32 %v4670, %v4685
      %v4709 = vadd.f32 %v4671, %v4685
      %v4710 = vadd.f32 %v4672, %v4685
      %v4711 = vadd.f32 %v4673, %v4685
      %v4712 = vadd.f32 %v4674, %v4685
      %v4713 = vadd.f32 %v4675, %v4685
      %v4714 = vadd.f32 %v4676, %v4685
      %v4715 = vadd.f32 %v4677, %v4685
      %v4716 = vadd.f32 %v4678, %v4685
      %v4717 = vadd.f32 %v4679, %v4685
      %v4718 = vadd.f32 %v4680, %v4685
      %v4719 = vadd.f32 %v4687, %v3084
      %v4720 = vadd.f32 %v4688, %v3085
      %v4721 = vadd.f32 %v4689, %v3086
      %v4722 = vadd.f32 %v4690, %v3087
      %v4723 = vadd.f32 %v4691, %v3088
      %v4724 = vadd.f32 %v4692, %v3089
      %v4725 = vadd.f32 %v4693, %v3090
      %v4726 = vadd.f32 %v4694, %v3091
      %v4727 = vadd.f32 %v4695, %v3092
      %v4728 = vadd.f32 %v4696, %v3093
      %v4729 = vadd.f32 %v4697, %v3094
      %v4730 = vadd.f32 %v4698, %v3095
      %v4731 = vadd.f32 %v4699, %v3096
      %v4732 = vadd.f32 %v4700, %v3097
      %v4733 = vadd.f32 %v4701, %v3098
      %v4734 = vadd.f32 %v4702, %v3099
      %v4735 = vadd.f32 %v4703, %v3100
      %v4736 = vadd.f32 %v4704, %v3101
      %v4737 = vadd.f32 %v4705, %v3102
      %v4738 = vadd.f32 %v4706, %v3103
      %v4739 = vadd.f32 %v4707, %v3104
      %v4740 = vadd.f32 %v4708, %v3105
      %v4741 = vadd.f32 %v4709, %v3106
      %v4742 = vadd.f32 %v4710, %v3107
      %v4743 = vadd.f32 %v4711, %v3108
      %v4744 = vadd.f32 %v4712, %v3109
      %v4745 = vadd.f32 %v4713, %v3110
      %v4746 = vadd.f32 %v4714, %v3111
      %v4747 = vadd.f32 %v4715, %v3112
      %v4748 = vadd.f32 %v4716, %v3113
      %v4749 = vadd.f32 %v4717, %v3114
      %v4750 = vadd.f32 %v4718, %v3115
      %v4751 = vmax.f32 %v4719, 0.0
      %v4752 = vmax.f32 %v4720, 0.0
      %v4753 = vmax.f32 %v4721, 0.0
      %v4754 = vmax.f32 %v4722, 0.0
      %v4755 = vmax.f32 %v4723, 0.0
      %v4756 = vmax.f32 %v4724, 0.0
      %v4757 = vmax.f32 %v4725, 0.0
      %v4758 = vmax.f32 %v4726, 0.0
      %v4759 = vmax.f32 %v4727, 0.0
      %v4760 = vmax.f32 %v4728, 0.0
      %v4761 = vmax.f32 %v4729, 0.0
      %v4762 = vmax.f32 %v4730, 0.0
      %v4763 = vmax.f32 %v4731, 0.0
      %v4764 = vmax.f32 %v4732, 0.0
      %v4765 = vmax.f32 %v4733, 0.0
      %v4766 = vmax.f32 %v4734, 0.0
      %v4767 = vmax.f32 %v4735, 0.0
      %v4768 = vmax.f32 %v4736, 0.0
      %v4769 = vmax.f32 %v4737, 0.0
      %v4770 = vmax.f32 %v4738, 0.0
      %v4771 = vmax.f32 %v4739, 0.0
      %v4772 = vmax.f32 %v4740, 0.0
      %v4773 = vmax.f32 %v4741, 0.0
      %v4774 = vmax.f32 %v4742, 0.0
      %v4775 = vmax.f32 %v4743, 0.0
      %v4776 = vmax.f32 %v4744, 0.0
      %v4777 = vmax.f32 %v4745, 0.0
      %v4778 = vmax.f32 %v4746, 0.0
      %v4779 = vmax.f32 %v4747, 0.0
      %v4780 = vmax.f32 %v4748, 0.0
      %v4781 = vmax.f32 %v4749, 0.0
      %v4782 = vmax.f32 %v4750, 0.0
      %v4783 = vld [vmem:[%s37] sm:$0xff]
      %v4784 = vld [vmem:[%s37 + $0x8] sm:$0xff]
      %v4785 = vld [vmem:[%s37 + $0x10] sm:$0xff]
      %v4786 = vld [vmem:[%s37 + $0x18] sm:$0xff]
      %v4787 = vld [vmem:[%s37 + $0x20] sm:$0xff]
      %v4788 = vld [vmem:[%s37 + $0x28] sm:$0xff]
      %v4789 = vld [vmem:[%s37 + $0x30] sm:$0xff]
      %v4790 = vld [vmem:[%s37 + $0x38] sm:$0xff]
      %v4791 = vld [vmem:[%s39] sm:$0x1]
      %v4792 = vld [vmem:[%s41] sm:$0xff]
      %v4793 = vld [vmem:[%s41 + $0x8] sm:$0xff]
      %v4794 = vld [vmem:[%s41 + $0x10] sm:$0xff]
      %v4795 = vld [vmem:[%s41 + $0x18] sm:$0xff]
      %v4796 = vld [vmem:[%s41 + $0x20] sm:$0xff]
      %v4797 = vld [vmem:[%s41 + $0x28] sm:$0xff]
      %v4798 = vld [vmem:[%s41 + $0x30] sm:$0xff]
      %v4799 = vld [vmem:[%s41 + $0x38] sm:$0xff]
      %v4800 = vld [vmem:[%s41 + $0x40] sm:$0xff]
      %v4801 = vld [vmem:[%s41 + $0x48] sm:$0xff]
      %v4802 = vld [vmem:[%s41 + $0x50] sm:$0xff]
      %v4803 = vld [vmem:[%s41 + $0x58] sm:$0xff]
      %v4804 = vld [vmem:[%s41 + $0x60] sm:$0xff]
      %v4805 = vld [vmem:[%s41 + $0x68] sm:$0xff]
      %v4806 = vld [vmem:[%s41 + $0x70] sm:$0xff]
      %v4807 = vld [vmem:[%s41 + $0x78] sm:$0xff]
      %v4808 = vld [vmem:[%s41 + $0x80] sm:$0xff]
      %v4809 = vld [vmem:[%s41 + $0x88] sm:$0xff]
      %v4810 = vld [vmem:[%s41 + $0x90] sm:$0xff]
      %v4811 = vld [vmem:[%s41 + $0x98] sm:$0xff]
      %v4812 = vld [vmem:[%s41 + $0xa0] sm:$0xff]
      %v4813 = vld [vmem:[%s41 + $0xa8] sm:$0xff]
      %v4814 = vld [vmem:[%s41 + $0xb0] sm:$0xff]
      %v4815 = vld [vmem:[%s41 + $0xb8] sm:$0xff]
      %v4816 = vld [vmem:[%s41 + $0xc0] sm:$0xff]
      %v4817 = vld [vmem:[%s41 + $0xc8] sm:$0xff]
      %v4818 = vld [vmem:[%s41 + $0xd0] sm:$0xff]
      %v4819 = vld [vmem:[%s41 + $0xd8] sm:$0xff]
      %v4820 = vld [vmem:[%s41 + $0xe0] sm:$0xff]
      %v4821 = vld [vmem:[%s41 + $0xe8] sm:$0xff]
      %v4822 = vld [vmem:[%s41 + $0xf0] sm:$0xff]
      %v4823 = vld [vmem:[%s41 + $0xf8] sm:$0xff]
      %v4824 = vld [vmem:[%s41 + $0x100] sm:$0xff]
      %v4825 = vld [vmem:[%s41 + $0x108] sm:$0xff]
      %v4826 = vld [vmem:[%s41 + $0x110] sm:$0xff]
      %v4827 = vld [vmem:[%s41 + $0x118] sm:$0xff]
      %v4828 = vld [vmem:[%s41 + $0x120] sm:$0xff]
      %v4829 = vld [vmem:[%s41 + $0x128] sm:$0xff]
      %v4830 = vld [vmem:[%s41 + $0x130] sm:$0xff]
      %v4831 = vld [vmem:[%s41 + $0x138] sm:$0xff]
      %v4832 = vld [vmem:[%s41 + $0x140] sm:$0xff]
      %v4833 = vld [vmem:[%s41 + $0x148] sm:$0xff]
      %v4834 = vld [vmem:[%s41 + $0x150] sm:$0xff]
      %v4835 = vld [vmem:[%s41 + $0x158] sm:$0xff]
      %v4836 = vld [vmem:[%s41 + $0x160] sm:$0xff]
      %v4837 = vld [vmem:[%s41 + $0x168] sm:$0xff]
      %v4838 = vld [vmem:[%s41 + $0x170] sm:$0xff]
      %v4839 = vld [vmem:[%s41 + $0x178] sm:$0xff]
      %v4840 = vld [vmem:[%s41 + $0x180] sm:$0xff]
      %v4841 = vld [vmem:[%s41 + $0x188] sm:$0xff]
      %v4842 = vld [vmem:[%s41 + $0x190] sm:$0xff]
      %v4843 = vld [vmem:[%s41 + $0x198] sm:$0xff]
      %v4844 = vld [vmem:[%s41 + $0x1a0] sm:$0xff]
      %v4845 = vld [vmem:[%s41 + $0x1a8] sm:$0xff]
      %v4846 = vld [vmem:[%s41 + $0x1b0] sm:$0xff]
      %v4847 = vld [vmem:[%s41 + $0x1b8] sm:$0xff]
      %v4848 = vld [vmem:[%s41 + $0x1c0] sm:$0xff]
      %v4849 = vld [vmem:[%s41 + $0x1c8] sm:$0xff]
      %v4850 = vld [vmem:[%s41 + $0x1d0] sm:$0xff]
      %v4851 = vld [vmem:[%s41 + $0x1d8] sm:$0xff]
      %v4852 = vld [vmem:[%s41 + $0x1e0] sm:$0xff]
      %v4853 = vld [vmem:[%s41 + $0x1e8] sm:$0xff]
      %v4854 = vld [vmem:[%s41 + $0x1f0] sm:$0xff]
      %v4855 = vld [vmem:[%s41 + $0x1f8] sm:$0xff]
      %v4856 = vld [vmem:[%s41 + $0x200] sm:$0xff]
      %v4857 = vld [vmem:[%s41 + $0x208] sm:$0xff]
      %v4858 = vld [vmem:[%s41 + $0x210] sm:$0xff]
      %v4859 = vld [vmem:[%s41 + $0x218] sm:$0xff]
      %v4860 = vld [vmem:[%s41 + $0x220] sm:$0xff]
      %v4861 = vld [vmem:[%s41 + $0x228] sm:$0xff]
      %v4862 = vld [vmem:[%s41 + $0x230] sm:$0xff]
      %v4863 = vld [vmem:[%s41 + $0x238] sm:$0xff]
      %v4864 = vld [vmem:[%s43] sm:$0x1]
      %v4865 = vld [vmem:[%s45] sm:$0x1]
      %v4866 = vld [vmem:[%s47] sm:$0x1]
      %v4868 = vsel %vm2209, %v4751, 0
      %v4871 = vsel %vm2209, %v4752, 0
      %v4874 = vsel %vm2209, %v4753, 0
      %v4877 = vsel %vm2209, %v4754, 0
      %v4880 = vsel %vm2209, %v4755, 0
      %v4883 = vsel %vm2209, %v4756, 0
      %v4886 = vsel %vm2209, %v4757, 0
      %v4889 = vsel %vm2209, %v4758, 0
      %v4892 = vsel %vm2209, %v4759, 0
      %v4895 = vsel %vm2209, %v4760, 0
      %v4898 = vsel %vm2209, %v4761, 0
      %v4901 = vsel %vm2209, %v4762, 0
      %v4904 = vsel %vm2209, %v4763, 0
      %v4907 = vsel %vm2209, %v4764, 0
      %v4910 = vsel %vm2209, %v4765, 0
      %v4913 = vsel %vm2209, %v4766, 0
      %v4916 = vsel %vm2209, %v4767, 0
      %v4919 = vsel %vm2209, %v4768, 0
      %v4922 = vsel %vm2209, %v4769, 0
      %v4925 = vsel %vm2209, %v4770, 0
      %v4928 = vsel %vm2209, %v4771, 0
      %v4931 = vsel %vm2209, %v4772, 0
      %v4934 = vsel %vm2209, %v4773, 0
      %v4937 = vsel %vm2209, %v4774, 0
      %v4940 = vsel %vm2209, %v4775, 0
      %v4943 = vsel %vm2209, %v4776, 0
      %v4946 = vsel %vm2209, %v4777, 0
      %v4949 = vsel %vm2209, %v4778, 0
      %v4952 = vsel %vm2209, %v4779, 0
      %v4955 = vsel %vm2209, %v4780, 0
      %v4958 = vsel %vm2209, %v4781, 0
      %v4961 = vsel %vm2209, %v4782, 0
      %4963 = vmatprep.subr.mxu0 0.0
      %4964 = vmatpush1.msra.mxu0 %v4783
      %4965 = vmatprep.subr.mxu0 0.0
      %4966 = vmatpush1.msra.mxu0 %v4784
      %4967 = vmatprep.subr.mxu0 0.0
      %4968 = vmatpush1.msra.mxu0 %v4785
      %4969 = vmatprep.subr.mxu0 0.0
      %4970 = vmatpush1.msra.mxu0 %v4786
      %4971 = vmatprep.subr.mxu0 0.0
      %4972 = vmatpush1.msra.mxu0 %v4787
      %4973 = vmatprep.subr.mxu0 0.0
      %4974 = vmatpush1.msra.mxu0 %v4788
      %4975 = vmatprep.subr.mxu0 0.0
      %4976 = vmatpush1.msra.mxu0 %v4789
      %4977 = vmatprep.subr.mxu0 0.0
      %4978 = vmatpush1.msra.mxu0 %v4790
      %4979 = vmatprep.subr.mxu0 0.0
      %4980 = vmatpush1.msra.mxu0 0.0
      %4981 = vmatprep.subr.mxu0 0.0
      %4982 = vmatpush1.msra.mxu0 0.0
      %4983 = vmatprep.subr.mxu0 0.0
      %4984 = vmatpush1.msra.mxu0 0.0
      %4985 = vmatprep.subr.mxu0 0.0
      %4986 = vmatpush1.msra.mxu0 0.0
      %4987 = vmatprep.subr.mxu0 0.0
      %4988 = vmatpush1.msra.mxu0 0.0
      %4989 = vmatprep.subr.mxu0 0.0
      %4990 = vmatpush1.msra.mxu0 0.0
      %4991 = vmatprep.subr.mxu0 0.0
      %4992 = vmatpush1.msra.mxu0 0.0
      %4993 = vmatprep.subr.mxu0 0.0
      %4994 = vmatpush1.msra.mxu0 0.0
      %4995 = vmatprep.subr.mxu0 0.0
      %4996 = vmatpush1.msra.mxu0 0.0
      %4997 = vmatprep.subr.mxu0 0.0
      %4998 = vmatpush1.msra.mxu0 0.0
      %4999 = vmatprep.subr.mxu0 0.0
      %5000 = vmatpush1.msra.mxu0 0.0
      %5001 = vmatprep.subr.mxu0 0.0
      %5002 = vmatpush1.msra.mxu0 0.0
      %5003 = vmatprep.subr.mxu0 0.0
      %5004 = vmatpush1.msra.mxu0 0.0
      %5005 = vmatprep.subr.mxu0 0.0
      %5006 = vmatpush1.msra.mxu0 0.0
      %5007 = vmatprep.subr.mxu0 0.0
      %5008 = vmatpush1.msra.mxu0 0.0
      %5009 = vmatprep.subr.mxu0 0.0
      %5010 = vmatpush1.msra.mxu0 0.0
      %5011 = vmatprep.subr.mxu0 0.0
      %5012 = vmatpush1.msra.mxu0 0.0
      %5013 = vmatprep.subr.mxu0 0.0
      %5014 = vmatpush1.msra.mxu0 0.0
      %5015 = vmatprep.subr.mxu0 0.0
      %5016 = vmatpush1.msra.mxu0 0.0
      %5017 = vmatprep.subr.mxu0 0.0
      %5018 = vmatpush1.msra.mxu0 0.0
      %5019 = vmatprep.subr.mxu0 0.0
      %5020 = vmatpush1.msra.mxu0 0.0
      %5021 = vmatprep.subr.mxu0 0.0
      %5022 = vmatpush1.msra.mxu0 0.0
      %5023 = vmatprep.subr.mxu0 0.0
      %5024 = vmatpush1.msra.mxu0 0.0
      %5025 = vmatprep.subr.mxu0 0.0
      %5026 = vmatpush1.msra.mxu0 0.0
      %5027 = vmatprep.mubr.f32.mxu0 0.0
      %5028 = vmatmul.mubr.f32.gmra.mrb[0].mxu0 %v4868
      %v5029 = vpop.f32.mrb[0].mxu0
      %v5030 = vadd.f32 0.0, %v5029
      %v5031 = vpop.f32.mrb[0].mxu0
      %5032 = vmatprep.mubr.f32.mxu0 0.0
      %5033 = vmatmul.mubr.f32.gmra.mrb[0].mxu0 %v4871
      %v5034 = vpop.f32.mrb[0].mxu0
      %v5035 = vadd.f32 0.0, %v5034
      %v5036 = vpop.f32.mrb[0].mxu0
      %5037 = vmatprep.mubr.f32.mxu0 0.0
      %5038 = vmatmul.mubr.f32.gmra.mrb[0].mxu0 %v4874
      %v5039 = vpop.f32.mrb[0].mxu0
      %v5040 = vadd.f32 0.0, %v5039
      %v5041 = vpop.f32.mrb[0].mxu0
      %5042 = vmatprep.mubr.f32.mxu0 0.0
      %5043 = vmatmul.mubr.f32.gmra.mrb[0].mxu0 %v4877
      %v5044 = vpop.f32.mrb[0].mxu0
      %v5045 = vadd.f32 0.0, %v5044
      %v5046 = vpop.f32.mrb[0].mxu0
      %5047 = vmatprep.mubr.f32.mxu0 0.0
      %5048 = vmatmul.mubr.f32.gmra.mrb[0].mxu0 %v4880
      %v5049 = vpop.f32.mrb[0].mxu0
      %v5050 = vadd.f32 0.0, %v5049
      %v5051 = vpop.f32.mrb[0].mxu0
      %5052 = vmatprep.mubr.f32.mxu0 0.0
      %5053 = vmatmul.mubr.f32.gmra.mrb[0].mxu0 %v4883
      %v5054 = vpop.f32.mrb[0].mxu0
      %v5055 = vadd.f32 0.0, %v5054
      %v5056 = vpop.f32.mrb[0].mxu0
      %5057 = vmatprep.mubr.f32.mxu0 0.0
      %5058 = vmatmul.mubr.f32.gmra.mrb[0].mxu0 %v4886
      %v5059 = vpop.f32.mrb[0].mxu0
      %v5060 = vadd.f32 0.0, %v5059
      %v5061 = vpop.f32.mrb[0].mxu0
      %5062 = vmatprep.mubr.f32.mxu0 0.0
      %5063 = vmatmul.mubr.f32.gmra.mrb[0].mxu0 %v4889
      %v5064 = vpop.f32.mrb[0].mxu0
      %v5065 = vadd.f32 0.0, %v5064
      %v5066 = vpop.f32.mrb[0].mxu0
      %5067 = vmatprep.mubr.f32.mxu0 0.0
      %5068 = vmatmul.mubr.f32.gmra.mrb[0].mxu0 %v4892
      %v5069 = vpop.f32.mrb[0].mxu0
      %v5070 = vadd.f32 0.0, %v5069
      %v5071 = vpop.f32.mrb[0].mxu0
      %5072 = vmatprep.mubr.f32.mxu0 0.0
      %5073 = vmatmul.mubr.f32.gmra.mrb[0].mxu0 %v4895
      %v5074 = vpop.f32.mrb[0].mxu0
      %v5075 = vadd.f32 0.0, %v5074
      %v5076 = vpop.f32.mrb[0].mxu0
      %5077 = vmatprep.mubr.f32.mxu0 0.0
      %5078 = vmatmul.mubr.f32.gmra.mrb[0].mxu0 %v4898
      %v5079 = vpop.f32.mrb[0].mxu0
      %v5080 = vadd.f32 0.0, %v5079
      %v5081 = vpop.f32.mrb[0].mxu0
      %5082 = vmatprep.mubr.f32.mxu0 0.0
      %5083 = vmatmul.mubr.f32.gmra.mrb[0].mxu0 %v4901
      %v5084 = vpop.f32.mrb[0].mxu0
      %v5085 = vadd.f32 0.0, %v5084
      %v5086 = vpop.f32.mrb[0].mxu0
      %5087 = vmatprep.mubr.f32.mxu0 0.0
      %5088 = vmatmul.mubr.f32.gmra.mrb[0].mxu0 %v4904
      %v5089 = vpop.f32.mrb[0].mxu0
      %v5090 = vadd.f32 0.0, %v5089
      %v5091 = vpop.f32.mrb[0].mxu0
      %5092 = vmatprep.mubr.f32.mxu0 0.0
      %5093 = vmatmul.mubr.f32.gmra.mrb[0].mxu0 %v4907
      %v5094 = vpop.f32.mrb[0].mxu0
      %v5095 = vadd.f32 0.0, %v5094
      %v5096 = vpop.f32.mrb[0].mxu0
      %5097 = vmatprep.mubr.f32.mxu0 0.0
      %5098 = vmatmul.mubr.f32.gmra.mrb[0].mxu0 %v4910
      %v5099 = vpop.f32.mrb[0].mxu0
      %v5100 = vadd.f32 0.0, %v5099
      %v5101 = vpop.f32.mrb[0].mxu0
      %5102 = vmatprep.mubr.f32.mxu0 0.0
      %5103 = vmatmul.mubr.f32.gmra.mrb[0].mxu0 %v4913
      %v5104 = vpop.f32.mrb[0].mxu0
      %v5105 = vadd.f32 0.0, %v5104
      %v5106 = vpop.f32.mrb[0].mxu0
      %5107 = vmatprep.mubr.f32.mxu0 0.0
      %5108 = vmatmul.mubr.f32.gmra.mrb[0].mxu0 %v4916
      %v5109 = vpop.f32.mrb[0].mxu0
      %v5110 = vadd.f32 0.0, %v5109
      %v5111 = vpop.f32.mrb[0].mxu0
      %5112 = vmatprep.mubr.f32.mxu0 0.0
      %5113 = vmatmul.mubr.f32.gmra.mrb[0].mxu0 %v4919
      %v5114 = vpop.f32.mrb[0].mxu0
      %v5115 = vadd.f32 0.0, %v5114
      %v5116 = vpop.f32.mrb[0].mxu0
      %5117 = vmatprep.mubr.f32.mxu0 0.0
      %5118 = vmatmul.mubr.f32.gmra.mrb[0].mxu0 %v4922
      %v5119 = vpop.f32.mrb[0].mxu0
      %v5120 = vadd.f32 0.0, %v5119
      %v5121 = vpop.f32.mrb[0].mxu0
      %5122 = vmatprep.mubr.f32.mxu0 0.0
      %5123 = vmatmul.mubr.f32.gmra.mrb[0].mxu0 %v4925
      %v5124 = vpop.f32.mrb[0].mxu0
      %v5125 = vadd.f32 0.0, %v5124
      %v5126 = vpop.f32.mrb[0].mxu0
      %5127 = vmatprep.mubr.f32.mxu0 0.0
      %5128 = vmatmul.mubr.f32.gmra.mrb[0].mxu0 %v4928
      %v5129 = vpop.f32.mrb[0].mxu0
      %v5130 = vadd.f32 0.0, %v5129
      %v5131 = vpop.f32.mrb[0].mxu0
      %5132 = vmatprep.mubr.f32.mxu0 0.0
      %5133 = vmatmul.mubr.f32.gmra.mrb[0].mxu0 %v4931
      %v5134 = vpop.f32.mrb[0].mxu0
      %v5135 = vadd.f32 0.0, %v5134
      %v5136 = vpop.f32.mrb[0].mxu0
      %5137 = vmatprep.mubr.f32.mxu0 0.0
      %5138 = vmatmul.mubr.f32.gmra.mrb[0].mxu0 %v4934
      %v5139 = vpop.f32.mrb[0].mxu0
      %v5140 = vadd.f32 0.0, %v5139
      %v5141 = vpop.f32.mrb[0].mxu0
      %5142 = vmatprep.mubr.f32.mxu0 0.0
      %5143 = vmatmul.mubr.f32.gmra.mrb[0].mxu0 %v4937
      %v5144 = vpop.f32.mrb[0].mxu0
      %v5145 = vadd.f32 0.0, %v5144
      %v5146 = vpop.f32.mrb[0].mxu0
      %5147 = vmatprep.mubr.f32.mxu0 0.0
      %5148 = vmatmul.mubr.f32.gmra.mrb[0].mxu0 %v4940
      %v5149 = vpop.f32.mrb[0].mxu0
      %v5150 = vadd.f32 0.0, %v5149
      %v5151 = vpop.f32.mrb[0].mxu0
      %5152 = vmatprep.mubr.f32.mxu0 0.0
      %5153 = vmatmul.mubr.f32.gmra.mrb[0].mxu0 %v4943
      %v5154 = vpop.f32.mrb[0].mxu0
      %v5155 = vadd.f32 0.0, %v5154
      %v5156 = vpop.f32.mrb[0].mxu0
      %5157 = vmatprep.mubr.f32.mxu0 0.0
      %5158 = vmatmul.mubr.f32.gmra.mrb[0].mxu0 %v4946
      %v5159 = vpop.f32.mrb[0].mxu0
      %v5160 = vadd.f32 0.0, %v5159
      %v5161 = vpop.f32.mrb[0].mxu0
      %5162 = vmatprep.mubr.f32.mxu0 0.0
      %5163 = vmatmul.mubr.f32.gmra.mrb[0].mxu0 %v4949
      %v5164 = vpop.f32.mrb[0].mxu0
      %v5165 = vadd.f32 0.0, %v5164
      %v5166 = vpop.f32.mrb[0].mxu0
      %5167 = vmatprep.mubr.f32.mxu0 0.0
      %5168 = vmatmul.mubr.f32.gmra.mrb[0].mxu0 %v4952
      %v5169 = vpop.f32.mrb[0].mxu0
      %v5170 = vadd.f32 0.0, %v5169
      %v5171 = vpop.f32.mrb[0].mxu0
      %5172 = vmatprep.mubr.f32.mxu0 0.0
      %5173 = vmatmul.mubr.f32.gmra.mrb[0].mxu0 %v4955
      %v5174 = vpop.f32.mrb[0].mxu0
      %v5175 = vadd.f32 0.0, %v5174
      %v5176 = vpop.f32.mrb[0].mxu0
      %5177 = vmatprep.mubr.f32.mxu0 0.0
      %5178 = vmatmul.mubr.f32.gmra.mrb[0].mxu0 %v4958
      %v5179 = vpop.f32.mrb[0].mxu0
      %v5180 = vadd.f32 0.0, %v5179
      %v5181 = vpop.f32.mrb[0].mxu0
      %5182 = vmatprep.mubr.f32.mxu0 0.0
      %5183 = vmatmul.mubr.f32.gmra.mrb[0].mxu0 %v4961
      %v5184 = vpop.f32.mrb[0].mxu0
      %v5185 = vadd.f32 0.0, %v5184
      %v5186 = vpop.f32.mrb[0].mxu0
      %5187 = vdwg.mxu0
      %v5189 = vlaneseq
      %v5190 = vshrl.u32 %v5189, 7
      %v5191 = vsub.s32 0, %v5190
      %v5192 = vrot.slane %v4791, %v5191
      %5194 = vmatprep.subr.mxu0 0.0
      %5195 = vmatpush1.msra.mxu0 %v5030
      %5196 = vmatprep.subr.mxu0 0.0
      %5197 = vmatpush1.msra.mxu0 %v5035
      %5198 = vmatprep.subr.mxu0 0.0
      %5199 = vmatpush1.msra.mxu0 %v5040
      %5200 = vmatprep.subr.mxu0 0.0
      %5201 = vmatpush1.msra.mxu0 %v5045
      %5202 = vmatprep.subr.mxu0 0.0
      %5203 = vmatpush1.msra.mxu0 %v5050
      %5204 = vmatprep.subr.mxu0 0.0
      %5205 = vmatpush1.msra.mxu0 %v5055
      %5206 = vmatprep.subr.mxu0 0.0
      %5207 = vmatpush1.msra.mxu0 %v5060
      %5208 = vmatprep.subr.mxu0 0.0
      %5209 = vmatpush1.msra.mxu0 %v5065
      %5210 = vmatprep.subr.mxu0 0.0
      %5211 = vmatpush1.msra.mxu0 %v5070
      %5212 = vmatprep.subr.mxu0 0.0
      %5213 = vmatpush1.msra.mxu0 %v5075
      %5214 = vmatprep.subr.mxu0 0.0
      %5215 = vmatpush1.msra.mxu0 %v5080
      %5216 = vmatprep.subr.mxu0 0.0
      %5217 = vmatpush1.msra.mxu0 %v5085
      %5218 = vmatprep.subr.mxu0 0.0
      %5219 = vmatpush1.msra.mxu0 %v5090
      %5220 = vmatprep.subr.mxu0 0.0
      %5221 = vmatpush1.msra.mxu0 %v5095
      %5222 = vmatprep.subr.mxu0 0.0
      %5223 = vmatpush1.msra.mxu0 %v5100
      %5224 = vmatprep.subr.mxu0 0.0
      %5225 = vmatpush1.msra.mxu0 %v5105
      %5226 = vmatprep.subr.mxu0 0.0
      %5227 = vmatpush1.msra.mxu0 %v5110
      %5228 = vmatprep.subr.mxu0 0.0
      %5229 = vmatpush1.msra.mxu0 %v5115
      %5230 = vmatprep.subr.mxu0 0.0
      %5231 = vmatpush1.msra.mxu0 %v5120
      %5232 = vmatprep.subr.mxu0 0.0
      %5233 = vmatpush1.msra.mxu0 %v5125
      %5234 = vmatprep.subr.mxu0 0.0
      %5235 = vmatpush1.msra.mxu0 %v5130
      %5236 = vmatprep.subr.mxu0 0.0
      %5237 = vmatpush1.msra.mxu0 %v5135
      %5238 = vmatprep.subr.mxu0 0.0
      %5239 = vmatpush1.msra.mxu0 %v5140
      %5240 = vmatprep.subr.mxu0 0.0
      %5241 = vmatpush1.msra.mxu0 %v5145
      %5242 = vmatprep.subr.mxu0 0.0
      %5243 = vmatpush1.msra.mxu0 %v5150
      %5244 = vmatprep.subr.mxu0 0.0
      %5245 = vmatpush1.msra.mxu0 %v5155
      %5246 = vmatprep.subr.mxu0 0.0
      %5247 = vmatpush1.msra.mxu0 %v5160
      %5248 = vmatprep.subr.mxu0 0.0
      %5249 = vmatpush1.msra.mxu0 %v5165
      %5250 = vmatprep.subr.mxu0 0.0
      %5251 = vmatpush1.msra.mxu0 %v5170
      %5252 = vmatprep.subr.mxu0 0.0
      %5253 = vmatpush1.msra.mxu0 %v5175
      %5254 = vmatprep.subr.mxu0 0.0
      %5255 = vmatpush1.msra.mxu0 %v5180
      %5256 = vmatprep.subr.mxu0 0.0
      %5257 = vmatpush1.msra.mxu0 %v5185
      %5258 = vmatprep.mubr.f32.mxu0 %v1144
      %5259 = vmatmul.mubr.f32.gmra.mrb[0].mxu0 %v1143
      %v5260 = vpop.f32.mrb[0].mxu0
      %v5261 = vadd.f32 %v5192, %v5260
      %v5262 = vpop.f32.mrb[0].mxu0
      %5263 = vmatprep.mubr.f32.mxu0 %v1146
      %5264 = vmatmul.mubr.f32.gmra.mrb[0].mxu0 %v1145
      %v5265 = vpop.f32.mrb[0].mxu0
      %v5266 = vadd.f32 %v5192, %v5265
      %v5267 = vpop.f32.mrb[0].mxu0
      %5268 = vmatprep.mubr.f32.mxu0 %v1148
      %5269 = vmatmul.mubr.f32.gmra.mrb[0].mxu0 %v1147
      %v5270 = vpop.f32.mrb[0].mxu0
      %v5271 = vadd.f32 %v5192, %v5270
      %v5272 = vpop.f32.mrb[0].mxu0
      %5273 = vmatprep.mubr.f32.mxu0 %v1150
      %5274 = vmatmul.mubr.f32.gmra.mrb[0].mxu0 %v1149
      %v5275 = vpop.f32.mrb[0].mxu0
      %v5276 = vadd.f32 %v5192, %v5275
      %v5277 = vpop.f32.mrb[0].mxu0
      %5278 = vmatprep.mubr.f32.mxu0 %v1152
      %5279 = vmatmul.mubr.f32.gmra.mrb[0].mxu0 %v1151
      %v5280 = vpop.f32.mrb[0].mxu0
      %v5281 = vadd.f32 %v5192, %v5280
      %v5282 = vpop.f32.mrb[0].mxu0
      %5283 = vmatprep.mubr.f32.mxu0 %v1154
      %5284 = vmatmul.mubr.f32.gmra.mrb[0].mxu0 %v1153
      %v5285 = vpop.f32.mrb[0].mxu0
      %v5286 = vadd.f32 %v5192, %v5285
      %v5287 = vpop.f32.mrb[0].mxu0
      %5288 = vmatprep.mubr.f32.mxu0 %v1156
      %5289 = vmatmul.mubr.f32.gmra.mrb[0].mxu0 %v1155
      %v5290 = vpop.f32.mrb[0].mxu0
      %v5291 = vadd.f32 %v5192, %v5290
      %v5292 = vpop.f32.mrb[0].mxu0
      %5293 = vmatprep.mubr.f32.mxu0 %v1158
      %5294 = vmatmul.mubr.f32.gmra.mrb[0].mxu0 %v1157
      %v5295 = vpop.f32.mrb[0].mxu0
      %v5296 = vadd.f32 %v5192, %v5295
      %v5297 = vpop.f32.mrb[0].mxu0
      %5298 = vmatprep.mubr.f32.mxu0 %v1160
      %5299 = vmatmul.mubr.f32.gmra.mrb[0].mxu0 %v1159
      %v5300 = vpop.f32.mrb[0].mxu0
      %v5301 = vadd.f32 %v5192, %v5300
      %v5302 = vpop.f32.mrb[0].mxu0
      %5303 = vmatprep.mubr.f32.mxu0 %v1162
      %5304 = vmatmul.mubr.f32.gmra.mrb[0].mxu0 %v1161
      %v5305 = vpop.f32.mrb[0].mxu0
      %v5306 = vadd.f32 %v5192, %v5305
      %v5307 = vpop.f32.mrb[0].mxu0
      %5308 = vmatprep.mubr.f32.mxu0 %v1164
      %5309 = vmatmul.mubr.f32.gmra.mrb[0].mxu0 %v1163
      %v5310 = vpop.f32.mrb[0].mxu0
      %v5311 = vadd.f32 %v5192, %v5310
      %v5312 = vpop.f32.mrb[0].mxu0
      %5313 = vmatprep.mubr.f32.mxu0 %v1166
      %5314 = vmatmul.mubr.f32.gmra.mrb[0].mxu0 %v1165
      %v5315 = vpop.f32.mrb[0].mxu0
      %v5316 = vadd.f32 %v5192, %v5315
      %v5317 = vpop.f32.mrb[0].mxu0
      %5318 = vmatprep.mubr.f32.mxu0 %v1168
      %5319 = vmatmul.mubr.f32.gmra.mrb[0].mxu0 %v1167
      %v5320 = vpop.f32.mrb[0].mxu0
      %v5321 = vadd.f32 %v5192, %v5320
      %v5322 = vpop.f32.mrb[0].mxu0
      %5323 = vmatprep.mubr.f32.mxu0 %v1170
      %5324 = vmatmul.mubr.f32.gmra.mrb[0].mxu0 %v1169
      %v5325 = vpop.f32.mrb[0].mxu0
      %v5326 = vadd.f32 %v5192, %v5325
      %v5327 = vpop.f32.mrb[0].mxu0
      %5328 = vmatprep.mubr.f32.mxu0 %v1172
      %5329 = vmatmul.mubr.f32.gmra.mrb[0].mxu0 %v1171
      %v5330 = vpop.f32.mrb[0].mxu0
      %v5331 = vadd.f32 %v5192, %v5330
      %v5332 = vpop.f32.mrb[0].mxu0
      %5333 = vmatprep.mubr.f32.mxu0 %v1174
      %5334 = vmatmul.mubr.f32.gmra.mrb[0].mxu0 %v1173
      %v5335 = vpop.f32.mrb[0].mxu0
      %v5336 = vadd.f32 %v5192, %v5335
      %v5337 = vpop.f32.mrb[0].mxu0
      %5338 = vmatprep.mubr.f32.mxu0 %v1176
      %5339 = vmatmul.mubr.f32.gmra.mrb[0].mxu0 %v1175
      %v5340 = vpop.f32.mrb[0].mxu0
      %v5341 = vadd.f32 %v5192, %v5340
      %v5342 = vpop.f32.mrb[0].mxu0
      %5343 = vmatprep.mubr.f32.mxu0 %v1178
      %5344 = vmatmul.mubr.f32.gmra.mrb[0].mxu0 %v1177
      %v5345 = vpop.f32.mrb[0].mxu0
      %v5346 = vadd.f32 %v5192, %v5345
      %v5347 = vpop.f32.mrb[0].mxu0
      %5348 = vmatprep.mubr.f32.mxu0 %v1180
      %5349 = vmatmul.mubr.f32.gmra.mrb[0].mxu0 %v1179
      %v5350 = vpop.f32.mrb[0].mxu0
      %v5351 = vadd.f32 %v5192, %v5350
      %v5352 = vpop.f32.mrb[0].mxu0
      %5353 = vmatprep.mubr.f32.mxu0 %v1182
      %5354 = vmatmul.mubr.f32.gmra.mrb[0].mxu0 %v1181
      %v5355 = vpop.f32.mrb[0].mxu0
      %v5356 = vadd.f32 %v5192, %v5355
      %v5357 = vpop.f32.mrb[0].mxu0
      %5358 = vmatprep.mubr.f32.mxu0 %v1184
      %5359 = vmatmul.mubr.f32.gmra.mrb[0].mxu0 %v1183
      %v5360 = vpop.f32.mrb[0].mxu0
      %v5361 = vadd.f32 %v5192, %v5360
      %v5362 = vpop.f32.mrb[0].mxu0
      %5363 = vmatprep.mubr.f32.mxu0 %v1186
      %5364 = vmatmul.mubr.f32.gmra.mrb[0].mxu0 %v1185
      %v5365 = vpop.f32.mrb[0].mxu0
      %v5366 = vadd.f32 %v5192, %v5365
      %v5367 = vpop.f32.mrb[0].mxu0
      %5368 = vmatprep.mubr.f32.mxu0 %v1188
      %5369 = vmatmul.mubr.f32.gmra.mrb[0].mxu0 %v1187
      %v5370 = vpop.f32.mrb[0].mxu0
      %v5371 = vadd.f32 %v5192, %v5370
      %v5372 = vpop.f32.mrb[0].mxu0
      %5373 = vmatprep.mubr.f32.mxu0 %v1190
      %5374 = vmatmul.mubr.f32.gmra.mrb[0].mxu0 %v1189
      %v5375 = vpop.f32.mrb[0].mxu0
      %v5376 = vadd.f32 %v5192, %v5375
      %v5377 = vpop.f32.mrb[0].mxu0
      %5378 = vmatprep.mubr.f32.mxu0 %v1192
      %5379 = vmatmul.mubr.f32.gmra.mrb[0].mxu0 %v1191
      %v5380 = vpop.f32.mrb[0].mxu0
      %v5381 = vadd.f32 %v5192, %v5380
      %v5382 = vpop.f32.mrb[0].mxu0
      %5383 = vmatprep.mubr.f32.mxu0 %v1194
      %5384 = vmatmul.mubr.f32.gmra.mrb[0].mxu0 %v1193
      %v5385 = vpop.f32.mrb[0].mxu0
      %v5386 = vadd.f32 %v5192, %v5385
      %v5387 = vpop.f32.mrb[0].mxu0
      %5388 = vmatprep.mubr.f32.mxu0 %v1196
      %5389 = vmatmul.mubr.f32.gmra.mrb[0].mxu0 %v1195
      %v5390 = vpop.f32.mrb[0].mxu0
      %v5391 = vadd.f32 %v5192, %v5390
      %v5392 = vpop.f32.mrb[0].mxu0
      %5393 = vmatprep.mubr.f32.mxu0 %v1198
      %5394 = vmatmul.mubr.f32.gmra.mrb[0].mxu0 %v1197
      %v5395 = vpop.f32.mrb[0].mxu0
      %v5396 = vadd.f32 %v5192, %v5395
      %v5397 = vpop.f32.mrb[0].mxu0
      %5398 = vmatprep.mubr.f32.mxu0 %v1200
      %5399 = vmatmul.mubr.f32.gmra.mrb[0].mxu0 %v1199
      %v5400 = vpop.f32.mrb[0].mxu0
      %v5401 = vadd.f32 %v5192, %v5400
      %v5402 = vpop.f32.mrb[0].mxu0
      %5403 = vmatprep.mubr.f32.mxu0 %v1202
      %5404 = vmatmul.mubr.f32.gmra.mrb[0].mxu0 %v1201
      %v5405 = vpop.f32.mrb[0].mxu0
      %v5406 = vadd.f32 %v5192, %v5405
      %v5407 = vpop.f32.mrb[0].mxu0
      %5408 = vmatprep.mubr.f32.mxu0 %v1204
      %5409 = vmatmul.mubr.f32.gmra.mrb[0].mxu0 %v1203
      %v5410 = vpop.f32.mrb[0].mxu0
      %v5411 = vadd.f32 %v5192, %v5410
      %v5412 = vpop.f32.mrb[0].mxu0
      %5413 = vmatprep.mubr.f32.mxu0 %v1206
      %5414 = vmatmul.mubr.f32.gmra.mrb[0].mxu0 %v1205
      %v5415 = vpop.f32.mrb[0].mxu0
      %v5416 = vadd.f32 %v5192, %v5415
      %v5417 = vpop.f32.mrb[0].mxu0
      %5418 = vdwg.mxu0
      %5445 = vrot.lane.b32.xlu0 %v5261, 64
      %v5446 = vpop.permute.xlu0 %5445
      %5447 = vrot.lane.b32.xlu0 %v5266, 64
      %v5448 = vpop.permute.xlu0 %5447
      %5449 = vrot.lane.b32.xlu0 %v5271, 64
      %v5450 = vpop.permute.xlu0 %5449
      %5451 = vrot.lane.b32.xlu0 %v5276, 64
      %v5452 = vpop.permute.xlu0 %5451
      %5453 = vrot.lane.b32.xlu0 %v5281, 64
      %v5454 = vpop.permute.xlu0 %5453
      %5455 = vrot.lane.b32.xlu0 %v5286, 64
      %v5456 = vpop.permute.xlu0 %5455
      %5457 = vrot.lane.b32.xlu0 %v5291, 64
      %v5458 = vpop.permute.xlu0 %5457
      %5459 = vrot.lane.b32.xlu0 %v5296, 64
      %v5460 = vpop.permute.xlu0 %5459
      %5461 = vrot.lane.b32.xlu0 %v5301, 64
      %v5462 = vpop.permute.xlu0 %5461
      %5463 = vrot.lane.b32.xlu0 %v5306, 64
      %v5464 = vpop.permute.xlu0 %5463
      %5465 = vrot.lane.b32.xlu0 %v5311, 64
      %v5466 = vpop.permute.xlu0 %5465
      %5467 = vrot.lane.b32.xlu0 %v5316, 64
      %v5468 = vpop.permute.xlu0 %5467
      %5469 = vrot.lane.b32.xlu0 %v5321, 64
      %v5470 = vpop.permute.xlu0 %5469
      %5471 = vrot.lane.b32.xlu0 %v5326, 64
      %v5472 = vpop.permute.xlu0 %5471
      %5473 = vrot.lane.b32.xlu0 %v5331, 64
      %v5474 = vpop.permute.xlu0 %5473
      %5475 = vrot.lane.b32.xlu0 %v5336, 64
      %v5476 = vpop.permute.xlu0 %5475
      %5477 = vrot.lane.b32.xlu0 %v5341, 64
      %v5478 = vpop.permute.xlu0 %5477
      %5479 = vrot.lane.b32.xlu0 %v5346, 64
      %v5480 = vpop.permute.xlu0 %5479
      %5481 = vrot.lane.b32.xlu0 %v5351, 64
      %v5482 = vpop.permute.xlu0 %5481
      %5483 = vrot.lane.b32.xlu0 %v5356, 64
      %v5484 = vpop.permute.xlu0 %5483
      %5485 = vrot.lane.b32.xlu0 %v5361, 64
      %v5486 = vpop.permute.xlu0 %5485
      %5487 = vrot.lane.b32.xlu0 %v5366, 64
      %v5488 = vpop.permute.xlu0 %5487
      %5489 = vrot.lane.b32.xlu0 %v5371, 64
      %v5490 = vpop.permute.xlu0 %5489
      %5491 = vrot.lane.b32.xlu0 %v5376, 64
      %v5492 = vpop.permute.xlu0 %5491
      %5493 = vrot.lane.b32.xlu0 %v5381, 64
      %v5494 = vpop.permute.xlu0 %5493
      %5495 = vrot.lane.b32.xlu0 %v5386, 64
      %v5496 = vpop.permute.xlu0 %5495
      %5527 = vrot.lane.b32.xlu0 %v5391, 64
      %v5528 = vpop.permute.xlu0 %5527
      %5529 = vrot.lane.b32.xlu0 %v5396, 64
      %v5530 = vpop.permute.xlu0 %5529
      %5531 = vrot.lane.b32.xlu0 %v5401, 64
      %v5532 = vpop.permute.xlu0 %5531
      %5533 = vrot.lane.b32.xlu0 %v5406, 64
      %v5534 = vpop.permute.xlu0 %5533
      %5541 = vrot.lane.b32.xlu0 %v5411, 64
      %v5542 = vpop.permute.xlu0 %5541
      %5543 = vrot.lane.b32.xlu0 %v5416, 64
      %v5544 = vpop.permute.xlu0 %5543
      %v5547 = vsel %vm2209, 0.0, %v5446
      %v5548 = vsel %vm2209, 0.0, %v5448
      %v5549 = vsel %vm2209, %v5261, %v5450
      %v5550 = vsel %vm2209, %v5266, %v5452
      %v5551 = vsel %vm2209, %v5271, %v5454
      %v5552 = vsel %vm2209, %v5276, %v5456
      %v5553 = vsel %vm2209, %v5281, %v5458
      %v5554 = vsel %vm2209, %v5286, %v5460
      %v5555 = vsel %vm2209, %v5291, %v5462
      %v5556 = vsel %vm2209, %v5296, %v5464
      %v5557 = vsel %vm2209, %v5301, %v5466
      %v5558 = vsel %vm2209, %v5306, %v5468
      %v5559 = vsel %vm2209, %v5311, %v5470
      %v5560 = vsel %vm2209, %v5316, %v5472
      %v5561 = vsel %vm2209, %v5321, %v5474
      %v5562 = vsel %vm2209, %v5326, %v5476
      %v5563 = vsel %vm2209, %v5331, %v5478
      %v5564 = vsel %vm2209, %v5336, %v5480
      %v5565 = vsel %vm2209, %v5341, %v5482
      %v5566 = vsel %vm2209, %v5346, %v5484
      %v5567 = vsel %vm2209, %v5351, %v5486
      %v5568 = vsel %vm2209, %v5356, %v5488
      %v5569 = vsel %vm2209, %v5361, %v5490
      %v5570 = vsel %vm2209, %v5366, %v5492
      %v5571 = vsel %vm2209, %v5371, %v5494
      %v5572 = vsel %vm2209, %v5376, %v5496
      %v5573 = vsel %vm2209, %v5381, %v5528
      %v5574 = vsel %vm2209, %v5386, %v5530
      %v5575 = vsel %vm2209, %v5391, %v5532
      %v5576 = vsel %vm2209, %v5396, %v5534
      %v5577 = vsel %vm2209, %v5401, %v5542
      %v5578 = vsel %vm2209, %v5406, %v5544
      %v5579 = vsel %vm2209, %v5411, %v2105
      %v5580 = vsel %vm2209, %v5416, %v2105
      %v5582 = vlaneseq
      %v5583 = vshrl.u32 %v5582, 7
      %v5584 = vsub.s32 0, %v5583
      %v5585 = vrot.slane %v4864, %v5584
      %v5587 = vsel %vm2209, %v5301, 0
      %v5589 = vsel %vm2209, %v5306, 0
      %v5591 = vsel %vm2209, %v5311, 0
      %v5593 = vsel %vm2209, %v5316, 0
      %v5595 = vsel %vm2209, %v5321, 0
      %v5597 = vsel %vm2209, %v5326, 0
      %v5599 = vsel %vm2209, %v5331, 0
      %v5601 = vsel %vm2209, %v5336, 0
      %v5603 = vsel %vm2209, %v5341, 0
      %v5605 = vsel %vm2209, %v5346, 0
      %v5607 = vsel %vm2209, %v5351, 0
      %v5609 = vsel %vm2209, %v5356, 0
      %v5611 = vsel %vm2209, %v5361, 0
      %v5613 = vsel %vm2209, %v5366, 0
      %v5615 = vsel %vm2209, %v5371, 0
      %v5617 = vsel %vm2209, %v5376, 0
      %v5619 = vsel %vm2209, %v5381, 0
      %v5621 = vsel %vm2209, %v5386, 0
      %v5623 = vsel %vm2209, %v5391, 0
      %v5625 = vsel %vm2209, %v5396, 0
      %v5627 = vsel %vm2209, %v5401, 0
      %v5629 = vsel %vm2209, %v5406, 0
      %v5631 = vsel %vm2209, %v5411, 0
      %v5633 = vsel %vm2209, %v5416, 0
      %5635 = vmatprep.subr.mxu0 0.0
      %5636 = vmatpush1.msra.mxu0 %v4792
      %5637 = vmatprep.subr.mxu0 0.0
      %5638 = vmatpush1.msra.mxu0 %v4793
      %5639 = vmatprep.subr.mxu0 0.0
      %5640 = vmatpush1.msra.mxu0 %v4794
      %5641 = vmatprep.subr.mxu0 0.0
      %5642 = vmatpush1.msra.mxu0 %v4795
      %5643 = vmatprep.subr.mxu0 0.0
      %5644 = vmatpush1.msra.mxu0 %v4796
      %5645 = vmatprep.subr.mxu0 0.0
      %5646 = vmatpush1.msra.mxu0 %v4797
      %5647 = vmatprep.subr.mxu0 0.0
      %5648 = vmatpush1.msra.mxu0 %v4798
      %5649 = vmatprep.subr.mxu0 0.0
      %5650 = vmatpush1.msra.mxu0 %v4799
      %5651 = vmatprep.subr.mxu0 0.0
      %5652 = vmatpush1.msra.mxu0 %v4800
      %5653 = vmatprep.subr.mxu0 0.0
      %5654 = vmatpush1.msra.mxu0 %v4801
      %5655 = vmatprep.subr.mxu0 0.0
      %5656 = vmatpush1.msra.mxu0 %v4802
      %5657 = vmatprep.subr.mxu0 0.0
      %5658 = vmatpush1.msra.mxu0 %v4803
      %5659 = vmatprep.subr.mxu0 0.0
      %5660 = vmatpush1.msra.mxu0 %v4804
      %5661 = vmatprep.subr.mxu0 0.0
      %5662 = vmatpush1.msra.mxu0 %v4805
      %5663 = vmatprep.subr.mxu0 0.0
      %5664 = vmatpush1.msra.mxu0 %v4806
      %5665 = vmatprep.subr.mxu0 0.0
      %5666 = vmatpush1.msra.mxu0 %v4807
      %5667 = vmatprep.subr.mxu0 0.0
      %5668 = vmatpush1.msra.mxu0 %v4808
      %5669 = vmatprep.subr.mxu0 0.0
      %5670 = vmatpush1.msra.mxu0 %v4809
      %5671 = vmatprep.subr.mxu0 0.0
      %5672 = vmatpush1.msra.mxu0 %v4810
      %5673 = vmatprep.subr.mxu0 0.0
      %5674 = vmatpush1.msra.mxu0 %v4811
      %5675 = vmatprep.subr.mxu0 0.0
      %5676 = vmatpush1.msra.mxu0 %v4812
      %5677 = vmatprep.subr.mxu0 0.0
      %5678 = vmatpush1.msra.mxu0 %v4813
      %5679 = vmatprep.subr.mxu0 0.0
      %5680 = vmatpush1.msra.mxu0 %v4814
      %5681 = vmatprep.subr.mxu0 0.0
      %5682 = vmatpush1.msra.mxu0 %v4815
      %5683 = vmatprep.subr.mxu0 0.0
      %5684 = vmatpush1.msra.mxu0 %v4816
      %5685 = vmatprep.subr.mxu0 0.0
      %5686 = vmatpush1.msra.mxu0 %v4817
      %5687 = vmatprep.subr.mxu0 0.0
      %5688 = vmatpush1.msra.mxu0 %v4818
      %5689 = vmatprep.subr.mxu0 0.0
      %5690 = vmatpush1.msra.mxu0 %v4819
      %5691 = vmatprep.subr.mxu0 0.0
      %5692 = vmatpush1.msra.mxu0 %v4820
      %5693 = vmatprep.subr.mxu0 0.0
      %5694 = vmatpush1.msra.mxu0 %v4821
      %5695 = vmatprep.subr.mxu0 0.0
      %5696 = vmatpush1.msra.mxu0 %v4822
      %5697 = vmatprep.subr.mxu0 0.0
      %5698 = vmatpush1.msra.mxu0 %v4823
      %5699 = vmatprep.mubr.f32.mxu0 %v2210
      %5700 = vmatmul.mubr.f32.gmra.mrb[0].mxu0 %v2210
      %v5701 = vpop.f32.mrb[0].mxu0
      %v5702 = vadd.f32 %v5585, %v5701
      %v5703 = vpop.f32.mrb[0].mxu0
      %5704 = vmatprep.mubr.f32.mxu0 %v2210
      %5705 = vmatmul.mubr.f32.gmra.mrb[0].mxu0 %v2210
      %v5706 = vpop.f32.mrb[0].mxu0
      %v5707 = vadd.f32 %v5585, %v5706
      %v5708 = vpop.f32.mrb[0].mxu0
      %5709 = vmatprep.mubr.f32.mxu0 %v5547
      %5710 = vmatmul.mubr.f32.gmra.mrb[0].mxu0 %v2210
      %v5711 = vpop.f32.mrb[0].mxu0
      %v5712 = vadd.f32 %v5585, %v5711
      %v5713 = vpop.f32.mrb[0].mxu0
      %5714 = vmatprep.mubr.f32.mxu0 %v5548
      %5715 = vmatmul.mubr.f32.gmra.mrb[0].mxu0 %v2210
      %v5716 = vpop.f32.mrb[0].mxu0
      %v5717 = vadd.f32 %v5585, %v5716
      %v5718 = vpop.f32.mrb[0].mxu0
      %5719 = vmatprep.mubr.f32.mxu0 %v5549
      %5720 = vmatmul.mubr.f32.gmra.mrb[0].mxu0 %v2210
      %v5721 = vpop.f32.mrb[0].mxu0
      %v5722 = vadd.f32 %v5585, %v5721
      %v5723 = vpop.f32.mrb[0].mxu0
      %5724 = vmatprep.mubr.f32.mxu0 %v5550
      %5725 = vmatmul.mubr.f32.gmra.mrb[0].mxu0 %v2210
      %v5726 = vpop.f32.mrb[0].mxu0
      %v5727 = vadd.f32 %v5585, %v5726
      %v5728 = vpop.f32.mrb[0].mxu0
      %5729 = vmatprep.mubr.f32.mxu0 %v5551
      %5730 = vmatmul.mubr.f32.gmra.mrb[0].mxu0 %v5547
      %v5731 = vpop.f32.mrb[0].mxu0
      %v5732 = vadd.f32 %v5585, %v5731
      %v5733 = vpop.f32.mrb[0].mxu0
      %5734 = vmatprep.mubr.f32.mxu0 %v5552
      %5735 = vmatmul.mubr.f32.gmra.mrb[0].mxu0 %v5548
      %v5736 = vpop.f32.mrb[0].mxu0
      %v5737 = vadd.f32 %v5585, %v5736
      %v5738 = vpop.f32.mrb[0].mxu0
      %5739 = vmatprep.mubr.f32.mxu0 %v5553
      %5740 = vmatmul.mubr.f32.gmra.mrb[0].mxu0 %v5549
      %v5741 = vpop.f32.mrb[0].mxu0
      %v5742 = vadd.f32 %v5585, %v5741
      %v5743 = vpop.f32.mrb[0].mxu0
      %5744 = vmatprep.mubr.f32.mxu0 %v5554
      %5745 = vmatmul.mubr.f32.gmra.mrb[0].mxu0 %v5550
      %v5746 = vpop.f32.mrb[0].mxu0
      %v5747 = vadd.f32 %v5585, %v5746
      %v5748 = vpop.f32.mrb[0].mxu0
      %5749 = vmatprep.mubr.f32.mxu0 %v5555
      %5750 = vmatmul.mubr.f32.gmra.mrb[0].mxu0 %v5551
      %v5751 = vpop.f32.mrb[0].mxu0
      %v5752 = vadd.f32 %v5585, %v5751
      %v5753 = vpop.f32.mrb[0].mxu0
      %5754 = vmatprep.mubr.f32.mxu0 %v5556
      %5755 = vmatmul.mubr.f32.gmra.mrb[0].mxu0 %v5552
      %v5756 = vpop.f32.mrb[0].mxu0
      %v5757 = vadd.f32 %v5585, %v5756
      %v5758 = vpop.f32.mrb[0].mxu0
      %5759 = vmatprep.mubr.f32.mxu0 %v5557
      %5760 = vmatmul.mubr.f32.gmra.mrb[0].mxu0 %v5553
      %v5761 = vpop.f32.mrb[0].mxu0
      %v5762 = vadd.f32 %v5585, %v5761
      %v5763 = vpop.f32.mrb[0].mxu0
      %5764 = vmatprep.mubr.f32.mxu0 %v5558
      %5765 = vmatmul.mubr.f32.gmra.mrb[0].mxu0 %v5554
      %v5766 = vpop.f32.mrb[0].mxu0
      %v5767 = vadd.f32 %v5585, %v5766
      %v5768 = vpop.f32.mrb[0].mxu0
      %5769 = vmatprep.mubr.f32.mxu0 %v5559
      %5770 = vmatmul.mubr.f32.gmra.mrb[0].mxu0 %v5555
      %v5771 = vpop.f32.mrb[0].mxu0
      %v5772 = vadd.f32 %v5585, %v5771
      %v5773 = vpop.f32.mrb[0].mxu0
      %5774 = vmatprep.mubr.f32.mxu0 %v5560
      %5775 = vmatmul.mubr.f32.gmra.mrb[0].mxu0 %v5556
      %v5776 = vpop.f32.mrb[0].mxu0
      %v5777 = vadd.f32 %v5585, %v5776
      %v5778 = vpop.f32.mrb[0].mxu0
      %5779 = vmatprep.mubr.f32.mxu0 %v5561
      %5780 = vmatmul.mubr.f32.gmra.mrb[0].mxu0 %v5557
      %v5781 = vpop.f32.mrb[0].mxu0
      %v5782 = vadd.f32 %v5585, %v5781
      %v5783 = vpop.f32.mrb[0].mxu0
      %5784 = vmatprep.mubr.f32.mxu0 %v5562
      %5785 = vmatmul.mubr.f32.gmra.mrb[0].mxu0 %v5558
      %v5786 = vpop.f32.mrb[0].mxu0
      %v5787 = vadd.f32 %v5585, %v5786
      %v5788 = vpop.f32.mrb[0].mxu0
      %5789 = vmatprep.mubr.f32.mxu0 %v5563
      %5790 = vmatmul.mubr.f32.gmra.mrb[0].mxu0 %v5559
      %v5791 = vpop.f32.mrb[0].mxu0
      %v5792 = vadd.f32 %v5585, %v5791
      %v5793 = vpop.f32.mrb[0].mxu0
      %5794 = vmatprep.mubr.f32.mxu0 %v5564
      %5795 = vmatmul.mubr.f32.gmra.mrb[0].mxu0 %v5560
      %v5796 = vpop.f32.mrb[0].mxu0
      %v5797 = vadd.f32 %v5585, %v5796
      %v5798 = vpop.f32.mrb[0].mxu0
      %5799 = vmatprep.mubr.f32.mxu0 %v5565
      %5800 = vmatmul.mubr.f32.gmra.mrb[0].mxu0 %v5561
      %v5801 = vpop.f32.mrb[0].mxu0
      %v5802 = vadd.f32 %v5585, %v5801
      %v5803 = vpop.f32.mrb[0].mxu0
      %5804 = vmatprep.mubr.f32.mxu0 %v5566
      %5805 = vmatmul.mubr.f32.gmra.mrb[0].mxu0 %v5562
      %v5806 = vpop.f32.mrb[0].mxu0
      %v5807 = vadd.f32 %v5585, %v5806
      %v5808 = vpop.f32.mrb[0].mxu0
      %5809 = vmatprep.mubr.f32.mxu0 %v5567
      %5810 = vmatmul.mubr.f32.gmra.mrb[0].mxu0 %v5563
      %v5811 = vpop.f32.mrb[0].mxu0
      %v5812 = vadd.f32 %v5585, %v5811
      %v5813 = vpop.f32.mrb[0].mxu0
      %5814 = vmatprep.mubr.f32.mxu0 %v5568
      %5815 = vmatmul.mubr.f32.gmra.mrb[0].mxu0 %v5564
      %v5816 = vpop.f32.mrb[0].mxu0
      %v5817 = vadd.f32 %v5585, %v5816
      %v5818 = vpop.f32.mrb[0].mxu0
      %5819 = vmatprep.mubr.f32.mxu0 %v5569
      %5820 = vmatmul.mubr.f32.gmra.mrb[0].mxu0 %v5565
      %v5821 = vpop.f32.mrb[0].mxu0
      %v5822 = vadd.f32 %v5585, %v5821
      %v5823 = vpop.f32.mrb[0].mxu0
      %5824 = vmatprep.mubr.f32.mxu0 %v5570
      %5825 = vmatmul.mubr.f32.gmra.mrb[0].mxu0 %v5566
      %v5826 = vpop.f32.mrb[0].mxu0
      %v5827 = vadd.f32 %v5585, %v5826
      %v5828 = vpop.f32.mrb[0].mxu0
      %5829 = vmatprep.mubr.f32.mxu0 %v5571
      %5830 = vmatmul.mubr.f32.gmra.mrb[0].mxu0 %v5567
      %v5831 = vpop.f32.mrb[0].mxu0
      %v5832 = vadd.f32 %v5585, %v5831
      %v5833 = vpop.f32.mrb[0].mxu0
      %5834 = vmatprep.mubr.f32.mxu0 %v5572
      %5835 = vmatmul.mubr.f32.gmra.mrb[0].mxu0 %v5568
      %v5836 = vpop.f32.mrb[0].mxu0
      %v5837 = vadd.f32 %v5585, %v5836
      %v5838 = vpop.f32.mrb[0].mxu0
      %5839 = vmatprep.mubr.f32.mxu0 %v5573
      %5840 = vmatmul.mubr.f32.gmra.mrb[0].mxu0 %v5569
      %v5841 = vpop.f32.mrb[0].mxu0
      %v5842 = vadd.f32 %v5585, %v5841
      %v5843 = vpop.f32.mrb[0].mxu0
      %5844 = vmatprep.mubr.f32.mxu0 %v5574
      %5845 = vmatmul.mubr.f32.gmra.mrb[0].mxu0 %v5570
      %v5846 = vpop.f32.mrb[0].mxu0
      %v5847 = vadd.f32 %v5585, %v5846
      %v5848 = vpop.f32.mrb[0].mxu0
      %5849 = vmatprep.mubr.f32.mxu0 %v5575
      %5850 = vmatmul.mubr.f32.gmra.mrb[0].mxu0 %v5571
      %v5851 = vpop.f32.mrb[0].mxu0
      %v5852 = vadd.f32 %v5585, %v5851
      %v5853 = vpop.f32.mrb[0].mxu0
      %5854 = vmatprep.mubr.f32.mxu0 %v5576
      %5855 = vmatmul.mubr.f32.gmra.mrb[0].mxu0 %v5572
      %v5856 = vpop.f32.mrb[0].mxu0
      %v5857 = vadd.f32 %v5585, %v5856
      %v5858 = vpop.f32.mrb[0].mxu0
      %5859 = vdwg.mxu0
      %5860 = vmatprep.subr.mxu0 0.0
      %5861 = vmatpush1.msra.mxu0 %v4824
      %5862 = vmatprep.subr.mxu0 0.0
      %5863 = vmatpush1.msra.mxu0 %v4825
      %5864 = vmatprep.subr.mxu0 0.0
      %5865 = vmatpush1.msra.mxu0 %v4826
      %5866 = vmatprep.subr.mxu0 0.0
      %5867 = vmatpush1.msra.mxu0 %v4827
      %5868 = vmatprep.subr.mxu0 0.0
      %5869 = vmatpush1.msra.mxu0 %v4828
      %5870 = vmatprep.subr.mxu0 0.0
      %5871 = vmatpush1.msra.mxu0 %v4829
      %5872 = vmatprep.subr.mxu0 0.0
      %5873 = vmatpush1.msra.mxu0 %v4830
      %5874 = vmatprep.subr.mxu0 0.0
      %5875 = vmatpush1.msra.mxu0 %v4831
      %5876 = vmatprep.subr.mxu0 0.0
      %5877 = vmatpush1.msra.mxu0 %v4832
      %5878 = vmatprep.subr.mxu0 0.0
      %5879 = vmatpush1.msra.mxu0 %v4833
      %5880 = vmatprep.subr.mxu0 0.0
      %5881 = vmatpush1.msra.mxu0 %v4834
      %5882 = vmatprep.subr.mxu0 0.0
      %5883 = vmatpush1.msra.mxu0 %v4835
      %5884 = vmatprep.subr.mxu0 0.0
      %5885 = vmatpush1.msra.mxu0 %v4836
      %5886 = vmatprep.subr.mxu0 0.0
      %5887 = vmatpush1.msra.mxu0 %v4837
      %5888 = vmatprep.subr.mxu0 0.0
      %5889 = vmatpush1.msra.mxu0 %v4838
      %5890 = vmatprep.subr.mxu0 0.0
      %5891 = vmatpush1.msra.mxu0 %v4839
      %5892 = vmatprep.subr.mxu0 0.0
      %5893 = vmatpush1.msra.mxu0 %v4840
      %5894 = vmatprep.subr.mxu0 0.0
      %5895 = vmatpush1.msra.mxu0 %v4841
      %5896 = vmatprep.subr.mxu0 0.0
      %5897 = vmatpush1.msra.mxu0 %v4842
      %5898 = vmatprep.subr.mxu0 0.0
      %5899 = vmatpush1.msra.mxu0 %v4843
      %5900 = vmatprep.subr.mxu0 0.0
      %5901 = vmatpush1.msra.mxu0 %v4844
      %5902 = vmatprep.subr.mxu0 0.0
      %5903 = vmatpush1.msra.mxu0 %v4845
      %5904 = vmatprep.subr.mxu0 0.0
      %5905 = vmatpush1.msra.mxu0 %v4846
      %5906 = vmatprep.subr.mxu0 0.0
      %5907 = vmatpush1.msra.mxu0 %v4847
      %5908 = vmatprep.subr.mxu0 0.0
      %5909 = vmatpush1.msra.mxu0 %v4848
      %5910 = vmatprep.subr.mxu0 0.0
      %5911 = vmatpush1.msra.mxu0 %v4849
      %5912 = vmatprep.subr.mxu0 0.0
      %5913 = vmatpush1.msra.mxu0 %v4850
      %5914 = vmatprep.subr.mxu0 0.0
      %5915 = vmatpush1.msra.mxu0 %v4851
      %5916 = vmatprep.subr.mxu0 0.0
      %5917 = vmatpush1.msra.mxu0 %v4852
      %5918 = vmatprep.subr.mxu0 0.0
      %5919 = vmatpush1.msra.mxu0 %v4853
      %5920 = vmatprep.subr.mxu0 0.0
      %5921 = vmatpush1.msra.mxu0 %v4854
      %5922 = vmatprep.subr.mxu0 0.0
      %5923 = vmatpush1.msra.mxu0 %v4855
      %5924 = vmatprep.mubr.f32.mxu0 %v5553
      %5925 = vmatmul.mubr.f32.gmra.mrb[0].mxu0 %v5549
      %v5926 = vpop.f32.mrb[0].mxu0
      %v5927 = vadd.f32 %v5702, %v5926
      %v5928 = vpop.f32.mrb[0].mxu0
      %5929 = vmatprep.mubr.f32.mxu0 %v5554
      %5930 = vmatmul.mubr.f32.gmra.mrb[0].mxu0 %v5550
      %v5931 = vpop.f32.mrb[0].mxu0
      %v5932 = vadd.f32 %v5707, %v5931
      %v5933 = vpop.f32.mrb[0].mxu0
      %5934 = vmatprep.mubr.f32.mxu0 %v5555
      %5935 = vmatmul.mubr.f32.gmra.mrb[0].mxu0 %v5551
      %v5936 = vpop.f32.mrb[0].mxu0
      %v5937 = vadd.f32 %v5712, %v5936
      %v5938 = vpop.f32.mrb[0].mxu0
      %5939 = vmatprep.mubr.f32.mxu0 %v5556
      %5940 = vmatmul.mubr.f32.gmra.mrb[0].mxu0 %v5552
      %v5941 = vpop.f32.mrb[0].mxu0
      %v5942 = vadd.f32 %v5717, %v5941
      %v5943 = vpop.f32.mrb[0].mxu0
      %5944 = vmatprep.mubr.f32.mxu0 %v5557
      %5945 = vmatmul.mubr.f32.gmra.mrb[0].mxu0 %v5553
      %v5946 = vpop.f32.mrb[0].mxu0
      %v5947 = vadd.f32 %v5722, %v5946
      %v5948 = vpop.f32.mrb[0].mxu0
      %5949 = vmatprep.mubr.f32.mxu0 %v5558
      %5950 = vmatmul.mubr.f32.gmra.mrb[0].mxu0 %v5554
      %v5951 = vpop.f32.mrb[0].mxu0
      %v5952 = vadd.f32 %v5727, %v5951
      %v5953 = vpop.f32.mrb[0].mxu0
      %5954 = vmatprep.mubr.f32.mxu0 %v5559
      %5955 = vmatmul.mubr.f32.gmra.mrb[0].mxu0 %v5555
      %v5956 = vpop.f32.mrb[0].mxu0
      %v5957 = vadd.f32 %v5732, %v5956
      %v5958 = vpop.f32.mrb[0].mxu0
      %5959 = vmatprep.mubr.f32.mxu0 %v5560
      %5960 = vmatmul.mubr.f32.gmra.mrb[0].mxu0 %v5556
      %v5961 = vpop.f32.mrb[0].mxu0
      %v5962 = vadd.f32 %v5737, %v5961
      %v5963 = vpop.f32.mrb[0].mxu0
      %5964 = vmatprep.mubr.f32.mxu0 %v5561
      %5965 = vmatmul.mubr.f32.gmra.mrb[0].mxu0 %v5557
      %v5966 = vpop.f32.mrb[0].mxu0
      %v5967 = vadd.f32 %v5742, %v5966
      %v5968 = vpop.f32.mrb[0].mxu0
      %5969 = vmatprep.mubr.f32.mxu0 %v5562
      %5970 = vmatmul.mubr.f32.gmra.mrb[0].mxu0 %v5558
      %v5971 = vpop.f32.mrb[0].mxu0
      %v5972 = vadd.f32 %v5747, %v5971
      %v5973 = vpop.f32.mrb[0].mxu0
      %5974 = vmatprep.mubr.f32.mxu0 %v5563
      %5975 = vmatmul.mubr.f32.gmra.mrb[0].mxu0 %v5559
      %v5976 = vpop.f32.mrb[0].mxu0
      %v5977 = vadd.f32 %v5752, %v5976
      %v5978 = vpop.f32.mrb[0].mxu0
      %5979 = vmatprep.mubr.f32.mxu0 %v5564
      %5980 = vmatmul.mubr.f32.gmra.mrb[0].mxu0 %v5560
      %v5981 = vpop.f32.mrb[0].mxu0
      %v5982 = vadd.f32 %v5757, %v5981
      %v5983 = vpop.f32.mrb[0].mxu0
      %5984 = vmatprep.mubr.f32.mxu0 %v5565
      %5985 = vmatmul.mubr.f32.gmra.mrb[0].mxu0 %v5561
      %v5986 = vpop.f32.mrb[0].mxu0
      %v5987 = vadd.f32 %v5762, %v5986
      %v5988 = vpop.f32.mrb[0].mxu0
      %5989 = vmatprep.mubr.f32.mxu0 %v5566
      %5990 = vmatmul.mubr.f32.gmra.mrb[0].mxu0 %v5562
      %v5991 = vpop.f32.mrb[0].mxu0
      %v5992 = vadd.f32 %v5767, %v5991
      %v5993 = vpop.f32.mrb[0].mxu0
      %5994 = vmatprep.mubr.f32.mxu0 %v5567
      %5995 = vmatmul.mubr.f32.gmra.mrb[0].mxu0 %v5563
      %v5996 = vpop.f32.mrb[0].mxu0
      %v5997 = vadd.f32 %v5772, %v5996
      %v5998 = vpop.f32.mrb[0].mxu0
      %5999 = vmatprep.mubr.f32.mxu0 %v5568
      %6000 = vmatmul.mubr.f32.gmra.mrb[0].mxu0 %v5564
      %v6001 = vpop.f32.mrb[0].mxu0
      %v6002 = vadd.f32 %v5777, %v6001
      %v6003 = vpop.f32.mrb[0].mxu0
      %6004 = vmatprep.mubr.f32.mxu0 %v5569
      %6005 = vmatmul.mubr.f32.gmra.mrb[0].mxu0 %v5565
      %v6006 = vpop.f32.mrb[0].mxu0
      %v6007 = vadd.f32 %v5782, %v6006
      %v6008 = vpop.f32.mrb[0].mxu0
      %6009 = vmatprep.mubr.f32.mxu0 %v5570
      %6010 = vmatmul.mubr.f32.gmra.mrb[0].mxu0 %v5566
      %v6011 = vpop.f32.mrb[0].mxu0
      %v6012 = vadd.f32 %v5787, %v6011
      %v6013 = vpop.f32.mrb[0].mxu0
      %6014 = vmatprep.mubr.f32.mxu0 %v5571
      %6015 = vmatmul.mubr.f32.gmra.mrb[0].mxu0 %v5567
      %v6016 = vpop.f32.mrb[0].mxu0
      %v6017 = vadd.f32 %v5792, %v6016
      %v6018 = vpop.f32.mrb[0].mxu0
      %6019 = vmatprep.mubr.f32.mxu0 %v5572
      %6020 = vmatmul.mubr.f32.gmra.mrb[0].mxu0 %v5568
      %v6021 = vpop.f32.mrb[0].mxu0
      %v6022 = vadd.f32 %v5797, %v6021
      %v6023 = vpop.f32.mrb[0].mxu0
      %6024 = vmatprep.mubr.f32.mxu0 %v5573
      %6025 = vmatmul.mubr.f32.gmra.mrb[0].mxu0 %v5569
      %v6026 = vpop.f32.mrb[0].mxu0
      %v6027 = vadd.f32 %v5802, %v6026
      %v6028 = vpop.f32.mrb[0].mxu0
      %6029 = vmatprep.mubr.f32.mxu0 %v5574
      %6030 = vmatmul.mubr.f32.gmra.mrb[0].mxu0 %v5570
      %v6031 = vpop.f32.mrb[0].mxu0
      %v6032 = vadd.f32 %v5807, %v6031
      %v6033 = vpop.f32.mrb[0].mxu0
      %6034 = vmatprep.mubr.f32.mxu0 %v5575
      %6035 = vmatmul.mubr.f32.gmra.mrb[0].mxu0 %v5571
      %v6036 = vpop.f32.mrb[0].mxu0
      %v6037 = vadd.f32 %v5812, %v6036
      %v6038 = vpop.f32.mrb[0].mxu0
      %6039 = vmatprep.mubr.f32.mxu0 %v5576
      %6040 = vmatmul.mubr.f32.gmra.mrb[0].mxu0 %v5572
      %v6041 = vpop.f32.mrb[0].mxu0
      %v6042 = vadd.f32 %v5817, %v6041
      %v6043 = vpop.f32.mrb[0].mxu0
      %6044 = vmatprep.mubr.f32.mxu0 %v5577
      %6045 = vmatmul.mubr.f32.gmra.mrb[0].mxu0 %v5573
      %v6046 = vpop.f32.mrb[0].mxu0
      %v6047 = vadd.f32 %v5822, %v6046
      %v6048 = vpop.f32.mrb[0].mxu0
      %6049 = vmatprep.mubr.f32.mxu0 %v5578
      %6050 = vmatmul.mubr.f32.gmra.mrb[0].mxu0 %v5574
      %v6051 = vpop.f32.mrb[0].mxu0
      %v6052 = vadd.f32 %v5827, %v6051
      %v6053 = vpop.f32.mrb[0].mxu0
      %6054 = vmatprep.mubr.f32.mxu0 %v5579
      %6055 = vmatmul.mubr.f32.gmra.mrb[0].mxu0 %v5575
      %v6056 = vpop.f32.mrb[0].mxu0
      %v6057 = vadd.f32 %v5832, %v6056
      %v6058 = vpop.f32.mrb[0].mxu0
      %6059 = vmatprep.mubr.f32.mxu0 %v5580
      %6060 = vmatmul.mubr.f32.gmra.mrb[0].mxu0 %v5576
      %v6061 = vpop.f32.mrb[0].mxu0
      %v6062 = vadd.f32 %v5837, %v6061
      %v6063 = vpop.f32.mrb[0].mxu0
      %6064 = vmatprep.mubr.f32.mxu0 %v2210
      %6065 = vmatmul.mubr.f32.gmra.mrb[0].mxu0 %v5577
      %v6066 = vpop.f32.mrb[0].mxu0
      %v6067 = vadd.f32 %v5842, %v6066
      %v6068 = vpop.f32.mrb[0].mxu0
      %6069 = vmatprep.mubr.f32.mxu0 %v2210
      %6070 = vmatmul.mubr.f32.gmra.mrb[0].mxu0 %v5578
      %v6071 = vpop.f32.mrb[0].mxu0
      %v6072 = vadd.f32 %v5847, %v6071
      %v6073 = vpop.f32.mrb[0].mxu0
      %6074 = vmatprep.mubr.f32.mxu0 %v2210
      %6075 = vmatmul.mubr.f32.gmra.mrb[0].mxu0 %v5579
      %v6076 = vpop.f32.mrb[0].mxu0
      %v6077 = vadd.f32 %v5852, %v6076
      %v6078 = vpop.f32.mrb[0].mxu0
      %6079 = vmatprep.mubr.f32.mxu0 %v2210
      %6080 = vmatmul.mubr.f32.gmra.mrb[0].mxu0 %v5580
      %v6081 = vpop.f32.mrb[0].mxu0
      %v6082 = vadd.f32 %v5857, %v6081
      %v6083 = vpop.f32.mrb[0].mxu0
      %6084 = vdwg.mxu0
      %6085 = vmatprep.subr.mxu0 0.0
      %6086 = vmatpush1.msra.mxu0 %v4856
      %6087 = vmatprep.subr.mxu0 0.0
      %6088 = vmatpush1.msra.mxu0 %v4857
      %6089 = vmatprep.subr.mxu0 0.0
      %6090 = vmatpush1.msra.mxu0 %v4858
      %6091 = vmatprep.subr.mxu0 0.0
      %6092 = vmatpush1.msra.mxu0 %v4859
      %6093 = vmatprep.subr.mxu0 0.0
      %6094 = vmatpush1.msra.mxu0 %v4860
      %6095 = vmatprep.subr.mxu0 0.0
      %6096 = vmatpush1.msra.mxu0 %v4861
      %6097 = vmatprep.subr.mxu0 0.0
      %6098 = vmatpush1.msra.mxu0 %v4862
      %6099 = vmatprep.subr.mxu0 0.0
      %6100 = vmatpush1.msra.mxu0 %v4863
      %6101 = vmatprep.subr.mxu0 0.0
      %6102 = vmatpush1.msra.mxu0 0.0
      %6103 = vmatprep.subr.mxu0 0.0
      %6104 = vmatpush1.msra.mxu0 0.0
      %6105 = vmatprep.subr.mxu0 0.0
      %6106 = vmatpush1.msra.mxu0 0.0
      %6107 = vmatprep.subr.mxu0 0.0
      %6108 = vmatpush1.msra.mxu0 0.0
      %6109 = vmatprep.subr.mxu0 0.0
      %6110 = vmatpush1.msra.mxu0 0.0
      %6111 = vmatprep.subr.mxu0 0.0
      %6112 = vmatpush1.msra.mxu0 0.0
      %6113 = vmatprep.subr.mxu0 0.0
      %6114 = vmatpush1.msra.mxu0 0.0
      %6115 = vmatprep.subr.mxu0 0.0
      %6116 = vmatpush1.msra.mxu0 0.0
      %6117 = vmatprep.subr.mxu0 0.0
      %6118 = vmatpush1.msra.mxu0 0.0
      %6119 = vmatprep.subr.mxu0 0.0
      %6120 = vmatpush1.msra.mxu0 0.0
      %6121 = vmatprep.subr.mxu0 0.0
      %6122 = vmatpush1.msra.mxu0 0.0
      %6123 = vmatprep.subr.mxu0 0.0
      %6124 = vmatpush1.msra.mxu0 0.0
      %6125 = vmatprep.subr.mxu0 0.0
      %6126 = vmatpush1.msra.mxu0 0.0
      %6127 = vmatprep.subr.mxu0 0.0
      %6128 = vmatpush1.msra.mxu0 0.0
      %6129 = vmatprep.subr.mxu0 0.0
      %6130 = vmatpush1.msra.mxu0 0.0
      %6131 = vmatprep.subr.mxu0 0.0
      %6132 = vmatpush1.msra.mxu0 0.0
      %6133 = vmatprep.subr.mxu0 0.0
      %6134 = vmatpush1.msra.mxu0 0.0
      %6135 = vmatprep.subr.mxu0 0.0
      %6136 = vmatpush1.msra.mxu0 0.0
      %6137 = vmatprep.subr.mxu0 0.0
      %6138 = vmatpush1.msra.mxu0 0.0
      %6139 = vmatprep.subr.mxu0 0.0
      %6140 = vmatpush1.msra.mxu0 0.0
      %6141 = vmatprep.subr.mxu0 0.0
      %6142 = vmatpush1.msra.mxu0 0.0
      %6143 = vmatprep.subr.mxu0 0.0
      %6144 = vmatpush1.msra.mxu0 0.0
      %6145 = vmatprep.subr.mxu0 0.0
      %6146 = vmatpush1.msra.mxu0 0.0
      %6147 = vmatprep.subr.mxu0 0.0
      %6148 = vmatpush1.msra.mxu0 0.0
      %6149 = vmatprep.mubr.f32.mxu0 0.0
      %6150 = vmatmul.mubr.f32.gmra.mrb[0].mxu0 %v5587
      %v6151 = vpop.f32.mrb[0].mxu0
      %v6152 = vadd.f32 %v5927, %v6151
      %v6153 = vpop.f32.mrb[0].mxu0
      %6154 = vmatprep.mubr.f32.mxu0 0.0
      %6155 = vmatmul.mubr.f32.gmra.mrb[0].mxu0 %v5589
      %v6156 = vpop.f32.mrb[0].mxu0
      %v6157 = vadd.f32 %v5932, %v6156
      %v6158 = vpop.f32.mrb[0].mxu0
      %6159 = vmatprep.mubr.f32.mxu0 0.0
      %6160 = vmatmul.mubr.f32.gmra.mrb[0].mxu0 %v5591
      %v6161 = vpop.f32.mrb[0].mxu0
      %v6162 = vadd.f32 %v5937, %v6161
      %v6163 = vpop.f32.mrb[0].mxu0
      %6164 = vmatprep.mubr.f32.mxu0 0.0
      %6165 = vmatmul.mubr.f32.gmra.mrb[0].mxu0 %v5593
      %v6166 = vpop.f32.mrb[0].mxu0
      %v6167 = vadd.f32 %v5942, %v6166
      %v6168 = vpop.f32.mrb[0].mxu0
      %6169 = vmatprep.mubr.f32.mxu0 0.0
      %6170 = vmatmul.mubr.f32.gmra.mrb[0].mxu0 %v5595
      %v6171 = vpop.f32.mrb[0].mxu0
      %v6172 = vadd.f32 %v5947, %v6171
      %v6173 = vpop.f32.mrb[0].mxu0
      %6174 = vmatprep.mubr.f32.mxu0 0.0
      %6175 = vmatmul.mubr.f32.gmra.mrb[0].mxu0 %v5597
      %v6176 = vpop.f32.mrb[0].mxu0
      %v6177 = vadd.f32 %v5952, %v6176
      %v6178 = vpop.f32.mrb[0].mxu0
      %6179 = vmatprep.mubr.f32.mxu0 0.0
      %6180 = vmatmul.mubr.f32.gmra.mrb[0].mxu0 %v5599
      %v6181 = vpop.f32.mrb[0].mxu0
      %v6182 = vadd.f32 %v5957, %v6181
      %v6183 = vpop.f32.mrb[0].mxu0
      %6184 = vmatprep.mubr.f32.mxu0 0.0
      %6185 = vmatmul.mubr.f32.gmra.mrb[0].mxu0 %v5601
      %v6186 = vpop.f32.mrb[0].mxu0
      %v6187 = vadd.f32 %v5962, %v6186
      %v6188 = vpop.f32.mrb[0].mxu0
      %6189 = vmatprep.mubr.f32.mxu0 0.0
      %6190 = vmatmul.mubr.f32.gmra.mrb[0].mxu0 %v5603
      %v6191 = vpop.f32.mrb[0].mxu0
      %v6192 = vadd.f32 %v5967, %v6191
      %v6193 = vpop.f32.mrb[0].mxu0
      %6194 = vmatprep.mubr.f32.mxu0 0.0
      %6195 = vmatmul.mubr.f32.gmra.mrb[0].mxu0 %v5605
      %v6196 = vpop.f32.mrb[0].mxu0
      %v6197 = vadd.f32 %v5972, %v6196
      %v6198 = vpop.f32.mrb[0].mxu0
      %6199 = vmatprep.mubr.f32.mxu0 0.0
      %6200 = vmatmul.mubr.f32.gmra.mrb[0].mxu0 %v5607
      %v6201 = vpop.f32.mrb[0].mxu0
      %v6202 = vadd.f32 %v5977, %v6201
      %v6203 = vpop.f32.mrb[0].mxu0
      %6204 = vmatprep.mubr.f32.mxu0 0.0
      %6205 = vmatmul.mubr.f32.gmra.mrb[0].mxu0 %v5609
      %v6206 = vpop.f32.mrb[0].mxu0
      %v6207 = vadd.f32 %v5982, %v6206
      %v6208 = vpop.f32.mrb[0].mxu0
      %6209 = vmatprep.mubr.f32.mxu0 0.0
      %6210 = vmatmul.mubr.f32.gmra.mrb[0].mxu0 %v5611
      %v6211 = vpop.f32.mrb[0].mxu0
      %v6212 = vadd.f32 %v5987, %v6211
      %v6213 = vpop.f32.mrb[0].mxu0
      %6214 = vmatprep.mubr.f32.mxu0 0.0
      %6215 = vmatmul.mubr.f32.gmra.mrb[0].mxu0 %v5613
      %v6216 = vpop.f32.mrb[0].mxu0
      %v6217 = vadd.f32 %v5992, %v6216
      %v6218 = vpop.f32.mrb[0].mxu0
      %6219 = vmatprep.mubr.f32.mxu0 0.0
      %6220 = vmatmul.mubr.f32.gmra.mrb[0].mxu0 %v5615
      %v6221 = vpop.f32.mrb[0].mxu0
      %v6222 = vadd.f32 %v5997, %v6221
      %v6223 = vpop.f32.mrb[0].mxu0
      %6224 = vmatprep.mubr.f32.mxu0 0.0
      %6225 = vmatmul.mubr.f32.gmra.mrb[0].mxu0 %v5617
      %v6226 = vpop.f32.mrb[0].mxu0
      %v6227 = vadd.f32 %v6002, %v6226
      %v6228 = vpop.f32.mrb[0].mxu0
      %6229 = vmatprep.mubr.f32.mxu0 0.0
      %6230 = vmatmul.mubr.f32.gmra.mrb[0].mxu0 %v5619
      %v6231 = vpop.f32.mrb[0].mxu0
      %v6232 = vadd.f32 %v6007, %v6231
      %v6233 = vpop.f32.mrb[0].mxu0
      %6234 = vmatprep.mubr.f32.mxu0 0.0
      %6235 = vmatmul.mubr.f32.gmra.mrb[0].mxu0 %v5621
      %v6236 = vpop.f32.mrb[0].mxu0
      %v6237 = vadd.f32 %v6012, %v6236
      %v6238 = vpop.f32.mrb[0].mxu0
      %6239 = vmatprep.mubr.f32.mxu0 0.0
      %6240 = vmatmul.mubr.f32.gmra.mrb[0].mxu0 %v5623
      %v6241 = vpop.f32.mrb[0].mxu0
      %v6242 = vadd.f32 %v6017, %v6241
      %v6243 = vpop.f32.mrb[0].mxu0
      %6244 = vmatprep.mubr.f32.mxu0 0.0
      %6245 = vmatmul.mubr.f32.gmra.mrb[0].mxu0 %v5625
      %v6246 = vpop.f32.mrb[0].mxu0
      %v6247 = vadd.f32 %v6022, %v6246
      %v6248 = vpop.f32.mrb[0].mxu0
      %6249 = vmatprep.mubr.f32.mxu0 0.0
      %6250 = vmatmul.mubr.f32.gmra.mrb[0].mxu0 %v5627
      %v6251 = vpop.f32.mrb[0].mxu0
      %v6252 = vadd.f32 %v6027, %v6251
      %v6253 = vpop.f32.mrb[0].mxu0
      %6254 = vmatprep.mubr.f32.mxu0 0.0
      %6255 = vmatmul.mubr.f32.gmra.mrb[0].mxu0 %v5629
      %v6256 = vpop.f32.mrb[0].mxu0
      %v6257 = vadd.f32 %v6032, %v6256
      %v6258 = vpop.f32.mrb[0].mxu0
      %6259 = vmatprep.mubr.f32.mxu0 0.0
      %6260 = vmatmul.mubr.f32.gmra.mrb[0].mxu0 %v5631
      %v6261 = vpop.f32.mrb[0].mxu0
      %v6262 = vadd.f32 %v6037, %v6261
      %v6263 = vpop.f32.mrb[0].mxu0
      %6264 = vmatprep.mubr.f32.mxu0 0.0
      %6265 = vmatmul.mubr.f32.gmra.mrb[0].mxu0 %v5633
      %v6266 = vpop.f32.mrb[0].mxu0
      %v6267 = vadd.f32 %v6042, %v6266
      %v6268 = vpop.f32.mrb[0].mxu0
      %6269 = vmatprep.mubr.f32.mxu0 0.0
      %6270 = vmatmul.mubr.f32.gmra.mrb[0].mxu0 %v2299
      %v6271 = vpop.f32.mrb[0].mxu0
      %v6272 = vadd.f32 %v6047, %v6271
      %v6273 = vpop.f32.mrb[0].mxu0
      %6274 = vmatprep.mubr.f32.mxu0 0.0
      %6275 = vmatmul.mubr.f32.gmra.mrb[0].mxu0 %v2299
      %v6276 = vpop.f32.mrb[0].mxu0
      %v6277 = vadd.f32 %v6052, %v6276
      %v6278 = vpop.f32.mrb[0].mxu0
      %6279 = vmatprep.mubr.f32.mxu0 0.0
      %6280 = vmatmul.mubr.f32.gmra.mrb[0].mxu0 %v2299
      %v6281 = vpop.f32.mrb[0].mxu0
      %v6282 = vadd.f32 %v6057, %v6281
      %v6283 = vpop.f32.mrb[0].mxu0
      %6284 = vmatprep.mubr.f32.mxu0 0.0
      %6285 = vmatmul.mubr.f32.gmra.mrb[0].mxu0 %v2299
      %v6286 = vpop.f32.mrb[0].mxu0
      %v6287 = vadd.f32 %v6062, %v6286
      %v6288 = vpop.f32.mrb[0].mxu0
      %6289 = vmatprep.mubr.f32.mxu0 0.0
      %6290 = vmatmul.mubr.f32.gmra.mrb[0].mxu0 %v2299
      %v6291 = vpop.f32.mrb[0].mxu0
      %v6292 = vadd.f32 %v6067, %v6291
      %v6293 = vpop.f32.mrb[0].mxu0
      %6294 = vmatprep.mubr.f32.mxu0 0.0
      %6295 = vmatmul.mubr.f32.gmra.mrb[0].mxu0 %v2299
      %v6296 = vpop.f32.mrb[0].mxu0
      %v6297 = vadd.f32 %v6072, %v6296
      %v6298 = vpop.f32.mrb[0].mxu0
      %6299 = vmatprep.mubr.f32.mxu0 0.0
      %6300 = vmatmul.mubr.f32.gmra.mrb[0].mxu0 %v2299
      %v6301 = vpop.f32.mrb[0].mxu0
      %v6302 = vadd.f32 %v6077, %v6301
      %v6303 = vpop.f32.mrb[0].mxu0
      %6304 = vmatprep.mubr.f32.mxu0 0.0
      %6305 = vmatmul.mubr.f32.gmra.mrb[0].mxu0 %v2299
      %v6306 = vpop.f32.mrb[0].mxu0
      %v6307 = vadd.f32 %v6082, %v6306
      %v6308 = vpop.f32.mrb[0].mxu0
      %6309 = vdwg.mxu0
      %v6311 = vlaneseq
      %v6312 = vshrl.u32 %v6311, 7
      %v6313 = vsub.s32 0, %v6312
      %v6314 = vrot.slane %v4865, %v6313
      %v6316 = vmul.f32 %v6152, %v6314
      %v6317 = vmul.f32 %v6157, %v6314
      %v6318 = vmul.f32 %v6162, %v6314
      %v6319 = vmul.f32 %v6167, %v6314
      %v6320 = vmul.f32 %v6172, %v6314
      %v6321 = vmul.f32 %v6177, %v6314
      %v6322 = vmul.f32 %v6182, %v6314
      %v6323 = vmul.f32 %v6187, %v6314
      %v6324 = vmul.f32 %v6192, %v6314
      %v6325 = vmul.f32 %v6197, %v6314
      %v6326 = vmul.f32 %v6202, %v6314
      %v6327 = vmul.f32 %v6207, %v6314
      %v6328 = vmul.f32 %v6212, %v6314
      %v6329 = vmul.f32 %v6217, %v6314
      %v6330 = vmul.f32 %v6222, %v6314
      %v6331 = vmul.f32 %v6227, %v6314
      %v6332 = vmul.f32 %v6232, %v6314
      %v6333 = vmul.f32 %v6237, %v6314
      %v6334 = vmul.f32 %v6242, %v6314
      %v6335 = vmul.f32 %v6247, %v6314
      %v6336 = vmul.f32 %v6252, %v6314
      %v6337 = vmul.f32 %v6257, %v6314
      %v6338 = vmul.f32 %v6262, %v6314
      %v6339 = vmul.f32 %v6267, %v6314
      %v6340 = vmul.f32 %v6272, %v6314
      %v6341 = vmul.f32 %v6277, %v6314
      %v6342 = vmul.f32 %v6282, %v6314
      %v6343 = vmul.f32 %v6287, %v6314
      %v6344 = vmul.f32 %v6292, %v6314
      %v6345 = vmul.f32 %v6297, %v6314
      %v6346 = vmul.f32 %v6302, %v6314
      %v6347 = vmul.f32 %v6307, %v6314
      %v6349 = vlaneseq
      %v6350 = vshrl.u32 %v6349, 7
      %v6351 = vsub.s32 0, %v6350
      %v6352 = vrot.slane %v4866, %v6351
      %v6354 = vadd.f32 %v6316, %v6352
      %v6355 = vadd.f32 %v6317, %v6352
      %v6356 = vadd.f32 %v6318, %v6352
      %v6357 = vadd.f32 %v6319, %v6352
      %v6358 = vadd.f32 %v6320, %v6352
      %v6359 = vadd.f32 %v6321, %v6352
      %v6360 = vadd.f32 %v6322, %v6352
      %v6361 = vadd.f32 %v6323, %v6352
      %v6362 = vadd.f32 %v6324, %v6352
      %v6363 = vadd.f32 %v6325, %v6352
      %v6364 = vadd.f32 %v6326, %v6352
      %v6365 = vadd.f32 %v6327, %v6352
      %v6366 = vadd.f32 %v6328, %v6352
      %v6367 = vadd.f32 %v6329, %v6352
      %v6368 = vadd.f32 %v6330, %v6352
      %v6369 = vadd.f32 %v6331, %v6352
      %v6370 = vadd.f32 %v6332, %v6352
      %v6371 = vadd.f32 %v6333, %v6352
      %v6372 = vadd.f32 %v6334, %v6352
      %v6373 = vadd.f32 %v6335, %v6352
      %v6374 = vadd.f32 %v6336, %v6352
      %v6375 = vadd.f32 %v6337, %v6352
      %v6376 = vadd.f32 %v6338, %v6352
      %v6377 = vadd.f32 %v6339, %v6352
      %v6378 = vadd.f32 %v6340, %v6352
      %v6379 = vadd.f32 %v6341, %v6352
      %v6380 = vadd.f32 %v6342, %v6352
      %v6381 = vadd.f32 %v6343, %v6352
      %v6382 = vadd.f32 %v6344, %v6352
      %v6383 = vadd.f32 %v6345, %v6352
      %v6384 = vadd.f32 %v6346, %v6352
      %v6385 = vadd.f32 %v6347, %v6352
      %v6386 = vadd.f32 %v6354, %v4751
      %v6387 = vadd.f32 %v6355, %v4752
      %v6388 = vadd.f32 %v6356, %v4753
      %v6389 = vadd.f32 %v6357, %v4754
      %v6390 = vadd.f32 %v6358, %v4755
      %v6391 = vadd.f32 %v6359, %v4756
      %v6392 = vadd.f32 %v6360, %v4757
      %v6393 = vadd.f32 %v6361, %v4758
      %v6394 = vadd.f32 %v6362, %v4759
      %v6395 = vadd.f32 %v6363, %v4760
      %v6396 = vadd.f32 %v6364, %v4761
      %v6397 = vadd.f32 %v6365, %v4762
      %v6398 = vadd.f32 %v6366, %v4763
      %v6399 = vadd.f32 %v6367, %v4764
      %v6400 = vadd.f32 %v6368, %v4765
      %v6401 = vadd.f32 %v6369, %v4766
      %v6402 = vadd.f32 %v6370, %v4767
      %v6403 = vadd.f32 %v6371, %v4768
      %v6404 = vadd.f32 %v6372, %v4769
      %v6405 = vadd.f32 %v6373, %v4770
      %v6406 = vadd.f32 %v6374, %v4771
      %v6407 = vadd.f32 %v6375, %v4772
      %v6408 = vadd.f32 %v6376, %v4773
      %v6409 = vadd.f32 %v6377, %v4774
      %v6410 = vadd.f32 %v6378, %v4775
      %v6411 = vadd.f32 %v6379, %v4776
      %v6412 = vadd.f32 %v6380, %v4777
      %v6413 = vadd.f32 %v6381, %v4778
      %v6414 = vadd.f32 %v6382, %v4779
      %v6415 = vadd.f32 %v6383, %v4780
      %v6416 = vadd.f32 %v6384, %v4781
      %v6417 = vadd.f32 %v6385, %v4782
      %v6418 = vmax.f32 %v6386, 0.0
      %v6419 = vmax.f32 %v6387, 0.0
      %v6420 = vmax.f32 %v6388, 0.0
      %v6421 = vmax.f32 %v6389, 0.0
      %v6422 = vmax.f32 %v6390, 0.0
      %v6423 = vmax.f32 %v6391, 0.0
      %v6424 = vmax.f32 %v6392, 0.0
      %v6425 = vmax.f32 %v6393, 0.0
      %v6426 = vmax.f32 %v6394, 0.0
      %v6427 = vmax.f32 %v6395, 0.0
      %v6428 = vmax.f32 %v6396, 0.0
      %v6429 = vmax.f32 %v6397, 0.0
      %v6430 = vmax.f32 %v6398, 0.0
      %v6431 = vmax.f32 %v6399, 0.0
      %v6432 = vmax.f32 %v6400, 0.0
      %v6433 = vmax.f32 %v6401, 0.0
      %v6434 = vmax.f32 %v6402, 0.0
      %v6435 = vmax.f32 %v6403, 0.0
      %v6436 = vmax.f32 %v6404, 0.0
      %v6437 = vmax.f32 %v6405, 0.0
      %v6438 = vmax.f32 %v6406, 0.0
      %v6439 = vmax.f32 %v6407, 0.0
      %v6440 = vmax.f32 %v6408, 0.0
      %v6441 = vmax.f32 %v6409, 0.0
      %v6442 = vmax.f32 %v6410, 0.0
      %v6443 = vmax.f32 %v6411, 0.0
      %v6444 = vmax.f32 %v6412, 0.0
      %v6445 = vmax.f32 %v6413, 0.0
      %v6446 = vmax.f32 %v6414, 0.0
      %v6447 = vmax.f32 %v6415, 0.0
      %v6448 = vmax.f32 %v6416, 0.0
      %v6449 = vmax.f32 %v6417, 0.0
      %v6450 = vld [vmem:[%s49] sm:$0xff]
      %v6451 = vld [vmem:[%s49 + $0x8] sm:$0xff]
      %v6452 = vld [vmem:[%s49 + $0x10] sm:$0xff]
      %v6453 = vld [vmem:[%s49 + $0x18] sm:$0xff]
      %v6454 = vld [vmem:[%s49 + $0x20] sm:$0xff]
      %v6455 = vld [vmem:[%s49 + $0x28] sm:$0xff]
      %v6456 = vld [vmem:[%s49 + $0x30] sm:$0xff]
      %v6457 = vld [vmem:[%s49 + $0x38] sm:$0xff]
      %v6458 = vld [vmem:[%s51] sm:$0x1]
      %v6459 = vld [vmem:[%s53] sm:$0xff]
      %v6460 = vld [vmem:[%s53 + $0x8] sm:$0xff]
      %v6461 = vld [vmem:[%s53 + $0x10] sm:$0xff]
      %v6462 = vld [vmem:[%s53 + $0x18] sm:$0xff]
      %v6463 = vld [vmem:[%s53 + $0x20] sm:$0xff]
      %v6464 = vld [vmem:[%s53 + $0x28] sm:$0xff]
      %v6465 = vld [vmem:[%s53 + $0x30] sm:$0xff]
      %v6466 = vld [vmem:[%s53 + $0x38] sm:$0xff]
      %v6467 = vld [vmem:[%s53 + $0x40] sm:$0xff]
      %v6468 = vld [vmem:[%s53 + $0x48] sm:$0xff]
      %v6469 = vld [vmem:[%s53 + $0x50] sm:$0xff]
      %v6470 = vld [vmem:[%s53 + $0x58] sm:$0xff]
      %v6471 = vld [vmem:[%s53 + $0x60] sm:$0xff]
      %v6472 = vld [vmem:[%s53 + $0x68] sm:$0xff]
      %v6473 = vld [vmem:[%s53 + $0x70] sm:$0xff]
      %v6474 = vld [vmem:[%s53 + $0x78] sm:$0xff]
      %v6475 = vld [vmem:[%s53 + $0x80] sm:$0xff]
      %v6476 = vld [vmem:[%s53 + $0x88] sm:$0xff]
      %v6477 = vld [vmem:[%s53 + $0x90] sm:$0xff]
      %v6478 = vld [vmem:[%s53 + $0x98] sm:$0xff]
      %v6479 = vld [vmem:[%s53 + $0xa0] sm:$0xff]
      %v6480 = vld [vmem:[%s53 + $0xa8] sm:$0xff]
      %v6481 = vld [vmem:[%s53 + $0xb0] sm:$0xff]
      %v6482 = vld [vmem:[%s53 + $0xb8] sm:$0xff]
      %v6483 = vld [vmem:[%s53 + $0xc0] sm:$0xff]
      %v6484 = vld [vmem:[%s53 + $0xc8] sm:$0xff]
      %v6485 = vld [vmem:[%s53 + $0xd0] sm:$0xff]
      %v6486 = vld [vmem:[%s53 + $0xd8] sm:$0xff]
      %v6487 = vld [vmem:[%s53 + $0xe0] sm:$0xff]
      %v6488 = vld [vmem:[%s53 + $0xe8] sm:$0xff]
      %v6489 = vld [vmem:[%s53 + $0xf0] sm:$0xff]
      %v6490 = vld [vmem:[%s53 + $0xf8] sm:$0xff]
      %v6491 = vld [vmem:[%s53 + $0x100] sm:$0xff]
      %v6492 = vld [vmem:[%s53 + $0x108] sm:$0xff]
      %v6493 = vld [vmem:[%s53 + $0x110] sm:$0xff]
      %v6494 = vld [vmem:[%s53 + $0x118] sm:$0xff]
      %v6495 = vld [vmem:[%s53 + $0x120] sm:$0xff]
      %v6496 = vld [vmem:[%s53 + $0x128] sm:$0xff]
      %v6497 = vld [vmem:[%s53 + $0x130] sm:$0xff]
      %v6498 = vld [vmem:[%s53 + $0x138] sm:$0xff]
      %v6499 = vld [vmem:[%s53 + $0x140] sm:$0xff]
      %v6500 = vld [vmem:[%s53 + $0x148] sm:$0xff]
      %v6501 = vld [vmem:[%s53 + $0x150] sm:$0xff]
      %v6502 = vld [vmem:[%s53 + $0x158] sm:$0xff]
      %v6503 = vld [vmem:[%s53 + $0x160] sm:$0xff]
      %v6504 = vld [vmem:[%s53 + $0x168] sm:$0xff]
      %v6505 = vld [vmem:[%s53 + $0x170] sm:$0xff]
      %v6506 = vld [vmem:[%s53 + $0x178] sm:$0xff]
      %v6507 = vld [vmem:[%s53 + $0x180] sm:$0xff]
      %v6508 = vld [vmem:[%s53 + $0x188] sm:$0xff]
      %v6509 = vld [vmem:[%s53 + $0x190] sm:$0xff]
      %v6510 = vld [vmem:[%s53 + $0x198] sm:$0xff]
      %v6511 = vld [vmem:[%s53 + $0x1a0] sm:$0xff]
      %v6512 = vld [vmem:[%s53 + $0x1a8] sm:$0xff]
      %v6513 = vld [vmem:[%s53 + $0x1b0] sm:$0xff]
      %v6514 = vld [vmem:[%s53 + $0x1b8] sm:$0xff]
      %v6515 = vld [vmem:[%s53 + $0x1c0] sm:$0xff]
      %v6516 = vld [vmem:[%s53 + $0x1c8] sm:$0xff]
      %v6517 = vld [vmem:[%s53 + $0x1d0] sm:$0xff]
      %v6518 = vld [vmem:[%s53 + $0x1d8] sm:$0xff]
      %v6519 = vld [vmem:[%s53 + $0x1e0] sm:$0xff]
      %v6520 = vld [vmem:[%s53 + $0x1e8] sm:$0xff]
      %v6521 = vld [vmem:[%s53 + $0x1f0] sm:$0xff]
      %v6522 = vld [vmem:[%s53 + $0x1f8] sm:$0xff]
      %v6523 = vld [vmem:[%s53 + $0x200] sm:$0xff]
      %v6524 = vld [vmem:[%s53 + $0x208] sm:$0xff]
      %v6525 = vld [vmem:[%s53 + $0x210] sm:$0xff]
      %v6526 = vld [vmem:[%s53 + $0x218] sm:$0xff]
      %v6527 = vld [vmem:[%s53 + $0x220] sm:$0xff]
      %v6528 = vld [vmem:[%s53 + $0x228] sm:$0xff]
      %v6529 = vld [vmem:[%s53 + $0x230] sm:$0xff]
      %v6530 = vld [vmem:[%s53 + $0x238] sm:$0xff]
      %v6531 = vld [vmem:[%s53 + $0x240] sm:$0xff]
      %v6532 = vld [vmem:[%s53 + $0x248] sm:$0xff]
      %v6533 = vld [vmem:[%s53 + $0x250] sm:$0xff]
      %v6534 = vld [vmem:[%s53 + $0x258] sm:$0xff]
      %v6535 = vld [vmem:[%s53 + $0x260] sm:$0xff]
      %v6536 = vld [vmem:[%s53 + $0x268] sm:$0xff]
      %v6537 = vld [vmem:[%s53 + $0x270] sm:$0xff]
      %v6538 = vld [vmem:[%s53 + $0x278] sm:$0xff]
      %v6539 = vld [vmem:[%s53 + $0x280] sm:$0xff]
      %v6540 = vld [vmem:[%s53 + $0x288] sm:$0xff]
      %v6541 = vld [vmem:[%s53 + $0x290] sm:$0xff]
      %v6542 = vld [vmem:[%s53 + $0x298] sm:$0xff]
      %v6543 = vld [vmem:[%s53 + $0x2a0] sm:$0xff]
      %v6544 = vld [vmem:[%s53 + $0x2a8] sm:$0xff]
      %v6545 = vld [vmem:[%s53 + $0x2b0] sm:$0xff]
      %v6546 = vld [vmem:[%s53 + $0x2b8] sm:$0xff]
      %v6547 = vld [vmem:[%s53 + $0x2c0] sm:$0xff]
      %v6548 = vld [vmem:[%s53 + $0x2c8] sm:$0xff]
      %v6549 = vld [vmem:[%s53 + $0x2d0] sm:$0xff]
      %v6550 = vld [vmem:[%s53 + $0x2d8] sm:$0xff]
      %v6551 = vld [vmem:[%s53 + $0x2e0] sm:$0xff]
      %v6552 = vld [vmem:[%s53 + $0x2e8] sm:$0xff]
      %v6553 = vld [vmem:[%s53 + $0x2f0] sm:$0xff]
      %v6554 = vld [vmem:[%s53 + $0x2f8] sm:$0xff]
      %v6555 = vld [vmem:[%s53 + $0x300] sm:$0xff]
      %v6556 = vld [vmem:[%s53 + $0x308] sm:$0xff]
      %v6557 = vld [vmem:[%s53 + $0x310] sm:$0xff]
      %v6558 = vld [vmem:[%s53 + $0x318] sm:$0xff]
      %v6559 = vld [vmem:[%s53 + $0x320] sm:$0xff]
      %v6560 = vld [vmem:[%s53 + $0x328] sm:$0xff]
      %v6561 = vld [vmem:[%s53 + $0x330] sm:$0xff]
      %v6562 = vld [vmem:[%s53 + $0x338] sm:$0xff]
      %v6563 = vld [vmem:[%s53 + $0x340] sm:$0xff]
      %v6564 = vld [vmem:[%s53 + $0x348] sm:$0xff]
      %v6565 = vld [vmem:[%s53 + $0x350] sm:$0xff]
      %v6566 = vld [vmem:[%s53 + $0x358] sm:$0xff]
      %v6567 = vld [vmem:[%s53 + $0x360] sm:$0xff]
      %v6568 = vld [vmem:[%s53 + $0x368] sm:$0xff]
      %v6569 = vld [vmem:[%s53 + $0x370] sm:$0xff]
      %v6570 = vld [vmem:[%s53 + $0x378] sm:$0xff]
      %v6571 = vld [vmem:[%s53 + $0x380] sm:$0xff]
      %v6572 = vld [vmem:[%s53 + $0x388] sm:$0xff]
      %v6573 = vld [vmem:[%s53 + $0x390] sm:$0xff]
      %v6574 = vld [vmem:[%s53 + $0x398] sm:$0xff]
      %v6575 = vld [vmem:[%s53 + $0x3a0] sm:$0xff]
      %v6576 = vld [vmem:[%s53 + $0x3a8] sm:$0xff]
      %v6577 = vld [vmem:[%s53 + $0x3b0] sm:$0xff]
      %v6578 = vld [vmem:[%s53 + $0x3b8] sm:$0xff]
      %v6579 = vld [vmem:[%s53 + $0x3c0] sm:$0xff]
      %v6580 = vld [vmem:[%s53 + $0x3c8] sm:$0xff]
      %v6581 = vld [vmem:[%s53 + $0x3d0] sm:$0xff]
      %v6582 = vld [vmem:[%s53 + $0x3d8] sm:$0xff]
      %v6583 = vld [vmem:[%s53 + $0x3e0] sm:$0xff]
      %v6584 = vld [vmem:[%s53 + $0x3e8] sm:$0xff]
      %v6585 = vld [vmem:[%s53 + $0x3f0] sm:$0xff]
      %v6586 = vld [vmem:[%s53 + $0x3f8] sm:$0xff]
      %v6587 = vld [vmem:[%s53 + $0x400] sm:$0xff]
      %v6588 = vld [vmem:[%s53 + $0x408] sm:$0xff]
      %v6589 = vld [vmem:[%s53 + $0x410] sm:$0xff]
      %v6590 = vld [vmem:[%s53 + $0x418] sm:$0xff]
      %v6591 = vld [vmem:[%s53 + $0x420] sm:$0xff]
      %v6592 = vld [vmem:[%s53 + $0x428] sm:$0xff]
      %v6593 = vld [vmem:[%s53 + $0x430] sm:$0xff]
      %v6594 = vld [vmem:[%s53 + $0x438] sm:$0xff]
      %v6595 = vld [vmem:[%s53 + $0x440] sm:$0xff]
      %v6596 = vld [vmem:[%s53 + $0x448] sm:$0xff]
      %v6597 = vld [vmem:[%s53 + $0x450] sm:$0xff]
      %v6598 = vld [vmem:[%s53 + $0x458] sm:$0xff]
      %v6599 = vld [vmem:[%s53 + $0x460] sm:$0xff]
      %v6600 = vld [vmem:[%s53 + $0x468] sm:$0xff]
      %v6601 = vld [vmem:[%s53 + $0x470] sm:$0xff]
      %v6602 = vld [vmem:[%s53 + $0x478] sm:$0xff]
      %v6603 = vld [vmem:[%s55] sm:$0x1]
      %v6604 = vld [vmem:[%s57] sm:$0x1]
      %v6605 = vld [vmem:[%s59] sm:$0x1]
      %v6606 = vld [vmem:[%s61] sm:$0xff]
      %v6607 = vld [vmem:[%s61 + $0x8] sm:$0xff]
      %v6608 = vld [vmem:[%s61 + $0x10] sm:$0xff]
      %v6609 = vld [vmem:[%s61 + $0x18] sm:$0xff]
      %v6610 = vld [vmem:[%s61 + $0x20] sm:$0xff]
      %v6611 = vld [vmem:[%s61 + $0x28] sm:$0xff]
      %v6612 = vld [vmem:[%s61 + $0x30] sm:$0xff]
      %v6613 = vld [vmem:[%s61 + $0x38] sm:$0xff]
      %v6614 = vld [vmem:[%s63] sm:$0x1]
      %v6616 = vlaneseq
      %v6617 = vshrl.u32 %v6616, 7
      %v6618 = vsub.s32 0, %v6617
      %v6619 = vrot.slane %v6614, %v6618
      %v6622 = vsel %vm2209, %v6418, 0
      %v6625 = vsel %vm2209, %v6419, 0
      %v6628 = vsel %vm2209, %v6420, 0
      %v6631 = vsel %vm2209, %v6421, 0
      %v6634 = vsel %vm2209, %v6422, 0
      %v6637 = vsel %vm2209, %v6423, 0
      %v6640 = vsel %vm2209, %v6424, 0
      %v6643 = vsel %vm2209, %v6425, 0
      %v6646 = vsel %vm2209, %v6426, 0
      %v6649 = vsel %vm2209, %v6427, 0
      %v6652 = vsel %vm2209, %v6428, 0
      %v6655 = vsel %vm2209, %v6429, 0
      %v6658 = vsel %vm2209, %v6430, 0
      %v6661 = vsel %vm2209, %v6431, 0
      %v6664 = vsel %vm2209, %v6432, 0
      %v6667 = vsel %vm2209, %v6433, 0
      %v6670 = vsel %vm2209, %v6434, 0
      %v6673 = vsel %vm2209, %v6435, 0
      %v6676 = vsel %vm2209, %v6436, 0
      %v6679 = vsel %vm2209, %v6437, 0
      %v6682 = vsel %vm2209, %v6438, 0
      %v6685 = vsel %vm2209, %v6439, 0
      %v6688 = vsel %vm2209, %v6440, 0
      %v6691 = vsel %vm2209, %v6441, 0
      %v6694 = vsel %vm2209, %v6442, 0
      %v6697 = vsel %vm2209, %v6443, 0
      %v6700 = vsel %vm2209, %v6444, 0
      %v6703 = vsel %vm2209, %v6445, 0
      %v6706 = vsel %vm2209, %v6446, 0
      %v6709 = vsel %vm2209, %v6447, 0
      %v6712 = vsel %vm2209, %v6448, 0
      %v6715 = vsel %vm2209, %v6449, 0
      %6717 = vmatprep.subr.mxu0 0.0
      %6718 = vmatpush1.msra.mxu0 %v6606
      %6719 = vmatprep.subr.mxu0 0.0
      %6720 = vmatpush1.msra.mxu0 %v6607
      %6721 = vmatprep.subr.mxu0 0.0
      %6722 = vmatpush1.msra.mxu0 %v6608
      %6723 = vmatprep.subr.mxu0 0.0
      %6724 = vmatpush1.msra.mxu0 %v6609
      %6725 = vmatprep.subr.mxu0 0.0
      %6726 = vmatpush1.msra.mxu0 %v6610
      %6727 = vmatprep.subr.mxu0 0.0
      %6728 = vmatpush1.msra.mxu0 %v6611
      %6729 = vmatprep.subr.mxu0 0.0
      %6730 = vmatpush1.msra.mxu0 %v6612
      %6731 = vmatprep.subr.mxu0 0.0
      %6732 = vmatpush1.msra.mxu0 %v6613
      %6733 = vmatprep.subr.mxu0 0.0
      %6734 = vmatpush1.msra.mxu0 0.0
      %6735 = vmatprep.subr.mxu0 0.0
      %6736 = vmatpush1.msra.mxu0 0.0
      %6737 = vmatprep.subr.mxu0 0.0
      %6738 = vmatpush1.msra.mxu0 0.0
      %6739 = vmatprep.subr.mxu0 0.0
      %6740 = vmatpush1.msra.mxu0 0.0
      %6741 = vmatprep.subr.mxu0 0.0
      %6742 = vmatpush1.msra.mxu0 0.0
      %6743 = vmatprep.subr.mxu0 0.0
      %6744 = vmatpush1.msra.mxu0 0.0
      %6745 = vmatprep.subr.mxu0 0.0
      %6746 = vmatpush1.msra.mxu0 0.0
      %6747 = vmatprep.subr.mxu0 0.0
      %6748 = vmatpush1.msra.mxu0 0.0
      %6749 = vmatprep.subr.mxu0 0.0
      %6750 = vmatpush1.msra.mxu0 0.0
      %6751 = vmatprep.subr.mxu0 0.0
      %6752 = vmatpush1.msra.mxu0 0.0
      %6753 = vmatprep.subr.mxu0 0.0
      %6754 = vmatpush1.msra.mxu0 0.0
      %6755 = vmatprep.subr.mxu0 0.0
      %6756 = vmatpush1.msra.mxu0 0.0
      %6757 = vmatprep.subr.mxu0 0.0
      %6758 = vmatpush1.msra.mxu0 0.0
      %6759 = vmatprep.subr.mxu0 0.0
      %6760 = vmatpush1.msra.mxu0 0.0
      %6761 = vmatprep.subr.mxu0 0.0
      %6762 = vmatpush1.msra.mxu0 0.0
      %6763 = vmatprep.subr.mxu0 0.0
      %6764 = vmatpush1.msra.mxu0 0.0
      %6765 = vmatprep.subr.mxu0 0.0
      %6766 = vmatpush1.msra.mxu0 0.0
      %6767 = vmatprep.subr.mxu0 0.0
      %6768 = vmatpush1.msra.mxu0 0.0
      %6769 = vmatprep.subr.mxu0 0.0
      %6770 = vmatpush1.msra.mxu0 0.0
      %6771 = vmatprep.subr.mxu0 0.0
      %6772 = vmatpush1.msra.mxu0 0.0
      %6773 = vmatprep.subr.mxu0 0.0
      %6774 = vmatpush1.msra.mxu0 0.0
      %6775 = vmatprep.subr.mxu0 0.0
      %6776 = vmatpush1.msra.mxu0 0.0
      %6777 = vmatprep.subr.mxu0 0.0
      %6778 = vmatpush1.msra.mxu0 0.0
      %6779 = vmatprep.subr.mxu0 0.0
      %6780 = vmatpush1.msra.mxu0 0.0
      %6781 = vmatprep.mubr.f32.mxu0 0.0
      %6782 = vmatmul.mubr.f32.gmra.mrb[0].mxu0 %v6622
      %v6783 = vpop.f32.mrb[0].mxu0
      %v6784 = vadd.f32 %v6619, %v6783
      %v6785 = vpop.f32.mrb[0].mxu0
      %6786 = vmatprep.mubr.f32.mxu0 0.0
      %6787 = vmatmul.mubr.f32.gmra.mrb[0].mxu0 %v6625
      %v6788 = vpop.f32.mrb[0].mxu0
      %v6789 = vadd.f32 %v6619, %v6788
      %v6790 = vpop.f32.mrb[0].mxu0
      %6791 = vmatprep.mubr.f32.mxu0 0.0
      %6792 = vmatmul.mubr.f32.gmra.mrb[0].mxu0 %v6628
      %v6793 = vpop.f32.mrb[0].mxu0
      %v6794 = vadd.f32 %v6619, %v6793
      %v6795 = vpop.f32.mrb[0].mxu0
      %6796 = vmatprep.mubr.f32.mxu0 0.0
      %6797 = vmatmul.mubr.f32.gmra.mrb[0].mxu0 %v6631
      %v6798 = vpop.f32.mrb[0].mxu0
      %v6799 = vadd.f32 %v6619, %v6798
      %v6800 = vpop.f32.mrb[0].mxu0
      %6801 = vmatprep.mubr.f32.mxu0 0.0
      %6802 = vmatmul.mubr.f32.gmra.mrb[0].mxu0 %v6634
      %v6803 = vpop.f32.mrb[0].mxu0
      %v6804 = vadd.f32 %v6619, %v6803
      %v6805 = vpop.f32.mrb[0].mxu0
      %6806 = vmatprep.mubr.f32.mxu0 0.0
      %6807 = vmatmul.mubr.f32.gmra.mrb[0].mxu0 %v6637
      %v6808 = vpop.f32.mrb[0].mxu0
      %v6809 = vadd.f32 %v6619, %v6808
      %v6810 = vpop.f32.mrb[0].mxu0
      %6811 = vmatprep.mubr.f32.mxu0 0.0
      %6812 = vmatmul.mubr.f32.gmra.mrb[0].mxu0 %v6640
      %v6813 = vpop.f32.mrb[0].mxu0
      %v6814 = vadd.f32 %v6619, %v6813
      %v6815 = vpop.f32.mrb[0].mxu0
      %6816 = vmatprep.mubr.f32.mxu0 0.0
      %6817 = vmatmul.mubr.f32.gmra.mrb[0].mxu0 %v6643
      %v6818 = vpop.f32.mrb[0].mxu0
      %v6819 = vadd.f32 %v6619, %v6818
      %v6820 = vpop.f32.mrb[0].mxu0
      %6821 = vmatprep.mubr.f32.mxu0 0.0
      %6822 = vmatmul.mubr.f32.gmra.mrb[0].mxu0 %v6646
      %v6823 = vpop.f32.mrb[0].mxu0
      %v6824 = vadd.f32 %v6619, %v6823
      %v6825 = vpop.f32.mrb[0].mxu0
      %6826 = vmatprep.mubr.f32.mxu0 0.0
      %6827 = vmatmul.mubr.f32.gmra.mrb[0].mxu0 %v6649
      %v6828 = vpop.f32.mrb[0].mxu0
      %v6829 = vadd.f32 %v6619, %v6828
      %v6830 = vpop.f32.mrb[0].mxu0
      %6831 = vmatprep.mubr.f32.mxu0 0.0
      %6832 = vmatmul.mubr.f32.gmra.mrb[0].mxu0 %v6652
      %v6833 = vpop.f32.mrb[0].mxu0
      %v6834 = vadd.f32 %v6619, %v6833
      %v6835 = vpop.f32.mrb[0].mxu0
      %6836 = vmatprep.mubr.f32.mxu0 0.0
      %6837 = vmatmul.mubr.f32.gmra.mrb[0].mxu0 %v6655
      %v6838 = vpop.f32.mrb[0].mxu0
      %v6839 = vadd.f32 %v6619, %v6838
      %v6840 = vpop.f32.mrb[0].mxu0
      %6841 = vmatprep.mubr.f32.mxu0 0.0
      %6842 = vmatmul.mubr.f32.gmra.mrb[0].mxu0 %v6658
      %v6843 = vpop.f32.mrb[0].mxu0
      %v6844 = vadd.f32 %v6619, %v6843
      %v6845 = vpop.f32.mrb[0].mxu0
      %6846 = vmatprep.mubr.f32.mxu0 0.0
      %6847 = vmatmul.mubr.f32.gmra.mrb[0].mxu0 %v6661
      %v6848 = vpop.f32.mrb[0].mxu0
      %v6849 = vadd.f32 %v6619, %v6848
      %v6850 = vpop.f32.mrb[0].mxu0
      %6851 = vmatprep.mubr.f32.mxu0 0.0
      %6852 = vmatmul.mubr.f32.gmra.mrb[0].mxu0 %v6664
      %v6853 = vpop.f32.mrb[0].mxu0
      %v6854 = vadd.f32 %v6619, %v6853
      %v6855 = vpop.f32.mrb[0].mxu0
      %6856 = vmatprep.mubr.f32.mxu0 0.0
      %6857 = vmatmul.mubr.f32.gmra.mrb[0].mxu0 %v6667
      %v6858 = vpop.f32.mrb[0].mxu0
      %v6859 = vadd.f32 %v6619, %v6858
      %v6860 = vpop.f32.mrb[0].mxu0
      %6861 = vmatprep.mubr.f32.mxu0 0.0
      %6862 = vmatmul.mubr.f32.gmra.mrb[0].mxu0 %v6670
      %v6863 = vpop.f32.mrb[0].mxu0
      %v6864 = vadd.f32 %v6619, %v6863
      %v6865 = vpop.f32.mrb[0].mxu0
      %6866 = vmatprep.mubr.f32.mxu0 0.0
      %6867 = vmatmul.mubr.f32.gmra.mrb[0].mxu0 %v6673
      %v6868 = vpop.f32.mrb[0].mxu0
      %v6869 = vadd.f32 %v6619, %v6868
      %v6870 = vpop.f32.mrb[0].mxu0
      %6871 = vmatprep.mubr.f32.mxu0 0.0
      %6872 = vmatmul.mubr.f32.gmra.mrb[0].mxu0 %v6676
      %v6873 = vpop.f32.mrb[0].mxu0
      %v6874 = vadd.f32 %v6619, %v6873
      %v6875 = vpop.f32.mrb[0].mxu0
      %6876 = vmatprep.mubr.f32.mxu0 0.0
      %6877 = vmatmul.mubr.f32.gmra.mrb[0].mxu0 %v6679
      %v6878 = vpop.f32.mrb[0].mxu0
      %v6879 = vadd.f32 %v6619, %v6878
      %v6880 = vpop.f32.mrb[0].mxu0
      %6881 = vmatprep.mubr.f32.mxu0 0.0
      %6882 = vmatmul.mubr.f32.gmra.mrb[0].mxu0 %v6682
      %v6883 = vpop.f32.mrb[0].mxu0
      %v6884 = vadd.f32 %v6619, %v6883
      %v6885 = vpop.f32.mrb[0].mxu0
      %6886 = vmatprep.mubr.f32.mxu0 0.0
      %6887 = vmatmul.mubr.f32.gmra.mrb[0].mxu0 %v6685
      %v6888 = vpop.f32.mrb[0].mxu0
      %v6889 = vadd.f32 %v6619, %v6888
      %v6890 = vpop.f32.mrb[0].mxu0
      %6891 = vmatprep.mubr.f32.mxu0 0.0
      %6892 = vmatmul.mubr.f32.gmra.mrb[0].mxu0 %v6688
      %v6893 = vpop.f32.mrb[0].mxu0
      %v6894 = vadd.f32 %v6619, %v6893
      %v6895 = vpop.f32.mrb[0].mxu0
      %6896 = vmatprep.mubr.f32.mxu0 0.0
      %6897 = vmatmul.mubr.f32.gmra.mrb[0].mxu0 %v6691
      %v6898 = vpop.f32.mrb[0].mxu0
      %v6899 = vadd.f32 %v6619, %v6898
      %v6900 = vpop.f32.mrb[0].mxu0
      %6901 = vmatprep.mubr.f32.mxu0 0.0
      %6902 = vmatmul.mubr.f32.gmra.mrb[0].mxu0 %v6694
      %v6903 = vpop.f32.mrb[0].mxu0
      %v6904 = vadd.f32 %v6619, %v6903
      %v6905 = vpop.f32.mrb[0].mxu0
      %6906 = vmatprep.mubr.f32.mxu0 0.0
      %6907 = vmatmul.mubr.f32.gmra.mrb[0].mxu0 %v6697
      %v6908 = vpop.f32.mrb[0].mxu0
      %v6909 = vadd.f32 %v6619, %v6908
      %v6910 = vpop.f32.mrb[0].mxu0
      %6911 = vmatprep.mubr.f32.mxu0 0.0
      %6912 = vmatmul.mubr.f32.gmra.mrb[0].mxu0 %v6700
      %v6913 = vpop.f32.mrb[0].mxu0
      %v6914 = vadd.f32 %v6619, %v6913
      %v6915 = vpop.f32.mrb[0].mxu0
      %6916 = vmatprep.mubr.f32.mxu0 0.0
      %6917 = vmatmul.mubr.f32.gmra.mrb[0].mxu0 %v6703
      %v6918 = vpop.f32.mrb[0].mxu0
      %v6919 = vadd.f32 %v6619, %v6918
      %v6920 = vpop.f32.mrb[0].mxu0
      %6921 = vmatprep.mubr.f32.mxu0 0.0
      %6922 = vmatmul.mubr.f32.gmra.mrb[0].mxu0 %v6706
      %v6923 = vpop.f32.mrb[0].mxu0
      %v6924 = vadd.f32 %v6619, %v6923
      %v6925 = vpop.f32.mrb[0].mxu0
      %6926 = vmatprep.mubr.f32.mxu0 0.0
      %6927 = vmatmul.mubr.f32.gmra.mrb[0].mxu0 %v6709
      %v6928 = vpop.f32.mrb[0].mxu0
      %v6929 = vadd.f32 %v6619, %v6928
      %v6930 = vpop.f32.mrb[0].mxu0
      %6931 = vmatprep.mubr.f32.mxu0 0.0
      %6932 = vmatmul.mubr.f32.gmra.mrb[0].mxu0 %v6712
      %v6933 = vpop.f32.mrb[0].mxu0
      %v6934 = vadd.f32 %v6619, %v6933
      %v6935 = vpop.f32.mrb[0].mxu0
      %6936 = vmatprep.mubr.f32.mxu0 0.0
      %6937 = vmatmul.mubr.f32.gmra.mrb[0].mxu0 %v6715
      %v6938 = vpop.f32.mrb[0].mxu0
      %v6939 = vadd.f32 %v6619, %v6938
      %v6940 = vpop.f32.mrb[0].mxu0
      %6941 = vdwg.mxu0
      %6942 = vmatprep.subr.mxu0 0.0
      %6943 = vmatpush1.msra.mxu0 %v6450
      %6944 = vmatprep.subr.mxu0 0.0
      %6945 = vmatpush1.msra.mxu0 %v6451
      %6946 = vmatprep.subr.mxu0 0.0
      %6947 = vmatpush1.msra.mxu0 %v6452
      %6948 = vmatprep.subr.mxu0 0.0
      %6949 = vmatpush1.msra.mxu0 %v6453
      %6950 = vmatprep.subr.mxu0 0.0
      %6951 = vmatpush1.msra.mxu0 %v6454
      %6952 = vmatprep.subr.mxu0 0.0
      %6953 = vmatpush1.msra.mxu0 %v6455
      %6954 = vmatprep.subr.mxu0 0.0
      %6955 = vmatpush1.msra.mxu0 %v6456
      %6956 = vmatprep.subr.mxu0 0.0
      %6957 = vmatpush1.msra.mxu0 %v6457
      %6958 = vmatprep.subr.mxu0 0.0
      %6959 = vmatpush1.msra.mxu0 0.0
      %6960 = vmatprep.subr.mxu0 0.0
      %6961 = vmatpush1.msra.mxu0 0.0
      %6962 = vmatprep.subr.mxu0 0.0
      %6963 = vmatpush1.msra.mxu0 0.0
      %6964 = vmatprep.subr.mxu0 0.0
      %6965 = vmatpush1.msra.mxu0 0.0
      %6966 = vmatprep.subr.mxu0 0.0
      %6967 = vmatpush1.msra.mxu0 0.0
      %6968 = vmatprep.subr.mxu0 0.0
      %6969 = vmatpush1.msra.mxu0 0.0
      %6970 = vmatprep.subr.mxu0 0.0
      %6971 = vmatpush1.msra.mxu0 0.0
      %6972 = vmatprep.subr.mxu0 0.0
      %6973 = vmatpush1.msra.mxu0 0.0
      %6974 = vmatprep.subr.mxu0 0.0
      %6975 = vmatpush1.msra.mxu0 0.0
      %6976 = vmatprep.subr.mxu0 0.0
      %6977 = vmatpush1.msra.mxu0 0.0
      %6978 = vmatprep.subr.mxu0 0.0
      %6979 = vmatpush1.msra.mxu0 0.0
      %6980 = vmatprep.subr.mxu0 0.0
      %6981 = vmatpush1.msra.mxu0 0.0
      %6982 = vmatprep.subr.mxu0 0.0
      %6983 = vmatpush1.msra.mxu0 0.0
      %6984 = vmatprep.subr.mxu0 0.0
      %6985 = vmatpush1.msra.mxu0 0.0
      %6986 = vmatprep.subr.mxu0 0.0
      %6987 = vmatpush1.msra.mxu0 0.0
      %6988 = vmatprep.subr.mxu0 0.0
      %6989 = vmatpush1.msra.mxu0 0.0
      %6990 = vmatprep.subr.mxu0 0.0
      %6991 = vmatpush1.msra.mxu0 0.0
      %6992 = vmatprep.subr.mxu0 0.0
      %6993 = vmatpush1.msra.mxu0 0.0
      %6994 = vmatprep.subr.mxu0 0.0
      %6995 = vmatpush1.msra.mxu0 0.0
      %6996 = vmatprep.subr.mxu0 0.0
      %6997 = vmatpush1.msra.mxu0 0.0
      %6998 = vmatprep.subr.mxu0 0.0
      %6999 = vmatpush1.msra.mxu0 0.0
      %7000 = vmatprep.subr.mxu0 0.0
      %7001 = vmatpush1.msra.mxu0 0.0
      %7002 = vmatprep.subr.mxu0 0.0
      %7003 = vmatpush1.msra.mxu0 0.0
      %7004 = vmatprep.subr.mxu0 0.0
      %7005 = vmatpush1.msra.mxu0 0.0
      %7006 = vmatprep.mubr.f32.mxu0 0.0
      %7007 = vmatmul.mubr.f32.gmra.mrb[0].mxu0 %v6622
      %v7008 = vpop.f32.mrb[0].mxu0
      %v7009 = vadd.f32 0.0, %v7008
      %v7010 = vpop.f32.mrb[0].mxu0
      %7011 = vmatprep.mubr.f32.mxu0 0.0
      %7012 = vmatmul.mubr.f32.gmra.mrb[0].mxu0 %v6625
      %v7013 = vpop.f32.mrb[0].mxu0
      %v7014 = vadd.f32 0.0, %v7013
      %v7015 = vpop.f32.mrb[0].mxu0
      %7016 = vmatprep.mubr.f32.mxu0 0.0
      %7017 = vmatmul.mubr.f32.gmra.mrb[0].mxu0 %v6628
      %v7018 = vpop.f32.mrb[0].mxu0
      %v7019 = vadd.f32 0.0, %v7018
      %v7020 = vpop.f32.mrb[0].mxu0
      %7021 = vmatprep.mubr.f32.mxu0 0.0
      %7022 = vmatmul.mubr.f32.gmra.mrb[0].mxu0 %v6631
      %v7023 = vpop.f32.mrb[0].mxu0
      %v7024 = vadd.f32 0.0, %v7023
      %v7025 = vpop.f32.mrb[0].mxu0
      %7026 = vmatprep.mubr.f32.mxu0 0.0
      %7027 = vmatmul.mubr.f32.gmra.mrb[0].mxu0 %v6634
      %v7028 = vpop.f32.mrb[0].mxu0
      %v7029 = vadd.f32 0.0, %v7028
      %v7030 = vpop.f32.mrb[0].mxu0
      %7031 = vmatprep.mubr.f32.mxu0 0.0
      %7032 = vmatmul.mubr.f32.gmra.mrb[0].mxu0 %v6637
      %v7033 = vpop.f32.mrb[0].mxu0
      %v7034 = vadd.f32 0.0, %v7033
      %v7035 = vpop.f32.mrb[0].mxu0
      %7036 = vmatprep.mubr.f32.mxu0 0.0
      %7037 = vmatmul.mubr.f32.gmra.mrb[0].mxu0 %v6640
      %v7038 = vpop.f32.mrb[0].mxu0
      %v7039 = vadd.f32 0.0, %v7038
      %v7040 = vpop.f32.mrb[0].mxu0
      %7041 = vmatprep.mubr.f32.mxu0 0.0
      %7042 = vmatmul.mubr.f32.gmra.mrb[0].mxu0 %v6643
      %v7043 = vpop.f32.mrb[0].mxu0
      %v7044 = vadd.f32 0.0, %v7043
      %v7045 = vpop.f32.mrb[0].mxu0
      %7046 = vmatprep.mubr.f32.mxu0 0.0
      %7047 = vmatmul.mubr.f32.gmra.mrb[0].mxu0 %v6646
      %v7048 = vpop.f32.mrb[0].mxu0
      %v7049 = vadd.f32 0.0, %v7048
      %v7050 = vpop.f32.mrb[0].mxu0
      %7051 = vmatprep.mubr.f32.mxu0 0.0
      %7052 = vmatmul.mubr.f32.gmra.mrb[0].mxu0 %v6649
      %v7053 = vpop.f32.mrb[0].mxu0
      %v7054 = vadd.f32 0.0, %v7053
      %v7055 = vpop.f32.mrb[0].mxu0
      %7056 = vmatprep.mubr.f32.mxu0 0.0
      %7057 = vmatmul.mubr.f32.gmra.mrb[0].mxu0 %v6652
      %v7058 = vpop.f32.mrb[0].mxu0
      %v7059 = vadd.f32 0.0, %v7058
      %v7060 = vpop.f32.mrb[0].mxu0
      %7061 = vmatprep.mubr.f32.mxu0 0.0
      %7062 = vmatmul.mubr.f32.gmra.mrb[0].mxu0 %v6655
      %v7063 = vpop.f32.mrb[0].mxu0
      %v7064 = vadd.f32 0.0, %v7063
      %v7065 = vpop.f32.mrb[0].mxu0
      %7066 = vmatprep.mubr.f32.mxu0 0.0
      %7067 = vmatmul.mubr.f32.gmra.mrb[0].mxu0 %v6658
      %v7068 = vpop.f32.mrb[0].mxu0
      %v7069 = vadd.f32 0.0, %v7068
      %v7070 = vpop.f32.mrb[0].mxu0
      %7071 = vmatprep.mubr.f32.mxu0 0.0
      %7072 = vmatmul.mubr.f32.gmra.mrb[0].mxu0 %v6661
      %v7073 = vpop.f32.mrb[0].mxu0
      %v7074 = vadd.f32 0.0, %v7073
      %v7075 = vpop.f32.mrb[0].mxu0
      %7076 = vmatprep.mubr.f32.mxu0 0.0
      %7077 = vmatmul.mubr.f32.gmra.mrb[0].mxu0 %v6664
      %v7078 = vpop.f32.mrb[0].mxu0
      %v7079 = vadd.f32 0.0, %v7078
      %v7080 = vpop.f32.mrb[0].mxu0
      %7081 = vmatprep.mubr.f32.mxu0 0.0
      %7082 = vmatmul.mubr.f32.gmra.mrb[0].mxu0 %v6667
      %v7083 = vpop.f32.mrb[0].mxu0
      %v7084 = vadd.f32 0.0, %v7083
      %v7085 = vpop.f32.mrb[0].mxu0
      %7086 = vmatprep.mubr.f32.mxu0 0.0
      %7087 = vmatmul.mubr.f32.gmra.mrb[0].mxu0 %v6670
      %v7088 = vpop.f32.mrb[0].mxu0
      %v7089 = vadd.f32 0.0, %v7088
      %v7090 = vpop.f32.mrb[0].mxu0
      %7091 = vmatprep.mubr.f32.mxu0 0.0
      %7092 = vmatmul.mubr.f32.gmra.mrb[0].mxu0 %v6673
      %v7093 = vpop.f32.mrb[0].mxu0
      %v7094 = vadd.f32 0.0, %v7093
      %v7095 = vpop.f32.mrb[0].mxu0
      %7096 = vmatprep.mubr.f32.mxu0 0.0
      %7097 = vmatmul.mubr.f32.gmra.mrb[0].mxu0 %v6676
      %v7098 = vpop.f32.mrb[0].mxu0
      %v7099 = vadd.f32 0.0, %v7098
      %v7100 = vpop.f32.mrb[0].mxu0
      %7101 = vmatprep.mubr.f32.mxu0 0.0
      %7102 = vmatmul.mubr.f32.gmra.mrb[0].mxu0 %v6679
      %v7103 = vpop.f32.mrb[0].mxu0
      %v7104 = vadd.f32 0.0, %v7103
      %v7105 = vpop.f32.mrb[0].mxu0
      %7106 = vmatprep.mubr.f32.mxu0 0.0
      %7107 = vmatmul.mubr.f32.gmra.mrb[0].mxu0 %v6682
      %v7108 = vpop.f32.mrb[0].mxu0
      %v7109 = vadd.f32 0.0, %v7108
      %v7110 = vpop.f32.mrb[0].mxu0
      %7111 = vmatprep.mubr.f32.mxu0 0.0
      %7112 = vmatmul.mubr.f32.gmra.mrb[0].mxu0 %v6685
      %v7113 = vpop.f32.mrb[0].mxu0
      %v7114 = vadd.f32 0.0, %v7113
      %v7115 = vpop.f32.mrb[0].mxu0
      %7116 = vmatprep.mubr.f32.mxu0 0.0
      %7117 = vmatmul.mubr.f32.gmra.mrb[0].mxu0 %v6688
      %v7118 = vpop.f32.mrb[0].mxu0
      %v7119 = vadd.f32 0.0, %v7118
      %v7120 = vpop.f32.mrb[0].mxu0
      %7121 = vmatprep.mubr.f32.mxu0 0.0
      %7122 = vmatmul.mubr.f32.gmra.mrb[0].mxu0 %v6691
      %v7123 = vpop.f32.mrb[0].mxu0
      %v7124 = vadd.f32 0.0, %v7123
      %v7125 = vpop.f32.mrb[0].mxu0
      %7126 = vmatprep.mubr.f32.mxu0 0.0
      %7127 = vmatmul.mubr.f32.gmra.mrb[0].mxu0 %v6694
      %v7128 = vpop.f32.mrb[0].mxu0
      %v7129 = vadd.f32 0.0, %v7128
      %v7130 = vpop.f32.mrb[0].mxu0
      %7131 = vmatprep.mubr.f32.mxu0 0.0
      %7132 = vmatmul.mubr.f32.gmra.mrb[0].mxu0 %v6697
      %v7133 = vpop.f32.mrb[0].mxu0
      %v7134 = vadd.f32 0.0, %v7133
      %v7135 = vpop.f32.mrb[0].mxu0
      %7136 = vmatprep.mubr.f32.mxu0 0.0
      %7137 = vmatmul.mubr.f32.gmra.mrb[0].mxu0 %v6700
      %v7138 = vpop.f32.mrb[0].mxu0
      %v7139 = vadd.f32 0.0, %v7138
      %v7140 = vpop.f32.mrb[0].mxu0
      %7141 = vmatprep.mubr.f32.mxu0 0.0
      %7142 = vmatmul.mubr.f32.gmra.mrb[0].mxu0 %v6703
      %v7143 = vpop.f32.mrb[0].mxu0
      %v7144 = vadd.f32 0.0, %v7143
      %v7145 = vpop.f32.mrb[0].mxu0
      %7146 = vmatprep.mubr.f32.mxu0 0.0
      %7147 = vmatmul.mubr.f32.gmra.mrb[0].mxu0 %v6706
      %v7148 = vpop.f32.mrb[0].mxu0
      %v7149 = vadd.f32 0.0, %v7148
      %v7150 = vpop.f32.mrb[0].mxu0
      %7151 = vmatprep.mubr.f32.mxu0 0.0
      %7152 = vmatmul.mubr.f32.gmra.mrb[0].mxu0 %v6709
      %v7153 = vpop.f32.mrb[0].mxu0
      %v7154 = vadd.f32 0.0, %v7153
      %v7155 = vpop.f32.mrb[0].mxu0
      %7156 = vmatprep.mubr.f32.mxu0 0.0
      %7157 = vmatmul.mubr.f32.gmra.mrb[0].mxu0 %v6712
      %v7158 = vpop.f32.mrb[0].mxu0
      %v7159 = vadd.f32 0.0, %v7158
      %v7160 = vpop.f32.mrb[0].mxu0
      %7161 = vmatprep.mubr.f32.mxu0 0.0
      %7162 = vmatmul.mubr.f32.gmra.mrb[0].mxu0 %v6715
      %v7163 = vpop.f32.mrb[0].mxu0
      %v7164 = vadd.f32 0.0, %v7163
      %v7165 = vpop.f32.mrb[0].mxu0
      %7166 = vdwg.mxu0
      %v7168 = vlaneseq
      %v7169 = vshrl.u32 %v7168, 7
      %v7170 = vsub.s32 0, %v7169
      %v7171 = vrot.slane %v6458, %v7170
      %7173 = vmatprep.subr.mxu0 0.0
      %7174 = vmatpush1.msra.mxu0 %v7009
      %7175 = vmatprep.subr.mxu0 0.0
      %7176 = vmatpush1.msra.mxu0 %v7014
      %7177 = vmatprep.subr.mxu0 0.0
      %7178 = vmatpush1.msra.mxu0 %v7019
      %7179 = vmatprep.subr.mxu0 0.0
      %7180 = vmatpush1.msra.mxu0 %v7024
      %7181 = vmatprep.subr.mxu0 0.0
      %7182 = vmatpush1.msra.mxu0 %v7029
      %7183 = vmatprep.subr.mxu0 0.0
      %7184 = vmatpush1.msra.mxu0 %v7034
      %7185 = vmatprep.subr.mxu0 0.0
      %7186 = vmatpush1.msra.mxu0 %v7039
      %7187 = vmatprep.subr.mxu0 0.0
      %7188 = vmatpush1.msra.mxu0 %v7044
      %7189 = vmatprep.subr.mxu0 0.0
      %7190 = vmatpush1.msra.mxu0 %v7049
      %7191 = vmatprep.subr.mxu0 0.0
      %7192 = vmatpush1.msra.mxu0 %v7054
      %7193 = vmatprep.subr.mxu0 0.0
      %7194 = vmatpush1.msra.mxu0 %v7059
      %7195 = vmatprep.subr.mxu0 0.0
      %7196 = vmatpush1.msra.mxu0 %v7064
      %7197 = vmatprep.subr.mxu0 0.0
      %7198 = vmatpush1.msra.mxu0 %v7069
      %7199 = vmatprep.subr.mxu0 0.0
      %7200 = vmatpush1.msra.mxu0 %v7074
      %7201 = vmatprep.subr.mxu0 0.0
      %7202 = vmatpush1.msra.mxu0 %v7079
      %7203 = vmatprep.subr.mxu0 0.0
      %7204 = vmatpush1.msra.mxu0 %v7084
      %7205 = vmatprep.subr.mxu0 0.0
      %7206 = vmatpush1.msra.mxu0 %v7089
      %7207 = vmatprep.subr.mxu0 0.0
      %7208 = vmatpush1.msra.mxu0 %v7094
      %7209 = vmatprep.subr.mxu0 0.0
      %7210 = vmatpush1.msra.mxu0 %v7099
      %7211 = vmatprep.subr.mxu0 0.0
      %7212 = vmatpush1.msra.mxu0 %v7104
      %7213 = vmatprep.subr.mxu0 0.0
      %7214 = vmatpush1.msra.mxu0 %v7109
      %7215 = vmatprep.subr.mxu0 0.0
      %7216 = vmatpush1.msra.mxu0 %v7114
      %7217 = vmatprep.subr.mxu0 0.0
      %7218 = vmatpush1.msra.mxu0 %v7119
      %7219 = vmatprep.subr.mxu0 0.0
      %7220 = vmatpush1.msra.mxu0 %v7124
      %7221 = vmatprep.subr.mxu0 0.0
      %7222 = vmatpush1.msra.mxu0 %v7129
      %7223 = vmatprep.subr.mxu0 0.0
      %7224 = vmatpush1.msra.mxu0 %v7134
      %7225 = vmatprep.subr.mxu0 0.0
      %7226 = vmatpush1.msra.mxu0 %v7139
      %7227 = vmatprep.subr.mxu0 0.0
      %7228 = vmatpush1.msra.mxu0 %v7144
      %7229 = vmatprep.subr.mxu0 0.0
      %7230 = vmatpush1.msra.mxu0 %v7149
      %7231 = vmatprep.subr.mxu0 0.0
      %7232 = vmatpush1.msra.mxu0 %v7154
      %7233 = vmatprep.subr.mxu0 0.0
      %7234 = vmatpush1.msra.mxu0 %v7159
      %7235 = vmatprep.subr.mxu0 0.0
      %7236 = vmatpush1.msra.mxu0 %v7164
      %7237 = vmatprep.mubr.f32.mxu0 %v1144
      %7238 = vmatmul.mubr.f32.gmra.mrb[0].mxu0 %v1143
      %v7239 = vpop.f32.mrb[0].mxu0
      %v7240 = vadd.f32 %v7171, %v7239
      %v7241 = vpop.f32.mrb[0].mxu0
      %7242 = vmatprep.mubr.f32.mxu0 %v1146
      %7243 = vmatmul.mubr.f32.gmra.mrb[0].mxu0 %v1145
      %v7244 = vpop.f32.mrb[0].mxu0
      %v7245 = vadd.f32 %v7171, %v7244
      %v7246 = vpop.f32.mrb[0].mxu0
      %7247 = vmatprep.mubr.f32.mxu0 %v1148
      %7248 = vmatmul.mubr.f32.gmra.mrb[0].mxu0 %v1147
      %v7249 = vpop.f32.mrb[0].mxu0
      %v7250 = vadd.f32 %v7171, %v7249
      %v7251 = vpop.f32.mrb[0].mxu0
      %7252 = vmatprep.mubr.f32.mxu0 %v1150
      %7253 = vmatmul.mubr.f32.gmra.mrb[0].mxu0 %v1149
      %v7254 = vpop.f32.mrb[0].mxu0
      %v7255 = vadd.f32 %v7171, %v7254
      %v7256 = vpop.f32.mrb[0].mxu0
      %7257 = vmatprep.mubr.f32.mxu0 %v1152
      %7258 = vmatmul.mubr.f32.gmra.mrb[0].mxu0 %v1151
      %v7259 = vpop.f32.mrb[0].mxu0
      %v7260 = vadd.f32 %v7171, %v7259
      %v7261 = vpop.f32.mrb[0].mxu0
      %7262 = vmatprep.mubr.f32.mxu0 %v1154
      %7263 = vmatmul.mubr.f32.gmra.mrb[0].mxu0 %v1153
      %v7264 = vpop.f32.mrb[0].mxu0
      %v7265 = vadd.f32 %v7171, %v7264
      %v7266 = vpop.f32.mrb[0].mxu0
      %7267 = vmatprep.mubr.f32.mxu0 %v1156
      %7268 = vmatmul.mubr.f32.gmra.mrb[0].mxu0 %v1155
      %v7269 = vpop.f32.mrb[0].mxu0
      %v7270 = vadd.f32 %v7171, %v7269
      %v7271 = vpop.f32.mrb[0].mxu0
      %7272 = vmatprep.mubr.f32.mxu0 %v1158
      %7273 = vmatmul.mubr.f32.gmra.mrb[0].mxu0 %v1157
      %v7274 = vpop.f32.mrb[0].mxu0
      %v7275 = vadd.f32 %v7171, %v7274
      %v7276 = vpop.f32.mrb[0].mxu0
      %7277 = vmatprep.mubr.f32.mxu0 %v1160
      %7278 = vmatmul.mubr.f32.gmra.mrb[0].mxu0 %v1159
      %v7279 = vpop.f32.mrb[0].mxu0
      %v7280 = vadd.f32 %v7171, %v7279
      %v7281 = vpop.f32.mrb[0].mxu0
      %7282 = vmatprep.mubr.f32.mxu0 %v1162
      %7283 = vmatmul.mubr.f32.gmra.mrb[0].mxu0 %v1161
      %v7284 = vpop.f32.mrb[0].mxu0
      %v7285 = vadd.f32 %v7171, %v7284
      %v7286 = vpop.f32.mrb[0].mxu0
      %7287 = vmatprep.mubr.f32.mxu0 %v1164
      %7288 = vmatmul.mubr.f32.gmra.mrb[0].mxu0 %v1163
      %v7289 = vpop.f32.mrb[0].mxu0
      %v7290 = vadd.f32 %v7171, %v7289
      %v7291 = vpop.f32.mrb[0].mxu0
      %7292 = vmatprep.mubr.f32.mxu0 %v1166
      %7293 = vmatmul.mubr.f32.gmra.mrb[0].mxu0 %v1165
      %v7294 = vpop.f32.mrb[0].mxu0
      %v7295 = vadd.f32 %v7171, %v7294
      %v7296 = vpop.f32.mrb[0].mxu0
      %7297 = vmatprep.mubr.f32.mxu0 %v1168
      %7298 = vmatmul.mubr.f32.gmra.mrb[0].mxu0 %v1167
      %v7299 = vpop.f32.mrb[0].mxu0
      %v7300 = vadd.f32 %v7171, %v7299
      %v7301 = vpop.f32.mrb[0].mxu0
      %7302 = vmatprep.mubr.f32.mxu0 %v1170
      %7303 = vmatmul.mubr.f32.gmra.mrb[0].mxu0 %v1169
      %v7304 = vpop.f32.mrb[0].mxu0
      %v7305 = vadd.f32 %v7171, %v7304
      %v7306 = vpop.f32.mrb[0].mxu0
      %7307 = vmatprep.mubr.f32.mxu0 %v1172
      %7308 = vmatmul.mubr.f32.gmra.mrb[0].mxu0 %v1171
      %v7309 = vpop.f32.mrb[0].mxu0
      %v7310 = vadd.f32 %v7171, %v7309
      %v7311 = vpop.f32.mrb[0].mxu0
      %7312 = vmatprep.mubr.f32.mxu0 %v1174
      %7313 = vmatmul.mubr.f32.gmra.mrb[0].mxu0 %v1173
      %v7314 = vpop.f32.mrb[0].mxu0
      %v7315 = vadd.f32 %v7171, %v7314
      %v7316 = vpop.f32.mrb[0].mxu0
      %7317 = vmatprep.mubr.f32.mxu0 %v1176
      %7318 = vmatmul.mubr.f32.gmra.mrb[0].mxu0 %v1175
      %v7319 = vpop.f32.mrb[0].mxu0
      %v7320 = vadd.f32 %v7171, %v7319
      %v7321 = vpop.f32.mrb[0].mxu0
      %7322 = vmatprep.mubr.f32.mxu0 %v1178
      %7323 = vmatmul.mubr.f32.gmra.mrb[0].mxu0 %v1177
      %v7324 = vpop.f32.mrb[0].mxu0
      %v7325 = vadd.f32 %v7171, %v7324
      %v7326 = vpop.f32.mrb[0].mxu0
      %7327 = vmatprep.mubr.f32.mxu0 %v1180
      %7328 = vmatmul.mubr.f32.gmra.mrb[0].mxu0 %v1179
      %v7329 = vpop.f32.mrb[0].mxu0
      %v7330 = vadd.f32 %v7171, %v7329
      %v7331 = vpop.f32.mrb[0].mxu0
      %7332 = vmatprep.mubr.f32.mxu0 %v1182
      %7333 = vmatmul.mubr.f32.gmra.mrb[0].mxu0 %v1181
      %v7334 = vpop.f32.mrb[0].mxu0
      %v7335 = vadd.f32 %v7171, %v7334
      %v7336 = vpop.f32.mrb[0].mxu0
      %7337 = vmatprep.mubr.f32.mxu0 %v1184
      %7338 = vmatmul.mubr.f32.gmra.mrb[0].mxu0 %v1183
      %v7339 = vpop.f32.mrb[0].mxu0
      %v7340 = vadd.f32 %v7171, %v7339
      %v7341 = vpop.f32.mrb[0].mxu0
      %7342 = vmatprep.mubr.f32.mxu0 %v1186
      %7343 = vmatmul.mubr.f32.gmra.mrb[0].mxu0 %v1185
      %v7344 = vpop.f32.mrb[0].mxu0
      %v7345 = vadd.f32 %v7171, %v7344
      %v7346 = vpop.f32.mrb[0].mxu0
      %7347 = vmatprep.mubr.f32.mxu0 %v1188
      %7348 = vmatmul.mubr.f32.gmra.mrb[0].mxu0 %v1187
      %v7349 = vpop.f32.mrb[0].mxu0
      %v7350 = vadd.f32 %v7171, %v7349
      %v7351 = vpop.f32.mrb[0].mxu0
      %7352 = vmatprep.mubr.f32.mxu0 %v1190
      %7353 = vmatmul.mubr.f32.gmra.mrb[0].mxu0 %v1189
      %v7354 = vpop.f32.mrb[0].mxu0
      %v7355 = vadd.f32 %v7171, %v7354
      %v7356 = vpop.f32.mrb[0].mxu0
      %7357 = vmatprep.mubr.f32.mxu0 %v1192
      %7358 = vmatmul.mubr.f32.gmra.mrb[0].mxu0 %v1191
      %v7359 = vpop.f32.mrb[0].mxu0
      %v7360 = vadd.f32 %v7171, %v7359
      %v7361 = vpop.f32.mrb[0].mxu0
      %7362 = vmatprep.mubr.f32.mxu0 %v1194
      %7363 = vmatmul.mubr.f32.gmra.mrb[0].mxu0 %v1193
      %v7364 = vpop.f32.mrb[0].mxu0
      %v7365 = vadd.f32 %v7171, %v7364
      %v7366 = vpop.f32.mrb[0].mxu0
      %7367 = vmatprep.mubr.f32.mxu0 %v1196
      %7368 = vmatmul.mubr.f32.gmra.mrb[0].mxu0 %v1195
      %v7369 = vpop.f32.mrb[0].mxu0
      %v7370 = vadd.f32 %v7171, %v7369
      %v7371 = vpop.f32.mrb[0].mxu0
      %7372 = vmatprep.mubr.f32.mxu0 %v1198
      %7373 = vmatmul.mubr.f32.gmra.mrb[0].mxu0 %v1197
      %v7374 = vpop.f32.mrb[0].mxu0
      %v7375 = vadd.f32 %v7171, %v7374
      %v7376 = vpop.f32.mrb[0].mxu0
      %7377 = vmatprep.mubr.f32.mxu0 %v1200
      %7378 = vmatmul.mubr.f32.gmra.mrb[0].mxu0 %v1199
      %v7379 = vpop.f32.mrb[0].mxu0
      %v7380 = vadd.f32 %v7171, %v7379
      %v7381 = vpop.f32.mrb[0].mxu0
      %7382 = vmatprep.mubr.f32.mxu0 %v1202
      %7383 = vmatmul.mubr.f32.gmra.mrb[0].mxu0 %v1201
      %v7384 = vpop.f32.mrb[0].mxu0
      %v7385 = vadd.f32 %v7171, %v7384
      %v7386 = vpop.f32.mrb[0].mxu0
      %7387 = vmatprep.mubr.f32.mxu0 %v1204
      %7388 = vmatmul.mubr.f32.gmra.mrb[0].mxu0 %v1203
      %v7389 = vpop.f32.mrb[0].mxu0
      %v7390 = vadd.f32 %v7171, %v7389
      %v7391 = vpop.f32.mrb[0].mxu0
      %7392 = vmatprep.mubr.f32.mxu0 %v1206
      %7393 = vmatmul.mubr.f32.gmra.mrb[0].mxu0 %v1205
      %v7394 = vpop.f32.mrb[0].mxu0
      %v7395 = vadd.f32 %v7171, %v7394
      %v7396 = vpop.f32.mrb[0].mxu0
      %7397 = vdwg.mxu0
      %v7399 = vlaneseq
      %v7400 = vshrl.u32 %v7399, 7
      %v7401 = vsub.s32 0, %v7400
      %v7402 = vrot.slane %v6603, %v7401
      %7404 = vmatprep.subr.mxu0 0.0
      %7405 = vmatpush1.msra.mxu0 %v6459
      %7406 = vmatprep.subr.mxu0 0.0
      %7407 = vmatpush1.msra.mxu0 %v6460
      %7408 = vmatprep.subr.mxu0 0.0
      %7409 = vmatpush1.msra.mxu0 %v6461
      %7410 = vmatprep.subr.mxu0 0.0
      %7411 = vmatpush1.msra.mxu0 %v6462
      %7412 = vmatprep.subr.mxu0 0.0
      %7413 = vmatpush1.msra.mxu0 %v6463
      %7414 = vmatprep.subr.mxu0 0.0
      %7415 = vmatpush1.msra.mxu0 %v6464
      %7416 = vmatprep.subr.mxu0 0.0
      %7417 = vmatpush1.msra.mxu0 %v6465
      %7418 = vmatprep.subr.mxu0 0.0
      %7419 = vmatpush1.msra.mxu0 %v6466
      %7420 = vmatprep.subr.mxu0 0.0
      %7421 = vmatpush1.msra.mxu0 %v6467
      %7422 = vmatprep.subr.mxu0 0.0
      %7423 = vmatpush1.msra.mxu0 %v6468
      %7424 = vmatprep.subr.mxu0 0.0
      %7425 = vmatpush1.msra.mxu0 %v6469
      %7426 = vmatprep.subr.mxu0 0.0
      %7427 = vmatpush1.msra.mxu0 %v6470
      %7428 = vmatprep.subr.mxu0 0.0
      %7429 = vmatpush1.msra.mxu0 %v6471
      %7430 = vmatprep.subr.mxu0 0.0
      %7431 = vmatpush1.msra.mxu0 %v6472
      %7432 = vmatprep.subr.mxu0 0.0
      %7433 = vmatpush1.msra.mxu0 %v6473
      %7434 = vmatprep.subr.mxu0 0.0
      %7435 = vmatpush1.msra.mxu0 %v6474
      %7436 = vmatprep.subr.mxu0 0.0
      %7437 = vmatpush1.msra.mxu0 %v6475
      %7438 = vmatprep.subr.mxu0 0.0
      %7439 = vmatpush1.msra.mxu0 %v6476
      %7440 = vmatprep.subr.mxu0 0.0
      %7441 = vmatpush1.msra.mxu0 %v6477
      %7442 = vmatprep.subr.mxu0 0.0
      %7443 = vmatpush1.msra.mxu0 %v6478
      %7444 = vmatprep.subr.mxu0 0.0
      %7445 = vmatpush1.msra.mxu0 %v6479
      %7446 = vmatprep.subr.mxu0 0.0
      %7447 = vmatpush1.msra.mxu0 %v6480
      %7448 = vmatprep.subr.mxu0 0.0
      %7449 = vmatpush1.msra.mxu0 %v6481
      %7450 = vmatprep.subr.mxu0 0.0
      %7451 = vmatpush1.msra.mxu0 %v6482
      %7452 = vmatprep.subr.mxu0 0.0
      %7453 = vmatpush1.msra.mxu0 %v6483
      %7454 = vmatprep.subr.mxu0 0.0
      %7455 = vmatpush1.msra.mxu0 %v6484
      %7456 = vmatprep.subr.mxu0 0.0
      %7457 = vmatpush1.msra.mxu0 %v6485
      %7458 = vmatprep.subr.mxu0 0.0
      %7459 = vmatpush1.msra.mxu0 %v6486
      %7460 = vmatprep.subr.mxu0 0.0
      %7461 = vmatpush1.msra.mxu0 %v6487
      %7462 = vmatprep.subr.mxu0 0.0
      %7463 = vmatpush1.msra.mxu0 %v6488
      %7464 = vmatprep.subr.mxu0 0.0
      %7465 = vmatpush1.msra.mxu0 %v6489
      %7466 = vmatprep.subr.mxu0 0.0
      %7467 = vmatpush1.msra.mxu0 %v6490
      %7468 = vmatprep.mubr.f32.mxu0 0.0
      %7469 = vmatmul.mubr.f32.gmra.mrb[0].mxu0 0.0
      %v7470 = vpop.f32.mrb[0].mxu0
      %v7471 = vadd.f32 %v7402, %v7470
      %v7472 = vpop.f32.mrb[0].mxu0
      %7473 = vmatprep.mubr.f32.mxu0 0.0
      %7474 = vmatmul.mubr.f32.gmra.mrb[0].mxu0 0.0
      %v7475 = vpop.f32.mrb[0].mxu0
      %v7476 = vadd.f32 %v7402, %v7475
      %v7477 = vpop.f32.mrb[0].mxu0
      %7478 = vmatprep.mubr.f32.mxu0 0.0
      %7479 = vmatmul.mubr.f32.gmra.mrb[0].mxu0 0.0
      %v7480 = vpop.f32.mrb[0].mxu0
      %v7481 = vadd.f32 %v7402, %v7480
      %v7482 = vpop.f32.mrb[0].mxu0
      %7483 = vmatprep.mubr.f32.mxu0 0.0
      %7484 = vmatmul.mubr.f32.gmra.mrb[0].mxu0 0.0
      %v7485 = vpop.f32.mrb[0].mxu0
      %v7486 = vadd.f32 %v7402, %v7485
      %v7487 = vpop.f32.mrb[0].mxu0
      %7488 = vmatprep.mubr.f32.mxu0 0.0
      %7489 = vmatmul.mubr.f32.gmra.mrb[0].mxu0 0.0
      %v7490 = vpop.f32.mrb[0].mxu0
      %v7491 = vadd.f32 %v7402, %v7490
      %v7492 = vpop.f32.mrb[0].mxu0
      %7493 = vmatprep.mubr.f32.mxu0 0.0
      %7494 = vmatmul.mubr.f32.gmra.mrb[0].mxu0 0.0
      %v7495 = vpop.f32.mrb[0].mxu0
      %v7496 = vadd.f32 %v7402, %v7495
      %v7497 = vpop.f32.mrb[0].mxu0
      %7498 = vmatprep.mubr.f32.mxu0 %v7240
      %7499 = vmatmul.mubr.f32.gmra.mrb[0].mxu0 0.0
      %v7500 = vpop.f32.mrb[0].mxu0
      %v7501 = vadd.f32 %v7402, %v7500
      %v7502 = vpop.f32.mrb[0].mxu0
      %7503 = vmatprep.mubr.f32.mxu0 %v7245
      %7504 = vmatmul.mubr.f32.gmra.mrb[0].mxu0 0.0
      %v7505 = vpop.f32.mrb[0].mxu0
      %v7506 = vadd.f32 %v7402, %v7505
      %v7507 = vpop.f32.mrb[0].mxu0
      %7508 = vmatprep.mubr.f32.mxu0 %v7250
      %7509 = vmatmul.mubr.f32.gmra.mrb[0].mxu0 %v7240
      %v7510 = vpop.f32.mrb[0].mxu0
      %v7511 = vadd.f32 %v7402, %v7510
      %v7512 = vpop.f32.mrb[0].mxu0
      %7513 = vmatprep.mubr.f32.mxu0 %v7255
      %7514 = vmatmul.mubr.f32.gmra.mrb[0].mxu0 %v7245
      %v7515 = vpop.f32.mrb[0].mxu0
      %v7516 = vadd.f32 %v7402, %v7515
      %v7517 = vpop.f32.mrb[0].mxu0
      %7518 = vmatprep.mubr.f32.mxu0 %v7260
      %7519 = vmatmul.mubr.f32.gmra.mrb[0].mxu0 %v7250
      %v7520 = vpop.f32.mrb[0].mxu0
      %v7521 = vadd.f32 %v7402, %v7520
      %v7522 = vpop.f32.mrb[0].mxu0
      %7523 = vmatprep.mubr.f32.mxu0 %v7265
      %7524 = vmatmul.mubr.f32.gmra.mrb[0].mxu0 %v7255
      %v7525 = vpop.f32.mrb[0].mxu0
      %v7526 = vadd.f32 %v7402, %v7525
      %v7527 = vpop.f32.mrb[0].mxu0
      %7528 = vmatprep.mubr.f32.mxu0 %v7270
      %7529 = vmatmul.mubr.f32.gmra.mrb[0].mxu0 %v7260
      %v7530 = vpop.f32.mrb[0].mxu0
      %v7531 = vadd.f32 %v7402, %v7530
      %v7532 = vpop.f32.mrb[0].mxu0
      %7533 = vmatprep.mubr.f32.mxu0 %v7275
      %7534 = vmatmul.mubr.f32.gmra.mrb[0].mxu0 %v7265
      %v7535 = vpop.f32.mrb[0].mxu0
      %v7536 = vadd.f32 %v7402, %v7535
      %v7537 = vpop.f32.mrb[0].mxu0
      %7538 = vmatprep.mubr.f32.mxu0 %v7280
      %7539 = vmatmul.mubr.f32.gmra.mrb[0].mxu0 %v7270
      %v7540 = vpop.f32.mrb[0].mxu0
      %v7541 = vadd.f32 %v7402, %v7540
      %v7542 = vpop.f32.mrb[0].mxu0
      %7543 = vmatprep.mubr.f32.mxu0 %v7285
      %7544 = vmatmul.mubr.f32.gmra.mrb[0].mxu0 %v7275
      %v7545 = vpop.f32.mrb[0].mxu0
      %v7546 = vadd.f32 %v7402, %v7545
      %v7547 = vpop.f32.mrb[0].mxu0
      %7548 = vmatprep.mubr.f32.mxu0 %v7290
      %7549 = vmatmul.mubr.f32.gmra.mrb[0].mxu0 %v7280
      %v7550 = vpop.f32.mrb[0].mxu0
      %v7551 = vadd.f32 %v7402, %v7550
      %v7552 = vpop.f32.mrb[0].mxu0
      %7553 = vmatprep.mubr.f32.mxu0 %v7295
      %7554 = vmatmul.mubr.f32.gmra.mrb[0].mxu0 %v7285
      %v7555 = vpop.f32.mrb[0].mxu0
      %v7556 = vadd.f32 %v7402, %v7555
      %v7557 = vpop.f32.mrb[0].mxu0
      %7558 = vmatprep.mubr.f32.mxu0 %v7300
      %7559 = vmatmul.mubr.f32.gmra.mrb[0].mxu0 %v7290
      %v7560 = vpop.f32.mrb[0].mxu0
      %v7561 = vadd.f32 %v7402, %v7560
      %v7562 = vpop.f32.mrb[0].mxu0
      %7563 = vmatprep.mubr.f32.mxu0 %v7305
      %7564 = vmatmul.mubr.f32.gmra.mrb[0].mxu0 %v7295
      %v7565 = vpop.f32.mrb[0].mxu0
      %v7566 = vadd.f32 %v7402, %v7565
      %v7567 = vpop.f32.mrb[0].mxu0
      %7568 = vmatprep.mubr.f32.mxu0 %v7310
      %7569 = vmatmul.mubr.f32.gmra.mrb[0].mxu0 %v7300
      %v7570 = vpop.f32.mrb[0].mxu0
      %v7571 = vadd.f32 %v7402, %v7570
      %v7572 = vpop.f32.mrb[0].mxu0
      %7573 = vmatprep.mubr.f32.mxu0 %v7315
      %7574 = vmatmul.mubr.f32.gmra.mrb[0].mxu0 %v7305
      %v7575 = vpop.f32.mrb[0].mxu0
      %v7576 = vadd.f32 %v7402, %v7575
      %v7577 = vpop.f32.mrb[0].mxu0
      %7578 = vmatprep.mubr.f32.mxu0 %v7320
      %7579 = vmatmul.mubr.f32.gmra.mrb[0].mxu0 %v7310
      %v7580 = vpop.f32.mrb[0].mxu0
      %v7581 = vadd.f32 %v7402, %v7580
      %v7582 = vpop.f32.mrb[0].mxu0
      %7583 = vmatprep.mubr.f32.mxu0 %v7325
      %7584 = vmatmul.mubr.f32.gmra.mrb[0].mxu0 %v7315
      %v7585 = vpop.f32.mrb[0].mxu0
      %v7586 = vadd.f32 %v7402, %v7585
      %v7587 = vpop.f32.mrb[0].mxu0
      %7588 = vmatprep.mubr.f32.mxu0 %v7330
      %7589 = vmatmul.mubr.f32.gmra.mrb[0].mxu0 %v7320
      %v7590 = vpop.f32.mrb[0].mxu0
      %v7591 = vadd.f32 %v7402, %v7590
      %v7592 = vpop.f32.mrb[0].mxu0
      %7593 = vmatprep.mubr.f32.mxu0 %v7335
      %7594 = vmatmul.mubr.f32.gmra.mrb[0].mxu0 %v7325
      %v7595 = vpop.f32.mrb[0].mxu0
      %v7596 = vadd.f32 %v7402, %v7595
      %v7597 = vpop.f32.mrb[0].mxu0
      %7598 = vmatprep.mubr.f32.mxu0 %v7340
      %7599 = vmatmul.mubr.f32.gmra.mrb[0].mxu0 %v7330
      %v7600 = vpop.f32.mrb[0].mxu0
      %v7601 = vadd.f32 %v7402, %v7600
      %v7602 = vpop.f32.mrb[0].mxu0
      %7603 = vmatprep.mubr.f32.mxu0 %v7345
      %7604 = vmatmul.mubr.f32.gmra.mrb[0].mxu0 %v7335
      %v7605 = vpop.f32.mrb[0].mxu0
      %v7606 = vadd.f32 %v7402, %v7605
      %v7607 = vpop.f32.mrb[0].mxu0
      %7608 = vmatprep.mubr.f32.mxu0 %v7350
      %7609 = vmatmul.mubr.f32.gmra.mrb[0].mxu0 %v7340
      %v7610 = vpop.f32.mrb[0].mxu0
      %v7611 = vadd.f32 %v7402, %v7610
      %v7612 = vpop.f32.mrb[0].mxu0
      %7613 = vmatprep.mubr.f32.mxu0 %v7355
      %7614 = vmatmul.mubr.f32.gmra.mrb[0].mxu0 %v7345
      %v7615 = vpop.f32.mrb[0].mxu0
      %v7616 = vadd.f32 %v7402, %v7615
      %v7617 = vpop.f32.mrb[0].mxu0
      %7618 = vmatprep.mubr.f32.mxu0 %v7360
      %7619 = vmatmul.mubr.f32.gmra.mrb[0].mxu0 %v7350
      %v7620 = vpop.f32.mrb[0].mxu0
      %v7621 = vadd.f32 %v7402, %v7620
      %v7622 = vpop.f32.mrb[0].mxu0
      %7623 = vmatprep.mubr.f32.mxu0 %v7365
      %7624 = vmatmul.mubr.f32.gmra.mrb[0].mxu0 %v7355
      %v7625 = vpop.f32.mrb[0].mxu0
      %v7626 = vadd.f32 %v7402, %v7625
      %v7627 = vpop.f32.mrb[0].mxu0
      %7628 = vdwg.mxu0
      %7629 = vmatprep.subr.mxu0 0.0
      %7630 = vmatpush1.msra.mxu0 %v6491
      %7631 = vmatprep.subr.mxu0 0.0
      %7632 = vmatpush1.msra.mxu0 %v6492
      %7633 = vmatprep.subr.mxu0 0.0
      %7634 = vmatpush1.msra.mxu0 %v6493
      %7635 = vmatprep.subr.mxu0 0.0
      %7636 = vmatpush1.msra.mxu0 %v6494
      %7637 = vmatprep.subr.mxu0 0.0
      %7638 = vmatpush1.msra.mxu0 %v6495
      %7639 = vmatprep.subr.mxu0 0.0
      %7640 = vmatpush1.msra.mxu0 %v6496
      %7641 = vmatprep.subr.mxu0 0.0
      %7642 = vmatpush1.msra.mxu0 %v6497
      %7643 = vmatprep.subr.mxu0 0.0
      %7644 = vmatpush1.msra.mxu0 %v6498
      %7645 = vmatprep.subr.mxu0 0.0
      %7646 = vmatpush1.msra.mxu0 %v6499
      %7647 = vmatprep.subr.mxu0 0.0
      %7648 = vmatpush1.msra.mxu0 %v6500
      %7649 = vmatprep.subr.mxu0 0.0
      %7650 = vmatpush1.msra.mxu0 %v6501
      %7651 = vmatprep.subr.mxu0 0.0
      %7652 = vmatpush1.msra.mxu0 %v6502
      %7653 = vmatprep.subr.mxu0 0.0
      %7654 = vmatpush1.msra.mxu0 %v6503
      %7655 = vmatprep.subr.mxu0 0.0
      %7656 = vmatpush1.msra.mxu0 %v6504
      %7657 = vmatprep.subr.mxu0 0.0
      %7658 = vmatpush1.msra.mxu0 %v6505
      %7659 = vmatprep.subr.mxu0 0.0
      %7660 = vmatpush1.msra.mxu0 %v6506
      %7661 = vmatprep.subr.mxu0 0.0
      %7662 = vmatpush1.msra.mxu0 %v6507
      %7663 = vmatprep.subr.mxu0 0.0
      %7664 = vmatpush1.msra.mxu0 %v6508
      %7665 = vmatprep.subr.mxu0 0.0
      %7666 = vmatpush1.msra.mxu0 %v6509
      %7667 = vmatprep.subr.mxu0 0.0
      %7668 = vmatpush1.msra.mxu0 %v6510
      %7669 = vmatprep.subr.mxu0 0.0
      %7670 = vmatpush1.msra.mxu0 %v6511
      %7671 = vmatprep.subr.mxu0 0.0
      %7672 = vmatpush1.msra.mxu0 %v6512
      %7673 = vmatprep.subr.mxu0 0.0
      %7674 = vmatpush1.msra.mxu0 %v6513
      %7675 = vmatprep.subr.mxu0 0.0
      %7676 = vmatpush1.msra.mxu0 %v6514
      %7677 = vmatprep.subr.mxu0 0.0
      %7678 = vmatpush1.msra.mxu0 %v6515
      %7679 = vmatprep.subr.mxu0 0.0
      %7680 = vmatpush1.msra.mxu0 %v6516
      %7681 = vmatprep.subr.mxu0 0.0
      %7682 = vmatpush1.msra.mxu0 %v6517
      %7683 = vmatprep.subr.mxu0 0.0
      %7684 = vmatpush1.msra.mxu0 %v6518
      %7685 = vmatprep.subr.mxu0 0.0
      %7686 = vmatpush1.msra.mxu0 %v6519
      %7687 = vmatprep.subr.mxu0 0.0
      %7688 = vmatpush1.msra.mxu0 %v6520
      %7689 = vmatprep.subr.mxu0 0.0
      %7690 = vmatpush1.msra.mxu0 %v6521
      %7691 = vmatprep.subr.mxu0 0.0
      %7692 = vmatpush1.msra.mxu0 %v6522
      %7693 = vmatprep.mubr.f32.mxu0 0.0
      %7694 = vmatmul.mubr.f32.gmra.mrb[0].mxu0 0.0
      %v7695 = vpop.f32.mrb[0].mxu0
      %v7696 = vadd.f32 %v7471, %v7695
      %v7697 = vpop.f32.mrb[0].mxu0
      %7698 = vmatprep.mubr.f32.mxu0 0.0
      %7699 = vmatmul.mubr.f32.gmra.mrb[0].mxu0 0.0
      %v7700 = vpop.f32.mrb[0].mxu0
      %v7701 = vadd.f32 %v7476, %v7700
      %v7702 = vpop.f32.mrb[0].mxu0
      %7703 = vmatprep.mubr.f32.mxu0 %v7240
      %7704 = vmatmul.mubr.f32.gmra.mrb[0].mxu0 0.0
      %v7705 = vpop.f32.mrb[0].mxu0
      %v7706 = vadd.f32 %v7481, %v7705
      %v7707 = vpop.f32.mrb[0].mxu0
      %7708 = vmatprep.mubr.f32.mxu0 %v7245
      %7709 = vmatmul.mubr.f32.gmra.mrb[0].mxu0 0.0
      %v7710 = vpop.f32.mrb[0].mxu0
      %v7711 = vadd.f32 %v7486, %v7710
      %v7712 = vpop.f32.mrb[0].mxu0
      %7713 = vmatprep.mubr.f32.mxu0 %v7250
      %7714 = vmatmul.mubr.f32.gmra.mrb[0].mxu0 %v7240
      %v7715 = vpop.f32.mrb[0].mxu0
      %v7716 = vadd.f32 %v7491, %v7715
      %v7717 = vpop.f32.mrb[0].mxu0
      %7718 = vmatprep.mubr.f32.mxu0 %v7255
      %7719 = vmatmul.mubr.f32.gmra.mrb[0].mxu0 %v7245
      %v7720 = vpop.f32.mrb[0].mxu0
      %v7721 = vadd.f32 %v7496, %v7720
      %v7722 = vpop.f32.mrb[0].mxu0
      %7723 = vmatprep.mubr.f32.mxu0 %v7260
      %7724 = vmatmul.mubr.f32.gmra.mrb[0].mxu0 %v7250
      %v7725 = vpop.f32.mrb[0].mxu0
      %v7726 = vadd.f32 %v7501, %v7725
      %v7727 = vpop.f32.mrb[0].mxu0
      %7728 = vmatprep.mubr.f32.mxu0 %v7265
      %7729 = vmatmul.mubr.f32.gmra.mrb[0].mxu0 %v7255
      %v7730 = vpop.f32.mrb[0].mxu0
      %v7731 = vadd.f32 %v7506, %v7730
      %v7732 = vpop.f32.mrb[0].mxu0
      %7733 = vmatprep.mubr.f32.mxu0 %v7270
      %7734 = vmatmul.mubr.f32.gmra.mrb[0].mxu0 %v7260
      %v7735 = vpop.f32.mrb[0].mxu0
      %v7736 = vadd.f32 %v7511, %v7735
      %v7737 = vpop.f32.mrb[0].mxu0
      %7738 = vmatprep.mubr.f32.mxu0 %v7275
      %7739 = vmatmul.mubr.f32.gmra.mrb[0].mxu0 %v7265
      %v7740 = vpop.f32.mrb[0].mxu0
      %v7741 = vadd.f32 %v7516, %v7740
      %v7742 = vpop.f32.mrb[0].mxu0
      %7743 = vmatprep.mubr.f32.mxu0 %v7280
      %7744 = vmatmul.mubr.f32.gmra.mrb[0].mxu0 %v7270
      %v7745 = vpop.f32.mrb[0].mxu0
      %v7746 = vadd.f32 %v7521, %v7745
      %v7747 = vpop.f32.mrb[0].mxu0
      %7748 = vmatprep.mubr.f32.mxu0 %v7285
      %7749 = vmatmul.mubr.f32.gmra.mrb[0].mxu0 %v7275
      %v7750 = vpop.f32.mrb[0].mxu0
      %v7751 = vadd.f32 %v7526, %v7750
      %v7752 = vpop.f32.mrb[0].mxu0
      %7753 = vmatprep.mubr.f32.mxu0 %v7290
      %7754 = vmatmul.mubr.f32.gmra.mrb[0].mxu0 %v7280
      %v7755 = vpop.f32.mrb[0].mxu0
      %v7756 = vadd.f32 %v7531, %v7755
      %v7757 = vpop.f32.mrb[0].mxu0
      %7758 = vmatprep.mubr.f32.mxu0 %v7295
      %7759 = vmatmul.mubr.f32.gmra.mrb[0].mxu0 %v7285
      %v7760 = vpop.f32.mrb[0].mxu0
      %v7761 = vadd.f32 %v7536, %v7760
      %v7762 = vpop.f32.mrb[0].mxu0
      %7763 = vmatprep.mubr.f32.mxu0 %v7300
      %7764 = vmatmul.mubr.f32.gmra.mrb[0].mxu0 %v7290
      %v7765 = vpop.f32.mrb[0].mxu0
      %v7766 = vadd.f32 %v7541, %v7765
      %v7767 = vpop.f32.mrb[0].mxu0
      %7768 = vmatprep.mubr.f32.mxu0 %v7305
      %7769 = vmatmul.mubr.f32.gmra.mrb[0].mxu0 %v7295
      %v7770 = vpop.f32.mrb[0].mxu0
      %v7771 = vadd.f32 %v7546, %v7770
      %v7772 = vpop.f32.mrb[0].mxu0
      %7773 = vmatprep.mubr.f32.mxu0 %v7310
      %7774 = vmatmul.mubr.f32.gmra.mrb[0].mxu0 %v7300
      %v7775 = vpop.f32.mrb[0].mxu0
      %v7776 = vadd.f32 %v7551, %v7775
      %v7777 = vpop.f32.mrb[0].mxu0
      %7778 = vmatprep.mubr.f32.mxu0 %v7315
      %7779 = vmatmul.mubr.f32.gmra.mrb[0].mxu0 %v7305
      %v7780 = vpop.f32.mrb[0].mxu0
      %v7781 = vadd.f32 %v7556, %v7780
      %v7782 = vpop.f32.mrb[0].mxu0
      %7783 = vmatprep.mubr.f32.mxu0 %v7320
      %7784 = vmatmul.mubr.f32.gmra.mrb[0].mxu0 %v7310
      %v7785 = vpop.f32.mrb[0].mxu0
      %v7786 = vadd.f32 %v7561, %v7785
      %v7787 = vpop.f32.mrb[0].mxu0
      %7788 = vmatprep.mubr.f32.mxu0 %v7325
      %7789 = vmatmul.mubr.f32.gmra.mrb[0].mxu0 %v7315
      %v7790 = vpop.f32.mrb[0].mxu0
      %v7791 = vadd.f32 %v7566, %v7790
      %v7792 = vpop.f32.mrb[0].mxu0
      %7793 = vmatprep.mubr.f32.mxu0 %v7330
      %7794 = vmatmul.mubr.f32.gmra.mrb[0].mxu0 %v7320
      %v7795 = vpop.f32.mrb[0].mxu0
      %v7796 = vadd.f32 %v7571, %v7795
      %v7797 = vpop.f32.mrb[0].mxu0
      %7798 = vmatprep.mubr.f32.mxu0 %v7335
      %7799 = vmatmul.mubr.f32.gmra.mrb[0].mxu0 %v7325
      %v7800 = vpop.f32.mrb[0].mxu0
      %v7801 = vadd.f32 %v7576, %v7800
      %v7802 = vpop.f32.mrb[0].mxu0
      %7803 = vmatprep.mubr.f32.mxu0 %v7340
      %7804 = vmatmul.mubr.f32.gmra.mrb[0].mxu0 %v7330
      %v7805 = vpop.f32.mrb[0].mxu0
      %v7806 = vadd.f32 %v7581, %v7805
      %v7807 = vpop.f32.mrb[0].mxu0
      %7808 = vmatprep.mubr.f32.mxu0 %v7345
      %7809 = vmatmul.mubr.f32.gmra.mrb[0].mxu0 %v7335
      %v7810 = vpop.f32.mrb[0].mxu0
      %v7811 = vadd.f32 %v7586, %v7810
      %v7812 = vpop.f32.mrb[0].mxu0
      %7813 = vmatprep.mubr.f32.mxu0 %v7350
      %7814 = vmatmul.mubr.f32.gmra.mrb[0].mxu0 %v7340
      %v7815 = vpop.f32.mrb[0].mxu0
      %v7816 = vadd.f32 %v7591, %v7815
      %v7817 = vpop.f32.mrb[0].mxu0
      %7818 = vmatprep.mubr.f32.mxu0 %v7355
      %7819 = vmatmul.mubr.f32.gmra.mrb[0].mxu0 %v7345
      %v7820 = vpop.f32.mrb[0].mxu0
      %v7821 = vadd.f32 %v7596, %v7820
      %v7822 = vpop.f32.mrb[0].mxu0
      %7823 = vmatprep.mubr.f32.mxu0 %v7360
      %7824 = vmatmul.mubr.f32.gmra.mrb[0].mxu0 %v7350
      %v7825 = vpop.f32.mrb[0].mxu0
      %v7826 = vadd.f32 %v7601, %v7825
      %v7827 = vpop.f32.mrb[0].mxu0
      %7828 = vmatprep.mubr.f32.mxu0 %v7365
      %7829 = vmatmul.mubr.f32.gmra.mrb[0].mxu0 %v7355
      %v7830 = vpop.f32.mrb[0].mxu0
      %v7831 = vadd.f32 %v7606, %v7830
      %v7832 = vpop.f32.mrb[0].mxu0
      %7833 = vmatprep.mubr.f32.mxu0 %v7370
      %7834 = vmatmul.mubr.f32.gmra.mrb[0].mxu0 %v7360
      %v7835 = vpop.f32.mrb[0].mxu0
      %v7836 = vadd.f32 %v7611, %v7835
      %v7837 = vpop.f32.mrb[0].mxu0
      %7838 = vmatprep.mubr.f32.mxu0 %v7375
      %7839 = vmatmul.mubr.f32.gmra.mrb[0].mxu0 %v7365
      %v7840 = vpop.f32.mrb[0].mxu0
      %v7841 = vadd.f32 %v7616, %v7840
      %v7842 = vpop.f32.mrb[0].mxu0
      %7843 = vmatprep.mubr.f32.mxu0 %v7380
      %7844 = vmatmul.mubr.f32.gmra.mrb[0].mxu0 %v7370
      %v7845 = vpop.f32.mrb[0].mxu0
      %v7846 = vadd.f32 %v7621, %v7845
      %v7847 = vpop.f32.mrb[0].mxu0
      %7848 = vmatprep.mubr.f32.mxu0 %v7385
      %7849 = vmatmul.mubr.f32.gmra.mrb[0].mxu0 %v7375
      %v7850 = vpop.f32.mrb[0].mxu0
      %v7851 = vadd.f32 %v7626, %v7850
      %v7852 = vpop.f32.mrb[0].mxu0
      %7853 = vdwg.mxu0
      %7854 = vmatprep.subr.mxu0 0.0
      %7855 = vmatpush1.msra.mxu0 %v6523
      %7856 = vmatprep.subr.mxu0 0.0
      %7857 = vmatpush1.msra.mxu0 %v6524
      %7858 = vmatprep.subr.mxu0 0.0
      %7859 = vmatpush1.msra.mxu0 %v6525
      %7860 = vmatprep.subr.mxu0 0.0
      %7861 = vmatpush1.msra.mxu0 %v6526
      %7862 = vmatprep.subr.mxu0 0.0
      %7863 = vmatpush1.msra.mxu0 %v6527
      %7864 = vmatprep.subr.mxu0 0.0
      %7865 = vmatpush1.msra.mxu0 %v6528
      %7866 = vmatprep.subr.mxu0 0.0
      %7867 = vmatpush1.msra.mxu0 %v6529
      %7868 = vmatprep.subr.mxu0 0.0
      %7869 = vmatpush1.msra.mxu0 %v6530
      %7870 = vmatprep.subr.mxu0 0.0
      %7871 = vmatpush1.msra.mxu0 %v6531
      %7872 = vmatprep.subr.mxu0 0.0
      %7873 = vmatpush1.msra.mxu0 %v6532
      %7874 = vmatprep.subr.mxu0 0.0
      %7875 = vmatpush1.msra.mxu0 %v6533
      %7876 = vmatprep.subr.mxu0 0.0
      %7877 = vmatpush1.msra.mxu0 %v6534
      %7878 = vmatprep.subr.mxu0 0.0
      %7879 = vmatpush1.msra.mxu0 %v6535
      %7880 = vmatprep.subr.mxu0 0.0
      %7881 = vmatpush1.msra.mxu0 %v6536
      %7882 = vmatprep.subr.mxu0 0.0
      %7883 = vmatpush1.msra.mxu0 %v6537
      %7884 = vmatprep.subr.mxu0 0.0
      %7885 = vmatpush1.msra.mxu0 %v6538
      %7886 = vmatprep.subr.mxu0 0.0
      %7887 = vmatpush1.msra.mxu0 %v6539
      %7888 = vmatprep.subr.mxu0 0.0
      %7889 = vmatpush1.msra.mxu0 %v6540
      %7890 = vmatprep.subr.mxu0 0.0
      %7891 = vmatpush1.msra.mxu0 %v6541
      %7892 = vmatprep.subr.mxu0 0.0
      %7893 = vmatpush1.msra.mxu0 %v6542
      %7894 = vmatprep.subr.mxu0 0.0
      %7895 = vmatpush1.msra.mxu0 %v6543
      %7896 = vmatprep.subr.mxu0 0.0
      %7897 = vmatpush1.msra.mxu0 %v6544
      %7898 = vmatprep.subr.mxu0 0.0
      %7899 = vmatpush1.msra.mxu0 %v6545
      %7900 = vmatprep.subr.mxu0 0.0
      %7901 = vmatpush1.msra.mxu0 %v6546
      %7902 = vmatprep.subr.mxu0 0.0
      %7903 = vmatpush1.msra.mxu0 %v6547
      %7904 = vmatprep.subr.mxu0 0.0
      %7905 = vmatpush1.msra.mxu0 %v6548
      %7906 = vmatprep.subr.mxu0 0.0
      %7907 = vmatpush1.msra.mxu0 %v6549
      %7908 = vmatprep.subr.mxu0 0.0
      %7909 = vmatpush1.msra.mxu0 %v6550
      %7910 = vmatprep.subr.mxu0 0.0
      %7911 = vmatpush1.msra.mxu0 %v6551
      %7912 = vmatprep.subr.mxu0 0.0
      %7913 = vmatpush1.msra.mxu0 %v6552
      %7914 = vmatprep.subr.mxu0 0.0
      %7915 = vmatpush1.msra.mxu0 %v6553
      %7916 = vmatprep.subr.mxu0 0.0
      %7917 = vmatpush1.msra.mxu0 %v6554
      %7918 = vmatprep.mubr.f32.mxu0 %v7250
      %7919 = vmatmul.mubr.f32.gmra.mrb[0].mxu0 %v7240
      %v7920 = vpop.f32.mrb[0].mxu0
      %v7921 = vadd.f32 %v7696, %v7920
      %v7922 = vpop.f32.mrb[0].mxu0
      %7923 = vmatprep.mubr.f32.mxu0 %v7255
      %7924 = vmatmul.mubr.f32.gmra.mrb[0].mxu0 %v7245
      %v7925 = vpop.f32.mrb[0].mxu0
      %v7926 = vadd.f32 %v7701, %v7925
      %v7927 = vpop.f32.mrb[0].mxu0
      %7928 = vmatprep.mubr.f32.mxu0 %v7260
      %7929 = vmatmul.mubr.f32.gmra.mrb[0].mxu0 %v7250
      %v7930 = vpop.f32.mrb[0].mxu0
      %v7931 = vadd.f32 %v7706, %v7930
      %v7932 = vpop.f32.mrb[0].mxu0
      %7933 = vmatprep.mubr.f32.mxu0 %v7265
      %7934 = vmatmul.mubr.f32.gmra.mrb[0].mxu0 %v7255
      %v7935 = vpop.f32.mrb[0].mxu0
      %v7936 = vadd.f32 %v7711, %v7935
      %v7937 = vpop.f32.mrb[0].mxu0
      %7938 = vmatprep.mubr.f32.mxu0 %v7270
      %7939 = vmatmul.mubr.f32.gmra.mrb[0].mxu0 %v7260
      %v7940 = vpop.f32.mrb[0].mxu0
      %v7941 = vadd.f32 %v7716, %v7940
      %v7942 = vpop.f32.mrb[0].mxu0
      %7943 = vmatprep.mubr.f32.mxu0 %v7275
      %7944 = vmatmul.mubr.f32.gmra.mrb[0].mxu0 %v7265
      %v7945 = vpop.f32.mrb[0].mxu0
      %v7946 = vadd.f32 %v7721, %v7945
      %v7947 = vpop.f32.mrb[0].mxu0
      %7948 = vmatprep.mubr.f32.mxu0 %v7280
      %7949 = vmatmul.mubr.f32.gmra.mrb[0].mxu0 %v7270
      %v7950 = vpop.f32.mrb[0].mxu0
      %v7951 = vadd.f32 %v7726, %v7950
      %v7952 = vpop.f32.mrb[0].mxu0
      %7953 = vmatprep.mubr.f32.mxu0 %v7285
      %7954 = vmatmul.mubr.f32.gmra.mrb[0].mxu0 %v7275
      %v7955 = vpop.f32.mrb[0].mxu0
      %v7956 = vadd.f32 %v7731, %v7955
      %v7957 = vpop.f32.mrb[0].mxu0
      %7958 = vmatprep.mubr.f32.mxu0 %v7290
      %7959 = vmatmul.mubr.f32.gmra.mrb[0].mxu0 %v7280
      %v7960 = vpop.f32.mrb[0].mxu0
      %v7961 = vadd.f32 %v7736, %v7960
      %v7962 = vpop.f32.mrb[0].mxu0
      %7963 = vmatprep.mubr.f32.mxu0 %v7295
      %7964 = vmatmul.mubr.f32.gmra.mrb[0].mxu0 %v7285
      %v7965 = vpop.f32.mrb[0].mxu0
      %v7966 = vadd.f32 %v7741, %v7965
      %v7967 = vpop.f32.mrb[0].mxu0
      %7968 = vmatprep.mubr.f32.mxu0 %v7300
      %7969 = vmatmul.mubr.f32.gmra.mrb[0].mxu0 %v7290
      %v7970 = vpop.f32.mrb[0].mxu0
      %v7971 = vadd.f32 %v7746, %v7970
      %v7972 = vpop.f32.mrb[0].mxu0
      %7973 = vmatprep.mubr.f32.mxu0 %v7305
      %7974 = vmatmul.mubr.f32.gmra.mrb[0].mxu0 %v7295
      %v7975 = vpop.f32.mrb[0].mxu0
      %v7976 = vadd.f32 %v7751, %v7975
      %v7977 = vpop.f32.mrb[0].mxu0
      %7978 = vmatprep.mubr.f32.mxu0 %v7310
      %7979 = vmatmul.mubr.f32.gmra.mrb[0].mxu0 %v7300
      %v7980 = vpop.f32.mrb[0].mxu0
      %v7981 = vadd.f32 %v7756, %v7980
      %v7982 = vpop.f32.mrb[0].mxu0
      %7983 = vmatprep.mubr.f32.mxu0 %v7315
      %7984 = vmatmul.mubr.f32.gmra.mrb[0].mxu0 %v7305
      %v7985 = vpop.f32.mrb[0].mxu0
      %v7986 = vadd.f32 %v7761, %v7985
      %v7987 = vpop.f32.mrb[0].mxu0
      %7988 = vmatprep.mubr.f32.mxu0 %v7320
      %7989 = vmatmul.mubr.f32.gmra.mrb[0].mxu0 %v7310
      %v7990 = vpop.f32.mrb[0].mxu0
      %v7991 = vadd.f32 %v7766, %v7990
      %v7992 = vpop.f32.mrb[0].mxu0
      %7993 = vmatprep.mubr.f32.mxu0 %v7325
      %7994 = vmatmul.mubr.f32.gmra.mrb[0].mxu0 %v7315
      %v7995 = vpop.f32.mrb[0].mxu0
      %v7996 = vadd.f32 %v7771, %v7995
      %v7997 = vpop.f32.mrb[0].mxu0
      %7998 = vmatprep.mubr.f32.mxu0 %v7330
      %7999 = vmatmul.mubr.f32.gmra.mrb[0].mxu0 %v7320
      %v8000 = vpop.f32.mrb[0].mxu0
      %v8001 = vadd.f32 %v7776, %v8000
      %v8002 = vpop.f32.mrb[0].mxu0
      %8003 = vmatprep.mubr.f32.mxu0 %v7335
      %8004 = vmatmul.mubr.f32.gmra.mrb[0].mxu0 %v7325
      %v8005 = vpop.f32.mrb[0].mxu0
      %v8006 = vadd.f32 %v7781, %v8005
      %v8007 = vpop.f32.mrb[0].mxu0
      %8008 = vmatprep.mubr.f32.mxu0 %v7340
      %8009 = vmatmul.mubr.f32.gmra.mrb[0].mxu0 %v7330
      %v8010 = vpop.f32.mrb[0].mxu0
      %v8011 = vadd.f32 %v7786, %v8010
      %v8012 = vpop.f32.mrb[0].mxu0
      %8013 = vmatprep.mubr.f32.mxu0 %v7345
      %8014 = vmatmul.mubr.f32.gmra.mrb[0].mxu0 %v7335
      %v8015 = vpop.f32.mrb[0].mxu0
      %v8016 = vadd.f32 %v7791, %v8015
      %v8017 = vpop.f32.mrb[0].mxu0
      %8018 = vmatprep.mubr.f32.mxu0 %v7350
      %8019 = vmatmul.mubr.f32.gmra.mrb[0].mxu0 %v7340
      %v8020 = vpop.f32.mrb[0].mxu0
      %v8021 = vadd.f32 %v7796, %v8020
      %v8022 = vpop.f32.mrb[0].mxu0
      %8023 = vmatprep.mubr.f32.mxu0 %v7355
      %8024 = vmatmul.mubr.f32.gmra.mrb[0].mxu0 %v7345
      %v8025 = vpop.f32.mrb[0].mxu0
      %v8026 = vadd.f32 %v7801, %v8025
      %v8027 = vpop.f32.mrb[0].mxu0
      %8028 = vmatprep.mubr.f32.mxu0 %v7360
      %8029 = vmatmul.mubr.f32.gmra.mrb[0].mxu0 %v7350
      %v8030 = vpop.f32.mrb[0].mxu0
      %v8031 = vadd.f32 %v7806, %v8030
      %v8032 = vpop.f32.mrb[0].mxu0
      %8033 = vmatprep.mubr.f32.mxu0 %v7365
      %8034 = vmatmul.mubr.f32.gmra.mrb[0].mxu0 %v7355
      %v8035 = vpop.f32.mrb[0].mxu0
      %v8036 = vadd.f32 %v7811, %v8035
      %v8037 = vpop.f32.mrb[0].mxu0
      %8038 = vmatprep.mubr.f32.mxu0 %v7370
      %8039 = vmatmul.mubr.f32.gmra.mrb[0].mxu0 %v7360
      %v8040 = vpop.f32.mrb[0].mxu0
      %v8041 = vadd.f32 %v7816, %v8040
      %v8042 = vpop.f32.mrb[0].mxu0
      %8043 = vmatprep.mubr.f32.mxu0 %v7375
      %8044 = vmatmul.mubr.f32.gmra.mrb[0].mxu0 %v7365
      %v8045 = vpop.f32.mrb[0].mxu0
      %v8046 = vadd.f32 %v7821, %v8045
      %v8047 = vpop.f32.mrb[0].mxu0
      %8048 = vmatprep.mubr.f32.mxu0 %v7380
      %8049 = vmatmul.mubr.f32.gmra.mrb[0].mxu0 %v7370
      %v8050 = vpop.f32.mrb[0].mxu0
      %v8051 = vadd.f32 %v7826, %v8050
      %v8052 = vpop.f32.mrb[0].mxu0
      %8053 = vmatprep.mubr.f32.mxu0 %v7385
      %8054 = vmatmul.mubr.f32.gmra.mrb[0].mxu0 %v7375
      %v8055 = vpop.f32.mrb[0].mxu0
      %v8056 = vadd.f32 %v7831, %v8055
      %v8057 = vpop.f32.mrb[0].mxu0
      %8058 = vmatprep.mubr.f32.mxu0 %v7390
      %8059 = vmatmul.mubr.f32.gmra.mrb[0].mxu0 %v7380
      %v8060 = vpop.f32.mrb[0].mxu0
      %v8061 = vadd.f32 %v7836, %v8060
      %v8062 = vpop.f32.mrb[0].mxu0
      %8063 = vmatprep.mubr.f32.mxu0 %v7395
      %8064 = vmatmul.mubr.f32.gmra.mrb[0].mxu0 %v7385
      %v8065 = vpop.f32.mrb[0].mxu0
      %v8066 = vadd.f32 %v7841, %v8065
      %v8067 = vpop.f32.mrb[0].mxu0
      %8068 = vmatprep.mubr.f32.mxu0 0.0
      %8069 = vmatmul.mubr.f32.gmra.mrb[0].mxu0 %v7390
      %v8070 = vpop.f32.mrb[0].mxu0
      %v8071 = vadd.f32 %v7846, %v8070
      %v8072 = vpop.f32.mrb[0].mxu0
      %8073 = vmatprep.mubr.f32.mxu0 0.0
      %8074 = vmatmul.mubr.f32.gmra.mrb[0].mxu0 %v7395
      %v8075 = vpop.f32.mrb[0].mxu0
      %v8076 = vadd.f32 %v7851, %v8075
      %v8077 = vpop.f32.mrb[0].mxu0
      %8078 = vdwg.mxu0
      %8079 = vmatprep.subr.mxu0 0.0
      %8080 = vmatpush1.msra.mxu0 %v6555
      %8081 = vmatprep.subr.mxu0 0.0
      %8082 = vmatpush1.msra.mxu0 %v6556
      %8083 = vmatprep.subr.mxu0 0.0
      %8084 = vmatpush1.msra.mxu0 %v6557
      %8085 = vmatprep.subr.mxu0 0.0
      %8086 = vmatpush1.msra.mxu0 %v6558
      %8087 = vmatprep.subr.mxu0 0.0
      %8088 = vmatpush1.msra.mxu0 %v6559
      %8089 = vmatprep.subr.mxu0 0.0
      %8090 = vmatpush1.msra.mxu0 %v6560
      %8091 = vmatprep.subr.mxu0 0.0
      %8092 = vmatpush1.msra.mxu0 %v6561
      %8093 = vmatprep.subr.mxu0 0.0
      %8094 = vmatpush1.msra.mxu0 %v6562
      %8095 = vmatprep.subr.mxu0 0.0
      %8096 = vmatpush1.msra.mxu0 %v6563
      %8097 = vmatprep.subr.mxu0 0.0
      %8098 = vmatpush1.msra.mxu0 %v6564
      %8099 = vmatprep.subr.mxu0 0.0
      %8100 = vmatpush1.msra.mxu0 %v6565
      %8101 = vmatprep.subr.mxu0 0.0
      %8102 = vmatpush1.msra.mxu0 %v6566
      %8103 = vmatprep.subr.mxu0 0.0
      %8104 = vmatpush1.msra.mxu0 %v6567
      %8105 = vmatprep.subr.mxu0 0.0
      %8106 = vmatpush1.msra.mxu0 %v6568
      %8107 = vmatprep.subr.mxu0 0.0
      %8108 = vmatpush1.msra.mxu0 %v6569
      %8109 = vmatprep.subr.mxu0 0.0
      %8110 = vmatpush1.msra.mxu0 %v6570
      %8111 = vmatprep.subr.mxu0 0.0
      %8112 = vmatpush1.msra.mxu0 %v6571
      %8113 = vmatprep.subr.mxu0 0.0
      %8114 = vmatpush1.msra.mxu0 %v6572
      %8115 = vmatprep.subr.mxu0 0.0
      %8116 = vmatpush1.msra.mxu0 %v6573
      %8117 = vmatprep.subr.mxu0 0.0
      %8118 = vmatpush1.msra.mxu0 %v6574
      %8119 = vmatprep.subr.mxu0 0.0
      %8120 = vmatpush1.msra.mxu0 %v6575
      %8121 = vmatprep.subr.mxu0 0.0
      %8122 = vmatpush1.msra.mxu0 %v6576
      %8123 = vmatprep.subr.mxu0 0.0
      %8124 = vmatpush1.msra.mxu0 %v6577
      %8125 = vmatprep.subr.mxu0 0.0
      %8126 = vmatpush1.msra.mxu0 %v6578
      %8127 = vmatprep.subr.mxu0 0.0
      %8128 = vmatpush1.msra.mxu0 %v6579
      %8129 = vmatprep.subr.mxu0 0.0
      %8130 = vmatpush1.msra.mxu0 %v6580
      %8131 = vmatprep.subr.mxu0 0.0
      %8132 = vmatpush1.msra.mxu0 %v6581
      %8133 = vmatprep.subr.mxu0 0.0
      %8134 = vmatpush1.msra.mxu0 %v6582
      %8135 = vmatprep.subr.mxu0 0.0
      %8136 = vmatpush1.msra.mxu0 %v6583
      %8137 = vmatprep.subr.mxu0 0.0
      %8138 = vmatpush1.msra.mxu0 %v6584
      %8139 = vmatprep.subr.mxu0 0.0
      %8140 = vmatpush1.msra.mxu0 %v6585
      %8141 = vmatprep.subr.mxu0 0.0
      %8142 = vmatpush1.msra.mxu0 %v6586
      %8143 = vmatprep.mubr.f32.mxu0 %v7270
      %8144 = vmatmul.mubr.f32.gmra.mrb[0].mxu0 %v7260
      %v8145 = vpop.f32.mrb[0].mxu0
      %v8146 = vadd.f32 %v7921, %v8145
      %v8147 = vpop.f32.mrb[0].mxu0
      %8148 = vmatprep.mubr.f32.mxu0 %v7275
      %8149 = vmatmul.mubr.f32.gmra.mrb[0].mxu0 %v7265
      %v8150 = vpop.f32.mrb[0].mxu0
      %v8151 = vadd.f32 %v7926, %v8150
      %v8152 = vpop.f32.mrb[0].mxu0
      %8153 = vmatprep.mubr.f32.mxu0 %v7280
      %8154 = vmatmul.mubr.f32.gmra.mrb[0].mxu0 %v7270
      %v8155 = vpop.f32.mrb[0].mxu0
      %v8156 = vadd.f32 %v7931, %v8155
      %v8157 = vpop.f32.mrb[0].mxu0
      %8158 = vmatprep.mubr.f32.mxu0 %v7285
      %8159 = vmatmul.mubr.f32.gmra.mrb[0].mxu0 %v7275
      %v8160 = vpop.f32.mrb[0].mxu0
      %v8161 = vadd.f32 %v7936, %v8160
      %v8162 = vpop.f32.mrb[0].mxu0
      %8163 = vmatprep.mubr.f32.mxu0 %v7290
      %8164 = vmatmul.mubr.f32.gmra.mrb[0].mxu0 %v7280
      %v8165 = vpop.f32.mrb[0].mxu0
      %v8166 = vadd.f32 %v7941, %v8165
      %v8167 = vpop.f32.mrb[0].mxu0
      %8168 = vmatprep.mubr.f32.mxu0 %v7295
      %8169 = vmatmul.mubr.f32.gmra.mrb[0].mxu0 %v7285
      %v8170 = vpop.f32.mrb[0].mxu0
      %v8171 = vadd.f32 %v7946, %v8170
      %v8172 = vpop.f32.mrb[0].mxu0
      %8173 = vmatprep.mubr.f32.mxu0 %v7300
      %8174 = vmatmul.mubr.f32.gmra.mrb[0].mxu0 %v7290
      %v8175 = vpop.f32.mrb[0].mxu0
      %v8176 = vadd.f32 %v7951, %v8175
      %v8177 = vpop.f32.mrb[0].mxu0
      %8178 = vmatprep.mubr.f32.mxu0 %v7305
      %8179 = vmatmul.mubr.f32.gmra.mrb[0].mxu0 %v7295
      %v8180 = vpop.f32.mrb[0].mxu0
      %v8181 = vadd.f32 %v7956, %v8180
      %v8182 = vpop.f32.mrb[0].mxu0
      %8183 = vmatprep.mubr.f32.mxu0 %v7310
      %8184 = vmatmul.mubr.f32.gmra.mrb[0].mxu0 %v7300
      %v8185 = vpop.f32.mrb[0].mxu0
      %v8186 = vadd.f32 %v7961, %v8185
      %v8187 = vpop.f32.mrb[0].mxu0
      %8188 = vmatprep.mubr.f32.mxu0 %v7315
      %8189 = vmatmul.mubr.f32.gmra.mrb[0].mxu0 %v7305
      %v8190 = vpop.f32.mrb[0].mxu0
      %v8191 = vadd.f32 %v7966, %v8190
      %v8192 = vpop.f32.mrb[0].mxu0
      %8193 = vmatprep.mubr.f32.mxu0 %v7320
      %8194 = vmatmul.mubr.f32.gmra.mrb[0].mxu0 %v7310
      %v8195 = vpop.f32.mrb[0].mxu0
      %v8196 = vadd.f32 %v7971, %v8195
      %v8197 = vpop.f32.mrb[0].mxu0
      %8198 = vmatprep.mubr.f32.mxu0 %v7325
      %8199 = vmatmul.mubr.f32.gmra.mrb[0].mxu0 %v7315
      %v8200 = vpop.f32.mrb[0].mxu0
      %v8201 = vadd.f32 %v7976, %v8200
      %v8202 = vpop.f32.mrb[0].mxu0
      %8203 = vmatprep.mubr.f32.mxu0 %v7330
      %8204 = vmatmul.mubr.f32.gmra.mrb[0].mxu0 %v7320
      %v8205 = vpop.f32.mrb[0].mxu0
      %v8206 = vadd.f32 %v7981, %v8205
      %v8207 = vpop.f32.mrb[0].mxu0
      %8208 = vmatprep.mubr.f32.mxu0 %v7335
      %8209 = vmatmul.mubr.f32.gmra.mrb[0].mxu0 %v7325
      %v8210 = vpop.f32.mrb[0].mxu0
      %v8211 = vadd.f32 %v7986, %v8210
      %v8212 = vpop.f32.mrb[0].mxu0
      %8213 = vmatprep.mubr.f32.mxu0 %v7340
      %8214 = vmatmul.mubr.f32.gmra.mrb[0].mxu0 %v7330
      %v8215 = vpop.f32.mrb[0].mxu0
      %v8216 = vadd.f32 %v7991, %v8215
      %v8217 = vpop.f32.mrb[0].mxu0
      %8218 = vmatprep.mubr.f32.mxu0 %v7345
      %8219 = vmatmul.mubr.f32.gmra.mrb[0].mxu0 %v7335
      %v8220 = vpop.f32.mrb[0].mxu0
      %v8221 = vadd.f32 %v7996, %v8220
      %v8222 = vpop.f32.mrb[0].mxu0
      %8223 = vmatprep.mubr.f32.mxu0 %v7350
      %8224 = vmatmul.mubr.f32.gmra.mrb[0].mxu0 %v7340
      %v8225 = vpop.f32.mrb[0].mxu0
      %v8226 = vadd.f32 %v8001, %v8225
      %v8227 = vpop.f32.mrb[0].mxu0
      %8228 = vmatprep.mubr.f32.mxu0 %v7355
      %8229 = vmatmul.mubr.f32.gmra.mrb[0].mxu0 %v7345
      %v8230 = vpop.f32.mrb[0].mxu0
      %v8231 = vadd.f32 %v8006, %v8230
      %v8232 = vpop.f32.mrb[0].mxu0
      %8233 = vmatprep.mubr.f32.mxu0 %v7360
      %8234 = vmatmul.mubr.f32.gmra.mrb[0].mxu0 %v7350
      %v8235 = vpop.f32.mrb[0].mxu0
      %v8236 = vadd.f32 %v8011, %v8235
      %v8237 = vpop.f32.mrb[0].mxu0
      %8238 = vmatprep.mubr.f32.mxu0 %v7365
      %8239 = vmatmul.mubr.f32.gmra.mrb[0].mxu0 %v7355
      %v8240 = vpop.f32.mrb[0].mxu0
      %v8241 = vadd.f32 %v8016, %v8240
      %v8242 = vpop.f32.mrb[0].mxu0
      %8243 = vmatprep.mubr.f32.mxu0 %v7370
      %8244 = vmatmul.mubr.f32.gmra.mrb[0].mxu0 %v7360
      %v8245 = vpop.f32.mrb[0].mxu0
      %v8246 = vadd.f32 %v8021, %v8245
      %v8247 = vpop.f32.mrb[0].mxu0
      %8248 = vmatprep.mubr.f32.mxu0 %v7375
      %8249 = vmatmul.mubr.f32.gmra.mrb[0].mxu0 %v7365
      %v8250 = vpop.f32.mrb[0].mxu0
      %v8251 = vadd.f32 %v8026, %v8250
      %v8252 = vpop.f32.mrb[0].mxu0
      %8253 = vmatprep.mubr.f32.mxu0 %v7380
      %8254 = vmatmul.mubr.f32.gmra.mrb[0].mxu0 %v7370
      %v8255 = vpop.f32.mrb[0].mxu0
      %v8256 = vadd.f32 %v8031, %v8255
      %v8257 = vpop.f32.mrb[0].mxu0
      %8258 = vmatprep.mubr.f32.mxu0 %v7385
      %8259 = vmatmul.mubr.f32.gmra.mrb[0].mxu0 %v7375
      %v8260 = vpop.f32.mrb[0].mxu0
      %v8261 = vadd.f32 %v8036, %v8260
      %v8262 = vpop.f32.mrb[0].mxu0
      %8263 = vmatprep.mubr.f32.mxu0 %v7390
      %8264 = vmatmul.mubr.f32.gmra.mrb[0].mxu0 %v7380
      %v8265 = vpop.f32.mrb[0].mxu0
      %v8266 = vadd.f32 %v8041, %v8265
      %v8267 = vpop.f32.mrb[0].mxu0
      %8268 = vmatprep.mubr.f32.mxu0 %v7395
      %8269 = vmatmul.mubr.f32.gmra.mrb[0].mxu0 %v7385
      %v8270 = vpop.f32.mrb[0].mxu0
      %v8271 = vadd.f32 %v8046, %v8270
      %v8272 = vpop.f32.mrb[0].mxu0
      %8273 = vmatprep.mubr.f32.mxu0 0.0
      %8274 = vmatmul.mubr.f32.gmra.mrb[0].mxu0 %v7390
      %v8275 = vpop.f32.mrb[0].mxu0
      %v8276 = vadd.f32 %v8051, %v8275
      %v8277 = vpop.f32.mrb[0].mxu0
      %8278 = vmatprep.mubr.f32.mxu0 0.0
      %8279 = vmatmul.mubr.f32.gmra.mrb[0].mxu0 %v7395
      %v8280 = vpop.f32.mrb[0].mxu0
      %v8281 = vadd.f32 %v8056, %v8280
      %v8282 = vpop.f32.mrb[0].mxu0
      %8283 = vmatprep.mubr.f32.mxu0 0.0
      %8284 = vmatmul.mubr.f32.gmra.mrb[0].mxu0 0.0
      %v8285 = vpop.f32.mrb[0].mxu0
      %v8286 = vadd.f32 %v8061, %v8285
      %v8287 = vpop.f32.mrb[0].mxu0
      %8288 = vmatprep.mubr.f32.mxu0 0.0
      %8289 = vmatmul.mubr.f32.gmra.mrb[0].mxu0 0.0
      %v8290 = vpop.f32.mrb[0].mxu0
      %v8291 = vadd.f32 %v8066, %v8290
      %v8292 = vpop.f32.mrb[0].mxu0
      %8293 = vmatprep.mubr.f32.mxu0 0.0
      %8294 = vmatmul.mubr.f32.gmra.mrb[0].mxu0 0.0
      %v8295 = vpop.f32.mrb[0].mxu0
      %v8296 = vadd.f32 %v8071, %v8295
      %v8297 = vpop.f32.mrb[0].mxu0
      %8298 = vmatprep.mubr.f32.mxu0 0.0
      %8299 = vmatmul.mubr.f32.gmra.mrb[0].mxu0 0.0
      %v8300 = vpop.f32.mrb[0].mxu0
      %v8301 = vadd.f32 %v8076, %v8300
      %v8302 = vpop.f32.mrb[0].mxu0
      %8303 = vdwg.mxu0
      %8304 = vmatprep.subr.mxu0 0.0
      %8305 = vmatpush1.msra.mxu0 %v6587
      %8306 = vmatprep.subr.mxu0 0.0
      %8307 = vmatpush1.msra.mxu0 %v6588
      %8308 = vmatprep.subr.mxu0 0.0
      %8309 = vmatpush1.msra.mxu0 %v6589
      %8310 = vmatprep.subr.mxu0 0.0
      %8311 = vmatpush1.msra.mxu0 %v6590
      %8312 = vmatprep.subr.mxu0 0.0
      %8313 = vmatpush1.msra.mxu0 %v6591
      %8314 = vmatprep.subr.mxu0 0.0
      %8315 = vmatpush1.msra.mxu0 %v6592
      %8316 = vmatprep.subr.mxu0 0.0
      %8317 = vmatpush1.msra.mxu0 %v6593
      %8318 = vmatprep.subr.mxu0 0.0
      %8319 = vmatpush1.msra.mxu0 %v6594
      %8320 = vmatprep.subr.mxu0 0.0
      %8321 = vmatpush1.msra.mxu0 %v6595
      %8322 = vmatprep.subr.mxu0 0.0
      %8323 = vmatpush1.msra.mxu0 %v6596
      %8324 = vmatprep.subr.mxu0 0.0
      %8325 = vmatpush1.msra.mxu0 %v6597
      %8326 = vmatprep.subr.mxu0 0.0
      %8327 = vmatpush1.msra.mxu0 %v6598
      %8328 = vmatprep.subr.mxu0 0.0
      %8329 = vmatpush1.msra.mxu0 %v6599
      %8330 = vmatprep.subr.mxu0 0.0
      %8331 = vmatpush1.msra.mxu0 %v6600
      %8332 = vmatprep.subr.mxu0 0.0
      %8333 = vmatpush1.msra.mxu0 %v6601
      %8334 = vmatprep.subr.mxu0 0.0
      %8335 = vmatpush1.msra.mxu0 %v6602
      %8336 = vmatprep.subr.mxu0 0.0
      %8337 = vmatpush1.msra.mxu0 0.0
      %8338 = vmatprep.subr.mxu0 0.0
      %8339 = vmatpush1.msra.mxu0 0.0
      %8340 = vmatprep.subr.mxu0 0.0
      %8341 = vmatpush1.msra.mxu0 0.0
      %8342 = vmatprep.subr.mxu0 0.0
      %8343 = vmatpush1.msra.mxu0 0.0
      %8344 = vmatprep.subr.mxu0 0.0
      %8345 = vmatpush1.msra.mxu0 0.0
      %8346 = vmatprep.subr.mxu0 0.0
      %8347 = vmatpush1.msra.mxu0 0.0
      %8348 = vmatprep.subr.mxu0 0.0
      %8349 = vmatpush1.msra.mxu0 0.0
      %8350 = vmatprep.subr.mxu0 0.0
      %8351 = vmatpush1.msra.mxu0 0.0
      %8352 = vmatprep.subr.mxu0 0.0
      %8353 = vmatpush1.msra.mxu0 0.0
      %8354 = vmatprep.subr.mxu0 0.0
      %8355 = vmatpush1.msra.mxu0 0.0
      %8356 = vmatprep.subr.mxu0 0.0
      %8357 = vmatpush1.msra.mxu0 0.0
      %8358 = vmatprep.subr.mxu0 0.0
      %8359 = vmatpush1.msra.mxu0 0.0
      %8360 = vmatprep.subr.mxu0 0.0
      %8361 = vmatpush1.msra.mxu0 0.0
      %8362 = vmatprep.subr.mxu0 0.0
      %8363 = vmatpush1.msra.mxu0 0.0
      %8364 = vmatprep.subr.mxu0 0.0
      %8365 = vmatpush1.msra.mxu0 0.0
      %8366 = vmatprep.subr.mxu0 0.0
      %8367 = vmatpush1.msra.mxu0 0.0
      %8368 = vmatprep.mubr.f32.mxu0 0.0
      %8369 = vmatmul.mubr.f32.gmra.mrb[0].mxu0 %v7280
      %v8370 = vpop.f32.mrb[0].mxu0
      %v8371 = vadd.f32 %v8146, %v8370
      %v8372 = vpop.f32.mrb[0].mxu0
      %8373 = vmatprep.mubr.f32.mxu0 0.0
      %8374 = vmatmul.mubr.f32.gmra.mrb[0].mxu0 %v7285
      %v8375 = vpop.f32.mrb[0].mxu0
      %v8376 = vadd.f32 %v8151, %v8375
      %v8377 = vpop.f32.mrb[0].mxu0
      %8378 = vmatprep.mubr.f32.mxu0 0.0
      %8379 = vmatmul.mubr.f32.gmra.mrb[0].mxu0 %v7290
      %v8380 = vpop.f32.mrb[0].mxu0
      %v8381 = vadd.f32 %v8156, %v8380
      %v8382 = vpop.f32.mrb[0].mxu0
      %8383 = vmatprep.mubr.f32.mxu0 0.0
      %8384 = vmatmul.mubr.f32.gmra.mrb[0].mxu0 %v7295
      %v8385 = vpop.f32.mrb[0].mxu0
      %v8386 = vadd.f32 %v8161, %v8385
      %v8387 = vpop.f32.mrb[0].mxu0
      %8388 = vmatprep.mubr.f32.mxu0 0.0
      %8389 = vmatmul.mubr.f32.gmra.mrb[0].mxu0 %v7300
      %v8390 = vpop.f32.mrb[0].mxu0
      %v8391 = vadd.f32 %v8166, %v8390
      %v8392 = vpop.f32.mrb[0].mxu0
      %8393 = vmatprep.mubr.f32.mxu0 0.0
      %8394 = vmatmul.mubr.f32.gmra.mrb[0].mxu0 %v7305
      %v8395 = vpop.f32.mrb[0].mxu0
      %v8396 = vadd.f32 %v8171, %v8395
      %v8397 = vpop.f32.mrb[0].mxu0
      %8398 = vmatprep.mubr.f32.mxu0 0.0
      %8399 = vmatmul.mubr.f32.gmra.mrb[0].mxu0 %v7310
      %v8400 = vpop.f32.mrb[0].mxu0
      %v8401 = vadd.f32 %v8176, %v8400
      %v8402 = vpop.f32.mrb[0].mxu0
      %8403 = vmatprep.mubr.f32.mxu0 0.0
      %8404 = vmatmul.mubr.f32.gmra.mrb[0].mxu0 %v7315
      %v8405 = vpop.f32.mrb[0].mxu0
      %v8406 = vadd.f32 %v8181, %v8405
      %v8407 = vpop.f32.mrb[0].mxu0
      %8408 = vmatprep.mubr.f32.mxu0 0.0
      %8409 = vmatmul.mubr.f32.gmra.mrb[0].mxu0 %v7320
      %v8410 = vpop.f32.mrb[0].mxu0
      %v8411 = vadd.f32 %v8186, %v8410
      %v8412 = vpop.f32.mrb[0].mxu0
      %8413 = vmatprep.mubr.f32.mxu0 0.0
      %8414 = vmatmul.mubr.f32.gmra.mrb[0].mxu0 %v7325
      %v8415 = vpop.f32.mrb[0].mxu0
      %v8416 = vadd.f32 %v8191, %v8415
      %v8417 = vpop.f32.mrb[0].mxu0
      %8418 = vmatprep.mubr.f32.mxu0 0.0
      %8419 = vmatmul.mubr.f32.gmra.mrb[0].mxu0 %v7330
      %v8420 = vpop.f32.mrb[0].mxu0
      %v8421 = vadd.f32 %v8196, %v8420
      %v8422 = vpop.f32.mrb[0].mxu0
      %8423 = vmatprep.mubr.f32.mxu0 0.0
      %8424 = vmatmul.mubr.f32.gmra.mrb[0].mxu0 %v7335
      %v8425 = vpop.f32.mrb[0].mxu0
      %v8426 = vadd.f32 %v8201, %v8425
      %v8427 = vpop.f32.mrb[0].mxu0
      %8428 = vmatprep.mubr.f32.mxu0 0.0
      %8429 = vmatmul.mubr.f32.gmra.mrb[0].mxu0 %v7340
      %v8430 = vpop.f32.mrb[0].mxu0
      %v8431 = vadd.f32 %v8206, %v8430
      %v8432 = vpop.f32.mrb[0].mxu0
      %8433 = vmatprep.mubr.f32.mxu0 0.0
      %8434 = vmatmul.mubr.f32.gmra.mrb[0].mxu0 %v7345
      %v8435 = vpop.f32.mrb[0].mxu0
      %v8436 = vadd.f32 %v8211, %v8435
      %v8437 = vpop.f32.mrb[0].mxu0
      %8438 = vmatprep.mubr.f32.mxu0 0.0
      %8439 = vmatmul.mubr.f32.gmra.mrb[0].mxu0 %v7350
      %v8440 = vpop.f32.mrb[0].mxu0
      %v8441 = vadd.f32 %v8216, %v8440
      %v8442 = vpop.f32.mrb[0].mxu0
      %8443 = vmatprep.mubr.f32.mxu0 0.0
      %8444 = vmatmul.mubr.f32.gmra.mrb[0].mxu0 %v7355
      %v8445 = vpop.f32.mrb[0].mxu0
      %v8446 = vadd.f32 %v8221, %v8445
      %v8447 = vpop.f32.mrb[0].mxu0
      %8448 = vmatprep.mubr.f32.mxu0 0.0
      %8449 = vmatmul.mubr.f32.gmra.mrb[0].mxu0 %v7360
      %v8450 = vpop.f32.mrb[0].mxu0
      %v8451 = vadd.f32 %v8226, %v8450
      %v8452 = vpop.f32.mrb[0].mxu0
      %8453 = vmatprep.mubr.f32.mxu0 0.0
      %8454 = vmatmul.mubr.f32.gmra.mrb[0].mxu0 %v7365
      %v8455 = vpop.f32.mrb[0].mxu0
      %v8456 = vadd.f32 %v8231, %v8455
      %v8457 = vpop.f32.mrb[0].mxu0
      %8458 = vmatprep.mubr.f32.mxu0 0.0
      %8459 = vmatmul.mubr.f32.gmra.mrb[0].mxu0 %v7370
      %v8460 = vpop.f32.mrb[0].mxu0
      %v8461 = vadd.f32 %v8236, %v8460
      %v8462 = vpop.f32.mrb[0].mxu0
      %8463 = vmatprep.mubr.f32.mxu0 0.0
      %8464 = vmatmul.mubr.f32.gmra.mrb[0].mxu0 %v7375
      %v8465 = vpop.f32.mrb[0].mxu0
      %v8466 = vadd.f32 %v8241, %v8465
      %v8467 = vpop.f32.mrb[0].mxu0
      %8468 = vmatprep.mubr.f32.mxu0 0.0
      %8469 = vmatmul.mubr.f32.gmra.mrb[0].mxu0 %v7380
      %v8470 = vpop.f32.mrb[0].mxu0
      %v8471 = vadd.f32 %v8246, %v8470
      %v8472 = vpop.f32.mrb[0].mxu0
      %8473 = vmatprep.mubr.f32.mxu0 0.0
      %8474 = vmatmul.mubr.f32.gmra.mrb[0].mxu0 %v7385
      %v8475 = vpop.f32.mrb[0].mxu0
      %v8476 = vadd.f32 %v8251, %v8475
      %v8477 = vpop.f32.mrb[0].mxu0
      %8478 = vmatprep.mubr.f32.mxu0 0.0
      %8479 = vmatmul.mubr.f32.gmra.mrb[0].mxu0 %v7390
      %v8480 = vpop.f32.mrb[0].mxu0
      %v8481 = vadd.f32 %v8256, %v8480
      %v8482 = vpop.f32.mrb[0].mxu0
      %8483 = vmatprep.mubr.f32.mxu0 0.0
      %8484 = vmatmul.mubr.f32.gmra.mrb[0].mxu0 %v7395
      %v8485 = vpop.f32.mrb[0].mxu0
      %v8486 = vadd.f32 %v8261, %v8485
      %v8487 = vpop.f32.mrb[0].mxu0
      %8488 = vmatprep.mubr.f32.mxu0 0.0
      %8489 = vmatmul.mubr.f32.gmra.mrb[0].mxu0 0.0
      %v8490 = vpop.f32.mrb[0].mxu0
      %v8491 = vadd.f32 %v8266, %v8490
      %v8492 = vpop.f32.mrb[0].mxu0
      %8493 = vmatprep.mubr.f32.mxu0 0.0
      %8494 = vmatmul.mubr.f32.gmra.mrb[0].mxu0 0.0
      %v8495 = vpop.f32.mrb[0].mxu0
      %v8496 = vadd.f32 %v8271, %v8495
      %v8497 = vpop.f32.mrb[0].mxu0
      %8498 = vmatprep.mubr.f32.mxu0 0.0
      %8499 = vmatmul.mubr.f32.gmra.mrb[0].mxu0 0.0
      %v8500 = vpop.f32.mrb[0].mxu0
      %v8501 = vadd.f32 %v8276, %v8500
      %v8502 = vpop.f32.mrb[0].mxu0
      %8503 = vmatprep.mubr.f32.mxu0 0.0
      %8504 = vmatmul.mubr.f32.gmra.mrb[0].mxu0 0.0
      %v8505 = vpop.f32.mrb[0].mxu0
      %v8506 = vadd.f32 %v8281, %v8505
      %v8507 = vpop.f32.mrb[0].mxu0
      %8508 = vmatprep.mubr.f32.mxu0 0.0
      %8509 = vmatmul.mubr.f32.gmra.mrb[0].mxu0 0.0
      %v8510 = vpop.f32.mrb[0].mxu0
      %v8511 = vadd.f32 %v8286, %v8510
      %v8512 = vpop.f32.mrb[0].mxu0
      %8513 = vmatprep.mubr.f32.mxu0 0.0
      %8514 = vmatmul.mubr.f32.gmra.mrb[0].mxu0 0.0
      %v8515 = vpop.f32.mrb[0].mxu0
      %v8516 = vadd.f32 %v8291, %v8515
      %v8517 = vpop.f32.mrb[0].mxu0
      %8518 = vmatprep.mubr.f32.mxu0 0.0
      %8519 = vmatmul.mubr.f32.gmra.mrb[0].mxu0 0.0
      %v8520 = vpop.f32.mrb[0].mxu0
      %v8521 = vadd.f32 %v8296, %v8520
      %v8522 = vpop.f32.mrb[0].mxu0
      %8523 = vmatprep.mubr.f32.mxu0 0.0
      %8524 = vmatmul.mubr.f32.gmra.mrb[0].mxu0 0.0
      %v8525 = vpop.f32.mrb[0].mxu0
      %v8526 = vadd.f32 %v8301, %v8525
      %v8527 = vpop.f32.mrb[0].mxu0
      %8528 = vdwg.mxu0
      %v8530 = vlaneseq
      %v8531 = vshrl.u32 %v8530, 7
      %v8532 = vsub.s32 0, %v8531
      %v8533 = vrot.slane %v6604, %v8532
      %v8535 = vmul.f32 %v8371, %v8533
      %v8536 = vmul.f32 %v8376, %v8533
      %v8537 = vmul.f32 %v8381, %v8533
      %v8538 = vmul.f32 %v8386, %v8533
      %v8539 = vmul.f32 %v8391, %v8533
      %v8540 = vmul.f32 %v8396, %v8533
      %v8541 = vmul.f32 %v8401, %v8533
      %v8542 = vmul.f32 %v8406, %v8533
      %v8543 = vmul.f32 %v8411, %v8533
      %v8544 = vmul.f32 %v8416, %v8533
      %v8545 = vmul.f32 %v8421, %v8533
      %v8546 = vmul.f32 %v8426, %v8533
      %v8547 = vmul.f32 %v8431, %v8533
      %v8548 = vmul.f32 %v8436, %v8533
      %v8549 = vmul.f32 %v8441, %v8533
      %v8550 = vmul.f32 %v8446, %v8533
      %v8551 = vmul.f32 %v8451, %v8533
      %v8552 = vmul.f32 %v8456, %v8533
      %v8553 = vmul.f32 %v8461, %v8533
      %v8554 = vmul.f32 %v8466, %v8533
      %v8555 = vmul.f32 %v8471, %v8533
      %v8556 = vmul.f32 %v8476, %v8533
      %v8557 = vmul.f32 %v8481, %v8533
      %v8558 = vmul.f32 %v8486, %v8533
      %v8559 = vmul.f32 %v8491, %v8533
      %v8560 = vmul.f32 %v8496, %v8533
      %v8561 = vmul.f32 %v8501, %v8533
      %v8562 = vmul.f32 %v8506, %v8533
      %v8563 = vmul.f32 %v8511, %v8533
      %v8564 = vmul.f32 %v8516, %v8533
      %v8565 = vmul.f32 %v8521, %v8533
      %v8566 = vmul.f32 %v8526, %v8533
      %v8568 = vlaneseq
      %v8569 = vshrl.u32 %v8568, 7
      %v8570 = vsub.s32 0, %v8569
      %v8571 = vrot.slane %v6605, %v8570
      %v8573 = vadd.f32 %v8535, %v8571
      %v8574 = vadd.f32 %v8536, %v8571
      %v8575 = vadd.f32 %v8537, %v8571
      %v8576 = vadd.f32 %v8538, %v8571
      %v8577 = vadd.f32 %v8539, %v8571
      %v8578 = vadd.f32 %v8540, %v8571
      %v8579 = vadd.f32 %v8541, %v8571
      %v8580 = vadd.f32 %v8542, %v8571
      %v8581 = vadd.f32 %v8543, %v8571
      %v8582 = vadd.f32 %v8544, %v8571
      %v8583 = vadd.f32 %v8545, %v8571
      %v8584 = vadd.f32 %v8546, %v8571
      %v8585 = vadd.f32 %v8547, %v8571
      %v8586 = vadd.f32 %v8548, %v8571
      %v8587 = vadd.f32 %v8549, %v8571
      %v8588 = vadd.f32 %v8550, %v8571
      %v8589 = vadd.f32 %v8551, %v8571
      %v8590 = vadd.f32 %v8552, %v8571
      %v8591 = vadd.f32 %v8553, %v8571
      %v8592 = vadd.f32 %v8554, %v8571
      %v8593 = vadd.f32 %v8555, %v8571
      %v8594 = vadd.f32 %v8556, %v8571
      %v8595 = vadd.f32 %v8557, %v8571
      %v8596 = vadd.f32 %v8558, %v8571
      %v8597 = vadd.f32 %v8559, %v8571
      %v8598 = vadd.f32 %v8560, %v8571
      %v8599 = vadd.f32 %v8561, %v8571
      %v8600 = vadd.f32 %v8562, %v8571
      %v8601 = vadd.f32 %v8563, %v8571
      %v8602 = vadd.f32 %v8564, %v8571
      %v8603 = vadd.f32 %v8565, %v8571
      %v8604 = vadd.f32 %v8566, %v8571
      %v8605 = vadd.f32 %v8573, %v6784
      %v8606 = vadd.f32 %v8574, %v6789
      %v8607 = vadd.f32 %v8575, %v6794
      %v8608 = vadd.f32 %v8576, %v6799
      %v8609 = vadd.f32 %v8577, %v6804
      %v8610 = vadd.f32 %v8578, %v6809
      %v8611 = vadd.f32 %v8579, %v6814
      %v8612 = vadd.f32 %v8580, %v6819
      %v8613 = vadd.f32 %v8581, %v6824
      %v8614 = vadd.f32 %v8582, %v6829
      %v8615 = vadd.f32 %v8583, %v6834
      %v8616 = vadd.f32 %v8584, %v6839
      %v8617 = vadd.f32 %v8585, %v6844
      %v8618 = vadd.f32 %v8586, %v6849
      %v8619 = vadd.f32 %v8587, %v6854
      %v8620 = vadd.f32 %v8588, %v6859
      %v8621 = vadd.f32 %v8589, %v6864
      %v8622 = vadd.f32 %v8590, %v6869
      %v8623 = vadd.f32 %v8591, %v6874
      %v8624 = vadd.f32 %v8592, %v6879
      %v8625 = vadd.f32 %v8593, %v6884
      %v8626 = vadd.f32 %v8594, %v6889
      %v8627 = vadd.f32 %v8595, %v6894
      %v8628 = vadd.f32 %v8596, %v6899
      %v8629 = vadd.f32 %v8597, %v6904
      %v8630 = vadd.f32 %v8598, %v6909
      %v8631 = vadd.f32 %v8599, %v6914
      %v8632 = vadd.f32 %v8600, %v6919
      %v8633 = vadd.f32 %v8601, %v6924
      %v8634 = vadd.f32 %v8602, %v6929
      %v8635 = vadd.f32 %v8603, %v6934
      %v8636 = vadd.f32 %v8604, %v6939
      %v8637 = vmax.f32 %v8605, 0.0
      %v8638 = vmax.f32 %v8606, 0.0
      %v8639 = vmax.f32 %v8607, 0.0
      %v8640 = vmax.f32 %v8608, 0.0
      %v8641 = vmax.f32 %v8609, 0.0
      %v8642 = vmax.f32 %v8610, 0.0
      %v8643 = vmax.f32 %v8611, 0.0
      %v8644 = vmax.f32 %v8612, 0.0
      %v8645 = vmax.f32 %v8613, 0.0
      %v8646 = vmax.f32 %v8614, 0.0
      %v8647 = vmax.f32 %v8615, 0.0
      %v8648 = vmax.f32 %v8616, 0.0
      %v8649 = vmax.f32 %v8617, 0.0
      %v8650 = vmax.f32 %v8618, 0.0
      %v8651 = vmax.f32 %v8619, 0.0
      %v8652 = vmax.f32 %v8620, 0.0
      %v8653 = vmax.f32 %v8621, 0.0
      %v8654 = vmax.f32 %v8622, 0.0
      %v8655 = vmax.f32 %v8623, 0.0
      %v8656 = vmax.f32 %v8624, 0.0
      %v8657 = vmax.f32 %v8625, 0.0
      %v8658 = vmax.f32 %v8626, 0.0
      %v8659 = vmax.f32 %v8627, 0.0
      %v8660 = vmax.f32 %v8628, 0.0
      %v8661 = vmax.f32 %v8629, 0.0
      %v8662 = vmax.f32 %v8630, 0.0
      %v8663 = vmax.f32 %v8631, 0.0
      %v8664 = vmax.f32 %v8632, 0.0
      %v8665 = vmax.f32 %v8633, 0.0
      %v8666 = vmax.f32 %v8634, 0.0
      %v8667 = vmax.f32 %v8635, 0.0
      %v8668 = vmax.f32 %v8636, 0.0
      %v8669 = vld [vmem:[%s65] sm:$0xff]
      %v8670 = vld [vmem:[%s65 + $0x8] sm:$0xff]
      %v8671 = vld [vmem:[%s65 + $0x10] sm:$0xff]
      %v8672 = vld [vmem:[%s65 + $0x18] sm:$0xff]
      %v8673 = vld [vmem:[%s65 + $0x20] sm:$0xff]
      %v8674 = vld [vmem:[%s65 + $0x28] sm:$0xff]
      %v8675 = vld [vmem:[%s65 + $0x30] sm:$0xff]
      %v8676 = vld [vmem:[%s65 + $0x38] sm:$0xff]
      %v8677 = vld [vmem:[%s65 + $0x40] sm:$0xff]
      %v8678 = vld [vmem:[%s65 + $0x48] sm:$0xff]
      %v8679 = vld [vmem:[%s65 + $0x50] sm:$0xff]
      %v8680 = vld [vmem:[%s65 + $0x58] sm:$0xff]
      %v8681 = vld [vmem:[%s65 + $0x60] sm:$0xff]
      %v8682 = vld [vmem:[%s65 + $0x68] sm:$0xff]
      %v8683 = vld [vmem:[%s65 + $0x70] sm:$0xff]
      %v8684 = vld [vmem:[%s65 + $0x78] sm:$0xff]
      %v8685 = vld [vmem:[%s67] sm:$0x1]
      %v8686 = vadd.f32 %v8637, %v8638
      %v8687 = vrot.slane %v8686, 4
      %v8688 = vadd.f32 %v8686, %v8687
      %v8689 = vrot.slane %v8688, 2
      %v8690 = vadd.f32 %v8688, %v8689
      %v8691 = vrot.slane %v8690, 1
      %v8692 = vadd.f32 %v8690, %v8691
      %v8693 = vadd.f32 %v8639, %v8640
      %v8694 = vrot.slane %v8693, 4
      %v8695 = vadd.f32 %v8693, %v8694
      %v8696 = vrot.slane %v8695, 2
      %v8697 = vadd.f32 %v8695, %v8696
      %v8698 = vrot.slane %v8697, 1
      %v8699 = vadd.f32 %v8697, %v8698
      %v8700 = vadd.f32 %v8641, %v8642
      %v8701 = vrot.slane %v8700, 4
      %v8702 = vadd.f32 %v8700, %v8701
      %v8703 = vrot.slane %v8702, 2
      %v8704 = vadd.f32 %v8702, %v8703
      %v8705 = vrot.slane %v8704, 1
      %v8706 = vadd.f32 %v8704, %v8705
      %v8707 = vadd.f32 %v8643, %v8644
      %v8708 = vrot.slane %v8707, 4
      %v8709 = vadd.f32 %v8707, %v8708
      %v8710 = vrot.slane %v8709, 2
      %v8711 = vadd.f32 %v8709, %v8710
      %v8712 = vrot.slane %v8711, 1
      %v8713 = vadd.f32 %v8711, %v8712
      %v8714 = vadd.f32 %v8645, %v8646
      %v8715 = vrot.slane %v8714, 4
      %v8716 = vadd.f32 %v8714, %v8715
      %v8717 = vrot.slane %v8716, 2
      %v8718 = vadd.f32 %v8716, %v8717
      %v8719 = vrot.slane %v8718, 1
      %v8720 = vadd.f32 %v8718, %v8719
      %v8721 = vadd.f32 %v8647, %v8648
      %v8722 = vrot.slane %v8721, 4
      %v8723 = vadd.f32 %v8721, %v8722
      %v8724 = vrot.slane %v8723, 2
      %v8725 = vadd.f32 %v8723, %v8724
      %v8726 = vrot.slane %v8725, 1
      %v8727 = vadd.f32 %v8725, %v8726
      %v8728 = vadd.f32 %v8649, %v8650
      %v8729 = vrot.slane %v8728, 4
      %v8730 = vadd.f32 %v8728, %v8729
      %v8731 = vrot.slane %v8730, 2
      %v8732 = vadd.f32 %v8730, %v8731
      %v8733 = vrot.slane %v8732, 1
      %v8734 = vadd.f32 %v8732, %v8733
      %v8735 = vadd.f32 %v8651, %v8652
      %v8736 = vrot.slane %v8735, 4
      %v8737 = vadd.f32 %v8735, %v8736
      %v8738 = vrot.slane %v8737, 2
      %v8739 = vadd.f32 %v8737, %v8738
      %v8740 = vrot.slane %v8739, 1
      %v8741 = vadd.f32 %v8739, %v8740
      %v8742 = vadd.f32 %v8653, %v8654
      %v8743 = vrot.slane %v8742, 4
      %v8744 = vadd.f32 %v8742, %v8743
      %v8745 = vrot.slane %v8744, 2
      %v8746 = vadd.f32 %v8744, %v8745
      %v8747 = vrot.slane %v8746, 1
      %v8748 = vadd.f32 %v8746, %v8747
      %v8749 = vadd.f32 %v8655, %v8656
      %v8750 = vrot.slane %v8749, 4
      %v8751 = vadd.f32 %v8749, %v8750
      %v8752 = vrot.slane %v8751, 2
      %v8753 = vadd.f32 %v8751, %v8752
      %v8754 = vrot.slane %v8753, 1
      %v8755 = vadd.f32 %v8753, %v8754
      %v8756 = vadd.f32 %v8657, %v8658
      %v8757 = vrot.slane %v8756, 4
      %v8758 = vadd.f32 %v8756, %v8757
      %v8759 = vrot.slane %v8758, 2
      %v8760 = vadd.f32 %v8758, %v8759
      %v8761 = vrot.slane %v8760, 1
      %v8762 = vadd.f32 %v8760, %v8761
      %v8763 = vadd.f32 %v8659, %v8660
      %v8764 = vrot.slane %v8763, 4
      %v8765 = vadd.f32 %v8763, %v8764
      %v8766 = vrot.slane %v8765, 2
      %v8767 = vadd.f32 %v8765, %v8766
      %v8768 = vrot.slane %v8767, 1
      %v8769 = vadd.f32 %v8767, %v8768
      %v8770 = vadd.f32 %v8661, %v8662
      %v8771 = vrot.slane %v8770, 4
      %v8772 = vadd.f32 %v8770, %v8771
      %v8773 = vrot.slane %v8772, 2
      %v8774 = vadd.f32 %v8772, %v8773
      %v8775 = vrot.slane %v8774, 1
      %v8776 = vadd.f32 %v8774, %v8775
      %v8777 = vadd.f32 %v8663, %v8664
      %v8778 = vrot.slane %v8777, 4
      %v8779 = vadd.f32 %v8777, %v8778
      %v8780 = vrot.slane %v8779, 2
      %v8781 = vadd.f32 %v8779, %v8780
      %v8782 = vrot.slane %v8781, 1
      %v8783 = vadd.f32 %v8781, %v8782
      %v8784 = vadd.f32 %v8665, %v8666
      %v8785 = vrot.slane %v8784, 4
      %v8786 = vadd.f32 %v8784, %v8785
      %v8787 = vrot.slane %v8786, 2
      %v8788 = vadd.f32 %v8786, %v8787
      %v8789 = vrot.slane %v8788, 1
      %v8790 = vadd.f32 %v8788, %v8789
      %v8791 = vadd.f32 %v8667, %v8668
      %v8792 = vrot.slane %v8791, 4
      %v8793 = vadd.f32 %v8791, %v8792
      %v8794 = vrot.slane %v8793, 2
      %v8795 = vadd.f32 %v8793, %v8794
      %v8796 = vrot.slane %v8795, 1
      %v8797 = vadd.f32 %v8795, %v8796
      %v8798 = vrcp.pop 16.0
      %v8799 = vmul.f32 %v8692, %v8798
      %v8800 = vmul.f32 %v8699, %v8798
      %v8801 = vmul.f32 %v8706, %v8798
      %v8802 = vmul.f32 %v8713, %v8798
      %v8803 = vmul.f32 %v8720, %v8798
      %v8804 = vmul.f32 %v8727, %v8798
      %v8805 = vmul.f32 %v8734, %v8798
      %v8806 = vmul.f32 %v8741, %v8798
      %v8807 = vmul.f32 %v8748, %v8798
      %v8808 = vmul.f32 %v8755, %v8798
      %v8809 = vmul.f32 %v8762, %v8798
      %v8810 = vmul.f32 %v8769, %v8798
      %v8811 = vmul.f32 %v8776, %v8798
      %v8812 = vmul.f32 %v8783, %v8798
      %v8813 = vmul.f32 %v8790, %v8798
      %v8814 = vmul.f32 %v8797, %v8798
      %v8816 = vlaneseq
      %v8817 = vshrl.u32 %v8816, 7
      %v8818 = vsub.s32 0, %v8817
      %v8819 = vrot.slane %v8685, %v8818
      %vm8837 = vcmask 1041409
      %v8838 = vsel %vm8837, %v8800, %v8799
      %vm8839 = vcmask 1042434
      %v8840 = vsel %vm8839, %v8801, %v8838
      %vm8841 = vcmask 1043459
      %v8842 = vsel %vm8841, %v8802, %v8840
      %vm8843 = vcmask 1044484
      %v8844 = vsel %vm8843, %v8803, %v8842
      %vm8845 = vcmask 1045509
      %v8846 = vsel %vm8845, %v8804, %v8844
      %vm8847 = vcmask 1046534
      %v8848 = vsel %vm8847, %v8805, %v8846
      %vm8849 = vcmask 1047559
      %v8850 = vsel %vm8849, %v8806, %v8848
      %v8851 = vsel %vm8837, %v8808, %v8807
      %v8852 = vsel %vm8839, %v8809, %v8851
      %v8853 = vsel %vm8841, %v8810, %v8852
      %v8854 = vsel %vm8843, %v8811, %v8853
      %v8855 = vsel %vm8845, %v8812, %v8854
      %v8856 = vsel %vm8847, %v8813, %v8855
      %v8857 = vsel %vm8849, %v8814, %v8856
      %8860 = vmatprep.subr.mxu0 0.0
      %8861 = vmatpush1.msra.mxu0 %v8669
      %8862 = vmatprep.subr.mxu0 0.0
      %8863 = vmatpush1.msra.mxu0 %v8670
      %8864 = vmatprep.subr.mxu0 0.0
      %8865 = vmatpush1.msra.mxu0 %v8671
      %8866 = vmatprep.subr.mxu0 0.0
      %8867 = vmatpush1.msra.mxu0 %v8672
      %8868 = vmatprep.subr.mxu0 0.0
      %8869 = vmatpush1.msra.mxu0 %v8673
      %8870 = vmatprep.subr.mxu0 0.0
      %8871 = vmatpush1.msra.mxu0 %v8674
      %8872 = vmatprep.subr.mxu0 0.0
      %8873 = vmatpush1.msra.mxu0 %v8675
      %8874 = vmatprep.subr.mxu0 0.0
      %8875 = vmatpush1.msra.mxu0 %v8676
      %8876 = vmatprep.subr.mxu0 0.0
      %8877 = vmatpush1.msra.mxu0 %v8677
      %8878 = vmatprep.subr.mxu0 0.0
      %8879 = vmatpush1.msra.mxu0 %v8678
      %8880 = vmatprep.subr.mxu0 0.0
      %8881 = vmatpush1.msra.mxu0 %v8679
      %8882 = vmatprep.subr.mxu0 0.0
      %8883 = vmatpush1.msra.mxu0 %v8680
      %8884 = vmatprep.subr.mxu0 0.0
      %8885 = vmatpush1.msra.mxu0 %v8681
      %8886 = vmatprep.subr.mxu0 0.0
      %8887 = vmatpush1.msra.mxu0 %v8682
      %8888 = vmatprep.subr.mxu0 0.0
      %8889 = vmatpush1.msra.mxu0 %v8683
      %8890 = vmatprep.subr.mxu0 0.0
      %8891 = vmatpush1.msra.mxu0 %v8684
      %8892 = vmatprep.subr.mxu0 0.0
      %8893 = vmatpush1.msra.mxu0 0.0
      %8894 = vmatprep.subr.mxu0 0.0
      %8895 = vmatpush1.msra.mxu0 0.0
      %8896 = vmatprep.subr.mxu0 0.0
      %8897 = vmatpush1.msra.mxu0 0.0
      %8898 = vmatprep.subr.mxu0 0.0
      %8899 = vmatpush1.msra.mxu0 0.0
      %8900 = vmatprep.subr.mxu0 0.0
      %8901 = vmatpush1.msra.mxu0 0.0
      %8902 = vmatprep.subr.mxu0 0.0
      %8903 = vmatpush1.msra.mxu0 0.0
      %8904 = vmatprep.subr.mxu0 0.0
      %8905 = vmatpush1.msra.mxu0 0.0
      %8906 = vmatprep.subr.mxu0 0.0
      %8907 = vmatpush1.msra.mxu0 0.0
      %8908 = vmatprep.subr.mxu0 0.0
      %8909 = vmatpush1.msra.mxu0 0.0
      %8910 = vmatprep.subr.mxu0 0.0
      %8911 = vmatpush1.msra.mxu0 0.0
      %8912 = vmatprep.subr.mxu0 0.0
      %8913 = vmatpush1.msra.mxu0 0.0
      %8914 = vmatprep.subr.mxu0 0.0
      %8915 = vmatpush1.msra.mxu0 0.0
      %8916 = vmatprep.subr.mxu0 0.0
      %8917 = vmatpush1.msra.mxu0 0.0
      %8918 = vmatprep.subr.mxu0 0.0
      %8919 = vmatpush1.msra.mxu0 0.0
      %8920 = vmatprep.subr.mxu0 0.0
      %8921 = vmatpush1.msra.mxu0 0.0
      %8922 = vmatprep.subr.mxu0 0.0
      %8923 = vmatpush1.msra.mxu0 0.0
      %8924 = vmatprep.mubr.f32.mxu0 0.0
      %8925 = vmatmul.mubr.f32.gmra.mrb[0].mxu0 %v8850
      %v8926 = vpop.f32.mrb[0].mxu0
      %v8927 = vadd.f32 %v8819, %v8926
      %v8928 = vpop.f32.mrb[0].mxu0
      %8929 = vmatprep.mubr.f32.mxu0 0.0
      %8930 = vmatmul.mubr.f32.gmra.mrb[0].mxu0 %v8857
      %v8931 = vpop.f32.mrb[0].mxu0
      %v8932 = vadd.f32 %v8819, %v8931
      %v8933 = vpop.f32.mrb[0].mxu0
      %8934 = vdwg.mxu0
      %8935 = vmax.xlane.f32.xlu0 %v8927
      %v8936 = vpop.xlane.xlu0 %8935
      %8937 = vmax.xlane.f32.xlu0 %v8932
      %v8938 = vpop.xlane.xlu0 %8937
      %v8939 = vsub.f32 %v8927, %v8936
      %v8940 = vsub.f32 %v8932, %v8938
      %v8941 = vmul.f32 %v8939, 1.442695
      %v8942 = vpow.pop %v8941
      %v8943 = vmul.f32 %v8940, 1.442695
      %v8944 = vpow.pop %v8943
      %8945 = vadd.xlane.f32.xlu0 %v8942
      %v8946 = vpop.xlane.xlu0 %8945
      %8947 = vadd.xlane.f32.xlu0 %v8944
      %v8948 = vpop.xlane.xlu0 %8947
      %v8949 = vlog2.pop %v8946
      %v8950 = vmul.f32 %v8949, 0.6931472
      %v8951 = vlog2.pop %v8948
      %v8952 = vmul.f32 %v8951, 0.6931472
      %v8953 = vsub.f32 %v8939, %v8950
      %v8954 = vsub.f32 %v8940, %v8952
      %8955 = vst [vmem:[%s1042] sm:$0xff] %v8953
      %8956 = vst [vmem:[%s1042 + $0x8] sm:$0xff] %v8954
      %p8957 = scmp.lt.s32.totalorder %s80, 1
      %s8958 = scalar_select %p8957, %s80, 1
      %s8959 = smul.addr %s8958, 2
      %s8960 = smul.addr %s8959, 8
      %s8961 = scalar_lea.vmem %s69, %s8960
      // Predicated region
      $region157: #{stgcn_forward.1} parent=155 // pred_check
        %p8962 = pneg %p817
      $region158: #{stgcn_forward.1} parent=155 // pred_check_branch
        %8964 = sbr.rel (%p8962) target = $region160
      $region159: #{stgcn_forward.1} parent=155 // pred_region
        _
      $region160: #{stgcn_forward.1} parent=155 // pred_fallthru
        _
    $region156: #{stgcn_forward.1} parent=5 // pred_fallthru
      _
    %p8965 = scmp.le.s32.totalorder 2, %s75
    // Predicated region
    $region161: #{stgcn_forward.1} parent=5 // pred_check
      %p8966 = pneg %p8965
    $region162: #{stgcn_forward.1} parent=5 // pred_check_branch
      %8968 = sbr.rel (%p8966) target = $region164
    $region163: #{stgcn_forward.1} parent=5 // pred_region
      %s8969 = ssub.s32 %s75, 2
      // Predicated region
      $region165: #{stgcn_forward.1} parent=163 // pred_check
        %p8970 = pneg %p823
      $region166: #{stgcn_forward.1} parent=163 // pred_check_branch
        %8972 = sbr.rel (%p8970) target = $region168
      $region167: #{stgcn_forward.1} parent=163 // pred_region
        %p8973 = scmp.lt.s32.totalorder %s81, 1
        %s8974 = scalar_select %p8973, %s81, 1
        %s8975 = smul.addr %s8974, 2
        %s8976 = smul.addr %s8975, 8
        %s8977 = scalar_lea.vmem %s69, %s8976
      $region168: #{stgcn_forward.1} parent=163 // pred_fallthru
        _
    $region164: #{stgcn_forward.1} parent=5 // pred_fallthru
      _
  $region6: #{stgcn_forward.1} parent=0 // loop_footer
    %s79 = sadd.s32 1, %s75
  $region7: #{stgcn_forward.1} parent=0 // loop_footer_branch
    %74 = sbr.rel target = $region3
  $region8: #{stgcn_forward.1} parent=0 // loop_exit
    _

</llo_original>
